<compile_context>
chip_gen: v7x
topology: tpu7x:2x2x1
jax: 0.10.0
libtpu: 0.0.40
codegen_flags: <defaults>
</compile_context>

<pallas_src>
import jax
import jax.numpy as jnp
from jax import lax
from jax.experimental import pallas as pl
from jax.experimental.pallas import tpu as pltpu

K = 5  # conv kernel width (1, 5)


def char_conv_kernel(idx_ref, table_ref, w_ref, b_ref, out_ref):
    # idx_ref:   (tile_n, C)   int32  -- char indices for tile_n words
    # table_ref: (Vp, E)       bf16   -- zero-padded char-vector table (VMEM resident)
    # w_ref:     (K*E, dp)     bf16   -- stacked conv weights, output padded to dp
    # b_ref:     (1, dp)       f32
    # out_ref:   (tile_n, dp)  f32
    tn, c = idx_ref.shape
    vp = table_ref.shape[0]
    dp = out_ref.shape[-1]
    w_out = c - K + 1
    rows = tn * c

    # ---- fused embedding gather: bf16 one-hot @ bf16 table on the MXU ------
    idx = idx_ref[...]                                                 # (tn, c)
    viota = lax.broadcasted_iota(jnp.int32, (1, 1, vp), 2)
    onehot = (idx[:, :, None] == viota).astype(jnp.bfloat16)           # (tn, c, vp)
    emb = jnp.dot(onehot.reshape(rows, vp), table_ref[...],
                  preferred_element_type=jnp.float32)                  # (rows, E) f32
    # (values are exactly the bf16 table entries; f32 accumulation is exact here)

    # ---- (1,K) conv as ONE stacked matmul (contraction K*E) ----------------
    # window row i = n*C + w needs emb rows i..i+K-1; build the K shifted copies
    # with XLU rolls and concatenate along lanes, then a single MXU pass.
    parts = [emb] + [pltpu.roll(emb, shift=rows - k, axis=0) for k in range(1, K)]
    emb_win = jnp.concatenate(parts, axis=-1).astype(jnp.bfloat16)     # (rows, K*E)
    acc = jnp.dot(emb_win, w_ref[...],
                  preferred_element_type=jnp.float32)                  # (rows, dp)

    y = jnp.maximum(acc + b_ref[...], 0.0)                             # bias + ReLU
    y = y.reshape(tn, c, dp)

    # valid conv windows only (w < w_out); rolled cross-word rows sit at w >= w_out
    # and are simply excluded by the slice (no mask, no iota).
    out_ref[...] = jnp.max(y[:, :w_out, :], axis=1)                    # (tn, dp)


def char_embedding_forward(char_idxs, char_vectors, conv_w, conv_b, *, tile_n=None):
    """char_idxs: (B, S, C) int -> (B, d_model, S) float32 (PyTorch output order)."""
    B, S, C = char_idxs.shape
    vocab, E = char_vectors.shape
    d_model = conv_w.shape[0]
    assert conv_w.shape == (d_model, E, 1, K)
    assert C - K + 1 >= 1, "word length must be >= conv width"

    # TODO(synk): dropout (drop_char / drop_prob) is a no-op in eval mode; training-mode
    # dropout masks are not implemented here.

    N = B * S
    if tile_n is None:
        # >=4 grid steps for small N (v7x megacore balance), bigger tiles for large N.
        if N >= 8 * 512:
            tile_n = 512
        elif N >= 4 * 256:
            tile_n = 256
        else:
            tile_n = 128
    assert tile_n % 8 == 0

    n_pad = (-N) % tile_n                      # pad word count to a tile multiple
    idx2d = char_idxs.reshape(N, C).astype(jnp.int32)
    if n_pad:
        idx2d = jnp.concatenate([idx2d, jnp.zeros((n_pad, C), jnp.int32)], axis=0)
    Np = N + n_pad

    Vp = ((vocab + 127) // 128) * 128          # aligned one-hot contraction
    dp = ((d_model + 127) // 128) * 128        # lane-dense output stores

    table = (jnp.zeros((Vp, E), jnp.float32)
             .at[:vocab].set(char_vectors.astype(jnp.float32))
             .astype(jnp.bfloat16))
    # conv_w (d_model, E, 1, K) -> stacked (K*E, dp): w_stack[k*E + e, d] = conv_w[d, e, 0, k]
    w_keo = jnp.transpose(conv_w[:, :, 0, :], (2, 1, 0)).astype(jnp.float32)  # (K, E, d_model)
    w_stack = (jnp.zeros((K * E, dp), jnp.float32)
               .at[:, :d_model].set(w_keo.reshape(K * E, d_model))
               .astype(jnp.bfloat16))
    b_pad = jnp.zeros((1, dp), jnp.float32).at[0, :d_model].set(
        conv_b.astype(jnp.float32))

    out = pl.pallas_call(
        char_conv_kernel,
        out_shape=jax.ShapeDtypeStruct((Np, dp), jnp.float32),
        grid_spec=pltpu.PrefetchScalarGridSpec(
            num_scalar_prefetch=0,
            grid=(Np // tile_n,),
            in_specs=[
                pl.BlockSpec((tile_n, C), lambda i: (i, 0)),      # int32 indices (tiled)
                pl.BlockSpec((Vp, E), lambda i: (0, 0)),          # char table (resident, bf16)
                pl.BlockSpec((K * E, dp), lambda i: (0, 0)),      # stacked conv weights (bf16)
                pl.BlockSpec((1, dp), lambda i: (0, 0)),          # bias (resident)
            ],
            out_specs=pl.BlockSpec((tile_n, dp), lambda i: (i, 0)),
        ),
        compiler_params=pltpu.CompilerParams(
            dimension_semantics=("parallel",),
            vmem_limit_bytes=40 * 1024 * 1024,   # fits v7x's 64 MiB physical budget
        ),
    )(idx2d, table, w_stack, b_pad)

    out = out[:N, :d_model].reshape(B, S, d_model)
    # TODO(synk): the final transpose could be fused in-kernel (XLU) when S % tile_n == 0.
    return jnp.transpose(out, (0, 2, 1))       # (B, d_model, S)


def reference_forward(char_idxs, char_vectors, conv_w, conv_b):
    """Pure-JAX reference reproducing the PyTorch forward (eval mode), f32."""
    emb = jnp.take(char_vectors, char_idxs, axis=0).astype(jnp.float32)  # (B,S,C,E)
    B, S, C, E = emb.shape
    w_out = C - K + 1
    y = conv_b[None, :, None, None].astype(jnp.float32)
    for k in range(K):
        y = y + jnp.einsum("bswe,de->bdsw", emb[:, :, k:k + w_out, :],
                           conv_w[:, :, 0, k].astype(jnp.float32),
                           precision="highest")
    y = jnp.maximum(y, 0.0)
    return jnp.max(y, axis=3)  # (B, d_model, S)


if __name__ == "__main__":
    B, S, C = 2, 256, 16       # batch, seq_len, chars per word  (B*S = 512 -> 4 grid steps)
    E = 32                     # char-vector dim (input_char_emb_size)
    d_model = 64               # output char-embedding dim
    vocab = 100                # char vocab size

    key = jax.random.PRNGKey(0)
    k_vec, k_idx, k_w, k_b = jax.random.split(key, 4)

    char_vectors = jax.random.normal(k_vec, (vocab, E), dtype=jnp.float32)
    char_idxs = jax.random.randint(k_idx, (B, S, C), 0, vocab, dtype=jnp.int32)

    # kaiming_normal_ (fan_in mode, relu): std = sqrt(2 / fan_in), fan_in = E*1*K
    fan_in = E * 1 * K
    conv_w = jax.random.normal(k_w, (d_model, E, 1, K), dtype=jnp.float32) * jnp.sqrt(2.0 / fan_in)
    bound = 1.0 / jnp.sqrt(fan_in)
    conv_b = jax.random.uniform(k_b, (d_model,), minval=-bound, maxval=bound, dtype=jnp.float32)

    out = char_embedding_forward(char_idxs, char_vectors, conv_w, conv_b)
    out = jax.block_until_ready(out)
    assert out.shape == (B, d_model, S), out.shape

    # Tight check vs. a reference with the same bf16-quantized table/weights
    # (isolates kernel structure from bf16 rounding of the parameters).
    cv_q = char_vectors.astype(jnp.bfloat16).astype(jnp.float32)
    cw_q = conv_w.astype(jnp.bfloat16).astype(jnp.float32)
    ref_q = reference_forward(char_idxs, cv_q, cw_q, conv_b)
    err_q = float(jnp.max(jnp.abs(out - ref_q)))
    assert jnp.allclose(out, ref_q, atol=1e-3, rtol=1e-3), err_q

    # Loose check vs. the full-f32 reference (bf16 MXU operand rounding).
    ref = reference_forward(char_idxs, char_vectors, conv_w, conv_b)
    err = float(jnp.max(jnp.abs(out - ref)))
    assert jnp.allclose(out, ref, atol=5e-2, rtol=5e-2), err

    print("KERNEL_OK")
</pallas_src>

<mosaic_0001>
module attributes {stable_mosaic.version = 11 : i64} {
  func.func @char_conv_kernel(%arg0: i32, %arg1: memref<128x16xi32, #tpu.memory_space<vmem>>, %arg2: memref<128x32xbf16, #tpu.memory_space<vmem>>, %arg3: memref<160x128xbf16, #tpu.memory_space<vmem>>, %arg4: memref<1x128xf32, #tpu.memory_space<vmem>>, %arg5: memref<128x128xf32, #tpu.memory_space<vmem>>) attributes {dimension_semantics = [#tpu.dimension_semantics<parallel>], iteration_bounds = array<i64: 4>, scalar_prefetch = 0 : i64, scratch_operands = 0 : i64, tpu.core_type = #tpu.core_type<tc>, window_params = [{transform_indices = @transform_0, window_bounds = array<i64: 128, 16>}, {pipeline_mode = #tpu.pipeline_mode<synchronous>, transform_indices = @transform_1, window_bounds = array<i64: 128, 32>}, {pipeline_mode = #tpu.pipeline_mode<synchronous>, transform_indices = @transform_2, window_bounds = array<i64: 160, 128>}, {pipeline_mode = #tpu.pipeline_mode<synchronous>, transform_indices = @transform_3, window_bounds = array<i64: 1, 128>}, {transform_indices = @transform_4, window_bounds = array<i64: 128, 128>}]} {
    %c0 = arith.constant 0 : index
    %c0_0 = arith.constant 0 : index
    %0 = vector.load %arg1[%c0, %c0_0] : memref<128x16xi32, #tpu.memory_space<vmem>>, vector<128x16xi32>
    %1 = tpu.iota {dimensions = array<i32: 2>} : vector<1x1x128xi32>
    %2 = vector.shape_cast %0 : vector<128x16xi32> to vector<128x16x1xi32>
    %3 = vector.broadcast %2 : vector<128x16x1xi32> to vector<128x16x128xi32>
    %4 = vector.broadcast %1 : vector<1x1x128xi32> to vector<128x16x128xi32>
    %5 = arith.cmpi eq, %3, %4 : vector<128x16x128xi32>
    %6 = arith.extui %5 : vector<128x16x128xi1> to vector<128x16x128xi32>
    %7 = arith.sitofp %6 : vector<128x16x128xi32> to vector<128x16x128xf32>
    %8 = arith.truncf %7 : vector<128x16x128xf32> to vector<128x16x128xbf16>
    %9 = vector.shape_cast %8 : vector<128x16x128xbf16> to vector<2048x128xbf16>
    %c0_1 = arith.constant 0 : index
    %c0_2 = arith.constant 0 : index
    %10 = vector.load %arg2[%c0_1, %c0_2] : memref<128x32xbf16, #tpu.memory_space<vmem>>, vector<128x32xbf16>
    %cst = arith.constant dense<0.000000e+00> : vector<2048x32xf32>
    %11 = tpu.matmul %9, %10, %cst {dimension_numbers = #tpu.dot_dimension_numbers<[1], [0], [0], [1], [0, 0, 1, 1], [], []>} : vector<2048x128xbf16>, vector<128x32xbf16>, vector<2048x32xf32> -> vector<2048x32xf32>
    %c2047_i32 = arith.constant 2047 : i32
    %12 = tpu.dynamic_rotate %11 by %c2047_i32 dim 0 : vector<2048x32xf32>, i32 -> vector<2048x32xf32>
    %c2046_i32 = arith.constant 2046 : i32
    %13 = tpu.dynamic_rotate %11 by %c2046_i32 dim 0 : vector<2048x32xf32>, i32 -> vector<2048x32xf32>
    %c2045_i32 = arith.constant 2045 : i32
    %14 = tpu.dynamic_rotate %11 by %c2045_i32 dim 0 : vector<2048x32xf32>, i32 -> vector<2048x32xf32>
    %c2044_i32 = arith.constant 2044 : i32
    %15 = tpu.dynamic_rotate %11 by %c2044_i32 dim 0 : vector<2048x32xf32>, i32 -> vector<2048x32xf32>
    %16 = tpu.concatenate %11, %12, %13, %14, %15 in 1 : vector<2048x32xf32>, vector<2048x32xf32>, vector<2048x32xf32>, vector<2048x32xf32>, vector<2048x32xf32> -> vector<2048x160xf32>
    %17 = arith.truncf %16 : vector<2048x160xf32> to vector<2048x160xbf16>
    %c0_3 = arith.constant 0 : index
    %c0_4 = arith.constant 0 : index
    %18 = vector.load %arg3[%c0_3, %c0_4] : memref<160x128xbf16, #tpu.memory_space<vmem>>, vector<160x128xbf16>
    %cst_5 = arith.constant dense<0.000000e+00> : vector<2048x128xf32>
    %19 = tpu.matmul %17, %18, %cst_5 {dimension_numbers = #tpu.dot_dimension_numbers<[1], [0], [0], [1], [0, 0, 1, 1], [], []>} : vector<2048x160xbf16>, vector<160x128xbf16>, vector<2048x128xf32> -> vector<2048x128xf32>
    %c0_6 = arith.constant 0 : index
    %c0_7 = arith.constant 0 : index
    %20 = vector.load %arg4[%c0_6, %c0_7] : memref<1x128xf32, #tpu.memory_space<vmem>>, vector<1x128xf32>
    %21 = vector.broadcast %20 : vector<1x128xf32> to vector<2048x128xf32>
    %22 = arith.addf %19, %21 : vector<2048x128xf32>
    %cst_8 = arith.constant 0.000000e+00 : f32
    %23 = vector.broadcast %cst_8 : f32 to vector<2048x128xf32>
    %24 = arith.maximumf %22, %23 : vector<2048x128xf32>
    %25 = vector.shape_cast %24 : vector<2048x128xf32> to vector<128x16x128xf32>
    %26 = vector.extract_strided_slice %25 {offsets = [0, 0, 0], sizes = [128, 12, 128], strides = [1, 1, 1]} : vector<128x16x128xf32> to vector<128x12x128xf32>
    %cst_9 = arith.constant dense<0xFF800000> : vector<128x128xf32>
    %27 = vector.multi_reduction <maximumf>, %26, %cst_9 [1] : vector<128x12x128xf32> to vector<128x128xf32>
    %c0_10 = arith.constant 0 : index
    %c0_11 = arith.constant 0 : index
    %28 = vector.load %arg5[%c0_10, %c0_11] : memref<128x128xf32, #tpu.memory_space<vmem>>, vector<128x128xf32>
    tpu.vector_store %arg5[%c0_10, %c0_11], %27 {strides = array<i32>} : memref<128x128xf32, #tpu.memory_space<vmem>>, vector<128x128xf32>,
    return
  }
  func.func @transform_0(%arg0: i32) -> (i32, i32) {
    %c0_i32 = arith.constant 0 : i32
    %c0_i32_0 = arith.constant 0 : i32
    return %arg0, %c0_i32 : i32, i32
  }
  func.func @transform_1(%arg0: i32) -> (i32, i32) {
    %c0_i32 = arith.constant 0 : i32
    %c0_i32_0 = arith.constant 0 : i32
    %c0_i32_1 = arith.constant 0 : i32
    return %c0_i32, %c0_i32_0 : i32, i32
  }
  func.func @transform_2(%arg0: i32) -> (i32, i32) {
    %c0_i32 = arith.constant 0 : i32
    %c0_i32_0 = arith.constant 0 : i32
    %c0_i32_1 = arith.constant 0 : i32
    return %c0_i32, %c0_i32_0 : i32, i32
  }
  func.func @transform_3(%arg0: i32) -> (i32, i32) {
    %c0_i32 = arith.constant 0 : i32
    %c0_i32_0 = arith.constant 0 : i32
    %c0_i32_1 = arith.constant 0 : i32
    return %c0_i32, %c0_i32_0 : i32, i32
  }
  func.func @transform_4(%arg0: i32) -> (i32, i32) {
    %c0_i32 = arith.constant 0 : i32
    %c0_i32_0 = arith.constant 0 : i32
    return %arg0, %c0_i32 : i32, i32
  }
}

</mosaic_0001>

<llo_original>
// kernel: tpu_custom_call.1
$region0: #{tpu_custom_call.1}
  #allocation0 [shape = 'u32[]', space=smem, size = 0x4, offset = 0x4, fixed_abs, tag = 'smem constant byte address 0x4 - core index']
  #allocation1 [shape = 'u32[144,128]{1,0:T(1,128)}', space=vmem, size = 0x12000, scoped, tag = 'internal scratch']
  %s0 = inlined_call_operand.vmem [shape: s32[512,16], index: 0, kind: input, shape index: {}]
  %s1 = inlined_call_operand.vmem [shape: bf16[128,32], index: 1, kind: input, shape index: {}]
  %s2 = inlined_call_operand.vmem [shape: bf16[160,128], index: 2, kind: input, shape index: {}]
  %s3 = inlined_call_operand.vmem [shape: f32[1,128], index: 3, kind: input, shape index: {}]
  %s4 = inlined_call_operand.hbm [shape: f32[512,128], index: 4, kind: output, shape index: {}]
  %s5 = sld [smem:[#allocation0]]
  $region49: #{tpu_custom_call.1} parent=0
    _
  %s7 = ssub.s32 1, %s5
  %s8 = scalar_select 0, %s7, %s5
  $region1: #{tpu_custom_call.1} parent=0
    #allocation2 [shape = 'u8[131072]{0}', space=vmem, size = 0x20000, scoped, tag = 'output window, operand 0']
    #allocation3 [shape = 's32[2]{0}', space=sflag, size = 0x8, scoped, tag = 'scoped memory for tpu_custom_call.1']
    %9 = vsyncpa [#allocation3], 0
    %s10 = scalar_lea.sflag [#allocation3], 1
    %11 = vsyncpa %s10, 0
    loop: start=0, step=1, limit=6
    $region2: #{tpu_custom_call.1} parent=1 // loop_pre_header
      _
    $region3: #{tpu_custom_call.1} parent=1 // loop_header
      %s13 = sphi 0, %s17
      %p14 = scmp.ge.s32.totalorder %s13, 6
      %s23 = sphi 0, %s25
      %s26 = sphi 0, %s23
      %s27 = sphi 0, %s26
      %s43 = sphi 0, %s27
      %s47 = sphi 0, %s47
      %s49 = sphi 0, %s47
      %s50 = sphi 0, %s49
      %s64 = sphi 0, %s50
      %s68 = sphi 0, %s68
      %s70 = sphi 0, %s68
      %s71 = sphi 0, %s70
      %s85 = sphi 0, %s71
      %s89 = sphi 0, %s89
      %s91 = sphi 0, %s89
      %s92 = sphi 0, %s91
      %s106 = sphi 0, %s92
      %s112 = sphi 0, %s114
      %s115 = sphi 0, %s112
      %s116 = sphi 0, %s115
      %s132 = sphi 0, %s116
    $region4: #{tpu_custom_call.1} parent=1 // loop_header_branch
      %16 = sbr.rel (%p14) target = $region8
    $region5: #{tpu_custom_call.1} parent=1 // loop_body
      %s18 = ssub.s32 %s13, 1
      %s19 = ssub.s32 %s13, 2
      %s20 = sadd.s32 %s13, 1
      %s21 = ssub.s32 %s13, %s20
      %p22 = scmp.eq.s32.totalorder %s21, 0
      %s24 = sadd.s32 %s23, 1
      %s25 = scalar_select %p22, %s23, %s24
      %p28 = pneg %p22
      %p29 = scmp.eq.s32.totalorder %s13, 3
      %p30 = por %p28, %p29
      %p31 = scmp.ne.s32.totalorder %s23, %s26
      %p32 = scmp.eq.s32.totalorder %s13, 0
      %p33 = por %p31, %p32
      %p34 = scmp.ne.s32.totalorder %s23, %s26
      %p35 = scmp.eq.s32.totalorder %s18, 3
      %p36 = por %p34, %p35
      %p37 = scmp.ne.s32.totalorder %s26, %s27
      %p38 = scmp.eq.s32.totalorder %s18, 0
      %p39 = por %p37, %p38
      %p40 = scmp.ne.s32.totalorder %s26, %s27
      %p41 = scmp.eq.s32.totalorder %s19, 3
      %p42 = por %p40, %p41
      %p44 = scmp.ne.s32.totalorder %s27, %s43
      %p45 = scmp.eq.s32.totalorder %s19, 0
      %p46 = por %p44, %p45
      %s48 = sadd.s32 %s47, 1
      %p51 = scmp.eq.s32.totalorder %s13, 3
      %p52 = scmp.ne.s32.totalorder %s47, %s49
      %p53 = scmp.eq.s32.totalorder %s13, 0
      %p54 = por %p52, %p53
      %p55 = scmp.ne.s32.totalorder %s47, %s49
      %p56 = scmp.eq.s32.totalorder %s18, 3
      %p57 = por %p55, %p56
      %p58 = scmp.ne.s32.totalorder %s49, %s50
      %p59 = scmp.eq.s32.totalorder %s18, 0
      %p60 = por %p58, %p59
      %p61 = scmp.ne.s32.totalorder %s49, %s50
      %p62 = scmp.eq.s32.totalorder %s19, 3
      %p63 = por %p61, %p62
      %p65 = scmp.ne.s32.totalorder %s50, %s64
      %p66 = scmp.eq.s32.totalorder %s19, 0
      %p67 = por %p65, %p66
      %s69 = sadd.s32 %s68, 1
      %p72 = scmp.eq.s32.totalorder %s13, 3
      %p73 = scmp.ne.s32.totalorder %s68, %s70
      %p74 = scmp.eq.s32.totalorder %s13, 0
      %p75 = por %p73, %p74
      %p76 = scmp.ne.s32.totalorder %s68, %s70
      %p77 = scmp.eq.s32.totalorder %s18, 3
      %p78 = por %p76, %p77
      %p79 = scmp.ne.s32.totalorder %s70, %s71
      %p80 = scmp.eq.s32.totalorder %s18, 0
      %p81 = por %p79, %p80
      %p82 = scmp.ne.s32.totalorder %s70, %s71
      %p83 = scmp.eq.s32.totalorder %s19, 3
      %p84 = por %p82, %p83
      %p86 = scmp.ne.s32.totalorder %s71, %s85
      %p87 = scmp.eq.s32.totalorder %s19, 0
      %p88 = por %p86, %p87
      %s90 = sadd.s32 %s89, 1
      %p93 = scmp.eq.s32.totalorder %s13, 3
      %p94 = scmp.ne.s32.totalorder %s89, %s91
      %p95 = scmp.eq.s32.totalorder %s13, 0
      %p96 = por %p94, %p95
      %p97 = scmp.ne.s32.totalorder %s89, %s91
      %p98 = scmp.eq.s32.totalorder %s18, 3
      %p99 = por %p97, %p98
      %p100 = scmp.ne.s32.totalorder %s91, %s92
      %p101 = scmp.eq.s32.totalorder %s18, 0
      %p102 = por %p100, %p101
      %p103 = scmp.ne.s32.totalorder %s91, %s92
      %p104 = scmp.eq.s32.totalorder %s19, 3
      %p105 = por %p103, %p104
      %p107 = scmp.ne.s32.totalorder %s92, %s106
      %p108 = scmp.eq.s32.totalorder %s19, 0
      %p109 = por %p107, %p108
      %s110 = ssub.s32 %s13, %s20
      %p111 = scmp.eq.s32.totalorder %s110, 0
      %s113 = sadd.s32 %s112, 1
      %s114 = scalar_select %p111, %s112, %s113
      %p117 = pneg %p111
      %p118 = scmp.eq.s32.totalorder %s13, 3
      %p119 = por %p117, %p118
      %p120 = scmp.ne.s32.totalorder %s112, %s115
      %p121 = scmp.eq.s32.totalorder %s13, 0
      %p122 = por %p120, %p121
      %p123 = scmp.ne.s32.totalorder %s112, %s115
      %p124 = scmp.eq.s32.totalorder %s18, 3
      %p125 = por %p123, %p124
      %p126 = scmp.ne.s32.totalorder %s115, %s116
      %p127 = scmp.eq.s32.totalorder %s18, 0
      %p128 = por %p126, %p127
      %p129 = scmp.ne.s32.totalorder %s115, %s116
      %p130 = scmp.eq.s32.totalorder %s19, 3
      %p131 = por %p129, %p130
      %p133 = scmp.ne.s32.totalorder %s116, %s132
      %p134 = scmp.eq.s32.totalorder %s19, 0
      %p135 = por %p133, %p134
      %p136 = scmp.le.s32.totalorder 1, %s13
      %p137 = scmp.lt.s32.totalorder %s13, 5
      %p138 = pnand %p136, %p137
      %p139 = pneg %p138
      // Predicated region
      $region9: #{tpu_custom_call.1} parent=5 // pred_check
        _
      $region10: #{tpu_custom_call.1} parent=5 // pred_check_branch
        %141 = sbr.rel (%p138) target = $region12
      $region11: #{tpu_custom_call.1} parent=5 // pred_region
        %s142 = ssub.s32 %s13, 1
        // Predicated region
        $region13: #{tpu_custom_call.1} parent=11 // pred_check
          %p143 = pneg %p60
        $region14: #{tpu_custom_call.1} parent=11 // pred_check_branch
          %145 = sbr.rel (%p143) target = $region16
        $region15: #{tpu_custom_call.1} parent=11 // pred_region
          _
        $region16: #{tpu_custom_call.1} parent=11 // pred_fallthru
          _
        // Predicated region
        $region17: #{tpu_custom_call.1} parent=11 // pred_check
          %p146 = pneg %p81
        $region18: #{tpu_custom_call.1} parent=11 // pred_check_branch
          %148 = sbr.rel (%p146) target = $region20
        $region19: #{tpu_custom_call.1} parent=11 // pred_region
          _
        $region20: #{tpu_custom_call.1} parent=11 // pred_fallthru
          _
        // Predicated region
        $region21: #{tpu_custom_call.1} parent=11 // pred_check
          %p149 = pneg %p102
        $region22: #{tpu_custom_call.1} parent=11 // pred_check_branch
          %151 = sbr.rel (%p149) target = $region24
        $region23: #{tpu_custom_call.1} parent=11 // pred_region
          _
        $region24: #{tpu_custom_call.1} parent=11 // pred_fallthru
          _
      $region12: #{tpu_custom_call.1} parent=5 // pred_fallthru
        _
      %p152 = scmp.lt.s32.totalorder %s13, 4
      // Predicated region
      $region25: #{tpu_custom_call.1} parent=5 // pred_check
        %p153 = pneg %p152
      $region26: #{tpu_custom_call.1} parent=5 // pred_check_branch
        %155 = sbr.rel (%p153) target = $region28
      $region27: #{tpu_custom_call.1} parent=5 // pred_region
        // Predicated region
        $region29: #{tpu_custom_call.1} parent=27 // pred_check
          %p156 = pneg %p33
        $region30: #{tpu_custom_call.1} parent=27 // pred_check_branch
          %158 = sbr.rel (%p156) target = $region32
        $region31: #{tpu_custom_call.1} parent=27 // pred_region
          %s159 = smul.u32 16, %s13
          %p160 = scmp.lt.s32.totalorder %s159, 63
          %s161 = scalar_select %p160, %s159, 63
          %s162 = smul.addr %s161, 8
          %s163 = scalar_lea.vmem %s0, %s162
          %s164 = smul.u32 16, %s13
        $region32: #{tpu_custom_call.1} parent=27 // pred_fallthru
          _
      $region28: #{tpu_custom_call.1} parent=5 // pred_fallthru
        _
      %p165 = scmp.le.s32.totalorder 1, %s13
      %p166 = scmp.lt.s32.totalorder %s13, 5
      %p167 = pnand %p165, %p166
      %p168 = pneg %p167
      // Predicated region
      $region33: #{tpu_custom_call.1} parent=5 // pred_check
        _
      $region34: #{tpu_custom_call.1} parent=5 // pred_check_branch
        %170 = sbr.rel (%p167) target = $region36
      $region35: #{tpu_custom_call.1} parent=5 // pred_region
        %s171 = ssub.s32 %s13, 1
        %s172 = smul.u32 16, %s18
        %p173 = scmp.lt.s32.totalorder %s172, 63
        %s174 = scalar_select %p173, %s172, 63
        %s175 = smul.addr %s174, 8
        %s176 = scalar_lea.vmem %s0, %s175
        %p177 = pneg %p39
        %p178 = pneg %p36
        %p179 = pneg %p60
        %p180 = pneg %p57
        %p181 = pneg %p81
        %p182 = pneg %p78
        %p183 = pneg %p102
        %p184 = pneg %p99
        %p185 = pneg %p128
        %p186 = pneg %p125
        %s187 = sand.u32 %s115, 1
        %s188 = scalar_lea.sflag [#allocation3], %s187
        %s189 = sand.u32 %s115, 1
        %s190 = smul.addr %s189, 128
        %s191 = scalar_lea.vmem [#allocation2], %s190
        %s192 = smul.u32 16, %s18
        %p193 = scmp.lt.s32.totalorder %s192, 63
        %s194 = scalar_select %p193, %s192, 63
        %s195 = smul.addr %s194, 8
        %s196 = scalar_lea.vmem %s0, %s195
        %s197 = smul.u32 16, %s18
        %s198 = smul.u32 16, %s18
        %v200 = vld [vmem:[%s196] sm:$0xff]
        %v201 = vld [vmem:[%s196 + $0x8] sm:$0xff]
        %v202 = vld [vmem:[%s196 + $0x10] sm:$0xff]
        %v203 = vld [vmem:[%s196 + $0x18] sm:$0xff]
        %v204 = vld [vmem:[%s196 + $0x20] sm:$0xff]
        %v205 = vld [vmem:[%s196 + $0x28] sm:$0xff]
        %v206 = vld [vmem:[%s196 + $0x30] sm:$0xff]
        %v207 = vld [vmem:[%s196 + $0x38] sm:$0xff]
        %v208 = vld [vmem:[%s196 + $0x40] sm:$0xff]
        %v209 = vld [vmem:[%s196 + $0x48] sm:$0xff]
        %v210 = vld [vmem:[%s196 + $0x50] sm:$0xff]
        %v211 = vld [vmem:[%s196 + $0x58] sm:$0xff]
        %v212 = vld [vmem:[%s196 + $0x60] sm:$0xff]
        %v213 = vld [vmem:[%s196 + $0x68] sm:$0xff]
        %v214 = vld [vmem:[%s196 + $0x70] sm:$0xff]
        %v215 = vld [vmem:[%s196 + $0x78] sm:$0xff]
        %v216 = vlaneseq
        %v217 = vand.u32 %v216, 127
        %v218 = vlaneseq
        %v219 = vshrl.u32 %v218, 7
        %v220 = vsub.s32 0, %v219
        %v221 = vrot.slane %v200, %v220
        %223 = vbcast.lane.b32.xlu0 %v221, 256
        %v224 = vpop.permute.xlu0 %223
        %s226 = sor.u32 256, 8
        %227 = vbcast.lane.b32.xlu0 %v221, %s226
        %v228 = vpop.permute.xlu0 %227
        %v229 = vlaneseq
        %v230 = vshrl.u32 %v229, 7
        %v231 = vsub.s32 1, %v230
        %v232 = vrot.slane %v200, %v231
        %234 = vbcast.lane.b32.xlu0 %v232, 256
        %v235 = vpop.permute.xlu0 %234
        %s237 = sor.u32 256, 8
        %238 = vbcast.lane.b32.xlu0 %v232, %s237
        %v239 = vpop.permute.xlu0 %238
        %v240 = vlaneseq
        %v241 = vshrl.u32 %v240, 7
        %v242 = vsub.s32 2, %v241
        %v243 = vrot.slane %v200, %v242
        %245 = vbcast.lane.b32.xlu0 %v243, 256
        %v246 = vpop.permute.xlu0 %245
        %s248 = sor.u32 256, 8
        %249 = vbcast.lane.b32.xlu0 %v243, %s248
        %v250 = vpop.permute.xlu0 %249
        %v251 = vlaneseq
        %v252 = vshrl.u32 %v251, 7
        %v253 = vsub.s32 3, %v252
        %v254 = vrot.slane %v200, %v253
        %256 = vbcast.lane.b32.xlu0 %v254, 256
        %v257 = vpop.permute.xlu0 %256
        %s259 = sor.u32 256, 8
        %260 = vbcast.lane.b32.xlu0 %v254, %s259
        %v261 = vpop.permute.xlu0 %260
        %v262 = vlaneseq
        %v263 = vshrl.u32 %v262, 7
        %v264 = vsub.s32 4, %v263
        %v265 = vrot.slane %v200, %v264
        %267 = vbcast.lane.b32.xlu0 %v265, 256
        %v268 = vpop.permute.xlu0 %267
        %s270 = sor.u32 256, 8
        %271 = vbcast.lane.b32.xlu0 %v265, %s270
        %v272 = vpop.permute.xlu0 %271
        %v273 = vlaneseq
        %v274 = vshrl.u32 %v273, 7
        %v275 = vsub.s32 5, %v274
        %v276 = vrot.slane %v200, %v275
        %278 = vbcast.lane.b32.xlu0 %v276, 256
        %v279 = vpop.permute.xlu0 %278
        %s281 = sor.u32 256, 8
        %282 = vbcast.lane.b32.xlu0 %v276, %s281
        %v283 = vpop.permute.xlu0 %282
        %v284 = vlaneseq
        %v285 = vshrl.u32 %v284, 7
        %v286 = vsub.s32 6, %v285
        %v287 = vrot.slane %v200, %v286
        %289 = vbcast.lane.b32.xlu0 %v287, 256
        %v290 = vpop.permute.xlu0 %289
        %s292 = sor.u32 256, 8
        %293 = vbcast.lane.b32.xlu0 %v287, %s292
        %v294 = vpop.permute.xlu0 %293
        %v295 = vlaneseq
        %v296 = vshrl.u32 %v295, 7
        %v297 = vsub.s32 7, %v296
        %v298 = vrot.slane %v200, %v297
        %300 = vbcast.lane.b32.xlu0 %v298, 256
        %v301 = vpop.permute.xlu0 %300
        %s303 = sor.u32 256, 8
        %304 = vbcast.lane.b32.xlu0 %v298, %s303
        %v305 = vpop.permute.xlu0 %304
        %v306 = vlaneseq
        %v307 = vshrl.u32 %v306, 7
        %v308 = vsub.s32 0, %v307
        %v309 = vrot.slane %v201, %v308
        %311 = vbcast.lane.b32.xlu0 %v309, 256
        %v312 = vpop.permute.xlu0 %311
        %s314 = sor.u32 256, 8
        %315 = vbcast.lane.b32.xlu0 %v309, %s314
        %v316 = vpop.permute.xlu0 %315
        %v317 = vlaneseq
        %v318 = vshrl.u32 %v317, 7
        %v319 = vsub.s32 1, %v318
        %v320 = vrot.slane %v201, %v319
        %322 = vbcast.lane.b32.xlu0 %v320, 256
        %v323 = vpop.permute.xlu0 %322
        %s325 = sor.u32 256, 8
        %326 = vbcast.lane.b32.xlu0 %v320, %s325
        %v327 = vpop.permute.xlu0 %326
        %v328 = vlaneseq
        %v329 = vshrl.u32 %v328, 7
        %v330 = vsub.s32 2, %v329
        %v331 = vrot.slane %v201, %v330
        %333 = vbcast.lane.b32.xlu0 %v331, 256
        %v334 = vpop.permute.xlu0 %333
        %s336 = sor.u32 256, 8
        %337 = vbcast.lane.b32.xlu0 %v331, %s336
        %v338 = vpop.permute.xlu0 %337
        %v339 = vlaneseq
        %v340 = vshrl.u32 %v339, 7
        %v341 = vsub.s32 3, %v340
        %v342 = vrot.slane %v201, %v341
        %344 = vbcast.lane.b32.xlu0 %v342, 256
        %v345 = vpop.permute.xlu0 %344
        %s347 = sor.u32 256, 8
        %348 = vbcast.lane.b32.xlu0 %v342, %s347
        %v349 = vpop.permute.xlu0 %348
        %v350 = vlaneseq
        %v351 = vshrl.u32 %v350, 7
        %v352 = vsub.s32 4, %v351
        %v353 = vrot.slane %v201, %v352
        %355 = vbcast.lane.b32.xlu0 %v353, 256
        %v356 = vpop.permute.xlu0 %355
        %s358 = sor.u32 256, 8
        %359 = vbcast.lane.b32.xlu0 %v353, %s358
        %v360 = vpop.permute.xlu0 %359
        %v361 = vlaneseq
        %v362 = vshrl.u32 %v361, 7
        %v363 = vsub.s32 5, %v362
        %v364 = vrot.slane %v201, %v363
        %366 = vbcast.lane.b32.xlu0 %v364, 256
        %v367 = vpop.permute.xlu0 %366
        %s369 = sor.u32 256, 8
        %370 = vbcast.lane.b32.xlu0 %v364, %s369
        %v371 = vpop.permute.xlu0 %370
        %v372 = vlaneseq
        %v373 = vshrl.u32 %v372, 7
        %v374 = vsub.s32 6, %v373
        %v375 = vrot.slane %v201, %v374
        %377 = vbcast.lane.b32.xlu0 %v375, 256
        %v378 = vpop.permute.xlu0 %377
        %s380 = sor.u32 256, 8
        %381 = vbcast.lane.b32.xlu0 %v375, %s380
        %v382 = vpop.permute.xlu0 %381
        %v383 = vlaneseq
        %v384 = vshrl.u32 %v383, 7
        %v385 = vsub.s32 7, %v384
        %v386 = vrot.slane %v201, %v385
        %388 = vbcast.lane.b32.xlu0 %v386, 256
        %v389 = vpop.permute.xlu0 %388
        %s391 = sor.u32 256, 8
        %392 = vbcast.lane.b32.xlu0 %v386, %s391
        %v393 = vpop.permute.xlu0 %392
        %v394 = vlaneseq
        %v395 = vshrl.u32 %v394, 7
        %v396 = vsub.s32 0, %v395
        %v397 = vrot.slane %v202, %v396
        %399 = vbcast.lane.b32.xlu0 %v397, 256
        %v400 = vpop.permute.xlu0 %399
        %s402 = sor.u32 256, 8
        %403 = vbcast.lane.b32.xlu0 %v397, %s402
        %v404 = vpop.permute.xlu0 %403
        %v405 = vlaneseq
        %v406 = vshrl.u32 %v405, 7
        %v407 = vsub.s32 1, %v406
        %v408 = vrot.slane %v202, %v407
        %410 = vbcast.lane.b32.xlu0 %v408, 256
        %v411 = vpop.permute.xlu0 %410
        %s413 = sor.u32 256, 8
        %414 = vbcast.lane.b32.xlu0 %v408, %s413
        %v415 = vpop.permute.xlu0 %414
        %v416 = vlaneseq
        %v417 = vshrl.u32 %v416, 7
        %v418 = vsub.s32 2, %v417
        %v419 = vrot.slane %v202, %v418
        %421 = vbcast.lane.b32.xlu0 %v419, 256
        %v422 = vpop.permute.xlu0 %421
        %s424 = sor.u32 256, 8
        %425 = vbcast.lane.b32.xlu0 %v419, %s424
        %v426 = vpop.permute.xlu0 %425
        %v427 = vlaneseq
        %v428 = vshrl.u32 %v427, 7
        %v429 = vsub.s32 3, %v428
        %v430 = vrot.slane %v202, %v429
        %432 = vbcast.lane.b32.xlu0 %v430, 256
        %v433 = vpop.permute.xlu0 %432
        %s435 = sor.u32 256, 8
        %436 = vbcast.lane.b32.xlu0 %v430, %s435
        %v437 = vpop.permute.xlu0 %436
        %v438 = vlaneseq
        %v439 = vshrl.u32 %v438, 7
        %v440 = vsub.s32 4, %v439
        %v441 = vrot.slane %v202, %v440
        %443 = vbcast.lane.b32.xlu0 %v441, 256
        %v444 = vpop.permute.xlu0 %443
        %s446 = sor.u32 256, 8
        %447 = vbcast.lane.b32.xlu0 %v441, %s446
        %v448 = vpop.permute.xlu0 %447
        %v449 = vlaneseq
        %v450 = vshrl.u32 %v449, 7
        %v451 = vsub.s32 5, %v450
        %v452 = vrot.slane %v202, %v451
        %454 = vbcast.lane.b32.xlu0 %v452, 256
        %v455 = vpop.permute.xlu0 %454
        %s457 = sor.u32 256, 8
        %458 = vbcast.lane.b32.xlu0 %v452, %s457
        %v459 = vpop.permute.xlu0 %458
        %v460 = vlaneseq
        %v461 = vshrl.u32 %v460, 7
        %v462 = vsub.s32 6, %v461
        %v463 = vrot.slane %v202, %v462
        %465 = vbcast.lane.b32.xlu0 %v463, 256
        %v466 = vpop.permute.xlu0 %465
        %s468 = sor.u32 256, 8
        %469 = vbcast.lane.b32.xlu0 %v463, %s468
        %v470 = vpop.permute.xlu0 %469
        %v471 = vlaneseq
        %v472 = vshrl.u32 %v471, 7
        %v473 = vsub.s32 7, %v472
        %v474 = vrot.slane %v202, %v473
        %476 = vbcast.lane.b32.xlu0 %v474, 256
        %v477 = vpop.permute.xlu0 %476
        %s479 = sor.u32 256, 8
        %480 = vbcast.lane.b32.xlu0 %v474, %s479
        %v481 = vpop.permute.xlu0 %480
        %v482 = vlaneseq
        %v483 = vshrl.u32 %v482, 7
        %v484 = vsub.s32 0, %v483
        %v485 = vrot.slane %v203, %v484
        %487 = vbcast.lane.b32.xlu0 %v485, 256
        %v488 = vpop.permute.xlu0 %487
        %s490 = sor.u32 256, 8
        %491 = vbcast.lane.b32.xlu0 %v485, %s490
        %v492 = vpop.permute.xlu0 %491
        %v493 = vlaneseq
        %v494 = vshrl.u32 %v493, 7
        %v495 = vsub.s32 1, %v494
        %v496 = vrot.slane %v203, %v495
        %498 = vbcast.lane.b32.xlu0 %v496, 256
        %v499 = vpop.permute.xlu0 %498
        %s501 = sor.u32 256, 8
        %502 = vbcast.lane.b32.xlu0 %v496, %s501
        %v503 = vpop.permute.xlu0 %502
        %v504 = vlaneseq
        %v505 = vshrl.u32 %v504, 7
        %v506 = vsub.s32 2, %v505
        %v507 = vrot.slane %v203, %v506
        %509 = vbcast.lane.b32.xlu0 %v507, 256
        %v510 = vpop.permute.xlu0 %509
        %s512 = sor.u32 256, 8
        %513 = vbcast.lane.b32.xlu0 %v507, %s512
        %v514 = vpop.permute.xlu0 %513
        %v515 = vlaneseq
        %v516 = vshrl.u32 %v515, 7
        %v517 = vsub.s32 3, %v516
        %v518 = vrot.slane %v203, %v517
        %520 = vbcast.lane.b32.xlu0 %v518, 256
        %v521 = vpop.permute.xlu0 %520
        %s523 = sor.u32 256, 8
        %524 = vbcast.lane.b32.xlu0 %v518, %s523
        %v525 = vpop.permute.xlu0 %524
        %v526 = vlaneseq
        %v527 = vshrl.u32 %v526, 7
        %v528 = vsub.s32 4, %v527
        %v529 = vrot.slane %v203, %v528
        %531 = vbcast.lane.b32.xlu0 %v529, 256
        %v532 = vpop.permute.xlu0 %531
        %s534 = sor.u32 256, 8
        %535 = vbcast.lane.b32.xlu0 %v529, %s534
        %v536 = vpop.permute.xlu0 %535
        %v537 = vlaneseq
        %v538 = vshrl.u32 %v537, 7
        %v539 = vsub.s32 5, %v538
        %v540 = vrot.slane %v203, %v539
        %542 = vbcast.lane.b32.xlu0 %v540, 256
        %v543 = vpop.permute.xlu0 %542
        %s545 = sor.u32 256, 8
        %546 = vbcast.lane.b32.xlu0 %v540, %s545
        %v547 = vpop.permute.xlu0 %546
        %v548 = vlaneseq
        %v549 = vshrl.u32 %v548, 7
        %v550 = vsub.s32 6, %v549
        %v551 = vrot.slane %v203, %v550
        %553 = vbcast.lane.b32.xlu0 %v551, 256
        %v554 = vpop.permute.xlu0 %553
        %s556 = sor.u32 256, 8
        %557 = vbcast.lane.b32.xlu0 %v551, %s556
        %v558 = vpop.permute.xlu0 %557
        %v559 = vlaneseq
        %v560 = vshrl.u32 %v559, 7
        %v561 = vsub.s32 7, %v560
        %v562 = vrot.slane %v203, %v561
        %564 = vbcast.lane.b32.xlu0 %v562, 256
        %v565 = vpop.permute.xlu0 %564
        %s567 = sor.u32 256, 8
        %568 = vbcast.lane.b32.xlu0 %v562, %s567
        %v569 = vpop.permute.xlu0 %568
        %v570 = vlaneseq
        %v571 = vshrl.u32 %v570, 7
        %v572 = vsub.s32 0, %v571
        %v573 = vrot.slane %v204, %v572
        %575 = vbcast.lane.b32.xlu0 %v573, 256
        %v576 = vpop.permute.xlu0 %575
        %s578 = sor.u32 256, 8
        %579 = vbcast.lane.b32.xlu0 %v573, %s578
        %v580 = vpop.permute.xlu0 %579
        %v581 = vlaneseq
        %v582 = vshrl.u32 %v581, 7
        %v583 = vsub.s32 1, %v582
        %v584 = vrot.slane %v204, %v583
        %586 = vbcast.lane.b32.xlu0 %v584, 256
        %v587 = vpop.permute.xlu0 %586
        %s589 = sor.u32 256, 8
        %590 = vbcast.lane.b32.xlu0 %v584, %s589
        %v591 = vpop.permute.xlu0 %590
        %v592 = vlaneseq
        %v593 = vshrl.u32 %v592, 7
        %v594 = vsub.s32 2, %v593
        %v595 = vrot.slane %v204, %v594
        %597 = vbcast.lane.b32.xlu0 %v595, 256
        %v598 = vpop.permute.xlu0 %597
        %s600 = sor.u32 256, 8
        %601 = vbcast.lane.b32.xlu0 %v595, %s600
        %v602 = vpop.permute.xlu0 %601
        %v603 = vlaneseq
        %v604 = vshrl.u32 %v603, 7
        %v605 = vsub.s32 3, %v604
        %v606 = vrot.slane %v204, %v605
        %608 = vbcast.lane.b32.xlu0 %v606, 256
        %v609 = vpop.permute.xlu0 %608
        %s611 = sor.u32 256, 8
        %612 = vbcast.lane.b32.xlu0 %v606, %s611
        %v613 = vpop.permute.xlu0 %612
        %v614 = vlaneseq
        %v615 = vshrl.u32 %v614, 7
        %v616 = vsub.s32 4, %v615
        %v617 = vrot.slane %v204, %v616
        %619 = vbcast.lane.b32.xlu0 %v617, 256
        %v620 = vpop.permute.xlu0 %619
        %s622 = sor.u32 256, 8
        %623 = vbcast.lane.b32.xlu0 %v617, %s622
        %v624 = vpop.permute.xlu0 %623
        %v625 = vlaneseq
        %v626 = vshrl.u32 %v625, 7
        %v627 = vsub.s32 5, %v626
        %v628 = vrot.slane %v204, %v627
        %630 = vbcast.lane.b32.xlu0 %v628, 256
        %v631 = vpop.permute.xlu0 %630
        %s633 = sor.u32 256, 8
        %634 = vbcast.lane.b32.xlu0 %v628, %s633
        %v635 = vpop.permute.xlu0 %634
        %v636 = vlaneseq
        %v637 = vshrl.u32 %v636, 7
        %v638 = vsub.s32 6, %v637
        %v639 = vrot.slane %v204, %v638
        %641 = vbcast.lane.b32.xlu0 %v639, 256
        %v642 = vpop.permute.xlu0 %641
        %s644 = sor.u32 256, 8
        %645 = vbcast.lane.b32.xlu0 %v639, %s644
        %v646 = vpop.permute.xlu0 %645
        %v647 = vlaneseq
        %v648 = vshrl.u32 %v647, 7
        %v649 = vsub.s32 7, %v648
        %v650 = vrot.slane %v204, %v649
        %652 = vbcast.lane.b32.xlu0 %v650, 256
        %v653 = vpop.permute.xlu0 %652
        %s655 = sor.u32 256, 8
        %656 = vbcast.lane.b32.xlu0 %v650, %s655
        %v657 = vpop.permute.xlu0 %656
        %v658 = vlaneseq
        %v659 = vshrl.u32 %v658, 7
        %v660 = vsub.s32 0, %v659
        %v661 = vrot.slane %v205, %v660
        %663 = vbcast.lane.b32.xlu0 %v661, 256
        %v664 = vpop.permute.xlu0 %663
        %s666 = sor.u32 256, 8
        %667 = vbcast.lane.b32.xlu0 %v661, %s666
        %v668 = vpop.permute.xlu0 %667
        %v669 = vlaneseq
        %v670 = vshrl.u32 %v669, 7
        %v671 = vsub.s32 1, %v670
        %v672 = vrot.slane %v205, %v671
        %674 = vbcast.lane.b32.xlu0 %v672, 256
        %v675 = vpop.permute.xlu0 %674
        %s677 = sor.u32 256, 8
        %678 = vbcast.lane.b32.xlu0 %v672, %s677
        %v679 = vpop.permute.xlu0 %678
        %v680 = vlaneseq
        %v681 = vshrl.u32 %v680, 7
        %v682 = vsub.s32 2, %v681
        %v683 = vrot.slane %v205, %v682
        %685 = vbcast.lane.b32.xlu0 %v683, 256
        %v686 = vpop.permute.xlu0 %685
        %s688 = sor.u32 256, 8
        %689 = vbcast.lane.b32.xlu0 %v683, %s688
        %v690 = vpop.permute.xlu0 %689
        %v691 = vlaneseq
        %v692 = vshrl.u32 %v691, 7
        %v693 = vsub.s32 3, %v692
        %v694 = vrot.slane %v205, %v693
        %696 = vbcast.lane.b32.xlu0 %v694, 256
        %v697 = vpop.permute.xlu0 %696
        %s699 = sor.u32 256, 8
        %700 = vbcast.lane.b32.xlu0 %v694, %s699
        %v701 = vpop.permute.xlu0 %700
        %v702 = vlaneseq
        %v703 = vshrl.u32 %v702, 7
        %v704 = vsub.s32 4, %v703
        %v705 = vrot.slane %v205, %v704
        %707 = vbcast.lane.b32.xlu0 %v705, 256
        %v708 = vpop.permute.xlu0 %707
        %s710 = sor.u32 256, 8
        %711 = vbcast.lane.b32.xlu0 %v705, %s710
        %v712 = vpop.permute.xlu0 %711
        %v713 = vlaneseq
        %v714 = vshrl.u32 %v713, 7
        %v715 = vsub.s32 5, %v714
        %v716 = vrot.slane %v205, %v715
        %718 = vbcast.lane.b32.xlu0 %v716, 256
        %v719 = vpop.permute.xlu0 %718
        %s721 = sor.u32 256, 8
        %722 = vbcast.lane.b32.xlu0 %v716, %s721
        %v723 = vpop.permute.xlu0 %722
        %v724 = vlaneseq
        %v725 = vshrl.u32 %v724, 7
        %v726 = vsub.s32 6, %v725
        %v727 = vrot.slane %v205, %v726
        %729 = vbcast.lane.b32.xlu0 %v727, 256
        %v730 = vpop.permute.xlu0 %729
        %s732 = sor.u32 256, 8
        %733 = vbcast.lane.b32.xlu0 %v727, %s732
        %v734 = vpop.permute.xlu0 %733
        %v735 = vlaneseq
        %v736 = vshrl.u32 %v735, 7
        %v737 = vsub.s32 7, %v736
        %v738 = vrot.slane %v205, %v737
        %740 = vbcast.lane.b32.xlu0 %v738, 256
        %v741 = vpop.permute.xlu0 %740
        %s743 = sor.u32 256, 8
        %744 = vbcast.lane.b32.xlu0 %v738, %s743
        %v745 = vpop.permute.xlu0 %744
        %v746 = vlaneseq
        %v747 = vshrl.u32 %v746, 7
        %v748 = vsub.s32 0, %v747
        %v749 = vrot.slane %v206, %v748
        %751 = vbcast.lane.b32.xlu0 %v749, 256
        %v752 = vpop.permute.xlu0 %751
        %s754 = sor.u32 256, 8
        %755 = vbcast.lane.b32.xlu0 %v749, %s754
        %v756 = vpop.permute.xlu0 %755
        %v757 = vlaneseq
        %v758 = vshrl.u32 %v757, 7
        %v759 = vsub.s32 1, %v758
        %v760 = vrot.slane %v206, %v759
        %762 = vbcast.lane.b32.xlu0 %v760, 256
        %v763 = vpop.permute.xlu0 %762
        %s765 = sor.u32 256, 8
        %766 = vbcast.lane.b32.xlu0 %v760, %s765
        %v767 = vpop.permute.xlu0 %766
        %v768 = vlaneseq
        %v769 = vshrl.u32 %v768, 7
        %v770 = vsub.s32 2, %v769
        %v771 = vrot.slane %v206, %v770
        %773 = vbcast.lane.b32.xlu0 %v771, 256
        %v774 = vpop.permute.xlu0 %773
        %s776 = sor.u32 256, 8
        %777 = vbcast.lane.b32.xlu0 %v771, %s776
        %v778 = vpop.permute.xlu0 %777
        %v779 = vlaneseq
        %v780 = vshrl.u32 %v779, 7
        %v781 = vsub.s32 3, %v780
        %v782 = vrot.slane %v206, %v781
        %784 = vbcast.lane.b32.xlu0 %v782, 256
        %v785 = vpop.permute.xlu0 %784
        %s787 = sor.u32 256, 8
        %788 = vbcast.lane.b32.xlu0 %v782, %s787
        %v789 = vpop.permute.xlu0 %788
        %v790 = vlaneseq
        %v791 = vshrl.u32 %v790, 7
        %v792 = vsub.s32 4, %v791
        %v793 = vrot.slane %v206, %v792
        %795 = vbcast.lane.b32.xlu0 %v793, 256
        %v796 = vpop.permute.xlu0 %795
        %s798 = sor.u32 256, 8
        %799 = vbcast.lane.b32.xlu0 %v793, %s798
        %v800 = vpop.permute.xlu0 %799
        %v801 = vlaneseq
        %v802 = vshrl.u32 %v801, 7
        %v803 = vsub.s32 5, %v802
        %v804 = vrot.slane %v206, %v803
        %806 = vbcast.lane.b32.xlu0 %v804, 256
        %v807 = vpop.permute.xlu0 %806
        %s809 = sor.u32 256, 8
        %810 = vbcast.lane.b32.xlu0 %v804, %s809
        %v811 = vpop.permute.xlu0 %810
        %v812 = vlaneseq
        %v813 = vshrl.u32 %v812, 7
        %v814 = vsub.s32 6, %v813
        %v815 = vrot.slane %v206, %v814
        %817 = vbcast.lane.b32.xlu0 %v815, 256
        %v818 = vpop.permute.xlu0 %817
        %s820 = sor.u32 256, 8
        %821 = vbcast.lane.b32.xlu0 %v815, %s820
        %v822 = vpop.permute.xlu0 %821
        %v823 = vlaneseq
        %v824 = vshrl.u32 %v823, 7
        %v825 = vsub.s32 7, %v824
        %v826 = vrot.slane %v206, %v825
        %828 = vbcast.lane.b32.xlu0 %v826, 256
        %v829 = vpop.permute.xlu0 %828
        %s831 = sor.u32 256, 8
        %832 = vbcast.lane.b32.xlu0 %v826, %s831
        %v833 = vpop.permute.xlu0 %832
        %v834 = vlaneseq
        %v835 = vshrl.u32 %v834, 7
        %v836 = vsub.s32 0, %v835
        %v837 = vrot.slane %v207, %v836
        %839 = vbcast.lane.b32.xlu0 %v837, 256
        %v840 = vpop.permute.xlu0 %839
        %s842 = sor.u32 256, 8
        %843 = vbcast.lane.b32.xlu0 %v837, %s842
        %v844 = vpop.permute.xlu0 %843
        %v845 = vlaneseq
        %v846 = vshrl.u32 %v845, 7
        %v847 = vsub.s32 1, %v846
        %v848 = vrot.slane %v207, %v847
        %850 = vbcast.lane.b32.xlu0 %v848, 256
        %v851 = vpop.permute.xlu0 %850
        %s853 = sor.u32 256, 8
        %854 = vbcast.lane.b32.xlu0 %v848, %s853
        %v855 = vpop.permute.xlu0 %854
        %v856 = vlaneseq
        %v857 = vshrl.u32 %v856, 7
        %v858 = vsub.s32 2, %v857
        %v859 = vrot.slane %v207, %v858
        %861 = vbcast.lane.b32.xlu0 %v859, 256
        %v862 = vpop.permute.xlu0 %861
        %s864 = sor.u32 256, 8
        %865 = vbcast.lane.b32.xlu0 %v859, %s864
        %v866 = vpop.permute.xlu0 %865
        %v867 = vlaneseq
        %v868 = vshrl.u32 %v867, 7
        %v869 = vsub.s32 3, %v868
        %v870 = vrot.slane %v207, %v869
        %872 = vbcast.lane.b32.xlu0 %v870, 256
        %v873 = vpop.permute.xlu0 %872
        %s875 = sor.u32 256, 8
        %876 = vbcast.lane.b32.xlu0 %v870, %s875
        %v877 = vpop.permute.xlu0 %876
        %v878 = vlaneseq
        %v879 = vshrl.u32 %v878, 7
        %v880 = vsub.s32 4, %v879
        %v881 = vrot.slane %v207, %v880
        %883 = vbcast.lane.b32.xlu0 %v881, 256
        %v884 = vpop.permute.xlu0 %883
        %s886 = sor.u32 256, 8
        %887 = vbcast.lane.b32.xlu0 %v881, %s886
        %v888 = vpop.permute.xlu0 %887
        %v889 = vlaneseq
        %v890 = vshrl.u32 %v889, 7
        %v891 = vsub.s32 5, %v890
        %v892 = vrot.slane %v207, %v891
        %894 = vbcast.lane.b32.xlu0 %v892, 256
        %v895 = vpop.permute.xlu0 %894
        %s897 = sor.u32 256, 8
        %898 = vbcast.lane.b32.xlu0 %v892, %s897
        %v899 = vpop.permute.xlu0 %898
        %v900 = vlaneseq
        %v901 = vshrl.u32 %v900, 7
        %v902 = vsub.s32 6, %v901
        %v903 = vrot.slane %v207, %v902
        %905 = vbcast.lane.b32.xlu0 %v903, 256
        %v906 = vpop.permute.xlu0 %905
        %s908 = sor.u32 256, 8
        %909 = vbcast.lane.b32.xlu0 %v903, %s908
        %v910 = vpop.permute.xlu0 %909
        %v911 = vlaneseq
        %v912 = vshrl.u32 %v911, 7
        %v913 = vsub.s32 7, %v912
        %v914 = vrot.slane %v207, %v913
        %916 = vbcast.lane.b32.xlu0 %v914, 256
        %v917 = vpop.permute.xlu0 %916
        %s919 = sor.u32 256, 8
        %920 = vbcast.lane.b32.xlu0 %v914, %s919
        %v921 = vpop.permute.xlu0 %920
        %v922 = vlaneseq
        %v923 = vshrl.u32 %v922, 7
        %v924 = vsub.s32 0, %v923
        %v925 = vrot.slane %v208, %v924
        %927 = vbcast.lane.b32.xlu0 %v925, 256
        %v928 = vpop.permute.xlu0 %927
        %s930 = sor.u32 256, 8
        %931 = vbcast.lane.b32.xlu0 %v925, %s930
        %v932 = vpop.permute.xlu0 %931
        %v933 = vlaneseq
        %v934 = vshrl.u32 %v933, 7
        %v935 = vsub.s32 1, %v934
        %v936 = vrot.slane %v208, %v935
        %938 = vbcast.lane.b32.xlu0 %v936, 256
        %v939 = vpop.permute.xlu0 %938
        %s941 = sor.u32 256, 8
        %942 = vbcast.lane.b32.xlu0 %v936, %s941
        %v943 = vpop.permute.xlu0 %942
        %v944 = vlaneseq
        %v945 = vshrl.u32 %v944, 7
        %v946 = vsub.s32 2, %v945
        %v947 = vrot.slane %v208, %v946
        %949 = vbcast.lane.b32.xlu0 %v947, 256
        %v950 = vpop.permute.xlu0 %949
        %s952 = sor.u32 256, 8
        %953 = vbcast.lane.b32.xlu0 %v947, %s952
        %v954 = vpop.permute.xlu0 %953
        %v955 = vlaneseq
        %v956 = vshrl.u32 %v955, 7
        %v957 = vsub.s32 3, %v956
        %v958 = vrot.slane %v208, %v957
        %960 = vbcast.lane.b32.xlu0 %v958, 256
        %v961 = vpop.permute.xlu0 %960
        %s963 = sor.u32 256, 8
        %964 = vbcast.lane.b32.xlu0 %v958, %s963
        %v965 = vpop.permute.xlu0 %964
        %v966 = vlaneseq
        %v967 = vshrl.u32 %v966, 7
        %v968 = vsub.s32 4, %v967
        %v969 = vrot.slane %v208, %v968
        %971 = vbcast.lane.b32.xlu0 %v969, 256
        %v972 = vpop.permute.xlu0 %971
        %s974 = sor.u32 256, 8
        %975 = vbcast.lane.b32.xlu0 %v969, %s974
        %v976 = vpop.permute.xlu0 %975
        %v977 = vlaneseq
        %v978 = vshrl.u32 %v977, 7
        %v979 = vsub.s32 5, %v978
        %v980 = vrot.slane %v208, %v979
        %982 = vbcast.lane.b32.xlu0 %v980, 256
        %v983 = vpop.permute.xlu0 %982
        %s985 = sor.u32 256, 8
        %986 = vbcast.lane.b32.xlu0 %v980, %s985
        %v987 = vpop.permute.xlu0 %986
        %v988 = vlaneseq
        %v989 = vshrl.u32 %v988, 7
        %v990 = vsub.s32 6, %v989
        %v991 = vrot.slane %v208, %v990
        %993 = vbcast.lane.b32.xlu0 %v991, 256
        %v994 = vpop.permute.xlu0 %993
        %s996 = sor.u32 256, 8
        %997 = vbcast.lane.b32.xlu0 %v991, %s996
        %v998 = vpop.permute.xlu0 %997
        %v999 = vlaneseq
        %v1000 = vshrl.u32 %v999, 7
        %v1001 = vsub.s32 7, %v1000
        %v1002 = vrot.slane %v208, %v1001
        %1004 = vbcast.lane.b32.xlu0 %v1002, 256
        %v1005 = vpop.permute.xlu0 %1004
        %s1007 = sor.u32 256, 8
        %1008 = vbcast.lane.b32.xlu0 %v1002, %s1007
        %v1009 = vpop.permute.xlu0 %1008
        %v1010 = vlaneseq
        %v1011 = vshrl.u32 %v1010, 7
        %v1012 = vsub.s32 0, %v1011
        %v1013 = vrot.slane %v209, %v1012
        %1015 = vbcast.lane.b32.xlu0 %v1013, 256
        %v1016 = vpop.permute.xlu0 %1015
        %s1018 = sor.u32 256, 8
        %1019 = vbcast.lane.b32.xlu0 %v1013, %s1018
        %v1020 = vpop.permute.xlu0 %1019
        %v1021 = vlaneseq
        %v1022 = vshrl.u32 %v1021, 7
        %v1023 = vsub.s32 1, %v1022
        %v1024 = vrot.slane %v209, %v1023
        %1026 = vbcast.lane.b32.xlu0 %v1024, 256
        %v1027 = vpop.permute.xlu0 %1026
        %s1029 = sor.u32 256, 8
        %1030 = vbcast.lane.b32.xlu0 %v1024, %s1029
        %v1031 = vpop.permute.xlu0 %1030
        %v1032 = vlaneseq
        %v1033 = vshrl.u32 %v1032, 7
        %v1034 = vsub.s32 2, %v1033
        %v1035 = vrot.slane %v209, %v1034
        %1037 = vbcast.lane.b32.xlu0 %v1035, 256
        %v1038 = vpop.permute.xlu0 %1037
        %s1040 = sor.u32 256, 8
        %1041 = vbcast.lane.b32.xlu0 %v1035, %s1040
        %v1042 = vpop.permute.xlu0 %1041
        %v1043 = vlaneseq
        %v1044 = vshrl.u32 %v1043, 7
        %v1045 = vsub.s32 3, %v1044
        %v1046 = vrot.slane %v209, %v1045
        %1048 = vbcast.lane.b32.xlu0 %v1046, 256
        %v1049 = vpop.permute.xlu0 %1048
        %s1051 = sor.u32 256, 8
        %1052 = vbcast.lane.b32.xlu0 %v1046, %s1051
        %v1053 = vpop.permute.xlu0 %1052
        %v1054 = vlaneseq
        %v1055 = vshrl.u32 %v1054, 7
        %v1056 = vsub.s32 4, %v1055
        %v1057 = vrot.slane %v209, %v1056
        %1059 = vbcast.lane.b32.xlu0 %v1057, 256
        %v1060 = vpop.permute.xlu0 %1059
        %s1062 = sor.u32 256, 8
        %1063 = vbcast.lane.b32.xlu0 %v1057, %s1062
        %v1064 = vpop.permute.xlu0 %1063
        %v1065 = vlaneseq
        %v1066 = vshrl.u32 %v1065, 7
        %v1067 = vsub.s32 5, %v1066
        %v1068 = vrot.slane %v209, %v1067
        %1070 = vbcast.lane.b32.xlu0 %v1068, 256
        %v1071 = vpop.permute.xlu0 %1070
        %s1073 = sor.u32 256, 8
        %1074 = vbcast.lane.b32.xlu0 %v1068, %s1073
        %v1075 = vpop.permute.xlu0 %1074
        %v1076 = vlaneseq
        %v1077 = vshrl.u32 %v1076, 7
        %v1078 = vsub.s32 6, %v1077
        %v1079 = vrot.slane %v209, %v1078
        %1081 = vbcast.lane.b32.xlu0 %v1079, 256
        %v1082 = vpop.permute.xlu0 %1081
        %s1084 = sor.u32 256, 8
        %1085 = vbcast.lane.b32.xlu0 %v1079, %s1084
        %v1086 = vpop.permute.xlu0 %1085
        %v1087 = vlaneseq
        %v1088 = vshrl.u32 %v1087, 7
        %v1089 = vsub.s32 7, %v1088
        %v1090 = vrot.slane %v209, %v1089
        %1092 = vbcast.lane.b32.xlu0 %v1090, 256
        %v1093 = vpop.permute.xlu0 %1092
        %s1095 = sor.u32 256, 8
        %1096 = vbcast.lane.b32.xlu0 %v1090, %s1095
        %v1097 = vpop.permute.xlu0 %1096
        %v1098 = vlaneseq
        %v1099 = vshrl.u32 %v1098, 7
        %v1100 = vsub.s32 0, %v1099
        %v1101 = vrot.slane %v210, %v1100
        %1103 = vbcast.lane.b32.xlu0 %v1101, 256
        %v1104 = vpop.permute.xlu0 %1103
        %s1106 = sor.u32 256, 8
        %1107 = vbcast.lane.b32.xlu0 %v1101, %s1106
        %v1108 = vpop.permute.xlu0 %1107
        %v1109 = vlaneseq
        %v1110 = vshrl.u32 %v1109, 7
        %v1111 = vsub.s32 1, %v1110
        %v1112 = vrot.slane %v210, %v1111
        %1114 = vbcast.lane.b32.xlu0 %v1112, 256
        %v1115 = vpop.permute.xlu0 %1114
        %s1117 = sor.u32 256, 8
        %1118 = vbcast.lane.b32.xlu0 %v1112, %s1117
        %v1119 = vpop.permute.xlu0 %1118
        %v1120 = vlaneseq
        %v1121 = vshrl.u32 %v1120, 7
        %v1122 = vsub.s32 2, %v1121
        %v1123 = vrot.slane %v210, %v1122
        %1125 = vbcast.lane.b32.xlu0 %v1123, 256
        %v1126 = vpop.permute.xlu0 %1125
        %s1128 = sor.u32 256, 8
        %1129 = vbcast.lane.b32.xlu0 %v1123, %s1128
        %v1130 = vpop.permute.xlu0 %1129
        %v1131 = vlaneseq
        %v1132 = vshrl.u32 %v1131, 7
        %v1133 = vsub.s32 3, %v1132
        %v1134 = vrot.slane %v210, %v1133
        %1136 = vbcast.lane.b32.xlu0 %v1134, 256
        %v1137 = vpop.permute.xlu0 %1136
        %s1139 = sor.u32 256, 8
        %1140 = vbcast.lane.b32.xlu0 %v1134, %s1139
        %v1141 = vpop.permute.xlu0 %1140
        %v1142 = vlaneseq
        %v1143 = vshrl.u32 %v1142, 7
        %v1144 = vsub.s32 4, %v1143
        %v1145 = vrot.slane %v210, %v1144
        %1147 = vbcast.lane.b32.xlu0 %v1145, 256
        %v1148 = vpop.permute.xlu0 %1147
        %s1150 = sor.u32 256, 8
        %1151 = vbcast.lane.b32.xlu0 %v1145, %s1150
        %v1152 = vpop.permute.xlu0 %1151
        %v1153 = vlaneseq
        %v1154 = vshrl.u32 %v1153, 7
        %v1155 = vsub.s32 5, %v1154
        %v1156 = vrot.slane %v210, %v1155
        %1158 = vbcast.lane.b32.xlu0 %v1156, 256
        %v1159 = vpop.permute.xlu0 %1158
        %s1161 = sor.u32 256, 8
        %1162 = vbcast.lane.b32.xlu0 %v1156, %s1161
        %v1163 = vpop.permute.xlu0 %1162
        %v1164 = vlaneseq
        %v1165 = vshrl.u32 %v1164, 7
        %v1166 = vsub.s32 6, %v1165
        %v1167 = vrot.slane %v210, %v1166
        %1169 = vbcast.lane.b32.xlu0 %v1167, 256
        %v1170 = vpop.permute.xlu0 %1169
        %s1172 = sor.u32 256, 8
        %1173 = vbcast.lane.b32.xlu0 %v1167, %s1172
        %v1174 = vpop.permute.xlu0 %1173
        %v1175 = vlaneseq
        %v1176 = vshrl.u32 %v1175, 7
        %v1177 = vsub.s32 7, %v1176
        %v1178 = vrot.slane %v210, %v1177
        %1180 = vbcast.lane.b32.xlu0 %v1178, 256
        %v1181 = vpop.permute.xlu0 %1180
        %s1183 = sor.u32 256, 8
        %1184 = vbcast.lane.b32.xlu0 %v1178, %s1183
        %v1185 = vpop.permute.xlu0 %1184
        %v1186 = vlaneseq
        %v1187 = vshrl.u32 %v1186, 7
        %v1188 = vsub.s32 0, %v1187
        %v1189 = vrot.slane %v211, %v1188
        %1191 = vbcast.lane.b32.xlu0 %v1189, 256
        %v1192 = vpop.permute.xlu0 %1191
        %s1194 = sor.u32 256, 8
        %1195 = vbcast.lane.b32.xlu0 %v1189, %s1194
        %v1196 = vpop.permute.xlu0 %1195
        %v1197 = vlaneseq
        %v1198 = vshrl.u32 %v1197, 7
        %v1199 = vsub.s32 1, %v1198
        %v1200 = vrot.slane %v211, %v1199
        %1202 = vbcast.lane.b32.xlu0 %v1200, 256
        %v1203 = vpop.permute.xlu0 %1202
        %s1205 = sor.u32 256, 8
        %1206 = vbcast.lane.b32.xlu0 %v1200, %s1205
        %v1207 = vpop.permute.xlu0 %1206
        %v1208 = vlaneseq
        %v1209 = vshrl.u32 %v1208, 7
        %v1210 = vsub.s32 2, %v1209
        %v1211 = vrot.slane %v211, %v1210
        %1213 = vbcast.lane.b32.xlu0 %v1211, 256
        %v1214 = vpop.permute.xlu0 %1213
        %s1216 = sor.u32 256, 8
        %1217 = vbcast.lane.b32.xlu0 %v1211, %s1216
        %v1218 = vpop.permute.xlu0 %1217
        %v1219 = vlaneseq
        %v1220 = vshrl.u32 %v1219, 7
        %v1221 = vsub.s32 3, %v1220
        %v1222 = vrot.slane %v211, %v1221
        %1224 = vbcast.lane.b32.xlu0 %v1222, 256
        %v1225 = vpop.permute.xlu0 %1224
        %s1227 = sor.u32 256, 8
        %1228 = vbcast.lane.b32.xlu0 %v1222, %s1227
        %v1229 = vpop.permute.xlu0 %1228
        %v1230 = vlaneseq
        %v1231 = vshrl.u32 %v1230, 7
        %v1232 = vsub.s32 4, %v1231
        %v1233 = vrot.slane %v211, %v1232
        %1235 = vbcast.lane.b32.xlu0 %v1233, 256
        %v1236 = vpop.permute.xlu0 %1235
        %s1238 = sor.u32 256, 8
        %1239 = vbcast.lane.b32.xlu0 %v1233, %s1238
        %v1240 = vpop.permute.xlu0 %1239
        %v1241 = vlaneseq
        %v1242 = vshrl.u32 %v1241, 7
        %v1243 = vsub.s32 5, %v1242
        %v1244 = vrot.slane %v211, %v1243
        %1246 = vbcast.lane.b32.xlu0 %v1244, 256
        %v1247 = vpop.permute.xlu0 %1246
        %s1249 = sor.u32 256, 8
        %1250 = vbcast.lane.b32.xlu0 %v1244, %s1249
        %v1251 = vpop.permute.xlu0 %1250
        %v1252 = vlaneseq
        %v1253 = vshrl.u32 %v1252, 7
        %v1254 = vsub.s32 6, %v1253
        %v1255 = vrot.slane %v211, %v1254
        %1257 = vbcast.lane.b32.xlu0 %v1255, 256
        %v1258 = vpop.permute.xlu0 %1257
        %s1260 = sor.u32 256, 8
        %1261 = vbcast.lane.b32.xlu0 %v1255, %s1260
        %v1262 = vpop.permute.xlu0 %1261
        %v1263 = vlaneseq
        %v1264 = vshrl.u32 %v1263, 7
        %v1265 = vsub.s32 7, %v1264
        %v1266 = vrot.slane %v211, %v1265
        %1268 = vbcast.lane.b32.xlu0 %v1266, 256
        %v1269 = vpop.permute.xlu0 %1268
        %s1271 = sor.u32 256, 8
        %1272 = vbcast.lane.b32.xlu0 %v1266, %s1271
        %v1273 = vpop.permute.xlu0 %1272
        %v1274 = vlaneseq
        %v1275 = vshrl.u32 %v1274, 7
        %v1276 = vsub.s32 0, %v1275
        %v1277 = vrot.slane %v212, %v1276
        %1279 = vbcast.lane.b32.xlu0 %v1277, 256
        %v1280 = vpop.permute.xlu0 %1279
        %s1282 = sor.u32 256, 8
        %1283 = vbcast.lane.b32.xlu0 %v1277, %s1282
        %v1284 = vpop.permute.xlu0 %1283
        %v1285 = vlaneseq
        %v1286 = vshrl.u32 %v1285, 7
        %v1287 = vsub.s32 1, %v1286
        %v1288 = vrot.slane %v212, %v1287
        %1290 = vbcast.lane.b32.xlu0 %v1288, 256
        %v1291 = vpop.permute.xlu0 %1290
        %s1293 = sor.u32 256, 8
        %1294 = vbcast.lane.b32.xlu0 %v1288, %s1293
        %v1295 = vpop.permute.xlu0 %1294
        %v1296 = vlaneseq
        %v1297 = vshrl.u32 %v1296, 7
        %v1298 = vsub.s32 2, %v1297
        %v1299 = vrot.slane %v212, %v1298
        %1301 = vbcast.lane.b32.xlu0 %v1299, 256
        %v1302 = vpop.permute.xlu0 %1301
        %s1304 = sor.u32 256, 8
        %1305 = vbcast.lane.b32.xlu0 %v1299, %s1304
        %v1306 = vpop.permute.xlu0 %1305
        %v1307 = vlaneseq
        %v1308 = vshrl.u32 %v1307, 7
        %v1309 = vsub.s32 3, %v1308
        %v1310 = vrot.slane %v212, %v1309
        %1312 = vbcast.lane.b32.xlu0 %v1310, 256
        %v1313 = vpop.permute.xlu0 %1312
        %s1315 = sor.u32 256, 8
        %1316 = vbcast.lane.b32.xlu0 %v1310, %s1315
        %v1317 = vpop.permute.xlu0 %1316
        %v1318 = vlaneseq
        %v1319 = vshrl.u32 %v1318, 7
        %v1320 = vsub.s32 4, %v1319
        %v1321 = vrot.slane %v212, %v1320
        %1323 = vbcast.lane.b32.xlu0 %v1321, 256
        %v1324 = vpop.permute.xlu0 %1323
        %s1326 = sor.u32 256, 8
        %1327 = vbcast.lane.b32.xlu0 %v1321, %s1326
        %v1328 = vpop.permute.xlu0 %1327
        %v1329 = vlaneseq
        %v1330 = vshrl.u32 %v1329, 7
        %v1331 = vsub.s32 5, %v1330
        %v1332 = vrot.slane %v212, %v1331
        %1334 = vbcast.lane.b32.xlu0 %v1332, 256
        %v1335 = vpop.permute.xlu0 %1334
        %s1337 = sor.u32 256, 8
        %1338 = vbcast.lane.b32.xlu0 %v1332, %s1337
        %v1339 = vpop.permute.xlu0 %1338
        %v1340 = vlaneseq
        %v1341 = vshrl.u32 %v1340, 7
        %v1342 = vsub.s32 6, %v1341
        %v1343 = vrot.slane %v212, %v1342
        %1345 = vbcast.lane.b32.xlu0 %v1343, 256
        %v1346 = vpop.permute.xlu0 %1345
        %s1348 = sor.u32 256, 8
        %1349 = vbcast.lane.b32.xlu0 %v1343, %s1348
        %v1350 = vpop.permute.xlu0 %1349
        %v1351 = vlaneseq
        %v1352 = vshrl.u32 %v1351, 7
        %v1353 = vsub.s32 7, %v1352
        %v1354 = vrot.slane %v212, %v1353
        %1356 = vbcast.lane.b32.xlu0 %v1354, 256
        %v1357 = vpop.permute.xlu0 %1356
        %s1359 = sor.u32 256, 8
        %1360 = vbcast.lane.b32.xlu0 %v1354, %s1359
        %v1361 = vpop.permute.xlu0 %1360
        %v1362 = vlaneseq
        %v1363 = vshrl.u32 %v1362, 7
        %v1364 = vsub.s32 0, %v1363
        %v1365 = vrot.slane %v213, %v1364
        %1367 = vbcast.lane.b32.xlu0 %v1365, 256
        %v1368 = vpop.permute.xlu0 %1367
        %s1370 = sor.u32 256, 8
        %1371 = vbcast.lane.b32.xlu0 %v1365, %s1370
        %v1372 = vpop.permute.xlu0 %1371
        %v1373 = vlaneseq
        %v1374 = vshrl.u32 %v1373, 7
        %v1375 = vsub.s32 1, %v1374
        %v1376 = vrot.slane %v213, %v1375
        %1378 = vbcast.lane.b32.xlu0 %v1376, 256
        %v1379 = vpop.permute.xlu0 %1378
        %s1381 = sor.u32 256, 8
        %1382 = vbcast.lane.b32.xlu0 %v1376, %s1381
        %v1383 = vpop.permute.xlu0 %1382
        %v1384 = vlaneseq
        %v1385 = vshrl.u32 %v1384, 7
        %v1386 = vsub.s32 2, %v1385
        %v1387 = vrot.slane %v213, %v1386
        %1389 = vbcast.lane.b32.xlu0 %v1387, 256
        %v1390 = vpop.permute.xlu0 %1389
        %s1392 = sor.u32 256, 8
        %1393 = vbcast.lane.b32.xlu0 %v1387, %s1392
        %v1394 = vpop.permute.xlu0 %1393
        %v1395 = vlaneseq
        %v1396 = vshrl.u32 %v1395, 7
        %v1397 = vsub.s32 3, %v1396
        %v1398 = vrot.slane %v213, %v1397
        %1400 = vbcast.lane.b32.xlu0 %v1398, 256
        %v1401 = vpop.permute.xlu0 %1400
        %s1403 = sor.u32 256, 8
        %1404 = vbcast.lane.b32.xlu0 %v1398, %s1403
        %v1405 = vpop.permute.xlu0 %1404
        %v1406 = vlaneseq
        %v1407 = vshrl.u32 %v1406, 7
        %v1408 = vsub.s32 4, %v1407
        %v1409 = vrot.slane %v213, %v1408
        %1411 = vbcast.lane.b32.xlu0 %v1409, 256
        %v1412 = vpop.permute.xlu0 %1411
        %s1414 = sor.u32 256, 8
        %1415 = vbcast.lane.b32.xlu0 %v1409, %s1414
        %v1416 = vpop.permute.xlu0 %1415
        %v1417 = vlaneseq
        %v1418 = vshrl.u32 %v1417, 7
        %v1419 = vsub.s32 5, %v1418
        %v1420 = vrot.slane %v213, %v1419
        %1422 = vbcast.lane.b32.xlu0 %v1420, 256
        %v1423 = vpop.permute.xlu0 %1422
        %s1425 = sor.u32 256, 8
        %1426 = vbcast.lane.b32.xlu0 %v1420, %s1425
        %v1427 = vpop.permute.xlu0 %1426
        %v1428 = vlaneseq
        %v1429 = vshrl.u32 %v1428, 7
        %v1430 = vsub.s32 6, %v1429
        %v1431 = vrot.slane %v213, %v1430
        %1433 = vbcast.lane.b32.xlu0 %v1431, 256
        %v1434 = vpop.permute.xlu0 %1433
        %s1436 = sor.u32 256, 8
        %1437 = vbcast.lane.b32.xlu0 %v1431, %s1436
        %v1438 = vpop.permute.xlu0 %1437
        %v1439 = vlaneseq
        %v1440 = vshrl.u32 %v1439, 7
        %v1441 = vsub.s32 7, %v1440
        %v1442 = vrot.slane %v213, %v1441
        %1444 = vbcast.lane.b32.xlu0 %v1442, 256
        %v1445 = vpop.permute.xlu0 %1444
        %s1447 = sor.u32 256, 8
        %1448 = vbcast.lane.b32.xlu0 %v1442, %s1447
        %v1449 = vpop.permute.xlu0 %1448
        %v1450 = vlaneseq
        %v1451 = vshrl.u32 %v1450, 7
        %v1452 = vsub.s32 0, %v1451
        %v1453 = vrot.slane %v214, %v1452
        %1455 = vbcast.lane.b32.xlu0 %v1453, 256
        %v1456 = vpop.permute.xlu0 %1455
        %s1458 = sor.u32 256, 8
        %1459 = vbcast.lane.b32.xlu0 %v1453, %s1458
        %v1460 = vpop.permute.xlu0 %1459
        %v1461 = vlaneseq
        %v1462 = vshrl.u32 %v1461, 7
        %v1463 = vsub.s32 1, %v1462
        %v1464 = vrot.slane %v214, %v1463
        %1466 = vbcast.lane.b32.xlu0 %v1464, 256
        %v1467 = vpop.permute.xlu0 %1466
        %s1469 = sor.u32 256, 8
        %1470 = vbcast.lane.b32.xlu0 %v1464, %s1469
        %v1471 = vpop.permute.xlu0 %1470
        %v1472 = vlaneseq
        %v1473 = vshrl.u32 %v1472, 7
        %v1474 = vsub.s32 2, %v1473
        %v1475 = vrot.slane %v214, %v1474
        %1477 = vbcast.lane.b32.xlu0 %v1475, 256
        %v1478 = vpop.permute.xlu0 %1477
        %s1480 = sor.u32 256, 8
        %1481 = vbcast.lane.b32.xlu0 %v1475, %s1480
        %v1482 = vpop.permute.xlu0 %1481
        %v1483 = vlaneseq
        %v1484 = vshrl.u32 %v1483, 7
        %v1485 = vsub.s32 3, %v1484
        %v1486 = vrot.slane %v214, %v1485
        %1488 = vbcast.lane.b32.xlu0 %v1486, 256
        %v1489 = vpop.permute.xlu0 %1488
        %s1491 = sor.u32 256, 8
        %1492 = vbcast.lane.b32.xlu0 %v1486, %s1491
        %v1493 = vpop.permute.xlu0 %1492
        %v1494 = vlaneseq
        %v1495 = vshrl.u32 %v1494, 7
        %v1496 = vsub.s32 4, %v1495
        %v1497 = vrot.slane %v214, %v1496
        %1499 = vbcast.lane.b32.xlu0 %v1497, 256
        %v1500 = vpop.permute.xlu0 %1499
        %s1502 = sor.u32 256, 8
        %1503 = vbcast.lane.b32.xlu0 %v1497, %s1502
        %v1504 = vpop.permute.xlu0 %1503
        %v1505 = vlaneseq
        %v1506 = vshrl.u32 %v1505, 7
        %v1507 = vsub.s32 5, %v1506
        %v1508 = vrot.slane %v214, %v1507
        %1510 = vbcast.lane.b32.xlu0 %v1508, 256
        %v1511 = vpop.permute.xlu0 %1510
        %s1513 = sor.u32 256, 8
        %1514 = vbcast.lane.b32.xlu0 %v1508, %s1513
        %v1515 = vpop.permute.xlu0 %1514
        %v1516 = vlaneseq
        %v1517 = vshrl.u32 %v1516, 7
        %v1518 = vsub.s32 6, %v1517
        %v1519 = vrot.slane %v214, %v1518
        %1521 = vbcast.lane.b32.xlu0 %v1519, 256
        %v1522 = vpop.permute.xlu0 %1521
        %s1524 = sor.u32 256, 8
        %1525 = vbcast.lane.b32.xlu0 %v1519, %s1524
        %v1526 = vpop.permute.xlu0 %1525
        %v1527 = vlaneseq
        %v1528 = vshrl.u32 %v1527, 7
        %v1529 = vsub.s32 7, %v1528
        %v1530 = vrot.slane %v214, %v1529
        %1532 = vbcast.lane.b32.xlu0 %v1530, 256
        %v1533 = vpop.permute.xlu0 %1532
        %s1535 = sor.u32 256, 8
        %1536 = vbcast.lane.b32.xlu0 %v1530, %s1535
        %v1537 = vpop.permute.xlu0 %1536
        %v1538 = vlaneseq
        %v1539 = vshrl.u32 %v1538, 7
        %v1540 = vsub.s32 0, %v1539
        %v1541 = vrot.slane %v215, %v1540
        %1543 = vbcast.lane.b32.xlu0 %v1541, 256
        %v1544 = vpop.permute.xlu0 %1543
        %s1546 = sor.u32 256, 8
        %1547 = vbcast.lane.b32.xlu0 %v1541, %s1546
        %v1548 = vpop.permute.xlu0 %1547
        %v1549 = vlaneseq
        %v1550 = vshrl.u32 %v1549, 7
        %v1551 = vsub.s32 1, %v1550
        %v1552 = vrot.slane %v215, %v1551
        %1554 = vbcast.lane.b32.xlu0 %v1552, 256
        %v1555 = vpop.permute.xlu0 %1554
        %s1557 = sor.u32 256, 8
        %1558 = vbcast.lane.b32.xlu0 %v1552, %s1557
        %v1559 = vpop.permute.xlu0 %1558
        %v1560 = vlaneseq
        %v1561 = vshrl.u32 %v1560, 7
        %v1562 = vsub.s32 2, %v1561
        %v1563 = vrot.slane %v215, %v1562
        %1565 = vbcast.lane.b32.xlu0 %v1563, 256
        %v1566 = vpop.permute.xlu0 %1565
        %s1568 = sor.u32 256, 8
        %1569 = vbcast.lane.b32.xlu0 %v1563, %s1568
        %v1570 = vpop.permute.xlu0 %1569
        %v1571 = vlaneseq
        %v1572 = vshrl.u32 %v1571, 7
        %v1573 = vsub.s32 3, %v1572
        %v1574 = vrot.slane %v215, %v1573
        %1576 = vbcast.lane.b32.xlu0 %v1574, 256
        %v1577 = vpop.permute.xlu0 %1576
        %s1579 = sor.u32 256, 8
        %1580 = vbcast.lane.b32.xlu0 %v1574, %s1579
        %v1581 = vpop.permute.xlu0 %1580
        %v1582 = vlaneseq
        %v1583 = vshrl.u32 %v1582, 7
        %v1584 = vsub.s32 4, %v1583
        %v1585 = vrot.slane %v215, %v1584
        %1587 = vbcast.lane.b32.xlu0 %v1585, 256
        %v1588 = vpop.permute.xlu0 %1587
        %s1590 = sor.u32 256, 8
        %1591 = vbcast.lane.b32.xlu0 %v1585, %s1590
        %v1592 = vpop.permute.xlu0 %1591
        %v1593 = vlaneseq
        %v1594 = vshrl.u32 %v1593, 7
        %v1595 = vsub.s32 5, %v1594
        %v1596 = vrot.slane %v215, %v1595
        %1598 = vbcast.lane.b32.xlu0 %v1596, 256
        %v1599 = vpop.permute.xlu0 %1598
        %s1601 = sor.u32 256, 8
        %1602 = vbcast.lane.b32.xlu0 %v1596, %s1601
        %v1603 = vpop.permute.xlu0 %1602
        %v1604 = vlaneseq
        %v1605 = vshrl.u32 %v1604, 7
        %v1606 = vsub.s32 6, %v1605
        %v1607 = vrot.slane %v215, %v1606
        %1609 = vbcast.lane.b32.xlu0 %v1607, 256
        %v1610 = vpop.permute.xlu0 %1609
        %s1612 = sor.u32 256, 8
        %1613 = vbcast.lane.b32.xlu0 %v1607, %s1612
        %v1614 = vpop.permute.xlu0 %1613
        %v1615 = vlaneseq
        %v1616 = vshrl.u32 %v1615, 7
        %v1617 = vsub.s32 7, %v1616
        %v1618 = vrot.slane %v215, %v1617
        %1620 = vbcast.lane.b32.xlu0 %v1618, 256
        %v1621 = vpop.permute.xlu0 %1620
        %s1623 = sor.u32 256, 8
        %1624 = vbcast.lane.b32.xlu0 %v1618, %s1623
        %v1625 = vpop.permute.xlu0 %1624
        %vm1626 = vcmp.eq.s32.totalorder %v224, %v217
        %vm1627 = vcmp.eq.s32.totalorder %v228, %v217
        %vm1628 = vcmp.eq.s32.totalorder %v235, %v217
        %vm1629 = vcmp.eq.s32.totalorder %v239, %v217
        %vm1630 = vcmp.eq.s32.totalorder %v246, %v217
        %vm1631 = vcmp.eq.s32.totalorder %v250, %v217
        %vm1632 = vcmp.eq.s32.totalorder %v257, %v217
        %vm1633 = vcmp.eq.s32.totalorder %v261, %v217
        %vm1634 = vcmp.eq.s32.totalorder %v268, %v217
        %vm1635 = vcmp.eq.s32.totalorder %v272, %v217
        %vm1636 = vcmp.eq.s32.totalorder %v279, %v217
        %vm1637 = vcmp.eq.s32.totalorder %v283, %v217
        %vm1638 = vcmp.eq.s32.totalorder %v290, %v217
        %vm1639 = vcmp.eq.s32.totalorder %v294, %v217
        %vm1640 = vcmp.eq.s32.totalorder %v301, %v217
        %vm1641 = vcmp.eq.s32.totalorder %v305, %v217
        %vm1642 = vcmp.eq.s32.totalorder %v312, %v217
        %vm1643 = vcmp.eq.s32.totalorder %v316, %v217
        %vm1644 = vcmp.eq.s32.totalorder %v323, %v217
        %vm1645 = vcmp.eq.s32.totalorder %v327, %v217
        %vm1646 = vcmp.eq.s32.totalorder %v334, %v217
        %vm1647 = vcmp.eq.s32.totalorder %v338, %v217
        %vm1648 = vcmp.eq.s32.totalorder %v345, %v217
        %vm1649 = vcmp.eq.s32.totalorder %v349, %v217
        %vm1650 = vcmp.eq.s32.totalorder %v356, %v217
        %vm1651 = vcmp.eq.s32.totalorder %v360, %v217
        %vm1652 = vcmp.eq.s32.totalorder %v367, %v217
        %vm1653 = vcmp.eq.s32.totalorder %v371, %v217
        %vm1654 = vcmp.eq.s32.totalorder %v378, %v217
        %vm1655 = vcmp.eq.s32.totalorder %v382, %v217
        %vm1656 = vcmp.eq.s32.totalorder %v389, %v217
        %vm1657 = vcmp.eq.s32.totalorder %v393, %v217
        %vm1658 = vcmp.eq.s32.totalorder %v400, %v217
        %vm1659 = vcmp.eq.s32.totalorder %v404, %v217
        %vm1660 = vcmp.eq.s32.totalorder %v411, %v217
        %vm1661 = vcmp.eq.s32.totalorder %v415, %v217
        %vm1662 = vcmp.eq.s32.totalorder %v422, %v217
        %vm1663 = vcmp.eq.s32.totalorder %v426, %v217
        %vm1664 = vcmp.eq.s32.totalorder %v433, %v217
        %vm1665 = vcmp.eq.s32.totalorder %v437, %v217
        %vm1666 = vcmp.eq.s32.totalorder %v444, %v217
        %vm1667 = vcmp.eq.s32.totalorder %v448, %v217
        %vm1668 = vcmp.eq.s32.totalorder %v455, %v217
        %vm1669 = vcmp.eq.s32.totalorder %v459, %v217
        %vm1670 = vcmp.eq.s32.totalorder %v466, %v217
        %vm1671 = vcmp.eq.s32.totalorder %v470, %v217
        %vm1672 = vcmp.eq.s32.totalorder %v477, %v217
        %vm1673 = vcmp.eq.s32.totalorder %v481, %v217
        %vm1674 = vcmp.eq.s32.totalorder %v488, %v217
        %vm1675 = vcmp.eq.s32.totalorder %v492, %v217
        %vm1676 = vcmp.eq.s32.totalorder %v499, %v217
        %vm1677 = vcmp.eq.s32.totalorder %v503, %v217
        %vm1678 = vcmp.eq.s32.totalorder %v510, %v217
        %vm1679 = vcmp.eq.s32.totalorder %v514, %v217
        %vm1680 = vcmp.eq.s32.totalorder %v521, %v217
        %vm1681 = vcmp.eq.s32.totalorder %v525, %v217
        %vm1682 = vcmp.eq.s32.totalorder %v532, %v217
        %vm1683 = vcmp.eq.s32.totalorder %v536, %v217
        %vm1684 = vcmp.eq.s32.totalorder %v543, %v217
        %vm1685 = vcmp.eq.s32.totalorder %v547, %v217
        %vm1686 = vcmp.eq.s32.totalorder %v554, %v217
        %vm1687 = vcmp.eq.s32.totalorder %v558, %v217
        %vm1688 = vcmp.eq.s32.totalorder %v565, %v217
        %vm1689 = vcmp.eq.s32.totalorder %v569, %v217
        %vm1690 = vcmp.eq.s32.totalorder %v576, %v217
        %vm1691 = vcmp.eq.s32.totalorder %v580, %v217
        %vm1692 = vcmp.eq.s32.totalorder %v587, %v217
        %vm1693 = vcmp.eq.s32.totalorder %v591, %v217
        %vm1694 = vcmp.eq.s32.totalorder %v598, %v217
        %vm1695 = vcmp.eq.s32.totalorder %v602, %v217
        %vm1696 = vcmp.eq.s32.totalorder %v609, %v217
        %vm1697 = vcmp.eq.s32.totalorder %v613, %v217
        %vm1698 = vcmp.eq.s32.totalorder %v620, %v217
        %vm1699 = vcmp.eq.s32.totalorder %v624, %v217
        %vm1700 = vcmp.eq.s32.totalorder %v631, %v217
        %vm1701 = vcmp.eq.s32.totalorder %v635, %v217
        %vm1702 = vcmp.eq.s32.totalorder %v642, %v217
        %vm1703 = vcmp.eq.s32.totalorder %v646, %v217
        %vm1704 = vcmp.eq.s32.totalorder %v653, %v217
        %vm1705 = vcmp.eq.s32.totalorder %v657, %v217
        %vm1706 = vcmp.eq.s32.totalorder %v664, %v217
        %vm1707 = vcmp.eq.s32.totalorder %v668, %v217
        %vm1708 = vcmp.eq.s32.totalorder %v675, %v217
        %vm1709 = vcmp.eq.s32.totalorder %v679, %v217
        %vm1710 = vcmp.eq.s32.totalorder %v686, %v217
        %vm1711 = vcmp.eq.s32.totalorder %v690, %v217
        %vm1712 = vcmp.eq.s32.totalorder %v697, %v217
        %vm1713 = vcmp.eq.s32.totalorder %v701, %v217
        %vm1714 = vcmp.eq.s32.totalorder %v708, %v217
        %vm1715 = vcmp.eq.s32.totalorder %v712, %v217
        %vm1716 = vcmp.eq.s32.totalorder %v719, %v217
        %vm1717 = vcmp.eq.s32.totalorder %v723, %v217
        %vm1718 = vcmp.eq.s32.totalorder %v730, %v217
        %vm1719 = vcmp.eq.s32.totalorder %v734, %v217
        %vm1720 = vcmp.eq.s32.totalorder %v741, %v217
        %vm1721 = vcmp.eq.s32.totalorder %v745, %v217
        %vm1722 = vcmp.eq.s32.totalorder %v752, %v217
        %vm1723 = vcmp.eq.s32.totalorder %v756, %v217
        %vm1724 = vcmp.eq.s32.totalorder %v763, %v217
        %vm1725 = vcmp.eq.s32.totalorder %v767, %v217
        %vm1726 = vcmp.eq.s32.totalorder %v774, %v217
        %vm1727 = vcmp.eq.s32.totalorder %v778, %v217
        %vm1728 = vcmp.eq.s32.totalorder %v785, %v217
        %vm1729 = vcmp.eq.s32.totalorder %v789, %v217
        %vm1730 = vcmp.eq.s32.totalorder %v796, %v217
        %vm1731 = vcmp.eq.s32.totalorder %v800, %v217
        %vm1732 = vcmp.eq.s32.totalorder %v807, %v217
        %vm1733 = vcmp.eq.s32.totalorder %v811, %v217
        %vm1734 = vcmp.eq.s32.totalorder %v818, %v217
        %vm1735 = vcmp.eq.s32.totalorder %v822, %v217
        %vm1736 = vcmp.eq.s32.totalorder %v829, %v217
        %vm1737 = vcmp.eq.s32.totalorder %v833, %v217
        %vm1738 = vcmp.eq.s32.totalorder %v840, %v217
        %vm1739 = vcmp.eq.s32.totalorder %v844, %v217
        %vm1740 = vcmp.eq.s32.totalorder %v851, %v217
        %vm1741 = vcmp.eq.s32.totalorder %v855, %v217
        %vm1742 = vcmp.eq.s32.totalorder %v862, %v217
        %vm1743 = vcmp.eq.s32.totalorder %v866, %v217
        %vm1744 = vcmp.eq.s32.totalorder %v873, %v217
        %vm1745 = vcmp.eq.s32.totalorder %v877, %v217
        %vm1746 = vcmp.eq.s32.totalorder %v884, %v217
        %vm1747 = vcmp.eq.s32.totalorder %v888, %v217
        %vm1748 = vcmp.eq.s32.totalorder %v895, %v217
        %vm1749 = vcmp.eq.s32.totalorder %v899, %v217
        %vm1750 = vcmp.eq.s32.totalorder %v906, %v217
        %vm1751 = vcmp.eq.s32.totalorder %v910, %v217
        %vm1752 = vcmp.eq.s32.totalorder %v917, %v217
        %vm1753 = vcmp.eq.s32.totalorder %v921, %v217
        %vm1754 = vcmp.eq.s32.totalorder %v928, %v217
        %vm1755 = vcmp.eq.s32.totalorder %v932, %v217
        %vm1756 = vcmp.eq.s32.totalorder %v939, %v217
        %vm1757 = vcmp.eq.s32.totalorder %v943, %v217
        %vm1758 = vcmp.eq.s32.totalorder %v950, %v217
        %vm1759 = vcmp.eq.s32.totalorder %v954, %v217
        %vm1760 = vcmp.eq.s32.totalorder %v961, %v217
        %vm1761 = vcmp.eq.s32.totalorder %v965, %v217
        %vm1762 = vcmp.eq.s32.totalorder %v972, %v217
        %vm1763 = vcmp.eq.s32.totalorder %v976, %v217
        %vm1764 = vcmp.eq.s32.totalorder %v983, %v217
        %vm1765 = vcmp.eq.s32.totalorder %v987, %v217
        %vm1766 = vcmp.eq.s32.totalorder %v994, %v217
        %vm1767 = vcmp.eq.s32.totalorder %v998, %v217
        %vm1768 = vcmp.eq.s32.totalorder %v1005, %v217
        %vm1769 = vcmp.eq.s32.totalorder %v1009, %v217
        %vm1770 = vcmp.eq.s32.totalorder %v1016, %v217
        %vm1771 = vcmp.eq.s32.totalorder %v1020, %v217
        %vm1772 = vcmp.eq.s32.totalorder %v1027, %v217
        %vm1773 = vcmp.eq.s32.totalorder %v1031, %v217
        %vm1774 = vcmp.eq.s32.totalorder %v1038, %v217
        %vm1775 = vcmp.eq.s32.totalorder %v1042, %v217
        %vm1776 = vcmp.eq.s32.totalorder %v1049, %v217
        %vm1777 = vcmp.eq.s32.totalorder %v1053, %v217
        %vm1778 = vcmp.eq.s32.totalorder %v1060, %v217
        %vm1779 = vcmp.eq.s32.totalorder %v1064, %v217
        %vm1780 = vcmp.eq.s32.totalorder %v1071, %v217
        %vm1781 = vcmp.eq.s32.totalorder %v1075, %v217
        %vm1782 = vcmp.eq.s32.totalorder %v1082, %v217
        %vm1783 = vcmp.eq.s32.totalorder %v1086, %v217
        %vm1784 = vcmp.eq.s32.totalorder %v1093, %v217
        %vm1785 = vcmp.eq.s32.totalorder %v1097, %v217
        %vm1786 = vcmp.eq.s32.totalorder %v1104, %v217
        %vm1787 = vcmp.eq.s32.totalorder %v1108, %v217
        %vm1788 = vcmp.eq.s32.totalorder %v1115, %v217
        %vm1789 = vcmp.eq.s32.totalorder %v1119, %v217
        %vm1790 = vcmp.eq.s32.totalorder %v1126, %v217
        %vm1791 = vcmp.eq.s32.totalorder %v1130, %v217
        %vm1792 = vcmp.eq.s32.totalorder %v1137, %v217
        %vm1793 = vcmp.eq.s32.totalorder %v1141, %v217
        %vm1794 = vcmp.eq.s32.totalorder %v1148, %v217
        %vm1795 = vcmp.eq.s32.totalorder %v1152, %v217
        %vm1796 = vcmp.eq.s32.totalorder %v1159, %v217
        %vm1797 = vcmp.eq.s32.totalorder %v1163, %v217
        %vm1798 = vcmp.eq.s32.totalorder %v1170, %v217
        %vm1799 = vcmp.eq.s32.totalorder %v1174, %v217
        %vm1800 = vcmp.eq.s32.totalorder %v1181, %v217
        %vm1801 = vcmp.eq.s32.totalorder %v1185, %v217
        %vm1802 = vcmp.eq.s32.totalorder %v1192, %v217
        %vm1803 = vcmp.eq.s32.totalorder %v1196, %v217
        %vm1804 = vcmp.eq.s32.totalorder %v1203, %v217
        %vm1805 = vcmp.eq.s32.totalorder %v1207, %v217
        %vm1806 = vcmp.eq.s32.totalorder %v1214, %v217
        %vm1807 = vcmp.eq.s32.totalorder %v1218, %v217
        %vm1808 = vcmp.eq.s32.totalorder %v1225, %v217
        %vm1809 = vcmp.eq.s32.totalorder %v1229, %v217
        %vm1810 = vcmp.eq.s32.totalorder %v1236, %v217
        %vm1811 = vcmp.eq.s32.totalorder %v1240, %v217
        %vm1812 = vcmp.eq.s32.totalorder %v1247, %v217
        %vm1813 = vcmp.eq.s32.totalorder %v1251, %v217
        %vm1814 = vcmp.eq.s32.totalorder %v1258, %v217
        %vm1815 = vcmp.eq.s32.totalorder %v1262, %v217
        %vm1816 = vcmp.eq.s32.totalorder %v1269, %v217
        %vm1817 = vcmp.eq.s32.totalorder %v1273, %v217
        %vm1818 = vcmp.eq.s32.totalorder %v1280, %v217
        %vm1819 = vcmp.eq.s32.totalorder %v1284, %v217
        %vm1820 = vcmp.eq.s32.totalorder %v1291, %v217
        %vm1821 = vcmp.eq.s32.totalorder %v1295, %v217
        %vm1822 = vcmp.eq.s32.totalorder %v1302, %v217
        %vm1823 = vcmp.eq.s32.totalorder %v1306, %v217
        %vm1824 = vcmp.eq.s32.totalorder %v1313, %v217
        %vm1825 = vcmp.eq.s32.totalorder %v1317, %v217
        %vm1826 = vcmp.eq.s32.totalorder %v1324, %v217
        %vm1827 = vcmp.eq.s32.totalorder %v1328, %v217
        %vm1828 = vcmp.eq.s32.totalorder %v1335, %v217
        %vm1829 = vcmp.eq.s32.totalorder %v1339, %v217
        %vm1830 = vcmp.eq.s32.totalorder %v1346, %v217
        %vm1831 = vcmp.eq.s32.totalorder %v1350, %v217
        %vm1832 = vcmp.eq.s32.totalorder %v1357, %v217
        %vm1833 = vcmp.eq.s32.totalorder %v1361, %v217
        %vm1834 = vcmp.eq.s32.totalorder %v1368, %v217
        %vm1835 = vcmp.eq.s32.totalorder %v1372, %v217
        %vm1836 = vcmp.eq.s32.totalorder %v1379, %v217
        %vm1837 = vcmp.eq.s32.totalorder %v1383, %v217
        %vm1838 = vcmp.eq.s32.totalorder %v1390, %v217
        %vm1839 = vcmp.eq.s32.totalorder %v1394, %v217
        %vm1840 = vcmp.eq.s32.totalorder %v1401, %v217
        %vm1841 = vcmp.eq.s32.totalorder %v1405, %v217
        %vm1842 = vcmp.eq.s32.totalorder %v1412, %v217
        %vm1843 = vcmp.eq.s32.totalorder %v1416, %v217
        %vm1844 = vcmp.eq.s32.totalorder %v1423, %v217
        %vm1845 = vcmp.eq.s32.totalorder %v1427, %v217
        %vm1846 = vcmp.eq.s32.totalorder %v1434, %v217
        %vm1847 = vcmp.eq.s32.totalorder %v1438, %v217
        %vm1848 = vcmp.eq.s32.totalorder %v1445, %v217
        %vm1849 = vcmp.eq.s32.totalorder %v1449, %v217
        %vm1850 = vcmp.eq.s32.totalorder %v1456, %v217
        %vm1851 = vcmp.eq.s32.totalorder %v1460, %v217
        %vm1852 = vcmp.eq.s32.totalorder %v1467, %v217
        %vm1853 = vcmp.eq.s32.totalorder %v1471, %v217
        %vm1854 = vcmp.eq.s32.totalorder %v1478, %v217
        %vm1855 = vcmp.eq.s32.totalorder %v1482, %v217
        %vm1856 = vcmp.eq.s32.totalorder %v1489, %v217
        %vm1857 = vcmp.eq.s32.totalorder %v1493, %v217
        %vm1858 = vcmp.eq.s32.totalorder %v1500, %v217
        %vm1859 = vcmp.eq.s32.totalorder %v1504, %v217
        %vm1860 = vcmp.eq.s32.totalorder %v1511, %v217
        %vm1861 = vcmp.eq.s32.totalorder %v1515, %v217
        %vm1862 = vcmp.eq.s32.totalorder %v1522, %v217
        %vm1863 = vcmp.eq.s32.totalorder %v1526, %v217
        %vm1864 = vcmp.eq.s32.totalorder %v1533, %v217
        %vm1865 = vcmp.eq.s32.totalorder %v1537, %v217
        %vm1866 = vcmp.eq.s32.totalorder %v1544, %v217
        %vm1867 = vcmp.eq.s32.totalorder %v1548, %v217
        %vm1868 = vcmp.eq.s32.totalorder %v1555, %v217
        %vm1869 = vcmp.eq.s32.totalorder %v1559, %v217
        %vm1870 = vcmp.eq.s32.totalorder %v1566, %v217
        %vm1871 = vcmp.eq.s32.totalorder %v1570, %v217
        %vm1872 = vcmp.eq.s32.totalorder %v1577, %v217
        %vm1873 = vcmp.eq.s32.totalorder %v1581, %v217
        %vm1874 = vcmp.eq.s32.totalorder %v1588, %v217
        %vm1875 = vcmp.eq.s32.totalorder %v1592, %v217
        %vm1876 = vcmp.eq.s32.totalorder %v1599, %v217
        %vm1877 = vcmp.eq.s32.totalorder %v1603, %v217
        %vm1878 = vcmp.eq.s32.totalorder %v1610, %v217
        %vm1879 = vcmp.eq.s32.totalorder %v1614, %v217
        %vm1880 = vcmp.eq.s32.totalorder %v1621, %v217
        %vm1881 = vcmp.eq.s32.totalorder %v1625, %v217
        %v1882 = vsel %vm1626, 1, 0
        %v1883 = vsel %vm1627, 1, 0
        %v1884 = vsel %vm1628, 1, 0
        %v1885 = vsel %vm1629, 1, 0
        %v1886 = vsel %vm1630, 1, 0
        %v1887 = vsel %vm1631, 1, 0
        %v1888 = vsel %vm1632, 1, 0
        %v1889 = vsel %vm1633, 1, 0
        %v1890 = vsel %vm1634, 1, 0
        %v1891 = vsel %vm1635, 1, 0
        %v1892 = vsel %vm1636, 1, 0
        %v1893 = vsel %vm1637, 1, 0
        %v1894 = vsel %vm1638, 1, 0
        %v1895 = vsel %vm1639, 1, 0
        %v1896 = vsel %vm1640, 1, 0
        %v1897 = vsel %vm1641, 1, 0
        %v1898 = vsel %vm1642, 1, 0
        %v1899 = vsel %vm1643, 1, 0
        %v1900 = vsel %vm1644, 1, 0
        %v1901 = vsel %vm1645, 1, 0
        %v1902 = vsel %vm1646, 1, 0
        %v1903 = vsel %vm1647, 1, 0
        %v1904 = vsel %vm1648, 1, 0
        %v1905 = vsel %vm1649, 1, 0
        %v1906 = vsel %vm1650, 1, 0
        %v1907 = vsel %vm1651, 1, 0
        %v1908 = vsel %vm1652, 1, 0
        %v1909 = vsel %vm1653, 1, 0
        %v1910 = vsel %vm1654, 1, 0
        %v1911 = vsel %vm1655, 1, 0
        %v1912 = vsel %vm1656, 1, 0
        %v1913 = vsel %vm1657, 1, 0
        %v1914 = vsel %vm1658, 1, 0
        %v1915 = vsel %vm1659, 1, 0
        %v1916 = vsel %vm1660, 1, 0
        %v1917 = vsel %vm1661, 1, 0
        %v1918 = vsel %vm1662, 1, 0
        %v1919 = vsel %vm1663, 1, 0
        %v1920 = vsel %vm1664, 1, 0
        %v1921 = vsel %vm1665, 1, 0
        %v1922 = vsel %vm1666, 1, 0
        %v1923 = vsel %vm1667, 1, 0
        %v1924 = vsel %vm1668, 1, 0
        %v1925 = vsel %vm1669, 1, 0
        %v1926 = vsel %vm1670, 1, 0
        %v1927 = vsel %vm1671, 1, 0
        %v1928 = vsel %vm1672, 1, 0
        %v1929 = vsel %vm1673, 1, 0
        %v1930 = vsel %vm1674, 1, 0
        %v1931 = vsel %vm1675, 1, 0
        %v1932 = vsel %vm1676, 1, 0
        %v1933 = vsel %vm1677, 1, 0
        %v1934 = vsel %vm1678, 1, 0
        %v1935 = vsel %vm1679, 1, 0
        %v1936 = vsel %vm1680, 1, 0
        %v1937 = vsel %vm1681, 1, 0
        %v1938 = vsel %vm1682, 1, 0
        %v1939 = vsel %vm1683, 1, 0
        %v1940 = vsel %vm1684, 1, 0
        %v1941 = vsel %vm1685, 1, 0
        %v1942 = vsel %vm1686, 1, 0
        %v1943 = vsel %vm1687, 1, 0
        %v1944 = vsel %vm1688, 1, 0
        %v1945 = vsel %vm1689, 1, 0
        %v1946 = vsel %vm1690, 1, 0
        %v1947 = vsel %vm1691, 1, 0
        %v1948 = vsel %vm1692, 1, 0
        %v1949 = vsel %vm1693, 1, 0
        %v1950 = vsel %vm1694, 1, 0
        %v1951 = vsel %vm1695, 1, 0
        %v1952 = vsel %vm1696, 1, 0
        %v1953 = vsel %vm1697, 1, 0
        %v1954 = vsel %vm1698, 1, 0
        %v1955 = vsel %vm1699, 1, 0
        %v1956 = vsel %vm1700, 1, 0
        %v1957 = vsel %vm1701, 1, 0
        %v1958 = vsel %vm1702, 1, 0
        %v1959 = vsel %vm1703, 1, 0
        %v1960 = vsel %vm1704, 1, 0
        %v1961 = vsel %vm1705, 1, 0
        %v1962 = vsel %vm1706, 1, 0
        %v1963 = vsel %vm1707, 1, 0
        %v1964 = vsel %vm1708, 1, 0
        %v1965 = vsel %vm1709, 1, 0
        %v1966 = vsel %vm1710, 1, 0
        %v1967 = vsel %vm1711, 1, 0
        %v1968 = vsel %vm1712, 1, 0
        %v1969 = vsel %vm1713, 1, 0
        %v1970 = vsel %vm1714, 1, 0
        %v1971 = vsel %vm1715, 1, 0
        %v1972 = vsel %vm1716, 1, 0
        %v1973 = vsel %vm1717, 1, 0
        %v1974 = vsel %vm1718, 1, 0
        %v1975 = vsel %vm1719, 1, 0
        %v1976 = vsel %vm1720, 1, 0
        %v1977 = vsel %vm1721, 1, 0
        %v1978 = vsel %vm1722, 1, 0
        %v1979 = vsel %vm1723, 1, 0
        %v1980 = vsel %vm1724, 1, 0
        %v1981 = vsel %vm1725, 1, 0
        %v1982 = vsel %vm1726, 1, 0
        %v1983 = vsel %vm1727, 1, 0
        %v1984 = vsel %vm1728, 1, 0
        %v1985 = vsel %vm1729, 1, 0
        %v1986 = vsel %vm1730, 1, 0
        %v1987 = vsel %vm1731, 1, 0
        %v1988 = vsel %vm1732, 1, 0
        %v1989 = vsel %vm1733, 1, 0
        %v1990 = vsel %vm1734, 1, 0
        %v1991 = vsel %vm1735, 1, 0
        %v1992 = vsel %vm1736, 1, 0
        %v1993 = vsel %vm1737, 1, 0
        %v1994 = vsel %vm1738, 1, 0
        %v1995 = vsel %vm1739, 1, 0
        %v1996 = vsel %vm1740, 1, 0
        %v1997 = vsel %vm1741, 1, 0
        %v1998 = vsel %vm1742, 1, 0
        %v1999 = vsel %vm1743, 1, 0
        %v2000 = vsel %vm1744, 1, 0
        %v2001 = vsel %vm1745, 1, 0
        %v2002 = vsel %vm1746, 1, 0
        %v2003 = vsel %vm1747, 1, 0
        %v2004 = vsel %vm1748, 1, 0
        %v2005 = vsel %vm1749, 1, 0
        %v2006 = vsel %vm1750, 1, 0
        %v2007 = vsel %vm1751, 1, 0
        %v2008 = vsel %vm1752, 1, 0
        %v2009 = vsel %vm1753, 1, 0
        %v2010 = vsel %vm1754, 1, 0
        %v2011 = vsel %vm1755, 1, 0
        %v2012 = vsel %vm1756, 1, 0
        %v2013 = vsel %vm1757, 1, 0
        %v2014 = vsel %vm1758, 1, 0
        %v2015 = vsel %vm1759, 1, 0
        %v2016 = vsel %vm1760, 1, 0
        %v2017 = vsel %vm1761, 1, 0
        %v2018 = vsel %vm1762, 1, 0
        %v2019 = vsel %vm1763, 1, 0
        %v2020 = vsel %vm1764, 1, 0
        %v2021 = vsel %vm1765, 1, 0
        %v2022 = vsel %vm1766, 1, 0
        %v2023 = vsel %vm1767, 1, 0
        %v2024 = vsel %vm1768, 1, 0
        %v2025 = vsel %vm1769, 1, 0
        %v2026 = vsel %vm1770, 1, 0
        %v2027 = vsel %vm1771, 1, 0
        %v2028 = vsel %vm1772, 1, 0
        %v2029 = vsel %vm1773, 1, 0
        %v2030 = vsel %vm1774, 1, 0
        %v2031 = vsel %vm1775, 1, 0
        %v2032 = vsel %vm1776, 1, 0
        %v2033 = vsel %vm1777, 1, 0
        %v2034 = vsel %vm1778, 1, 0
        %v2035 = vsel %vm1779, 1, 0
        %v2036 = vsel %vm1780, 1, 0
        %v2037 = vsel %vm1781, 1, 0
        %v2038 = vsel %vm1782, 1, 0
        %v2039 = vsel %vm1783, 1, 0
        %v2040 = vsel %vm1784, 1, 0
        %v2041 = vsel %vm1785, 1, 0
        %v2042 = vsel %vm1786, 1, 0
        %v2043 = vsel %vm1787, 1, 0
        %v2044 = vsel %vm1788, 1, 0
        %v2045 = vsel %vm1789, 1, 0
        %v2046 = vsel %vm1790, 1, 0
        %v2047 = vsel %vm1791, 1, 0
        %v2048 = vsel %vm1792, 1, 0
        %v2049 = vsel %vm1793, 1, 0
        %v2050 = vsel %vm1794, 1, 0
        %v2051 = vsel %vm1795, 1, 0
        %v2052 = vsel %vm1796, 1, 0
        %v2053 = vsel %vm1797, 1, 0
        %v2054 = vsel %vm1798, 1, 0
        %v2055 = vsel %vm1799, 1, 0
        %v2056 = vsel %vm1800, 1, 0
        %v2057 = vsel %vm1801, 1, 0
        %v2058 = vsel %vm1802, 1, 0
        %v2059 = vsel %vm1803, 1, 0
        %v2060 = vsel %vm1804, 1, 0
        %v2061 = vsel %vm1805, 1, 0
        %v2062 = vsel %vm1806, 1, 0
        %v2063 = vsel %vm1807, 1, 0
        %v2064 = vsel %vm1808, 1, 0
        %v2065 = vsel %vm1809, 1, 0
        %v2066 = vsel %vm1810, 1, 0
        %v2067 = vsel %vm1811, 1, 0
        %v2068 = vsel %vm1812, 1, 0
        %v2069 = vsel %vm1813, 1, 0
        %v2070 = vsel %vm1814, 1, 0
        %v2071 = vsel %vm1815, 1, 0
        %v2072 = vsel %vm1816, 1, 0
        %v2073 = vsel %vm1817, 1, 0
        %v2074 = vsel %vm1818, 1, 0
        %v2075 = vsel %vm1819, 1, 0
        %v2076 = vsel %vm1820, 1, 0
        %v2077 = vsel %vm1821, 1, 0
        %v2078 = vsel %vm1822, 1, 0
        %v2079 = vsel %vm1823, 1, 0
        %v2080 = vsel %vm1824, 1, 0
        %v2081 = vsel %vm1825, 1, 0
        %v2082 = vsel %vm1826, 1, 0
        %v2083 = vsel %vm1827, 1, 0
        %v2084 = vsel %vm1828, 1, 0
        %v2085 = vsel %vm1829, 1, 0
        %v2086 = vsel %vm1830, 1, 0
        %v2087 = vsel %vm1831, 1, 0
        %v2088 = vsel %vm1832, 1, 0
        %v2089 = vsel %vm1833, 1, 0
        %v2090 = vsel %vm1834, 1, 0
        %v2091 = vsel %vm1835, 1, 0
        %v2092 = vsel %vm1836, 1, 0
        %v2093 = vsel %vm1837, 1, 0
        %v2094 = vsel %vm1838, 1, 0
        %v2095 = vsel %vm1839, 1, 0
        %v2096 = vsel %vm1840, 1, 0
        %v2097 = vsel %vm1841, 1, 0
        %v2098 = vsel %vm1842, 1, 0
        %v2099 = vsel %vm1843, 1, 0
        %v2100 = vsel %vm1844, 1, 0
        %v2101 = vsel %vm1845, 1, 0
        %v2102 = vsel %vm1846, 1, 0
        %v2103 = vsel %vm1847, 1, 0
        %v2104 = vsel %vm1848, 1, 0
        %v2105 = vsel %vm1849, 1, 0
        %v2106 = vsel %vm1850, 1, 0
        %v2107 = vsel %vm1851, 1, 0
        %v2108 = vsel %vm1852, 1, 0
        %v2109 = vsel %vm1853, 1, 0
        %v2110 = vsel %vm1854, 1, 0
        %v2111 = vsel %vm1855, 1, 0
        %v2112 = vsel %vm1856, 1, 0
        %v2113 = vsel %vm1857, 1, 0
        %v2114 = vsel %vm1858, 1, 0
        %v2115 = vsel %vm1859, 1, 0
        %v2116 = vsel %vm1860, 1, 0
        %v2117 = vsel %vm1861, 1, 0
        %v2118 = vsel %vm1862, 1, 0
        %v2119 = vsel %vm1863, 1, 0
        %v2120 = vsel %vm1864, 1, 0
        %v2121 = vsel %vm1865, 1, 0
        %v2122 = vsel %vm1866, 1, 0
        %v2123 = vsel %vm1867, 1, 0
        %v2124 = vsel %vm1868, 1, 0
        %v2125 = vsel %vm1869, 1, 0
        %v2126 = vsel %vm1870, 1, 0
        %v2127 = vsel %vm1871, 1, 0
        %v2128 = vsel %vm1872, 1, 0
        %v2129 = vsel %vm1873, 1, 0
        %v2130 = vsel %vm1874, 1, 0
        %v2131 = vsel %vm1875, 1, 0
        %v2132 = vsel %vm1876, 1, 0
        %v2133 = vsel %vm1877, 1, 0
        %v2134 = vsel %vm1878, 1, 0
        %v2135 = vsel %vm1879, 1, 0
        %v2136 = vsel %vm1880, 1, 0
        %v2137 = vsel %vm1881, 1, 0
        %v2138 = vcvt.s32.f32 %v1882
        %v2139 = vcvt.s32.f32 %v1883
        %v2140 = vcvt.s32.f32 %v1884
        %v2141 = vcvt.s32.f32 %v1885
        %v2142 = vcvt.s32.f32 %v1886
        %v2143 = vcvt.s32.f32 %v1887
        %v2144 = vcvt.s32.f32 %v1888
        %v2145 = vcvt.s32.f32 %v1889
        %v2146 = vcvt.s32.f32 %v1890
        %v2147 = vcvt.s32.f32 %v1891
        %v2148 = vcvt.s32.f32 %v1892
        %v2149 = vcvt.s32.f32 %v1893
        %v2150 = vcvt.s32.f32 %v1894
        %v2151 = vcvt.s32.f32 %v1895
        %v2152 = vcvt.s32.f32 %v1896
        %v2153 = vcvt.s32.f32 %v1897
        %v2154 = vcvt.s32.f32 %v1898
        %v2155 = vcvt.s32.f32 %v1899
        %v2156 = vcvt.s32.f32 %v1900
        %v2157 = vcvt.s32.f32 %v1901
        %v2158 = vcvt.s32.f32 %v1902
        %v2159 = vcvt.s32.f32 %v1903
        %v2160 = vcvt.s32.f32 %v1904
        %v2161 = vcvt.s32.f32 %v1905
        %v2162 = vcvt.s32.f32 %v1906
        %v2163 = vcvt.s32.f32 %v1907
        %v2164 = vcvt.s32.f32 %v1908
        %v2165 = vcvt.s32.f32 %v1909
        %v2166 = vcvt.s32.f32 %v1910
        %v2167 = vcvt.s32.f32 %v1911
        %v2168 = vcvt.s32.f32 %v1912
        %v2169 = vcvt.s32.f32 %v1913
        %v2170 = vcvt.s32.f32 %v1914
        %v2171 = vcvt.s32.f32 %v1915
        %v2172 = vcvt.s32.f32 %v1916
        %v2173 = vcvt.s32.f32 %v1917
        %v2174 = vcvt.s32.f32 %v1918
        %v2175 = vcvt.s32.f32 %v1919
        %v2176 = vcvt.s32.f32 %v1920
        %v2177 = vcvt.s32.f32 %v1921
        %v2178 = vcvt.s32.f32 %v1922
        %v2179 = vcvt.s32.f32 %v1923
        %v2180 = vcvt.s32.f32 %v1924
        %v2181 = vcvt.s32.f32 %v1925
        %v2182 = vcvt.s32.f32 %v1926
        %v2183 = vcvt.s32.f32 %v1927
        %v2184 = vcvt.s32.f32 %v1928
        %v2185 = vcvt.s32.f32 %v1929
        %v2186 = vcvt.s32.f32 %v1930
        %v2187 = vcvt.s32.f32 %v1931
        %v2188 = vcvt.s32.f32 %v1932
        %v2189 = vcvt.s32.f32 %v1933
        %v2190 = vcvt.s32.f32 %v1934
        %v2191 = vcvt.s32.f32 %v1935
        %v2192 = vcvt.s32.f32 %v1936
        %v2193 = vcvt.s32.f32 %v1937
        %v2194 = vcvt.s32.f32 %v1938
        %v2195 = vcvt.s32.f32 %v1939
        %v2196 = vcvt.s32.f32 %v1940
        %v2197 = vcvt.s32.f32 %v1941
        %v2198 = vcvt.s32.f32 %v1942
        %v2199 = vcvt.s32.f32 %v1943
        %v2200 = vcvt.s32.f32 %v1944
        %v2201 = vcvt.s32.f32 %v1945
        %v2202 = vcvt.s32.f32 %v1946
        %v2203 = vcvt.s32.f32 %v1947
        %v2204 = vcvt.s32.f32 %v1948
        %v2205 = vcvt.s32.f32 %v1949
        %v2206 = vcvt.s32.f32 %v1950
        %v2207 = vcvt.s32.f32 %v1951
        %v2208 = vcvt.s32.f32 %v1952
        %v2209 = vcvt.s32.f32 %v1953
        %v2210 = vcvt.s32.f32 %v1954
        %v2211 = vcvt.s32.f32 %v1955
        %v2212 = vcvt.s32.f32 %v1956
        %v2213 = vcvt.s32.f32 %v1957
        %v2214 = vcvt.s32.f32 %v1958
        %v2215 = vcvt.s32.f32 %v1959
        %v2216 = vcvt.s32.f32 %v1960
        %v2217 = vcvt.s32.f32 %v1961
        %v2218 = vcvt.s32.f32 %v1962
        %v2219 = vcvt.s32.f32 %v1963
        %v2220 = vcvt.s32.f32 %v1964
        %v2221 = vcvt.s32.f32 %v1965
        %v2222 = vcvt.s32.f32 %v1966
        %v2223 = vcvt.s32.f32 %v1967
        %v2224 = vcvt.s32.f32 %v1968
        %v2225 = vcvt.s32.f32 %v1969
        %v2226 = vcvt.s32.f32 %v1970
        %v2227 = vcvt.s32.f32 %v1971
        %v2228 = vcvt.s32.f32 %v1972
        %v2229 = vcvt.s32.f32 %v1973
        %v2230 = vcvt.s32.f32 %v1974
        %v2231 = vcvt.s32.f32 %v1975
        %v2232 = vcvt.s32.f32 %v1976
        %v2233 = vcvt.s32.f32 %v1977
        %v2234 = vcvt.s32.f32 %v1978
        %v2235 = vcvt.s32.f32 %v1979
        %v2236 = vcvt.s32.f32 %v1980
        %v2237 = vcvt.s32.f32 %v1981
        %v2238 = vcvt.s32.f32 %v1982
        %v2239 = vcvt.s32.f32 %v1983
        %v2240 = vcvt.s32.f32 %v1984
        %v2241 = vcvt.s32.f32 %v1985
        %v2242 = vcvt.s32.f32 %v1986
        %v2243 = vcvt.s32.f32 %v1987
        %v2244 = vcvt.s32.f32 %v1988
        %v2245 = vcvt.s32.f32 %v1989
        %v2246 = vcvt.s32.f32 %v1990
        %v2247 = vcvt.s32.f32 %v1991
        %v2248 = vcvt.s32.f32 %v1992
        %v2249 = vcvt.s32.f32 %v1993
        %v2250 = vcvt.s32.f32 %v1994
        %v2251 = vcvt.s32.f32 %v1995
        %v2252 = vcvt.s32.f32 %v1996
        %v2253 = vcvt.s32.f32 %v1997
        %v2254 = vcvt.s32.f32 %v1998
        %v2255 = vcvt.s32.f32 %v1999
        %v2256 = vcvt.s32.f32 %v2000
        %v2257 = vcvt.s32.f32 %v2001
        %v2258 = vcvt.s32.f32 %v2002
        %v2259 = vcvt.s32.f32 %v2003
        %v2260 = vcvt.s32.f32 %v2004
        %v2261 = vcvt.s32.f32 %v2005
        %v2262 = vcvt.s32.f32 %v2006
        %v2263 = vcvt.s32.f32 %v2007
        %v2264 = vcvt.s32.f32 %v2008
        %v2265 = vcvt.s32.f32 %v2009
        %v2266 = vcvt.s32.f32 %v2010
        %v2267 = vcvt.s32.f32 %v2011
        %v2268 = vcvt.s32.f32 %v2012
        %v2269 = vcvt.s32.f32 %v2013
        %v2270 = vcvt.s32.f32 %v2014
        %v2271 = vcvt.s32.f32 %v2015
        %v2272 = vcvt.s32.f32 %v2016
        %v2273 = vcvt.s32.f32 %v2017
        %v2274 = vcvt.s32.f32 %v2018
        %v2275 = vcvt.s32.f32 %v2019
        %v2276 = vcvt.s32.f32 %v2020
        %v2277 = vcvt.s32.f32 %v2021
        %v2278 = vcvt.s32.f32 %v2022
        %v2279 = vcvt.s32.f32 %v2023
        %v2280 = vcvt.s32.f32 %v2024
        %v2281 = vcvt.s32.f32 %v2025
        %v2282 = vcvt.s32.f32 %v2026
        %v2283 = vcvt.s32.f32 %v2027
        %v2284 = vcvt.s32.f32 %v2028
        %v2285 = vcvt.s32.f32 %v2029
        %v2286 = vcvt.s32.f32 %v2030
        %v2287 = vcvt.s32.f32 %v2031
        %v2288 = vcvt.s32.f32 %v2032
        %v2289 = vcvt.s32.f32 %v2033
        %v2290 = vcvt.s32.f32 %v2034
        %v2291 = vcvt.s32.f32 %v2035
        %v2292 = vcvt.s32.f32 %v2036
        %v2293 = vcvt.s32.f32 %v2037
        %v2294 = vcvt.s32.f32 %v2038
        %v2295 = vcvt.s32.f32 %v2039
        %v2296 = vcvt.s32.f32 %v2040
        %v2297 = vcvt.s32.f32 %v2041
        %v2298 = vcvt.s32.f32 %v2042
        %v2299 = vcvt.s32.f32 %v2043
        %v2300 = vcvt.s32.f32 %v2044
        %v2301 = vcvt.s32.f32 %v2045
        %v2302 = vcvt.s32.f32 %v2046
        %v2303 = vcvt.s32.f32 %v2047
        %v2304 = vcvt.s32.f32 %v2048
        %v2305 = vcvt.s32.f32 %v2049
        %v2306 = vcvt.s32.f32 %v2050
        %v2307 = vcvt.s32.f32 %v2051
        %v2308 = vcvt.s32.f32 %v2052
        %v2309 = vcvt.s32.f32 %v2053
        %v2310 = vcvt.s32.f32 %v2054
        %v2311 = vcvt.s32.f32 %v2055
        %v2312 = vcvt.s32.f32 %v2056
        %v2313 = vcvt.s32.f32 %v2057
        %v2314 = vcvt.s32.f32 %v2058
        %v2315 = vcvt.s32.f32 %v2059
        %v2316 = vcvt.s32.f32 %v2060
        %v2317 = vcvt.s32.f32 %v2061
        %v2318 = vcvt.s32.f32 %v2062
        %v2319 = vcvt.s32.f32 %v2063
        %v2320 = vcvt.s32.f32 %v2064
        %v2321 = vcvt.s32.f32 %v2065
        %v2322 = vcvt.s32.f32 %v2066
        %v2323 = vcvt.s32.f32 %v2067
        %v2324 = vcvt.s32.f32 %v2068
        %v2325 = vcvt.s32.f32 %v2069
        %v2326 = vcvt.s32.f32 %v2070
        %v2327 = vcvt.s32.f32 %v2071
        %v2328 = vcvt.s32.f32 %v2072
        %v2329 = vcvt.s32.f32 %v2073
        %v2330 = vcvt.s32.f32 %v2074
        %v2331 = vcvt.s32.f32 %v2075
        %v2332 = vcvt.s32.f32 %v2076
        %v2333 = vcvt.s32.f32 %v2077
        %v2334 = vcvt.s32.f32 %v2078
        %v2335 = vcvt.s32.f32 %v2079
        %v2336 = vcvt.s32.f32 %v2080
        %v2337 = vcvt.s32.f32 %v2081
        %v2338 = vcvt.s32.f32 %v2082
        %v2339 = vcvt.s32.f32 %v2083
        %v2340 = vcvt.s32.f32 %v2084
        %v2341 = vcvt.s32.f32 %v2085
        %v2342 = vcvt.s32.f32 %v2086
        %v2343 = vcvt.s32.f32 %v2087
        %v2344 = vcvt.s32.f32 %v2088
        %v2345 = vcvt.s32.f32 %v2089
        %v2346 = vcvt.s32.f32 %v2090
        %v2347 = vcvt.s32.f32 %v2091
        %v2348 = vcvt.s32.f32 %v2092
        %v2349 = vcvt.s32.f32 %v2093
        %v2350 = vcvt.s32.f32 %v2094
        %v2351 = vcvt.s32.f32 %v2095
        %v2352 = vcvt.s32.f32 %v2096
        %v2353 = vcvt.s32.f32 %v2097
        %v2354 = vcvt.s32.f32 %v2098
        %v2355 = vcvt.s32.f32 %v2099
        %v2356 = vcvt.s32.f32 %v2100
        %v2357 = vcvt.s32.f32 %v2101
        %v2358 = vcvt.s32.f32 %v2102
        %v2359 = vcvt.s32.f32 %v2103
        %v2360 = vcvt.s32.f32 %v2104
        %v2361 = vcvt.s32.f32 %v2105
        %v2362 = vcvt.s32.f32 %v2106
        %v2363 = vcvt.s32.f32 %v2107
        %v2364 = vcvt.s32.f32 %v2108
        %v2365 = vcvt.s32.f32 %v2109
        %v2366 = vcvt.s32.f32 %v2110
        %v2367 = vcvt.s32.f32 %v2111
        %v2368 = vcvt.s32.f32 %v2112
        %v2369 = vcvt.s32.f32 %v2113
        %v2370 = vcvt.s32.f32 %v2114
        %v2371 = vcvt.s32.f32 %v2115
        %v2372 = vcvt.s32.f32 %v2116
        %v2373 = vcvt.s32.f32 %v2117
        %v2374 = vcvt.s32.f32 %v2118
        %v2375 = vcvt.s32.f32 %v2119
        %v2376 = vcvt.s32.f32 %v2120
        %v2377 = vcvt.s32.f32 %v2121
        %v2378 = vcvt.s32.f32 %v2122
        %v2379 = vcvt.s32.f32 %v2123
        %v2380 = vcvt.s32.f32 %v2124
        %v2381 = vcvt.s32.f32 %v2125
        %v2382 = vcvt.s32.f32 %v2126
        %v2383 = vcvt.s32.f32 %v2127
        %v2384 = vcvt.s32.f32 %v2128
        %v2385 = vcvt.s32.f32 %v2129
        %v2386 = vcvt.s32.f32 %v2130
        %v2387 = vcvt.s32.f32 %v2131
        %v2388 = vcvt.s32.f32 %v2132
        %v2389 = vcvt.s32.f32 %v2133
        %v2390 = vcvt.s32.f32 %v2134
        %v2391 = vcvt.s32.f32 %v2135
        %v2392 = vcvt.s32.f32 %v2136
        %v2393 = vcvt.s32.f32 %v2137
        %v2394 = vpack.c.bf16 %v2139, %v2138
        %v2395 = vpack.c.bf16 %v2141, %v2140
        %v2396 = vpack.c.bf16 %v2143, %v2142
        %v2397 = vpack.c.bf16 %v2145, %v2144
        %v2398 = vpack.c.bf16 %v2147, %v2146
        %v2399 = vpack.c.bf16 %v2149, %v2148
        %v2400 = vpack.c.bf16 %v2151, %v2150
        %v2401 = vpack.c.bf16 %v2153, %v2152
        %v2402 = vpack.c.bf16 %v2155, %v2154
        %v2403 = vpack.c.bf16 %v2157, %v2156
        %v2404 = vpack.c.bf16 %v2159, %v2158
        %v2405 = vpack.c.bf16 %v2161, %v2160
        %v2406 = vpack.c.bf16 %v2163, %v2162
        %v2407 = vpack.c.bf16 %v2165, %v2164
        %v2408 = vpack.c.bf16 %v2167, %v2166
        %v2409 = vpack.c.bf16 %v2169, %v2168
        %v2410 = vpack.c.bf16 %v2171, %v2170
        %v2411 = vpack.c.bf16 %v2173, %v2172
        %v2412 = vpack.c.bf16 %v2175, %v2174
        %v2413 = vpack.c.bf16 %v2177, %v2176
        %v2414 = vpack.c.bf16 %v2179, %v2178
        %v2415 = vpack.c.bf16 %v2181, %v2180
        %v2416 = vpack.c.bf16 %v2183, %v2182
        %v2417 = vpack.c.bf16 %v2185, %v2184
        %v2418 = vpack.c.bf16 %v2187, %v2186
        %v2419 = vpack.c.bf16 %v2189, %v2188
        %v2420 = vpack.c.bf16 %v2191, %v2190
        %v2421 = vpack.c.bf16 %v2193, %v2192
        %v2422 = vpack.c.bf16 %v2195, %v2194
        %v2423 = vpack.c.bf16 %v2197, %v2196
        %v2424 = vpack.c.bf16 %v2199, %v2198
        %v2425 = vpack.c.bf16 %v2201, %v2200
        %v2426 = vpack.c.bf16 %v2203, %v2202
        %v2427 = vpack.c.bf16 %v2205, %v2204
        %v2428 = vpack.c.bf16 %v2207, %v2206
        %v2429 = vpack.c.bf16 %v2209, %v2208
        %v2430 = vpack.c.bf16 %v2211, %v2210
        %v2431 = vpack.c.bf16 %v2213, %v2212
        %v2432 = vpack.c.bf16 %v2215, %v2214
        %v2433 = vpack.c.bf16 %v2217, %v2216
        %v2434 = vpack.c.bf16 %v2219, %v2218
        %v2435 = vpack.c.bf16 %v2221, %v2220
        %v2436 = vpack.c.bf16 %v2223, %v2222
        %v2437 = vpack.c.bf16 %v2225, %v2224
        %v2438 = vpack.c.bf16 %v2227, %v2226
        %v2439 = vpack.c.bf16 %v2229, %v2228
        %v2440 = vpack.c.bf16 %v2231, %v2230
        %v2441 = vpack.c.bf16 %v2233, %v2232
        %v2442 = vpack.c.bf16 %v2235, %v2234
        %v2443 = vpack.c.bf16 %v2237, %v2236
        %v2444 = vpack.c.bf16 %v2239, %v2238
        %v2445 = vpack.c.bf16 %v2241, %v2240
        %v2446 = vpack.c.bf16 %v2243, %v2242
        %v2447 = vpack.c.bf16 %v2245, %v2244
        %v2448 = vpack.c.bf16 %v2247, %v2246
        %v2449 = vpack.c.bf16 %v2249, %v2248
        %v2450 = vpack.c.bf16 %v2251, %v2250
        %v2451 = vpack.c.bf16 %v2253, %v2252
        %v2452 = vpack.c.bf16 %v2255, %v2254
        %v2453 = vpack.c.bf16 %v2257, %v2256
        %v2454 = vpack.c.bf16 %v2259, %v2258
        %v2455 = vpack.c.bf16 %v2261, %v2260
        %v2456 = vpack.c.bf16 %v2263, %v2262
        %v2457 = vpack.c.bf16 %v2265, %v2264
        %v2458 = vpack.c.bf16 %v2267, %v2266
        %v2459 = vpack.c.bf16 %v2269, %v2268
        %v2460 = vpack.c.bf16 %v2271, %v2270
        %v2461 = vpack.c.bf16 %v2273, %v2272
        %v2462 = vpack.c.bf16 %v2275, %v2274
        %v2463 = vpack.c.bf16 %v2277, %v2276
        %v2464 = vpack.c.bf16 %v2279, %v2278
        %v2465 = vpack.c.bf16 %v2281, %v2280
        %v2466 = vpack.c.bf16 %v2283, %v2282
        %v2467 = vpack.c.bf16 %v2285, %v2284
        %v2468 = vpack.c.bf16 %v2287, %v2286
        %v2469 = vpack.c.bf16 %v2289, %v2288
        %v2470 = vpack.c.bf16 %v2291, %v2290
        %v2471 = vpack.c.bf16 %v2293, %v2292
        %v2472 = vpack.c.bf16 %v2295, %v2294
        %v2473 = vpack.c.bf16 %v2297, %v2296
        %v2474 = vpack.c.bf16 %v2299, %v2298
        %v2475 = vpack.c.bf16 %v2301, %v2300
        %v2476 = vpack.c.bf16 %v2303, %v2302
        %v2477 = vpack.c.bf16 %v2305, %v2304
        %v2478 = vpack.c.bf16 %v2307, %v2306
        %v2479 = vpack.c.bf16 %v2309, %v2308
        %v2480 = vpack.c.bf16 %v2311, %v2310
        %v2481 = vpack.c.bf16 %v2313, %v2312
        %v2482 = vpack.c.bf16 %v2315, %v2314
        %v2483 = vpack.c.bf16 %v2317, %v2316
        %v2484 = vpack.c.bf16 %v2319, %v2318
        %v2485 = vpack.c.bf16 %v2321, %v2320
        %v2486 = vpack.c.bf16 %v2323, %v2322
        %v2487 = vpack.c.bf16 %v2325, %v2324
        %v2488 = vpack.c.bf16 %v2327, %v2326
        %v2489 = vpack.c.bf16 %v2329, %v2328
        %v2490 = vpack.c.bf16 %v2331, %v2330
        %v2491 = vpack.c.bf16 %v2333, %v2332
        %v2492 = vpack.c.bf16 %v2335, %v2334
        %v2493 = vpack.c.bf16 %v2337, %v2336
        %v2494 = vpack.c.bf16 %v2339, %v2338
        %v2495 = vpack.c.bf16 %v2341, %v2340
        %v2496 = vpack.c.bf16 %v2343, %v2342
        %v2497 = vpack.c.bf16 %v2345, %v2344
        %v2498 = vpack.c.bf16 %v2347, %v2346
        %v2499 = vpack.c.bf16 %v2349, %v2348
        %v2500 = vpack.c.bf16 %v2351, %v2350
        %v2501 = vpack.c.bf16 %v2353, %v2352
        %v2502 = vpack.c.bf16 %v2355, %v2354
        %v2503 = vpack.c.bf16 %v2357, %v2356
        %v2504 = vpack.c.bf16 %v2359, %v2358
        %v2505 = vpack.c.bf16 %v2361, %v2360
        %v2506 = vpack.c.bf16 %v2363, %v2362
        %v2507 = vpack.c.bf16 %v2365, %v2364
        %v2508 = vpack.c.bf16 %v2367, %v2366
        %v2509 = vpack.c.bf16 %v2369, %v2368
        %v2510 = vpack.c.bf16 %v2371, %v2370
        %v2511 = vpack.c.bf16 %v2373, %v2372
        %v2512 = vpack.c.bf16 %v2375, %v2374
        %v2513 = vpack.c.bf16 %v2377, %v2376
        %v2514 = vpack.c.bf16 %v2379, %v2378
        %v2515 = vpack.c.bf16 %v2381, %v2380
        %v2516 = vpack.c.bf16 %v2383, %v2382
        %v2517 = vpack.c.bf16 %v2385, %v2384
        %v2518 = vpack.c.bf16 %v2387, %v2386
        %v2519 = vpack.c.bf16 %v2389, %v2388
        %v2520 = vpack.c.bf16 %v2391, %v2390
        %v2521 = vpack.c.bf16 %v2393, %v2392
        %v2522 = vld [vmem:[%s1] sm:$0xf]
        %v2523 = vld [vmem:[%s1 + $0x4] sm:$0xf]
        %v2524 = vld [vmem:[%s1 + $0x8] sm:$0xf]
        %v2525 = vld [vmem:[%s1 + $0xc] sm:$0xf]
        %v2526 = vld [vmem:[%s1 + $0x10] sm:$0xf]
        %v2527 = vld [vmem:[%s1 + $0x14] sm:$0xf]
        %v2528 = vld [vmem:[%s1 + $0x18] sm:$0xf]
        %v2529 = vld [vmem:[%s1 + $0x1c] sm:$0xf]
        %v2530 = vld [vmem:[%s1 + $0x20] sm:$0xf]
        %v2531 = vld [vmem:[%s1 + $0x24] sm:$0xf]
        %v2532 = vld [vmem:[%s1 + $0x28] sm:$0xf]
        %v2533 = vld [vmem:[%s1 + $0x2c] sm:$0xf]
        %v2534 = vld [vmem:[%s1 + $0x30] sm:$0xf]
        %v2535 = vld [vmem:[%s1 + $0x34] sm:$0xf]
        %v2536 = vld [vmem:[%s1 + $0x38] sm:$0xf]
        %v2537 = vld [vmem:[%s1 + $0x3c] sm:$0xf]
        %v2554 = vunpack.c.l.b16 %v2522
        %v2555 = vunpack.c.l.b16 %v2523
        %v2556 = vunpack.c.l.b16 %v2524
        %v2557 = vunpack.c.l.b16 %v2525
        %v2558 = vunpack.c.l.b16 %v2526
        %v2559 = vunpack.c.l.b16 %v2527
        %v2560 = vunpack.c.l.b16 %v2528
        %v2561 = vunpack.c.l.b16 %v2529
        %v2562 = vunpack.c.l.b16 %v2530
        %v2563 = vunpack.c.l.b16 %v2531
        %v2564 = vunpack.c.l.b16 %v2532
        %v2565 = vunpack.c.l.b16 %v2533
        %v2566 = vunpack.c.l.b16 %v2534
        %v2567 = vunpack.c.l.b16 %v2535
        %v2568 = vunpack.c.l.b16 %v2536
        %v2569 = vunpack.c.l.b16 %v2537
        %v2570 = vpack.c.b16 %v2555, %v2554
        %v2571 = vpack.c.b16 %v2557, %v2556
        %v2572 = vpack.c.b16 %v2559, %v2558
        %v2573 = vpack.c.b16 %v2561, %v2560
        %v2574 = vpack.c.b16 %v2563, %v2562
        %v2575 = vpack.c.b16 %v2565, %v2564
        %v2576 = vpack.c.b16 %v2567, %v2566
        %v2577 = vpack.c.b16 %v2569, %v2568
        %2586 = vmatprep.subr.bf16.mxu0 0
        %2587 = vmatpush1.bf16.msra.mxu0 %v2570
        %2588 = vmatprep.subr.bf16.mxu0 0
        %2589 = vmatpush1.bf16.msra.mxu0 %v2571
        %2590 = vmatprep.subr.bf16.mxu0 0
        %2591 = vmatpush1.bf16.msra.mxu0 %v2572
        %2592 = vmatprep.subr.bf16.mxu0 0
        %2593 = vmatpush1.bf16.msra.mxu0 %v2573
        %2594 = vmatprep.subr.bf16.mxu0 0
        %2595 = vmatpush1.bf16.msra.mxu0 %v2574
        %2596 = vmatprep.subr.bf16.mxu0 0
        %2597 = vmatpush1.bf16.msra.mxu0 %v2575
        %2598 = vmatprep.subr.bf16.mxu0 0
        %2599 = vmatpush1.bf16.msra.mxu0 %v2576
        %2600 = vmatprep.subr.bf16.mxu0 0
        %2601 = vmatpush1.bf16.msra.mxu0 %v2577
        %2602 = vmatprep.subr.bf16.mxu0 0
        %2603 = vmatpush1.bf16.msra.mxu0 0
        %2604 = vmatprep.subr.bf16.mxu0 0
        %2605 = vmatpush1.bf16.msra.mxu0 0
        %2606 = vmatprep.subr.bf16.mxu0 0
        %2607 = vmatpush1.bf16.msra.mxu0 0
        %2608 = vmatprep.subr.bf16.mxu0 0
        %2609 = vmatpush1.bf16.msra.mxu0 0
        %2610 = vmatprep.subr.bf16.mxu0 0
        %2611 = vmatpush1.bf16.msra.mxu0 0
        %2612 = vmatprep.subr.bf16.mxu0 0
        %2613 = vmatpush1.bf16.msra.mxu0 0
        %2614 = vmatprep.subr.bf16.mxu0 0
        %2615 = vmatpush1.bf16.msra.mxu0 0
        %2616 = vmatprep.subr.bf16.mxu0 0
        %2617 = vmatpush1.bf16.msra.mxu0 0
        %2618 = vmatprep.mubr.bf16.mxu0 0
        %2619 = vmatmul.mubr.bf16.gmra.mrb[0].mxu0 %v2394
        %v2620 = vpop.f32.mrb[0].mxu0
        %v2621 = vadd.f32 0.0, %v2620
        %v2622 = vpop.f32.mrb[0].mxu0
        %v2623 = vpop.f32.mrb[0].mxu0
        %v2624 = vadd.f32 0.0, %v2623
        %v2625 = vpop.f32.mrb[0].mxu0
        %2626 = vmatprep.mubr.bf16.mxu0 0
        %2627 = vmatmul.mubr.bf16.gmra.mrb[0].mxu0 %v2395
        %v2628 = vpop.f32.mrb[0].mxu0
        %v2629 = vadd.f32 0.0, %v2628
        %v2630 = vpop.f32.mrb[0].mxu0
        %v2631 = vpop.f32.mrb[0].mxu0
        %v2632 = vadd.f32 0.0, %v2631
        %v2633 = vpop.f32.mrb[0].mxu0
        %2634 = vmatprep.mubr.bf16.mxu0 0
        %2635 = vmatmul.mubr.bf16.gmra.mrb[0].mxu0 %v2396
        %v2636 = vpop.f32.mrb[0].mxu0
        %v2637 = vadd.f32 0.0, %v2636
        %v2638 = vpop.f32.mrb[0].mxu0
        %v2639 = vpop.f32.mrb[0].mxu0
        %v2640 = vadd.f32 0.0, %v2639
        %v2641 = vpop.f32.mrb[0].mxu0
        %2642 = vmatprep.mubr.bf16.mxu0 0
        %2643 = vmatmul.mubr.bf16.gmra.mrb[0].mxu0 %v2397
        %v2644 = vpop.f32.mrb[0].mxu0
        %v2645 = vadd.f32 0.0, %v2644
        %v2646 = vpop.f32.mrb[0].mxu0
        %v2647 = vpop.f32.mrb[0].mxu0
        %v2648 = vadd.f32 0.0, %v2647
        %v2649 = vpop.f32.mrb[0].mxu0
        %2650 = vmatprep.mubr.bf16.mxu0 0
        %2651 = vmatmul.mubr.bf16.gmra.mrb[0].mxu0 %v2398
        %v2652 = vpop.f32.mrb[0].mxu0
        %v2653 = vadd.f32 0.0, %v2652
        %v2654 = vpop.f32.mrb[0].mxu0
        %v2655 = vpop.f32.mrb[0].mxu0
        %v2656 = vadd.f32 0.0, %v2655
        %v2657 = vpop.f32.mrb[0].mxu0
        %2658 = vmatprep.mubr.bf16.mxu0 0
        %2659 = vmatmul.mubr.bf16.gmra.mrb[0].mxu0 %v2399
        %v2660 = vpop.f32.mrb[0].mxu0
        %v2661 = vadd.f32 0.0, %v2660
        %v2662 = vpop.f32.mrb[0].mxu0
        %v2663 = vpop.f32.mrb[0].mxu0
        %v2664 = vadd.f32 0.0, %v2663
        %v2665 = vpop.f32.mrb[0].mxu0
        %2666 = vmatprep.mubr.bf16.mxu0 0
        %2667 = vmatmul.mubr.bf16.gmra.mrb[0].mxu0 %v2400
        %v2668 = vpop.f32.mrb[0].mxu0
        %v2669 = vadd.f32 0.0, %v2668
        %v2670 = vpop.f32.mrb[0].mxu0
        %v2671 = vpop.f32.mrb[0].mxu0
        %v2672 = vadd.f32 0.0, %v2671
        %v2673 = vpop.f32.mrb[0].mxu0
        %2674 = vmatprep.mubr.bf16.mxu0 0
        %2675 = vmatmul.mubr.bf16.gmra.mrb[0].mxu0 %v2401
        %v2676 = vpop.f32.mrb[0].mxu0
        %v2677 = vadd.f32 0.0, %v2676
        %v2678 = vpop.f32.mrb[0].mxu0
        %v2679 = vpop.f32.mrb[0].mxu0
        %v2680 = vadd.f32 0.0, %v2679
        %v2681 = vpop.f32.mrb[0].mxu0
        %2682 = vmatprep.mubr.bf16.mxu0 0
        %2683 = vmatmul.mubr.bf16.gmra.mrb[0].mxu0 %v2402
        %v2684 = vpop.f32.mrb[0].mxu0
        %v2685 = vadd.f32 0.0, %v2684
        %v2686 = vpop.f32.mrb[0].mxu0
        %v2687 = vpop.f32.mrb[0].mxu0
        %v2688 = vadd.f32 0.0, %v2687
        %v2689 = vpop.f32.mrb[0].mxu0
        %2690 = vmatprep.mubr.bf16.mxu0 0
        %2691 = vmatmul.mubr.bf16.gmra.mrb[0].mxu0 %v2403
        %v2692 = vpop.f32.mrb[0].mxu0
        %v2693 = vadd.f32 0.0, %v2692
        %v2694 = vpop.f32.mrb[0].mxu0
        %v2695 = vpop.f32.mrb[0].mxu0
        %v2696 = vadd.f32 0.0, %v2695
        %v2697 = vpop.f32.mrb[0].mxu0
        %2698 = vmatprep.mubr.bf16.mxu0 0
        %2699 = vmatmul.mubr.bf16.gmra.mrb[0].mxu0 %v2404
        %v2700 = vpop.f32.mrb[0].mxu0
        %v2701 = vadd.f32 0.0, %v2700
        %v2702 = vpop.f32.mrb[0].mxu0
        %v2703 = vpop.f32.mrb[0].mxu0
        %v2704 = vadd.f32 0.0, %v2703
        %v2705 = vpop.f32.mrb[0].mxu0
        %2706 = vmatprep.mubr.bf16.mxu0 0
        %2707 = vmatmul.mubr.bf16.gmra.mrb[0].mxu0 %v2405
        %v2708 = vpop.f32.mrb[0].mxu0
        %v2709 = vadd.f32 0.0, %v2708
        %v2710 = vpop.f32.mrb[0].mxu0
        %v2711 = vpop.f32.mrb[0].mxu0
        %v2712 = vadd.f32 0.0, %v2711
        %v2713 = vpop.f32.mrb[0].mxu0
        %2714 = vmatprep.mubr.bf16.mxu0 0
        %2715 = vmatmul.mubr.bf16.gmra.mrb[0].mxu0 %v2406
        %v2716 = vpop.f32.mrb[0].mxu0
        %v2717 = vadd.f32 0.0, %v2716
        %v2718 = vpop.f32.mrb[0].mxu0
        %v2719 = vpop.f32.mrb[0].mxu0
        %v2720 = vadd.f32 0.0, %v2719
        %v2721 = vpop.f32.mrb[0].mxu0
        %2722 = vmatprep.mubr.bf16.mxu0 0
        %2723 = vmatmul.mubr.bf16.gmra.mrb[0].mxu0 %v2407
        %v2724 = vpop.f32.mrb[0].mxu0
        %v2725 = vadd.f32 0.0, %v2724
        %v2726 = vpop.f32.mrb[0].mxu0
        %v2727 = vpop.f32.mrb[0].mxu0
        %v2728 = vadd.f32 0.0, %v2727
        %v2729 = vpop.f32.mrb[0].mxu0
        %2730 = vmatprep.mubr.bf16.mxu0 0
        %2731 = vmatmul.mubr.bf16.gmra.mrb[0].mxu0 %v2408
        %v2732 = vpop.f32.mrb[0].mxu0
        %v2733 = vadd.f32 0.0, %v2732
        %v2734 = vpop.f32.mrb[0].mxu0
        %v2735 = vpop.f32.mrb[0].mxu0
        %v2736 = vadd.f32 0.0, %v2735
        %v2737 = vpop.f32.mrb[0].mxu0
        %2738 = vmatprep.mubr.bf16.mxu0 0
        %2739 = vmatmul.mubr.bf16.gmra.mrb[0].mxu0 %v2409
        %v2740 = vpop.f32.mrb[0].mxu0
        %v2741 = vadd.f32 0.0, %v2740
        %v2742 = vpop.f32.mrb[0].mxu0
        %v2743 = vpop.f32.mrb[0].mxu0
        %v2744 = vadd.f32 0.0, %v2743
        %v2745 = vpop.f32.mrb[0].mxu0
        %2746 = vmatprep.mubr.bf16.mxu0 0
        %2747 = vmatmul.mubr.bf16.gmra.mrb[0].mxu0 %v2410
        %v2748 = vpop.f32.mrb[0].mxu0
        %v2749 = vadd.f32 0.0, %v2748
        %v2750 = vpop.f32.mrb[0].mxu0
        %v2751 = vpop.f32.mrb[0].mxu0
        %v2752 = vadd.f32 0.0, %v2751
        %v2753 = vpop.f32.mrb[0].mxu0
        %2754 = vmatprep.mubr.bf16.mxu0 0
        %2755 = vmatmul.mubr.bf16.gmra.mrb[0].mxu0 %v2411
        %v2756 = vpop.f32.mrb[0].mxu0
        %v2757 = vadd.f32 0.0, %v2756
        %v2758 = vpop.f32.mrb[0].mxu0
        %v2759 = vpop.f32.mrb[0].mxu0
        %v2760 = vadd.f32 0.0, %v2759
        %v2761 = vpop.f32.mrb[0].mxu0
        %2762 = vmatprep.mubr.bf16.mxu0 0
        %2763 = vmatmul.mubr.bf16.gmra.mrb[0].mxu0 %v2412
        %v2764 = vpop.f32.mrb[0].mxu0
        %v2765 = vadd.f32 0.0, %v2764
        %v2766 = vpop.f32.mrb[0].mxu0
        %v2767 = vpop.f32.mrb[0].mxu0
        %v2768 = vadd.f32 0.0, %v2767
        %v2769 = vpop.f32.mrb[0].mxu0
        %2770 = vmatprep.mubr.bf16.mxu0 0
        %2771 = vmatmul.mubr.bf16.gmra.mrb[0].mxu0 %v2413
        %v2772 = vpop.f32.mrb[0].mxu0
        %v2773 = vadd.f32 0.0, %v2772
        %v2774 = vpop.f32.mrb[0].mxu0
        %v2775 = vpop.f32.mrb[0].mxu0
        %v2776 = vadd.f32 0.0, %v2775
        %v2777 = vpop.f32.mrb[0].mxu0
        %2778 = vmatprep.mubr.bf16.mxu0 0
        %2779 = vmatmul.mubr.bf16.gmra.mrb[0].mxu0 %v2414
        %v2780 = vpop.f32.mrb[0].mxu0
        %v2781 = vadd.f32 0.0, %v2780
        %v2782 = vpop.f32.mrb[0].mxu0
        %v2783 = vpop.f32.mrb[0].mxu0
        %v2784 = vadd.f32 0.0, %v2783
        %v2785 = vpop.f32.mrb[0].mxu0
        %2786 = vmatprep.mubr.bf16.mxu0 0
        %2787 = vmatmul.mubr.bf16.gmra.mrb[0].mxu0 %v2415
        %v2788 = vpop.f32.mrb[0].mxu0
        %v2789 = vadd.f32 0.0, %v2788
        %v2790 = vpop.f32.mrb[0].mxu0
        %v2791 = vpop.f32.mrb[0].mxu0
        %v2792 = vadd.f32 0.0, %v2791
        %v2793 = vpop.f32.mrb[0].mxu0
        %2794 = vmatprep.mubr.bf16.mxu0 0
        %2795 = vmatmul.mubr.bf16.gmra.mrb[0].mxu0 %v2416
        %v2796 = vpop.f32.mrb[0].mxu0
        %v2797 = vadd.f32 0.0, %v2796
        %v2798 = vpop.f32.mrb[0].mxu0
        %v2799 = vpop.f32.mrb[0].mxu0
        %v2800 = vadd.f32 0.0, %v2799
        %v2801 = vpop.f32.mrb[0].mxu0
        %2802 = vmatprep.mubr.bf16.mxu0 0
        %2803 = vmatmul.mubr.bf16.gmra.mrb[0].mxu0 %v2417
        %v2804 = vpop.f32.mrb[0].mxu0
        %v2805 = vadd.f32 0.0, %v2804
        %v2806 = vpop.f32.mrb[0].mxu0
        %v2807 = vpop.f32.mrb[0].mxu0
        %v2808 = vadd.f32 0.0, %v2807
        %v2809 = vpop.f32.mrb[0].mxu0
        %2810 = vmatprep.mubr.bf16.mxu0 0
        %2811 = vmatmul.mubr.bf16.gmra.mrb[0].mxu0 %v2418
        %v2812 = vpop.f32.mrb[0].mxu0
        %v2813 = vadd.f32 0.0, %v2812
        %v2814 = vpop.f32.mrb[0].mxu0
        %v2815 = vpop.f32.mrb[0].mxu0
        %v2816 = vadd.f32 0.0, %v2815
        %v2817 = vpop.f32.mrb[0].mxu0
        %2818 = vmatprep.mubr.bf16.mxu0 0
        %2819 = vmatmul.mubr.bf16.gmra.mrb[0].mxu0 %v2419
        %v2820 = vpop.f32.mrb[0].mxu0
        %v2821 = vadd.f32 0.0, %v2820
        %v2822 = vpop.f32.mrb[0].mxu0
        %v2823 = vpop.f32.mrb[0].mxu0
        %v2824 = vadd.f32 0.0, %v2823
        %v2825 = vpop.f32.mrb[0].mxu0
        %2826 = vmatprep.mubr.bf16.mxu0 0
        %2827 = vmatmul.mubr.bf16.gmra.mrb[0].mxu0 %v2420
        %v2828 = vpop.f32.mrb[0].mxu0
        %v2829 = vadd.f32 0.0, %v2828
        %v2830 = vpop.f32.mrb[0].mxu0
        %v2831 = vpop.f32.mrb[0].mxu0
        %v2832 = vadd.f32 0.0, %v2831
        %v2833 = vpop.f32.mrb[0].mxu0
        %2834 = vmatprep.mubr.bf16.mxu0 0
        %2835 = vmatmul.mubr.bf16.gmra.mrb[0].mxu0 %v2421
        %v2836 = vpop.f32.mrb[0].mxu0
        %v2837 = vadd.f32 0.0, %v2836
        %v2838 = vpop.f32.mrb[0].mxu0
        %v2839 = vpop.f32.mrb[0].mxu0
        %v2840 = vadd.f32 0.0, %v2839
        %v2841 = vpop.f32.mrb[0].mxu0
        %2842 = vmatprep.mubr.bf16.mxu0 0
        %2843 = vmatmul.mubr.bf16.gmra.mrb[0].mxu0 %v2422
        %v2844 = vpop.f32.mrb[0].mxu0
        %v2845 = vadd.f32 0.0, %v2844
        %v2846 = vpop.f32.mrb[0].mxu0
        %v2847 = vpop.f32.mrb[0].mxu0
        %v2848 = vadd.f32 0.0, %v2847
        %v2849 = vpop.f32.mrb[0].mxu0
        %2850 = vmatprep.mubr.bf16.mxu0 0
        %2851 = vmatmul.mubr.bf16.gmra.mrb[0].mxu0 %v2423
        %v2852 = vpop.f32.mrb[0].mxu0
        %v2853 = vadd.f32 0.0, %v2852
        %v2854 = vpop.f32.mrb[0].mxu0
        %v2855 = vpop.f32.mrb[0].mxu0
        %v2856 = vadd.f32 0.0, %v2855
        %v2857 = vpop.f32.mrb[0].mxu0
        %2858 = vmatprep.mubr.bf16.mxu0 0
        %2859 = vmatmul.mubr.bf16.gmra.mrb[0].mxu0 %v2424
        %v2860 = vpop.f32.mrb[0].mxu0
        %v2861 = vadd.f32 0.0, %v2860
        %v2862 = vpop.f32.mrb[0].mxu0
        %v2863 = vpop.f32.mrb[0].mxu0
        %v2864 = vadd.f32 0.0, %v2863
        %v2865 = vpop.f32.mrb[0].mxu0
        %2866 = vmatprep.mubr.bf16.mxu0 0
        %2867 = vmatmul.mubr.bf16.gmra.mrb[0].mxu0 %v2425
        %v2868 = vpop.f32.mrb[0].mxu0
        %v2869 = vadd.f32 0.0, %v2868
        %v2870 = vpop.f32.mrb[0].mxu0
        %v2871 = vpop.f32.mrb[0].mxu0
        %v2872 = vadd.f32 0.0, %v2871
        %v2873 = vpop.f32.mrb[0].mxu0
        %2874 = vmatprep.mubr.bf16.mxu0 0
        %2875 = vmatmul.mubr.bf16.gmra.mrb[0].mxu0 %v2426
        %v2876 = vpop.f32.mrb[0].mxu0
        %v2877 = vadd.f32 0.0, %v2876
        %v2878 = vpop.f32.mrb[0].mxu0
        %v2879 = vpop.f32.mrb[0].mxu0
        %v2880 = vadd.f32 0.0, %v2879
        %v2881 = vpop.f32.mrb[0].mxu0
        %2882 = vmatprep.mubr.bf16.mxu0 0
        %2883 = vmatmul.mubr.bf16.gmra.mrb[0].mxu0 %v2427
        %v2884 = vpop.f32.mrb[0].mxu0
        %v2885 = vadd.f32 0.0, %v2884
        %v2886 = vpop.f32.mrb[0].mxu0
        %v2887 = vpop.f32.mrb[0].mxu0
        %v2888 = vadd.f32 0.0, %v2887
        %v2889 = vpop.f32.mrb[0].mxu0
        %2890 = vmatprep.mubr.bf16.mxu0 0
        %2891 = vmatmul.mubr.bf16.gmra.mrb[0].mxu0 %v2428
        %v2892 = vpop.f32.mrb[0].mxu0
        %v2893 = vadd.f32 0.0, %v2892
        %v2894 = vpop.f32.mrb[0].mxu0
        %v2895 = vpop.f32.mrb[0].mxu0
        %v2896 = vadd.f32 0.0, %v2895
        %v2897 = vpop.f32.mrb[0].mxu0
        %2898 = vmatprep.mubr.bf16.mxu0 0
        %2899 = vmatmul.mubr.bf16.gmra.mrb[0].mxu0 %v2429
        %v2900 = vpop.f32.mrb[0].mxu0
        %v2901 = vadd.f32 0.0, %v2900
        %v2902 = vpop.f32.mrb[0].mxu0
        %v2903 = vpop.f32.mrb[0].mxu0
        %v2904 = vadd.f32 0.0, %v2903
        %v2905 = vpop.f32.mrb[0].mxu0
        %2906 = vmatprep.mubr.bf16.mxu0 0
        %2907 = vmatmul.mubr.bf16.gmra.mrb[0].mxu0 %v2430
        %v2908 = vpop.f32.mrb[0].mxu0
        %v2909 = vadd.f32 0.0, %v2908
        %v2910 = vpop.f32.mrb[0].mxu0
        %v2911 = vpop.f32.mrb[0].mxu0
        %v2912 = vadd.f32 0.0, %v2911
        %v2913 = vpop.f32.mrb[0].mxu0
        %2914 = vmatprep.mubr.bf16.mxu0 0
        %2915 = vmatmul.mubr.bf16.gmra.mrb[0].mxu0 %v2431
        %v2916 = vpop.f32.mrb[0].mxu0
        %v2917 = vadd.f32 0.0, %v2916
        %v2918 = vpop.f32.mrb[0].mxu0
        %v2919 = vpop.f32.mrb[0].mxu0
        %v2920 = vadd.f32 0.0, %v2919
        %v2921 = vpop.f32.mrb[0].mxu0
        %2922 = vmatprep.mubr.bf16.mxu0 0
        %2923 = vmatmul.mubr.bf16.gmra.mrb[0].mxu0 %v2432
        %v2924 = vpop.f32.mrb[0].mxu0
        %v2925 = vadd.f32 0.0, %v2924
        %v2926 = vpop.f32.mrb[0].mxu0
        %v2927 = vpop.f32.mrb[0].mxu0
        %v2928 = vadd.f32 0.0, %v2927
        %v2929 = vpop.f32.mrb[0].mxu0
        %2930 = vmatprep.mubr.bf16.mxu0 0
        %2931 = vmatmul.mubr.bf16.gmra.mrb[0].mxu0 %v2433
        %v2932 = vpop.f32.mrb[0].mxu0
        %v2933 = vadd.f32 0.0, %v2932
        %v2934 = vpop.f32.mrb[0].mxu0
        %v2935 = vpop.f32.mrb[0].mxu0
        %v2936 = vadd.f32 0.0, %v2935
        %v2937 = vpop.f32.mrb[0].mxu0
        %2938 = vmatprep.mubr.bf16.mxu0 0
        %2939 = vmatmul.mubr.bf16.gmra.mrb[0].mxu0 %v2434
        %v2940 = vpop.f32.mrb[0].mxu0
        %v2941 = vadd.f32 0.0, %v2940
        %v2942 = vpop.f32.mrb[0].mxu0
        %v2943 = vpop.f32.mrb[0].mxu0
        %v2944 = vadd.f32 0.0, %v2943
        %v2945 = vpop.f32.mrb[0].mxu0
        %2946 = vmatprep.mubr.bf16.mxu0 0
        %2947 = vmatmul.mubr.bf16.gmra.mrb[0].mxu0 %v2435
        %v2948 = vpop.f32.mrb[0].mxu0
        %v2949 = vadd.f32 0.0, %v2948
        %v2950 = vpop.f32.mrb[0].mxu0
        %v2951 = vpop.f32.mrb[0].mxu0
        %v2952 = vadd.f32 0.0, %v2951
        %v2953 = vpop.f32.mrb[0].mxu0
        %2954 = vmatprep.mubr.bf16.mxu0 0
        %2955 = vmatmul.mubr.bf16.gmra.mrb[0].mxu0 %v2436
        %v2956 = vpop.f32.mrb[0].mxu0
        %v2957 = vadd.f32 0.0, %v2956
        %v2958 = vpop.f32.mrb[0].mxu0
        %v2959 = vpop.f32.mrb[0].mxu0
        %v2960 = vadd.f32 0.0, %v2959
        %v2961 = vpop.f32.mrb[0].mxu0
        %2962 = vmatprep.mubr.bf16.mxu0 0
        %2963 = vmatmul.mubr.bf16.gmra.mrb[0].mxu0 %v2437
        %v2964 = vpop.f32.mrb[0].mxu0
        %v2965 = vadd.f32 0.0, %v2964
        %v2966 = vpop.f32.mrb[0].mxu0
        %v2967 = vpop.f32.mrb[0].mxu0
        %v2968 = vadd.f32 0.0, %v2967
        %v2969 = vpop.f32.mrb[0].mxu0
        %2970 = vmatprep.mubr.bf16.mxu0 0
        %2971 = vmatmul.mubr.bf16.gmra.mrb[0].mxu0 %v2438
        %v2972 = vpop.f32.mrb[0].mxu0
        %v2973 = vadd.f32 0.0, %v2972
        %v2974 = vpop.f32.mrb[0].mxu0
        %v2975 = vpop.f32.mrb[0].mxu0
        %v2976 = vadd.f32 0.0, %v2975
        %v2977 = vpop.f32.mrb[0].mxu0
        %2978 = vmatprep.mubr.bf16.mxu0 0
        %2979 = vmatmul.mubr.bf16.gmra.mrb[0].mxu0 %v2439
        %v2980 = vpop.f32.mrb[0].mxu0
        %v2981 = vadd.f32 0.0, %v2980
        %v2982 = vpop.f32.mrb[0].mxu0
        %v2983 = vpop.f32.mrb[0].mxu0
        %v2984 = vadd.f32 0.0, %v2983
        %v2985 = vpop.f32.mrb[0].mxu0
        %2986 = vmatprep.mubr.bf16.mxu0 0
        %2987 = vmatmul.mubr.bf16.gmra.mrb[0].mxu0 %v2440
        %v2988 = vpop.f32.mrb[0].mxu0
        %v2989 = vadd.f32 0.0, %v2988
        %v2990 = vpop.f32.mrb[0].mxu0
        %v2991 = vpop.f32.mrb[0].mxu0
        %v2992 = vadd.f32 0.0, %v2991
        %v2993 = vpop.f32.mrb[0].mxu0
        %2994 = vmatprep.mubr.bf16.mxu0 0
        %2995 = vmatmul.mubr.bf16.gmra.mrb[0].mxu0 %v2441
        %v2996 = vpop.f32.mrb[0].mxu0
        %v2997 = vadd.f32 0.0, %v2996
        %v2998 = vpop.f32.mrb[0].mxu0
        %v2999 = vpop.f32.mrb[0].mxu0
        %v3000 = vadd.f32 0.0, %v2999
        %v3001 = vpop.f32.mrb[0].mxu0
        %3002 = vmatprep.mubr.bf16.mxu0 0
        %3003 = vmatmul.mubr.bf16.gmra.mrb[0].mxu0 %v2442
        %v3004 = vpop.f32.mrb[0].mxu0
        %v3005 = vadd.f32 0.0, %v3004
        %v3006 = vpop.f32.mrb[0].mxu0
        %v3007 = vpop.f32.mrb[0].mxu0
        %v3008 = vadd.f32 0.0, %v3007
        %v3009 = vpop.f32.mrb[0].mxu0
        %3010 = vmatprep.mubr.bf16.mxu0 0
        %3011 = vmatmul.mubr.bf16.gmra.mrb[0].mxu0 %v2443
        %v3012 = vpop.f32.mrb[0].mxu0
        %v3013 = vadd.f32 0.0, %v3012
        %v3014 = vpop.f32.mrb[0].mxu0
        %v3015 = vpop.f32.mrb[0].mxu0
        %v3016 = vadd.f32 0.0, %v3015
        %v3017 = vpop.f32.mrb[0].mxu0
        %3018 = vmatprep.mubr.bf16.mxu0 0
        %3019 = vmatmul.mubr.bf16.gmra.mrb[0].mxu0 %v2444
        %v3020 = vpop.f32.mrb[0].mxu0
        %v3021 = vadd.f32 0.0, %v3020
        %v3022 = vpop.f32.mrb[0].mxu0
        %v3023 = vpop.f32.mrb[0].mxu0
        %v3024 = vadd.f32 0.0, %v3023
        %v3025 = vpop.f32.mrb[0].mxu0
        %3026 = vmatprep.mubr.bf16.mxu0 0
        %3027 = vmatmul.mubr.bf16.gmra.mrb[0].mxu0 %v2445
        %v3028 = vpop.f32.mrb[0].mxu0
        %v3029 = vadd.f32 0.0, %v3028
        %v3030 = vpop.f32.mrb[0].mxu0
        %v3031 = vpop.f32.mrb[0].mxu0
        %v3032 = vadd.f32 0.0, %v3031
        %v3033 = vpop.f32.mrb[0].mxu0
        %3034 = vmatprep.mubr.bf16.mxu0 0
        %3035 = vmatmul.mubr.bf16.gmra.mrb[0].mxu0 %v2446
        %v3036 = vpop.f32.mrb[0].mxu0
        %v3037 = vadd.f32 0.0, %v3036
        %v3038 = vpop.f32.mrb[0].mxu0
        %v3039 = vpop.f32.mrb[0].mxu0
        %v3040 = vadd.f32 0.0, %v3039
        %v3041 = vpop.f32.mrb[0].mxu0
        %3042 = vmatprep.mubr.bf16.mxu0 0
        %3043 = vmatmul.mubr.bf16.gmra.mrb[0].mxu0 %v2447
        %v3044 = vpop.f32.mrb[0].mxu0
        %v3045 = vadd.f32 0.0, %v3044
        %v3046 = vpop.f32.mrb[0].mxu0
        %v3047 = vpop.f32.mrb[0].mxu0
        %v3048 = vadd.f32 0.0, %v3047
        %v3049 = vpop.f32.mrb[0].mxu0
        %3050 = vmatprep.mubr.bf16.mxu0 0
        %3051 = vmatmul.mubr.bf16.gmra.mrb[0].mxu0 %v2448
        %v3052 = vpop.f32.mrb[0].mxu0
        %v3053 = vadd.f32 0.0, %v3052
        %v3054 = vpop.f32.mrb[0].mxu0
        %v3055 = vpop.f32.mrb[0].mxu0
        %v3056 = vadd.f32 0.0, %v3055
        %v3057 = vpop.f32.mrb[0].mxu0
        %3058 = vmatprep.mubr.bf16.mxu0 0
        %3059 = vmatmul.mubr.bf16.gmra.mrb[0].mxu0 %v2449
        %v3060 = vpop.f32.mrb[0].mxu0
        %v3061 = vadd.f32 0.0, %v3060
        %v3062 = vpop.f32.mrb[0].mxu0
        %v3063 = vpop.f32.mrb[0].mxu0
        %v3064 = vadd.f32 0.0, %v3063
        %v3065 = vpop.f32.mrb[0].mxu0
        %3066 = vmatprep.mubr.bf16.mxu0 0
        %3067 = vmatmul.mubr.bf16.gmra.mrb[0].mxu0 %v2450
        %v3068 = vpop.f32.mrb[0].mxu0
        %v3069 = vadd.f32 0.0, %v3068
        %v3070 = vpop.f32.mrb[0].mxu0
        %v3071 = vpop.f32.mrb[0].mxu0
        %v3072 = vadd.f32 0.0, %v3071
        %v3073 = vpop.f32.mrb[0].mxu0
        %3074 = vmatprep.mubr.bf16.mxu0 0
        %3075 = vmatmul.mubr.bf16.gmra.mrb[0].mxu0 %v2451
        %v3076 = vpop.f32.mrb[0].mxu0
        %v3077 = vadd.f32 0.0, %v3076
        %v3078 = vpop.f32.mrb[0].mxu0
        %v3079 = vpop.f32.mrb[0].mxu0
        %v3080 = vadd.f32 0.0, %v3079
        %v3081 = vpop.f32.mrb[0].mxu0
        %3082 = vmatprep.mubr.bf16.mxu0 0
        %3083 = vmatmul.mubr.bf16.gmra.mrb[0].mxu0 %v2452
        %v3084 = vpop.f32.mrb[0].mxu0
        %v3085 = vadd.f32 0.0, %v3084
        %v3086 = vpop.f32.mrb[0].mxu0
        %v3087 = vpop.f32.mrb[0].mxu0
        %v3088 = vadd.f32 0.0, %v3087
        %v3089 = vpop.f32.mrb[0].mxu0
        %3090 = vmatprep.mubr.bf16.mxu0 0
        %3091 = vmatmul.mubr.bf16.gmra.mrb[0].mxu0 %v2453
        %v3092 = vpop.f32.mrb[0].mxu0
        %v3093 = vadd.f32 0.0, %v3092
        %v3094 = vpop.f32.mrb[0].mxu0
        %v3095 = vpop.f32.mrb[0].mxu0
        %v3096 = vadd.f32 0.0, %v3095
        %v3097 = vpop.f32.mrb[0].mxu0
        %3098 = vmatprep.mubr.bf16.mxu0 0
        %3099 = vmatmul.mubr.bf16.gmra.mrb[0].mxu0 %v2454
        %v3100 = vpop.f32.mrb[0].mxu0
        %v3101 = vadd.f32 0.0, %v3100
        %v3102 = vpop.f32.mrb[0].mxu0
        %v3103 = vpop.f32.mrb[0].mxu0
        %v3104 = vadd.f32 0.0, %v3103
        %v3105 = vpop.f32.mrb[0].mxu0
        %3106 = vmatprep.mubr.bf16.mxu0 0
        %3107 = vmatmul.mubr.bf16.gmra.mrb[0].mxu0 %v2455
        %v3108 = vpop.f32.mrb[0].mxu0
        %v3109 = vadd.f32 0.0, %v3108
        %v3110 = vpop.f32.mrb[0].mxu0
        %v3111 = vpop.f32.mrb[0].mxu0
        %v3112 = vadd.f32 0.0, %v3111
        %v3113 = vpop.f32.mrb[0].mxu0
        %3114 = vmatprep.mubr.bf16.mxu0 0
        %3115 = vmatmul.mubr.bf16.gmra.mrb[0].mxu0 %v2456
        %v3116 = vpop.f32.mrb[0].mxu0
        %v3117 = vadd.f32 0.0, %v3116
        %v3118 = vpop.f32.mrb[0].mxu0
        %v3119 = vpop.f32.mrb[0].mxu0
        %v3120 = vadd.f32 0.0, %v3119
        %v3121 = vpop.f32.mrb[0].mxu0
        %3122 = vmatprep.mubr.bf16.mxu0 0
        %3123 = vmatmul.mubr.bf16.gmra.mrb[0].mxu0 %v2457
        %v3124 = vpop.f32.mrb[0].mxu0
        %v3125 = vadd.f32 0.0, %v3124
        %v3126 = vpop.f32.mrb[0].mxu0
        %v3127 = vpop.f32.mrb[0].mxu0
        %v3128 = vadd.f32 0.0, %v3127
        %v3129 = vpop.f32.mrb[0].mxu0
        %3130 = vmatprep.mubr.bf16.mxu0 0
        %3131 = vmatmul.mubr.bf16.gmra.mrb[0].mxu0 %v2458
        %v3132 = vpop.f32.mrb[0].mxu0
        %v3133 = vadd.f32 0.0, %v3132
        %v3134 = vpop.f32.mrb[0].mxu0
        %v3135 = vpop.f32.mrb[0].mxu0
        %v3136 = vadd.f32 0.0, %v3135
        %v3137 = vpop.f32.mrb[0].mxu0
        %3138 = vmatprep.mubr.bf16.mxu0 0
        %3139 = vmatmul.mubr.bf16.gmra.mrb[0].mxu0 %v2459
        %v3140 = vpop.f32.mrb[0].mxu0
        %v3141 = vadd.f32 0.0, %v3140
        %v3142 = vpop.f32.mrb[0].mxu0
        %v3143 = vpop.f32.mrb[0].mxu0
        %v3144 = vadd.f32 0.0, %v3143
        %v3145 = vpop.f32.mrb[0].mxu0
        %3146 = vmatprep.mubr.bf16.mxu0 0
        %3147 = vmatmul.mubr.bf16.gmra.mrb[0].mxu0 %v2460
        %v3148 = vpop.f32.mrb[0].mxu0
        %v3149 = vadd.f32 0.0, %v3148
        %v3150 = vpop.f32.mrb[0].mxu0
        %v3151 = vpop.f32.mrb[0].mxu0
        %v3152 = vadd.f32 0.0, %v3151
        %v3153 = vpop.f32.mrb[0].mxu0
        %3154 = vmatprep.mubr.bf16.mxu0 0
        %3155 = vmatmul.mubr.bf16.gmra.mrb[0].mxu0 %v2461
        %v3156 = vpop.f32.mrb[0].mxu0
        %v3157 = vadd.f32 0.0, %v3156
        %v3158 = vpop.f32.mrb[0].mxu0
        %v3159 = vpop.f32.mrb[0].mxu0
        %v3160 = vadd.f32 0.0, %v3159
        %v3161 = vpop.f32.mrb[0].mxu0
        %3162 = vmatprep.mubr.bf16.mxu0 0
        %3163 = vmatmul.mubr.bf16.gmra.mrb[0].mxu0 %v2462
        %v3164 = vpop.f32.mrb[0].mxu0
        %v3165 = vadd.f32 0.0, %v3164
        %v3166 = vpop.f32.mrb[0].mxu0
        %v3167 = vpop.f32.mrb[0].mxu0
        %v3168 = vadd.f32 0.0, %v3167
        %v3169 = vpop.f32.mrb[0].mxu0
        %3170 = vmatprep.mubr.bf16.mxu0 0
        %3171 = vmatmul.mubr.bf16.gmra.mrb[0].mxu0 %v2463
        %v3172 = vpop.f32.mrb[0].mxu0
        %v3173 = vadd.f32 0.0, %v3172
        %v3174 = vpop.f32.mrb[0].mxu0
        %v3175 = vpop.f32.mrb[0].mxu0
        %v3176 = vadd.f32 0.0, %v3175
        %v3177 = vpop.f32.mrb[0].mxu0
        %3178 = vmatprep.mubr.bf16.mxu0 0
        %3179 = vmatmul.mubr.bf16.gmra.mrb[0].mxu0 %v2464
        %v3180 = vpop.f32.mrb[0].mxu0
        %v3181 = vadd.f32 0.0, %v3180
        %v3182 = vpop.f32.mrb[0].mxu0
        %v3183 = vpop.f32.mrb[0].mxu0
        %v3184 = vadd.f32 0.0, %v3183
        %v3185 = vpop.f32.mrb[0].mxu0
        %3186 = vmatprep.mubr.bf16.mxu0 0
        %3187 = vmatmul.mubr.bf16.gmra.mrb[0].mxu0 %v2465
        %v3188 = vpop.f32.mrb[0].mxu0
        %v3189 = vadd.f32 0.0, %v3188
        %v3190 = vpop.f32.mrb[0].mxu0
        %v3191 = vpop.f32.mrb[0].mxu0
        %v3192 = vadd.f32 0.0, %v3191
        %v3193 = vpop.f32.mrb[0].mxu0
        %3194 = vmatprep.mubr.bf16.mxu0 0
        %3195 = vmatmul.mubr.bf16.gmra.mrb[0].mxu0 %v2466
        %v3196 = vpop.f32.mrb[0].mxu0
        %v3197 = vadd.f32 0.0, %v3196
        %v3198 = vpop.f32.mrb[0].mxu0
        %v3199 = vpop.f32.mrb[0].mxu0
        %v3200 = vadd.f32 0.0, %v3199
        %v3201 = vpop.f32.mrb[0].mxu0
        %3202 = vmatprep.mubr.bf16.mxu0 0
        %3203 = vmatmul.mubr.bf16.gmra.mrb[0].mxu0 %v2467
        %v3204 = vpop.f32.mrb[0].mxu0
        %v3205 = vadd.f32 0.0, %v3204
        %v3206 = vpop.f32.mrb[0].mxu0
        %v3207 = vpop.f32.mrb[0].mxu0
        %v3208 = vadd.f32 0.0, %v3207
        %v3209 = vpop.f32.mrb[0].mxu0
        %3210 = vmatprep.mubr.bf16.mxu0 0
        %3211 = vmatmul.mubr.bf16.gmra.mrb[0].mxu0 %v2468
        %v3212 = vpop.f32.mrb[0].mxu0
        %v3213 = vadd.f32 0.0, %v3212
        %v3214 = vpop.f32.mrb[0].mxu0
        %v3215 = vpop.f32.mrb[0].mxu0
        %v3216 = vadd.f32 0.0, %v3215
        %v3217 = vpop.f32.mrb[0].mxu0
        %3218 = vmatprep.mubr.bf16.mxu0 0
        %3219 = vmatmul.mubr.bf16.gmra.mrb[0].mxu0 %v2469
        %v3220 = vpop.f32.mrb[0].mxu0
        %v3221 = vadd.f32 0.0, %v3220
        %v3222 = vpop.f32.mrb[0].mxu0
        %v3223 = vpop.f32.mrb[0].mxu0
        %v3224 = vadd.f32 0.0, %v3223
        %v3225 = vpop.f32.mrb[0].mxu0
        %3226 = vmatprep.mubr.bf16.mxu0 0
        %3227 = vmatmul.mubr.bf16.gmra.mrb[0].mxu0 %v2470
        %v3228 = vpop.f32.mrb[0].mxu0
        %v3229 = vadd.f32 0.0, %v3228
        %v3230 = vpop.f32.mrb[0].mxu0
        %v3231 = vpop.f32.mrb[0].mxu0
        %v3232 = vadd.f32 0.0, %v3231
        %v3233 = vpop.f32.mrb[0].mxu0
        %3234 = vmatprep.mubr.bf16.mxu0 0
        %3235 = vmatmul.mubr.bf16.gmra.mrb[0].mxu0 %v2471
        %v3236 = vpop.f32.mrb[0].mxu0
        %v3237 = vadd.f32 0.0, %v3236
        %v3238 = vpop.f32.mrb[0].mxu0
        %v3239 = vpop.f32.mrb[0].mxu0
        %v3240 = vadd.f32 0.0, %v3239
        %v3241 = vpop.f32.mrb[0].mxu0
        %3242 = vmatprep.mubr.bf16.mxu0 0
        %3243 = vmatmul.mubr.bf16.gmra.mrb[0].mxu0 %v2472
        %v3244 = vpop.f32.mrb[0].mxu0
        %v3245 = vadd.f32 0.0, %v3244
        %v3246 = vpop.f32.mrb[0].mxu0
        %v3247 = vpop.f32.mrb[0].mxu0
        %v3248 = vadd.f32 0.0, %v3247
        %v3249 = vpop.f32.mrb[0].mxu0
        %3250 = vmatprep.mubr.bf16.mxu0 0
        %3251 = vmatmul.mubr.bf16.gmra.mrb[0].mxu0 %v2473
        %v3252 = vpop.f32.mrb[0].mxu0
        %v3253 = vadd.f32 0.0, %v3252
        %v3254 = vpop.f32.mrb[0].mxu0
        %v3255 = vpop.f32.mrb[0].mxu0
        %v3256 = vadd.f32 0.0, %v3255
        %v3257 = vpop.f32.mrb[0].mxu0
        %3258 = vmatprep.mubr.bf16.mxu0 0
        %3259 = vmatmul.mubr.bf16.gmra.mrb[0].mxu0 %v2474
        %v3260 = vpop.f32.mrb[0].mxu0
        %v3261 = vadd.f32 0.0, %v3260
        %v3262 = vpop.f32.mrb[0].mxu0
        %v3263 = vpop.f32.mrb[0].mxu0
        %v3264 = vadd.f32 0.0, %v3263
        %v3265 = vpop.f32.mrb[0].mxu0
        %3266 = vmatprep.mubr.bf16.mxu0 0
        %3267 = vmatmul.mubr.bf16.gmra.mrb[0].mxu0 %v2475
        %v3268 = vpop.f32.mrb[0].mxu0
        %v3269 = vadd.f32 0.0, %v3268
        %v3270 = vpop.f32.mrb[0].mxu0
        %v3271 = vpop.f32.mrb[0].mxu0
        %v3272 = vadd.f32 0.0, %v3271
        %v3273 = vpop.f32.mrb[0].mxu0
        %3274 = vmatprep.mubr.bf16.mxu0 0
        %3275 = vmatmul.mubr.bf16.gmra.mrb[0].mxu0 %v2476
        %v3276 = vpop.f32.mrb[0].mxu0
        %v3277 = vadd.f32 0.0, %v3276
        %v3278 = vpop.f32.mrb[0].mxu0
        %v3279 = vpop.f32.mrb[0].mxu0
        %v3280 = vadd.f32 0.0, %v3279
        %v3281 = vpop.f32.mrb[0].mxu0
        %3282 = vmatprep.mubr.bf16.mxu0 0
        %3283 = vmatmul.mubr.bf16.gmra.mrb[0].mxu0 %v2477
        %v3284 = vpop.f32.mrb[0].mxu0
        %v3285 = vadd.f32 0.0, %v3284
        %v3286 = vpop.f32.mrb[0].mxu0
        %v3287 = vpop.f32.mrb[0].mxu0
        %v3288 = vadd.f32 0.0, %v3287
        %v3289 = vpop.f32.mrb[0].mxu0
        %3290 = vmatprep.mubr.bf16.mxu0 0
        %3291 = vmatmul.mubr.bf16.gmra.mrb[0].mxu0 %v2478
        %v3292 = vpop.f32.mrb[0].mxu0
        %v3293 = vadd.f32 0.0, %v3292
        %v3294 = vpop.f32.mrb[0].mxu0
        %v3295 = vpop.f32.mrb[0].mxu0
        %v3296 = vadd.f32 0.0, %v3295
        %v3297 = vpop.f32.mrb[0].mxu0
        %3298 = vmatprep.mubr.bf16.mxu0 0
        %3299 = vmatmul.mubr.bf16.gmra.mrb[0].mxu0 %v2479
        %v3300 = vpop.f32.mrb[0].mxu0
        %v3301 = vadd.f32 0.0, %v3300
        %v3302 = vpop.f32.mrb[0].mxu0
        %v3303 = vpop.f32.mrb[0].mxu0
        %v3304 = vadd.f32 0.0, %v3303
        %v3305 = vpop.f32.mrb[0].mxu0
        %3306 = vmatprep.mubr.bf16.mxu0 0
        %3307 = vmatmul.mubr.bf16.gmra.mrb[0].mxu0 %v2480
        %v3308 = vpop.f32.mrb[0].mxu0
        %v3309 = vadd.f32 0.0, %v3308
        %v3310 = vpop.f32.mrb[0].mxu0
        %v3311 = vpop.f32.mrb[0].mxu0
        %v3312 = vadd.f32 0.0, %v3311
        %v3313 = vpop.f32.mrb[0].mxu0
        %3314 = vmatprep.mubr.bf16.mxu0 0
        %3315 = vmatmul.mubr.bf16.gmra.mrb[0].mxu0 %v2481
        %v3316 = vpop.f32.mrb[0].mxu0
        %v3317 = vadd.f32 0.0, %v3316
        %v3318 = vpop.f32.mrb[0].mxu0
        %v3319 = vpop.f32.mrb[0].mxu0
        %v3320 = vadd.f32 0.0, %v3319
        %v3321 = vpop.f32.mrb[0].mxu0
        %3322 = vmatprep.mubr.bf16.mxu0 0
        %3323 = vmatmul.mubr.bf16.gmra.mrb[0].mxu0 %v2482
        %v3324 = vpop.f32.mrb[0].mxu0
        %v3325 = vadd.f32 0.0, %v3324
        %v3326 = vpop.f32.mrb[0].mxu0
        %v3327 = vpop.f32.mrb[0].mxu0
        %v3328 = vadd.f32 0.0, %v3327
        %v3329 = vpop.f32.mrb[0].mxu0
        %3330 = vmatprep.mubr.bf16.mxu0 0
        %3331 = vmatmul.mubr.bf16.gmra.mrb[0].mxu0 %v2483
        %v3332 = vpop.f32.mrb[0].mxu0
        %v3333 = vadd.f32 0.0, %v3332
        %v3334 = vpop.f32.mrb[0].mxu0
        %v3335 = vpop.f32.mrb[0].mxu0
        %v3336 = vadd.f32 0.0, %v3335
        %v3337 = vpop.f32.mrb[0].mxu0
        %3338 = vmatprep.mubr.bf16.mxu0 0
        %3339 = vmatmul.mubr.bf16.gmra.mrb[0].mxu0 %v2484
        %v3340 = vpop.f32.mrb[0].mxu0
        %v3341 = vadd.f32 0.0, %v3340
        %v3342 = vpop.f32.mrb[0].mxu0
        %v3343 = vpop.f32.mrb[0].mxu0
        %v3344 = vadd.f32 0.0, %v3343
        %v3345 = vpop.f32.mrb[0].mxu0
        %3346 = vmatprep.mubr.bf16.mxu0 0
        %3347 = vmatmul.mubr.bf16.gmra.mrb[0].mxu0 %v2485
        %v3348 = vpop.f32.mrb[0].mxu0
        %v3349 = vadd.f32 0.0, %v3348
        %v3350 = vpop.f32.mrb[0].mxu0
        %v3351 = vpop.f32.mrb[0].mxu0
        %v3352 = vadd.f32 0.0, %v3351
        %v3353 = vpop.f32.mrb[0].mxu0
        %3354 = vmatprep.mubr.bf16.mxu0 0
        %3355 = vmatmul.mubr.bf16.gmra.mrb[0].mxu0 %v2486
        %v3356 = vpop.f32.mrb[0].mxu0
        %v3357 = vadd.f32 0.0, %v3356
        %v3358 = vpop.f32.mrb[0].mxu0
        %v3359 = vpop.f32.mrb[0].mxu0
        %v3360 = vadd.f32 0.0, %v3359
        %v3361 = vpop.f32.mrb[0].mxu0
        %3362 = vmatprep.mubr.bf16.mxu0 0
        %3363 = vmatmul.mubr.bf16.gmra.mrb[0].mxu0 %v2487
        %v3364 = vpop.f32.mrb[0].mxu0
        %v3365 = vadd.f32 0.0, %v3364
        %v3366 = vpop.f32.mrb[0].mxu0
        %v3367 = vpop.f32.mrb[0].mxu0
        %v3368 = vadd.f32 0.0, %v3367
        %v3369 = vpop.f32.mrb[0].mxu0
        %3370 = vmatprep.mubr.bf16.mxu0 0
        %3371 = vmatmul.mubr.bf16.gmra.mrb[0].mxu0 %v2488
        %v3372 = vpop.f32.mrb[0].mxu0
        %v3373 = vadd.f32 0.0, %v3372
        %v3374 = vpop.f32.mrb[0].mxu0
        %v3375 = vpop.f32.mrb[0].mxu0
        %v3376 = vadd.f32 0.0, %v3375
        %v3377 = vpop.f32.mrb[0].mxu0
        %3378 = vmatprep.mubr.bf16.mxu0 0
        %3379 = vmatmul.mubr.bf16.gmra.mrb[0].mxu0 %v2489
        %v3380 = vpop.f32.mrb[0].mxu0
        %v3381 = vadd.f32 0.0, %v3380
        %v3382 = vpop.f32.mrb[0].mxu0
        %v3383 = vpop.f32.mrb[0].mxu0
        %v3384 = vadd.f32 0.0, %v3383
        %v3385 = vpop.f32.mrb[0].mxu0
        %3386 = vmatprep.mubr.bf16.mxu0 0
        %3387 = vmatmul.mubr.bf16.gmra.mrb[0].mxu0 %v2490
        %v3388 = vpop.f32.mrb[0].mxu0
        %v3389 = vadd.f32 0.0, %v3388
        %v3390 = vpop.f32.mrb[0].mxu0
        %v3391 = vpop.f32.mrb[0].mxu0
        %v3392 = vadd.f32 0.0, %v3391
        %v3393 = vpop.f32.mrb[0].mxu0
        %3394 = vmatprep.mubr.bf16.mxu0 0
        %3395 = vmatmul.mubr.bf16.gmra.mrb[0].mxu0 %v2491
        %v3396 = vpop.f32.mrb[0].mxu0
        %v3397 = vadd.f32 0.0, %v3396
        %v3398 = vpop.f32.mrb[0].mxu0
        %v3399 = vpop.f32.mrb[0].mxu0
        %v3400 = vadd.f32 0.0, %v3399
        %v3401 = vpop.f32.mrb[0].mxu0
        %3402 = vmatprep.mubr.bf16.mxu0 0
        %3403 = vmatmul.mubr.bf16.gmra.mrb[0].mxu0 %v2492
        %v3404 = vpop.f32.mrb[0].mxu0
        %v3405 = vadd.f32 0.0, %v3404
        %v3406 = vpop.f32.mrb[0].mxu0
        %v3407 = vpop.f32.mrb[0].mxu0
        %v3408 = vadd.f32 0.0, %v3407
        %v3409 = vpop.f32.mrb[0].mxu0
        %3410 = vmatprep.mubr.bf16.mxu0 0
        %3411 = vmatmul.mubr.bf16.gmra.mrb[0].mxu0 %v2493
        %v3412 = vpop.f32.mrb[0].mxu0
        %v3413 = vadd.f32 0.0, %v3412
        %v3414 = vpop.f32.mrb[0].mxu0
        %v3415 = vpop.f32.mrb[0].mxu0
        %v3416 = vadd.f32 0.0, %v3415
        %v3417 = vpop.f32.mrb[0].mxu0
        %3418 = vmatprep.mubr.bf16.mxu0 0
        %3419 = vmatmul.mubr.bf16.gmra.mrb[0].mxu0 %v2494
        %v3420 = vpop.f32.mrb[0].mxu0
        %v3421 = vadd.f32 0.0, %v3420
        %v3422 = vpop.f32.mrb[0].mxu0
        %v3423 = vpop.f32.mrb[0].mxu0
        %v3424 = vadd.f32 0.0, %v3423
        %v3425 = vpop.f32.mrb[0].mxu0
        %3426 = vmatprep.mubr.bf16.mxu0 0
        %3427 = vmatmul.mubr.bf16.gmra.mrb[0].mxu0 %v2495
        %v3428 = vpop.f32.mrb[0].mxu0
        %v3429 = vadd.f32 0.0, %v3428
        %v3430 = vpop.f32.mrb[0].mxu0
        %v3431 = vpop.f32.mrb[0].mxu0
        %v3432 = vadd.f32 0.0, %v3431
        %v3433 = vpop.f32.mrb[0].mxu0
        %3434 = vmatprep.mubr.bf16.mxu0 0
        %3435 = vmatmul.mubr.bf16.gmra.mrb[0].mxu0 %v2496
        %v3436 = vpop.f32.mrb[0].mxu0
        %v3437 = vadd.f32 0.0, %v3436
        %v3438 = vpop.f32.mrb[0].mxu0
        %v3439 = vpop.f32.mrb[0].mxu0
        %v3440 = vadd.f32 0.0, %v3439
        %v3441 = vpop.f32.mrb[0].mxu0
        %3442 = vmatprep.mubr.bf16.mxu0 0
        %3443 = vmatmul.mubr.bf16.gmra.mrb[0].mxu0 %v2497
        %v3444 = vpop.f32.mrb[0].mxu0
        %v3445 = vadd.f32 0.0, %v3444
        %v3446 = vpop.f32.mrb[0].mxu0
        %v3447 = vpop.f32.mrb[0].mxu0
        %v3448 = vadd.f32 0.0, %v3447
        %v3449 = vpop.f32.mrb[0].mxu0
        %3450 = vmatprep.mubr.bf16.mxu0 0
        %3451 = vmatmul.mubr.bf16.gmra.mrb[0].mxu0 %v2498
        %v3452 = vpop.f32.mrb[0].mxu0
        %v3453 = vadd.f32 0.0, %v3452
        %v3454 = vpop.f32.mrb[0].mxu0
        %v3455 = vpop.f32.mrb[0].mxu0
        %v3456 = vadd.f32 0.0, %v3455
        %v3457 = vpop.f32.mrb[0].mxu0
        %3458 = vmatprep.mubr.bf16.mxu0 0
        %3459 = vmatmul.mubr.bf16.gmra.mrb[0].mxu0 %v2499
        %v3460 = vpop.f32.mrb[0].mxu0
        %v3461 = vadd.f32 0.0, %v3460
        %v3462 = vpop.f32.mrb[0].mxu0
        %v3463 = vpop.f32.mrb[0].mxu0
        %v3464 = vadd.f32 0.0, %v3463
        %v3465 = vpop.f32.mrb[0].mxu0
        %3466 = vmatprep.mubr.bf16.mxu0 0
        %3467 = vmatmul.mubr.bf16.gmra.mrb[0].mxu0 %v2500
        %v3468 = vpop.f32.mrb[0].mxu0
        %v3469 = vadd.f32 0.0, %v3468
        %v3470 = vpop.f32.mrb[0].mxu0
        %v3471 = vpop.f32.mrb[0].mxu0
        %v3472 = vadd.f32 0.0, %v3471
        %v3473 = vpop.f32.mrb[0].mxu0
        %3474 = vmatprep.mubr.bf16.mxu0 0
        %3475 = vmatmul.mubr.bf16.gmra.mrb[0].mxu0 %v2501
        %v3476 = vpop.f32.mrb[0].mxu0
        %v3477 = vadd.f32 0.0, %v3476
        %v3478 = vpop.f32.mrb[0].mxu0
        %v3479 = vpop.f32.mrb[0].mxu0
        %v3480 = vadd.f32 0.0, %v3479
        %v3481 = vpop.f32.mrb[0].mxu0
        %3482 = vmatprep.mubr.bf16.mxu0 0
        %3483 = vmatmul.mubr.bf16.gmra.mrb[0].mxu0 %v2502
        %v3484 = vpop.f32.mrb[0].mxu0
        %v3485 = vadd.f32 0.0, %v3484
        %v3486 = vpop.f32.mrb[0].mxu0
        %v3487 = vpop.f32.mrb[0].mxu0
        %v3488 = vadd.f32 0.0, %v3487
        %v3489 = vpop.f32.mrb[0].mxu0
        %3490 = vmatprep.mubr.bf16.mxu0 0
        %3491 = vmatmul.mubr.bf16.gmra.mrb[0].mxu0 %v2503
        %v3492 = vpop.f32.mrb[0].mxu0
        %v3493 = vadd.f32 0.0, %v3492
        %v3494 = vpop.f32.mrb[0].mxu0
        %v3495 = vpop.f32.mrb[0].mxu0
        %v3496 = vadd.f32 0.0, %v3495
        %v3497 = vpop.f32.mrb[0].mxu0
        %3498 = vmatprep.mubr.bf16.mxu0 0
        %3499 = vmatmul.mubr.bf16.gmra.mrb[0].mxu0 %v2504
        %v3500 = vpop.f32.mrb[0].mxu0
        %v3501 = vadd.f32 0.0, %v3500
        %v3502 = vpop.f32.mrb[0].mxu0
        %v3503 = vpop.f32.mrb[0].mxu0
        %v3504 = vadd.f32 0.0, %v3503
        %v3505 = vpop.f32.mrb[0].mxu0
        %3506 = vmatprep.mubr.bf16.mxu0 0
        %3507 = vmatmul.mubr.bf16.gmra.mrb[0].mxu0 %v2505
        %v3508 = vpop.f32.mrb[0].mxu0
        %v3509 = vadd.f32 0.0, %v3508
        %v3510 = vpop.f32.mrb[0].mxu0
        %v3511 = vpop.f32.mrb[0].mxu0
        %v3512 = vadd.f32 0.0, %v3511
        %v3513 = vpop.f32.mrb[0].mxu0
        %3514 = vmatprep.mubr.bf16.mxu0 0
        %3515 = vmatmul.mubr.bf16.gmra.mrb[0].mxu0 %v2506
        %v3516 = vpop.f32.mrb[0].mxu0
        %v3517 = vadd.f32 0.0, %v3516
        %v3518 = vpop.f32.mrb[0].mxu0
        %v3519 = vpop.f32.mrb[0].mxu0
        %v3520 = vadd.f32 0.0, %v3519
        %v3521 = vpop.f32.mrb[0].mxu0
        %3522 = vmatprep.mubr.bf16.mxu0 0
        %3523 = vmatmul.mubr.bf16.gmra.mrb[0].mxu0 %v2507
        %v3524 = vpop.f32.mrb[0].mxu0
        %v3525 = vadd.f32 0.0, %v3524
        %v3526 = vpop.f32.mrb[0].mxu0
        %v3527 = vpop.f32.mrb[0].mxu0
        %v3528 = vadd.f32 0.0, %v3527
        %v3529 = vpop.f32.mrb[0].mxu0
        %3530 = vmatprep.mubr.bf16.mxu0 0
        %3531 = vmatmul.mubr.bf16.gmra.mrb[0].mxu0 %v2508
        %v3532 = vpop.f32.mrb[0].mxu0
        %v3533 = vadd.f32 0.0, %v3532
        %v3534 = vpop.f32.mrb[0].mxu0
        %v3535 = vpop.f32.mrb[0].mxu0
        %v3536 = vadd.f32 0.0, %v3535
        %v3537 = vpop.f32.mrb[0].mxu0
        %3538 = vmatprep.mubr.bf16.mxu0 0
        %3539 = vmatmul.mubr.bf16.gmra.mrb[0].mxu0 %v2509
        %v3540 = vpop.f32.mrb[0].mxu0
        %v3541 = vadd.f32 0.0, %v3540
        %v3542 = vpop.f32.mrb[0].mxu0
        %v3543 = vpop.f32.mrb[0].mxu0
        %v3544 = vadd.f32 0.0, %v3543
        %v3545 = vpop.f32.mrb[0].mxu0
        %3546 = vmatprep.mubr.bf16.mxu0 0
        %3547 = vmatmul.mubr.bf16.gmra.mrb[0].mxu0 %v2510
        %v3548 = vpop.f32.mrb[0].mxu0
        %v3549 = vadd.f32 0.0, %v3548
        %v3550 = vpop.f32.mrb[0].mxu0
        %v3551 = vpop.f32.mrb[0].mxu0
        %v3552 = vadd.f32 0.0, %v3551
        %v3553 = vpop.f32.mrb[0].mxu0
        %3554 = vmatprep.mubr.bf16.mxu0 0
        %3555 = vmatmul.mubr.bf16.gmra.mrb[0].mxu0 %v2511
        %v3556 = vpop.f32.mrb[0].mxu0
        %v3557 = vadd.f32 0.0, %v3556
        %v3558 = vpop.f32.mrb[0].mxu0
        %v3559 = vpop.f32.mrb[0].mxu0
        %v3560 = vadd.f32 0.0, %v3559
        %v3561 = vpop.f32.mrb[0].mxu0
        %3562 = vmatprep.mubr.bf16.mxu0 0
        %3563 = vmatmul.mubr.bf16.gmra.mrb[0].mxu0 %v2512
        %v3564 = vpop.f32.mrb[0].mxu0
        %v3565 = vadd.f32 0.0, %v3564
        %v3566 = vpop.f32.mrb[0].mxu0
        %v3567 = vpop.f32.mrb[0].mxu0
        %v3568 = vadd.f32 0.0, %v3567
        %v3569 = vpop.f32.mrb[0].mxu0
        %3570 = vmatprep.mubr.bf16.mxu0 0
        %3571 = vmatmul.mubr.bf16.gmra.mrb[0].mxu0 %v2513
        %v3572 = vpop.f32.mrb[0].mxu0
        %v3573 = vadd.f32 0.0, %v3572
        %v3574 = vpop.f32.mrb[0].mxu0
        %v3575 = vpop.f32.mrb[0].mxu0
        %v3576 = vadd.f32 0.0, %v3575
        %v3577 = vpop.f32.mrb[0].mxu0
        %3578 = vmatprep.mubr.bf16.mxu0 0
        %3579 = vmatmul.mubr.bf16.gmra.mrb[0].mxu0 %v2514
        %v3580 = vpop.f32.mrb[0].mxu0
        %v3581 = vadd.f32 0.0, %v3580
        %v3582 = vpop.f32.mrb[0].mxu0
        %v3583 = vpop.f32.mrb[0].mxu0
        %v3584 = vadd.f32 0.0, %v3583
        %v3585 = vpop.f32.mrb[0].mxu0
        %3586 = vmatprep.mubr.bf16.mxu0 0
        %3587 = vmatmul.mubr.bf16.gmra.mrb[0].mxu0 %v2515
        %v3588 = vpop.f32.mrb[0].mxu0
        %v3589 = vadd.f32 0.0, %v3588
        %v3590 = vpop.f32.mrb[0].mxu0
        %v3591 = vpop.f32.mrb[0].mxu0
        %v3592 = vadd.f32 0.0, %v3591
        %v3593 = vpop.f32.mrb[0].mxu0
        %3594 = vmatprep.mubr.bf16.mxu0 0
        %3595 = vmatmul.mubr.bf16.gmra.mrb[0].mxu0 %v2516
        %v3596 = vpop.f32.mrb[0].mxu0
        %v3597 = vadd.f32 0.0, %v3596
        %v3598 = vpop.f32.mrb[0].mxu0
        %v3599 = vpop.f32.mrb[0].mxu0
        %v3600 = vadd.f32 0.0, %v3599
        %v3601 = vpop.f32.mrb[0].mxu0
        %3602 = vmatprep.mubr.bf16.mxu0 0
        %3603 = vmatmul.mubr.bf16.gmra.mrb[0].mxu0 %v2517
        %v3604 = vpop.f32.mrb[0].mxu0
        %v3605 = vadd.f32 0.0, %v3604
        %v3606 = vpop.f32.mrb[0].mxu0
        %v3607 = vpop.f32.mrb[0].mxu0
        %v3608 = vadd.f32 0.0, %v3607
        %v3609 = vpop.f32.mrb[0].mxu0
        %3610 = vmatprep.mubr.bf16.mxu0 0
        %3611 = vmatmul.mubr.bf16.gmra.mrb[0].mxu0 %v2518
        %v3612 = vpop.f32.mrb[0].mxu0
        %v3613 = vadd.f32 0.0, %v3612
        %v3614 = vpop.f32.mrb[0].mxu0
        %v3615 = vpop.f32.mrb[0].mxu0
        %v3616 = vadd.f32 0.0, %v3615
        %v3617 = vpop.f32.mrb[0].mxu0
        %3618 = vmatprep.mubr.bf16.mxu0 0
        %3619 = vmatmul.mubr.bf16.gmra.mrb[0].mxu0 %v2519
        %v3620 = vpop.f32.mrb[0].mxu0
        %v3621 = vadd.f32 0.0, %v3620
        %v3622 = vpop.f32.mrb[0].mxu0
        %v3623 = vpop.f32.mrb[0].mxu0
        %v3624 = vadd.f32 0.0, %v3623
        %v3625 = vpop.f32.mrb[0].mxu0
        %3626 = vmatprep.mubr.bf16.mxu0 0
        %3627 = vmatmul.mubr.bf16.gmra.mrb[0].mxu0 %v2520
        %v3628 = vpop.f32.mrb[0].mxu0
        %v3629 = vadd.f32 0.0, %v3628
        %v3630 = vpop.f32.mrb[0].mxu0
        %v3631 = vpop.f32.mrb[0].mxu0
        %v3632 = vadd.f32 0.0, %v3631
        %v3633 = vpop.f32.mrb[0].mxu0
        %3634 = vmatprep.mubr.bf16.mxu0 0
        %3635 = vmatmul.mubr.bf16.gmra.mrb[0].mxu0 %v2521
        %v3636 = vpop.f32.mrb[0].mxu0
        %v3637 = vadd.f32 0.0, %v3636
        %v3638 = vpop.f32.mrb[0].mxu0
        %v3639 = vpop.f32.mrb[0].mxu0
        %v3640 = vadd.f32 0.0, %v3639
        %v3641 = vpop.f32.mrb[0].mxu0
        %3642 = vdwg.mxu0
        %v3643 = vrot.slane %v2621, 1
        %v3644 = vrot.slane %v2624, 1
        %v3645 = vrot.slane %v2629, 1
        %v3646 = vrot.slane %v2632, 1
        %v3647 = vrot.slane %v2637, 1
        %v3648 = vrot.slane %v2640, 1
        %v3649 = vrot.slane %v2645, 1
        %v3650 = vrot.slane %v2648, 1
        %v3651 = vrot.slane %v2653, 1
        %v3652 = vrot.slane %v2656, 1
        %v3653 = vrot.slane %v2661, 1
        %v3654 = vrot.slane %v2664, 1
        %v3655 = vrot.slane %v2669, 1
        %v3656 = vrot.slane %v2672, 1
        %v3657 = vrot.slane %v2677, 1
        %v3658 = vrot.slane %v2680, 1
        %v3659 = vrot.slane %v2685, 1
        %v3660 = vrot.slane %v2688, 1
        %v3661 = vrot.slane %v2693, 1
        %v3662 = vrot.slane %v2696, 1
        %v3663 = vrot.slane %v2701, 1
        %v3664 = vrot.slane %v2704, 1
        %v3665 = vrot.slane %v2709, 1
        %v3666 = vrot.slane %v2712, 1
        %v3667 = vrot.slane %v2717, 1
        %v3668 = vrot.slane %v2720, 1
        %v3669 = vrot.slane %v2725, 1
        %v3670 = vrot.slane %v2728, 1
        %v3671 = vrot.slane %v2733, 1
        %v3672 = vrot.slane %v2736, 1
        %v3673 = vrot.slane %v2741, 1
        %v3674 = vrot.slane %v2744, 1
        %v3675 = vrot.slane %v2749, 1
        %v3676 = vrot.slane %v2752, 1
        %v3677 = vrot.slane %v2757, 1
        %v3678 = vrot.slane %v2760, 1
        %v3679 = vrot.slane %v2765, 1
        %v3680 = vrot.slane %v2768, 1
        %v3681 = vrot.slane %v2773, 1
        %v3682 = vrot.slane %v2776, 1
        %v3683 = vrot.slane %v2781, 1
        %v3684 = vrot.slane %v2784, 1
        %v3685 = vrot.slane %v2789, 1
        %v3686 = vrot.slane %v2792, 1
        %v3687 = vrot.slane %v2797, 1
        %v3688 = vrot.slane %v2800, 1
        %v3689 = vrot.slane %v2805, 1
        %v3690 = vrot.slane %v2808, 1
        %v3691 = vrot.slane %v2813, 1
        %v3692 = vrot.slane %v2816, 1
        %v3693 = vrot.slane %v2821, 1
        %v3694 = vrot.slane %v2824, 1
        %v3695 = vrot.slane %v2829, 1
        %v3696 = vrot.slane %v2832, 1
        %v3697 = vrot.slane %v2837, 1
        %v3698 = vrot.slane %v2840, 1
        %v3699 = vrot.slane %v2845, 1
        %v3700 = vrot.slane %v2848, 1
        %v3701 = vrot.slane %v2853, 1
        %v3702 = vrot.slane %v2856, 1
        %v3703 = vrot.slane %v2861, 1
        %v3704 = vrot.slane %v2864, 1
        %v3705 = vrot.slane %v2869, 1
        %v3706 = vrot.slane %v2872, 1
        %v3707 = vrot.slane %v2877, 1
        %v3708 = vrot.slane %v2880, 1
        %v3709 = vrot.slane %v2885, 1
        %v3710 = vrot.slane %v2888, 1
        %v3711 = vrot.slane %v2893, 1
        %v3712 = vrot.slane %v2896, 1
        %v3713 = vrot.slane %v2901, 1
        %v3714 = vrot.slane %v2904, 1
        %v3715 = vrot.slane %v2909, 1
        %v3716 = vrot.slane %v2912, 1
        %v3717 = vrot.slane %v2917, 1
        %v3718 = vrot.slane %v2920, 1
        %v3719 = vrot.slane %v2925, 1
        %v3720 = vrot.slane %v2928, 1
        %v3721 = vrot.slane %v2933, 1
        %v3722 = vrot.slane %v2936, 1
        %v3723 = vrot.slane %v2941, 1
        %v3724 = vrot.slane %v2944, 1
        %v3725 = vrot.slane %v2949, 1
        %v3726 = vrot.slane %v2952, 1
        %v3727 = vrot.slane %v2957, 1
        %v3728 = vrot.slane %v2960, 1
        %v3729 = vrot.slane %v2965, 1
        %v3730 = vrot.slane %v2968, 1
        %v3731 = vrot.slane %v2973, 1
        %v3732 = vrot.slane %v2976, 1
        %v3733 = vrot.slane %v2981, 1
        %v3734 = vrot.slane %v2984, 1
        %v3735 = vrot.slane %v2989, 1
        %v3736 = vrot.slane %v2992, 1
        %v3737 = vrot.slane %v2997, 1
        %v3738 = vrot.slane %v3000, 1
        %v3739 = vrot.slane %v3005, 1
        %v3740 = vrot.slane %v3008, 1
        %v3741 = vrot.slane %v3013, 1
        %v3742 = vrot.slane %v3016, 1
        %v3743 = vrot.slane %v3021, 1
        %v3744 = vrot.slane %v3024, 1
        %v3745 = vrot.slane %v3029, 1
        %v3746 = vrot.slane %v3032, 1
        %v3747 = vrot.slane %v3037, 1
        %v3748 = vrot.slane %v3040, 1
        %v3749 = vrot.slane %v3045, 1
        %v3750 = vrot.slane %v3048, 1
        %v3751 = vrot.slane %v3053, 1
        %v3752 = vrot.slane %v3056, 1
        %v3753 = vrot.slane %v3061, 1
        %v3754 = vrot.slane %v3064, 1
        %v3755 = vrot.slane %v3069, 1
        %v3756 = vrot.slane %v3072, 1
        %v3757 = vrot.slane %v3077, 1
        %v3758 = vrot.slane %v3080, 1
        %v3759 = vrot.slane %v3085, 1
        %v3760 = vrot.slane %v3088, 1
        %v3761 = vrot.slane %v3093, 1
        %v3762 = vrot.slane %v3096, 1
        %v3763 = vrot.slane %v3101, 1
        %v3764 = vrot.slane %v3104, 1
        %v3765 = vrot.slane %v3109, 1
        %v3766 = vrot.slane %v3112, 1
        %v3767 = vrot.slane %v3117, 1
        %v3768 = vrot.slane %v3120, 1
        %v3769 = vrot.slane %v3125, 1
        %v3770 = vrot.slane %v3128, 1
        %v3771 = vrot.slane %v3133, 1
        %v3772 = vrot.slane %v3136, 1
        %v3773 = vrot.slane %v3141, 1
        %v3774 = vrot.slane %v3144, 1
        %v3775 = vrot.slane %v3149, 1
        %v3776 = vrot.slane %v3152, 1
        %v3777 = vrot.slane %v3157, 1
        %v3778 = vrot.slane %v3160, 1
        %v3779 = vrot.slane %v3165, 1
        %v3780 = vrot.slane %v3168, 1
        %v3781 = vrot.slane %v3173, 1
        %v3782 = vrot.slane %v3176, 1
        %v3783 = vrot.slane %v3181, 1
        %v3784 = vrot.slane %v3184, 1
        %v3785 = vrot.slane %v3189, 1
        %v3786 = vrot.slane %v3192, 1
        %v3787 = vrot.slane %v3197, 1
        %v3788 = vrot.slane %v3200, 1
        %v3789 = vrot.slane %v3205, 1
        %v3790 = vrot.slane %v3208, 1
        %v3791 = vrot.slane %v3213, 1
        %v3792 = vrot.slane %v3216, 1
        %v3793 = vrot.slane %v3221, 1
        %v3794 = vrot.slane %v3224, 1
        %v3795 = vrot.slane %v3229, 1
        %v3796 = vrot.slane %v3232, 1
        %v3797 = vrot.slane %v3237, 1
        %v3798 = vrot.slane %v3240, 1
        %v3799 = vrot.slane %v3245, 1
        %v3800 = vrot.slane %v3248, 1
        %v3801 = vrot.slane %v3253, 1
        %v3802 = vrot.slane %v3256, 1
        %v3803 = vrot.slane %v3261, 1
        %v3804 = vrot.slane %v3264, 1
        %v3805 = vrot.slane %v3269, 1
        %v3806 = vrot.slane %v3272, 1
        %v3807 = vrot.slane %v3277, 1
        %v3808 = vrot.slane %v3280, 1
        %v3809 = vrot.slane %v3285, 1
        %v3810 = vrot.slane %v3288, 1
        %v3811 = vrot.slane %v3293, 1
        %v3812 = vrot.slane %v3296, 1
        %v3813 = vrot.slane %v3301, 1
        %v3814 = vrot.slane %v3304, 1
        %v3815 = vrot.slane %v3309, 1
        %v3816 = vrot.slane %v3312, 1
        %v3817 = vrot.slane %v3317, 1
        %v3818 = vrot.slane %v3320, 1
        %v3819 = vrot.slane %v3325, 1
        %v3820 = vrot.slane %v3328, 1
        %v3821 = vrot.slane %v3333, 1
        %v3822 = vrot.slane %v3336, 1
        %v3823 = vrot.slane %v3341, 1
        %v3824 = vrot.slane %v3344, 1
        %v3825 = vrot.slane %v3349, 1
        %v3826 = vrot.slane %v3352, 1
        %v3827 = vrot.slane %v3357, 1
        %v3828 = vrot.slane %v3360, 1
        %v3829 = vrot.slane %v3365, 1
        %v3830 = vrot.slane %v3368, 1
        %v3831 = vrot.slane %v3373, 1
        %v3832 = vrot.slane %v3376, 1
        %v3833 = vrot.slane %v3381, 1
        %v3834 = vrot.slane %v3384, 1
        %v3835 = vrot.slane %v3389, 1
        %v3836 = vrot.slane %v3392, 1
        %v3837 = vrot.slane %v3397, 1
        %v3838 = vrot.slane %v3400, 1
        %v3839 = vrot.slane %v3405, 1
        %v3840 = vrot.slane %v3408, 1
        %v3841 = vrot.slane %v3413, 1
        %v3842 = vrot.slane %v3416, 1
        %v3843 = vrot.slane %v3421, 1
        %v3844 = vrot.slane %v3424, 1
        %v3845 = vrot.slane %v3429, 1
        %v3846 = vrot.slane %v3432, 1
        %v3847 = vrot.slane %v3437, 1
        %v3848 = vrot.slane %v3440, 1
        %v3849 = vrot.slane %v3445, 1
        %v3850 = vrot.slane %v3448, 1
        %v3851 = vrot.slane %v3453, 1
        %v3852 = vrot.slane %v3456, 1
        %v3853 = vrot.slane %v3461, 1
        %v3854 = vrot.slane %v3464, 1
        %v3855 = vrot.slane %v3469, 1
        %v3856 = vrot.slane %v3472, 1
        %v3857 = vrot.slane %v3477, 1
        %v3858 = vrot.slane %v3480, 1
        %v3859 = vrot.slane %v3485, 1
        %v3860 = vrot.slane %v3488, 1
        %v3861 = vrot.slane %v3493, 1
        %v3862 = vrot.slane %v3496, 1
        %v3863 = vrot.slane %v3501, 1
        %v3864 = vrot.slane %v3504, 1
        %v3865 = vrot.slane %v3509, 1
        %v3866 = vrot.slane %v3512, 1
        %v3867 = vrot.slane %v3517, 1
        %v3868 = vrot.slane %v3520, 1
        %v3869 = vrot.slane %v3525, 1
        %v3870 = vrot.slane %v3528, 1
        %v3871 = vrot.slane %v3533, 1
        %v3872 = vrot.slane %v3536, 1
        %v3873 = vrot.slane %v3541, 1
        %v3874 = vrot.slane %v3544, 1
        %v3875 = vrot.slane %v3549, 1
        %v3876 = vrot.slane %v3552, 1
        %v3877 = vrot.slane %v3557, 1
        %v3878 = vrot.slane %v3560, 1
        %v3879 = vrot.slane %v3565, 1
        %v3880 = vrot.slane %v3568, 1
        %v3881 = vrot.slane %v3573, 1
        %v3882 = vrot.slane %v3576, 1
        %v3883 = vrot.slane %v3581, 1
        %v3884 = vrot.slane %v3584, 1
        %v3885 = vrot.slane %v3589, 1
        %v3886 = vrot.slane %v3592, 1
        %v3887 = vrot.slane %v3597, 1
        %v3888 = vrot.slane %v3600, 1
        %v3889 = vrot.slane %v3605, 1
        %v3890 = vrot.slane %v3608, 1
        %v3891 = vrot.slane %v3613, 1
        %v3892 = vrot.slane %v3616, 1
        %v3893 = vrot.slane %v3621, 1
        %v3894 = vrot.slane %v3624, 1
        %v3895 = vrot.slane %v3629, 1
        %v3896 = vrot.slane %v3632, 1
        %v3897 = vrot.slane %v3637, 1
        %v3898 = vrot.slane %v3640, 1
        %v3899 = vlaneseq
        %v3900 = vshrl.u32 %v3899, 7
        %vm3901 = vcmp.lt.s32.totalorder %v3900, 7
        %v3902 = vsel %vm3901, %v3897, %v3898
        %v3903 = vsel %vm3901, %v3896, %v3897
        %v3904 = vsel %vm3901, %v3895, %v3896
        %v3905 = vsel %vm3901, %v3894, %v3895
        %v3906 = vsel %vm3901, %v3893, %v3894
        %v3907 = vsel %vm3901, %v3892, %v3893
        %v3908 = vsel %vm3901, %v3891, %v3892
        %v3909 = vsel %vm3901, %v3890, %v3891
        %v3910 = vsel %vm3901, %v3889, %v3890
        %v3911 = vsel %vm3901, %v3888, %v3889
        %v3912 = vsel %vm3901, %v3887, %v3888
        %v3913 = vsel %vm3901, %v3886, %v3887
        %v3914 = vsel %vm3901, %v3885, %v3886
        %v3915 = vsel %vm3901, %v3884, %v3885
        %v3916 = vsel %vm3901, %v3883, %v3884
        %v3917 = vsel %vm3901, %v3882, %v3883
        %v3918 = vsel %vm3901, %v3881, %v3882
        %v3919 = vsel %vm3901, %v3880, %v3881
        %v3920 = vsel %vm3901, %v3879, %v3880
        %v3921 = vsel %vm3901, %v3878, %v3879
        %v3922 = vsel %vm3901, %v3877, %v3878
        %v3923 = vsel %vm3901, %v3876, %v3877
        %v3924 = vsel %vm3901, %v3875, %v3876
        %v3925 = vsel %vm3901, %v3874, %v3875
        %v3926 = vsel %vm3901, %v3873, %v3874
        %v3927 = vsel %vm3901, %v3872, %v3873
        %v3928 = vsel %vm3901, %v3871, %v3872
        %v3929 = vsel %vm3901, %v3870, %v3871
        %v3930 = vsel %vm3901, %v3869, %v3870
        %v3931 = vsel %vm3901, %v3868, %v3869
        %v3932 = vsel %vm3901, %v3867, %v3868
        %v3933 = vsel %vm3901, %v3866, %v3867
        %v3934 = vsel %vm3901, %v3865, %v3866
        %v3935 = vsel %vm3901, %v3864, %v3865
        %v3936 = vsel %vm3901, %v3863, %v3864
        %v3937 = vsel %vm3901, %v3862, %v3863
        %v3938 = vsel %vm3901, %v3861, %v3862
        %v3939 = vsel %vm3901, %v3860, %v3861
        %v3940 = vsel %vm3901, %v3859, %v3860
        %v3941 = vsel %vm3901, %v3858, %v3859
        %v3942 = vsel %vm3901, %v3857, %v3858
        %v3943 = vsel %vm3901, %v3856, %v3857
        %v3944 = vsel %vm3901, %v3855, %v3856
        %v3945 = vsel %vm3901, %v3854, %v3855
        %v3946 = vsel %vm3901, %v3853, %v3854
        %v3947 = vsel %vm3901, %v3852, %v3853
        %v3948 = vsel %vm3901, %v3851, %v3852
        %v3949 = vsel %vm3901, %v3850, %v3851
        %v3950 = vsel %vm3901, %v3849, %v3850
        %v3951 = vsel %vm3901, %v3848, %v3849
        %v3952 = vsel %vm3901, %v3847, %v3848
        %v3953 = vsel %vm3901, %v3846, %v3847
        %v3954 = vsel %vm3901, %v3845, %v3846
        %v3955 = vsel %vm3901, %v3844, %v3845
        %v3956 = vsel %vm3901, %v3843, %v3844
        %v3957 = vsel %vm3901, %v3842, %v3843
        %v3958 = vsel %vm3901, %v3841, %v3842
        %v3959 = vsel %vm3901, %v3840, %v3841
        %v3960 = vsel %vm3901, %v3839, %v3840
        %v3961 = vsel %vm3901, %v3838, %v3839
        %v3962 = vsel %vm3901, %v3837, %v3838
        %v3963 = vsel %vm3901, %v3836, %v3837
        %v3964 = vsel %vm3901, %v3835, %v3836
        %v3965 = vsel %vm3901, %v3834, %v3835
        %v3966 = vsel %vm3901, %v3833, %v3834
        %v3967 = vsel %vm3901, %v3832, %v3833
        %v3968 = vsel %vm3901, %v3831, %v3832
        %v3969 = vsel %vm3901, %v3830, %v3831
        %v3970 = vsel %vm3901, %v3829, %v3830
        %v3971 = vsel %vm3901, %v3828, %v3829
        %v3972 = vsel %vm3901, %v3827, %v3828
        %v3973 = vsel %vm3901, %v3826, %v3827
        %v3974 = vsel %vm3901, %v3825, %v3826
        %v3975 = vsel %vm3901, %v3824, %v3825
        %v3976 = vsel %vm3901, %v3823, %v3824
        %v3977 = vsel %vm3901, %v3822, %v3823
        %v3978 = vsel %vm3901, %v3821, %v3822
        %v3979 = vsel %vm3901, %v3820, %v3821
        %v3980 = vsel %vm3901, %v3819, %v3820
        %v3981 = vsel %vm3901, %v3818, %v3819
        %v3982 = vsel %vm3901, %v3817, %v3818
        %v3983 = vsel %vm3901, %v3816, %v3817
        %v3984 = vsel %vm3901, %v3815, %v3816
        %v3985 = vsel %vm3901, %v3814, %v3815
        %v3986 = vsel %vm3901, %v3813, %v3814
        %v3987 = vsel %vm3901, %v3812, %v3813
        %v3988 = vsel %vm3901, %v3811, %v3812
        %v3989 = vsel %vm3901, %v3810, %v3811
        %v3990 = vsel %vm3901, %v3809, %v3810
        %v3991 = vsel %vm3901, %v3808, %v3809
        %v3992 = vsel %vm3901, %v3807, %v3808
        %v3993 = vsel %vm3901, %v3806, %v3807
        %v3994 = vsel %vm3901, %v3805, %v3806
        %v3995 = vsel %vm3901, %v3804, %v3805
        %v3996 = vsel %vm3901, %v3803, %v3804
        %v3997 = vsel %vm3901, %v3802, %v3803
        %v3998 = vsel %vm3901, %v3801, %v3802
        %v3999 = vsel %vm3901, %v3800, %v3801
        %v4000 = vsel %vm3901, %v3799, %v3800
        %v4001 = vsel %vm3901, %v3798, %v3799
        %v4002 = vsel %vm3901, %v3797, %v3798
        %v4003 = vsel %vm3901, %v3796, %v3797
        %v4004 = vsel %vm3901, %v3795, %v3796
        %v4005 = vsel %vm3901, %v3794, %v3795
        %v4006 = vsel %vm3901, %v3793, %v3794
        %v4007 = vsel %vm3901, %v3792, %v3793
        %v4008 = vsel %vm3901, %v3791, %v3792
        %v4009 = vsel %vm3901, %v3790, %v3791
        %v4010 = vsel %vm3901, %v3789, %v3790
        %v4011 = vsel %vm3901, %v3788, %v3789
        %v4012 = vsel %vm3901, %v3787, %v3788
        %v4013 = vsel %vm3901, %v3786, %v3787
        %v4014 = vsel %vm3901, %v3785, %v3786
        %v4015 = vsel %vm3901, %v3784, %v3785
        %v4016 = vsel %vm3901, %v3783, %v3784
        %v4017 = vsel %vm3901, %v3782, %v3783
        %v4018 = vsel %vm3901, %v3781, %v3782
        %v4019 = vsel %vm3901, %v3780, %v3781
        %v4020 = vsel %vm3901, %v3779, %v3780
        %v4021 = vsel %vm3901, %v3778, %v3779
        %v4022 = vsel %vm3901, %v3777, %v3778
        %v4023 = vsel %vm3901, %v3776, %v3777
        %v4024 = vsel %vm3901, %v3775, %v3776
        %v4025 = vsel %vm3901, %v3774, %v3775
        %v4026 = vsel %vm3901, %v3773, %v3774
        %v4027 = vsel %vm3901, %v3772, %v3773
        %v4028 = vsel %vm3901, %v3771, %v3772
        %v4029 = vsel %vm3901, %v3770, %v3771
        %v4030 = vsel %vm3901, %v3769, %v3770
        %v4031 = vsel %vm3901, %v3768, %v3769
        %v4032 = vsel %vm3901, %v3767, %v3768
        %v4033 = vsel %vm3901, %v3766, %v3767
        %v4034 = vsel %vm3901, %v3765, %v3766
        %v4035 = vsel %vm3901, %v3764, %v3765
        %v4036 = vsel %vm3901, %v3763, %v3764
        %v4037 = vsel %vm3901, %v3762, %v3763
        %v4038 = vsel %vm3901, %v3761, %v3762
        %v4039 = vsel %vm3901, %v3760, %v3761
        %v4040 = vsel %vm3901, %v3759, %v3760
        %v4041 = vsel %vm3901, %v3758, %v3759
        %v4042 = vsel %vm3901, %v3757, %v3758
        %v4043 = vsel %vm3901, %v3756, %v3757
        %v4044 = vsel %vm3901, %v3755, %v3756
        %v4045 = vsel %vm3901, %v3754, %v3755
        %v4046 = vsel %vm3901, %v3753, %v3754
        %v4047 = vsel %vm3901, %v3752, %v3753
        %v4048 = vsel %vm3901, %v3751, %v3752
        %v4049 = vsel %vm3901, %v3750, %v3751
        %v4050 = vsel %vm3901, %v3749, %v3750
        %v4051 = vsel %vm3901, %v3748, %v3749
        %v4052 = vsel %vm3901, %v3747, %v3748
        %v4053 = vsel %vm3901, %v3746, %v3747
        %v4054 = vsel %vm3901, %v3745, %v3746
        %v4055 = vsel %vm3901, %v3744, %v3745
        %v4056 = vsel %vm3901, %v3743, %v3744
        %v4057 = vsel %vm3901, %v3742, %v3743
        %v4058 = vsel %vm3901, %v3741, %v3742
        %v4059 = vsel %vm3901, %v3740, %v3741
        %v4060 = vsel %vm3901, %v3739, %v3740
        %v4061 = vsel %vm3901, %v3738, %v3739
        %v4062 = vsel %vm3901, %v3737, %v3738
        %v4063 = vsel %vm3901, %v3736, %v3737
        %v4064 = vsel %vm3901, %v3735, %v3736
        %v4065 = vsel %vm3901, %v3734, %v3735
        %v4066 = vsel %vm3901, %v3733, %v3734
        %v4067 = vsel %vm3901, %v3732, %v3733
        %v4068 = vsel %vm3901, %v3731, %v3732
        %v4069 = vsel %vm3901, %v3730, %v3731
        %v4070 = vsel %vm3901, %v3729, %v3730
        %v4071 = vsel %vm3901, %v3728, %v3729
        %v4072 = vsel %vm3901, %v3727, %v3728
        %v4073 = vsel %vm3901, %v3726, %v3727
        %v4074 = vsel %vm3901, %v3725, %v3726
        %v4075 = vsel %vm3901, %v3724, %v3725
        %v4076 = vsel %vm3901, %v3723, %v3724
        %v4077 = vsel %vm3901, %v3722, %v3723
        %v4078 = vsel %vm3901, %v3721, %v3722
        %v4079 = vsel %vm3901, %v3720, %v3721
        %v4080 = vsel %vm3901, %v3719, %v3720
        %v4081 = vsel %vm3901, %v3718, %v3719
        %v4082 = vsel %vm3901, %v3717, %v3718
        %v4083 = vsel %vm3901, %v3716, %v3717
        %v4084 = vsel %vm3901, %v3715, %v3716
        %v4085 = vsel %vm3901, %v3714, %v3715
        %v4086 = vsel %vm3901, %v3713, %v3714
        %v4087 = vsel %vm3901, %v3712, %v3713
        %v4088 = vsel %vm3901, %v3711, %v3712
        %v4089 = vsel %vm3901, %v3710, %v3711
        %v4090 = vsel %vm3901, %v3709, %v3710
        %v4091 = vsel %vm3901, %v3708, %v3709
        %v4092 = vsel %vm3901, %v3707, %v3708
        %v4093 = vsel %vm3901, %v3706, %v3707
        %v4094 = vsel %vm3901, %v3705, %v3706
        %v4095 = vsel %vm3901, %v3704, %v3705
        %v4096 = vsel %vm3901, %v3703, %v3704
        %v4097 = vsel %vm3901, %v3702, %v3703
        %v4098 = vsel %vm3901, %v3701, %v3702
        %v4099 = vsel %vm3901, %v3700, %v3701
        %v4100 = vsel %vm3901, %v3699, %v3700
        %v4101 = vsel %vm3901, %v3698, %v3699
        %v4102 = vsel %vm3901, %v3697, %v3698
        %v4103 = vsel %vm3901, %v3696, %v3697
        %v4104 = vsel %vm3901, %v3695, %v3696
        %v4105 = vsel %vm3901, %v3694, %v3695
        %v4106 = vsel %vm3901, %v3693, %v3694
        %v4107 = vsel %vm3901, %v3692, %v3693
        %v4108 = vsel %vm3901, %v3691, %v3692
        %v4109 = vsel %vm3901, %v3690, %v3691
        %v4110 = vsel %vm3901, %v3689, %v3690
        %v4111 = vsel %vm3901, %v3688, %v3689
        %v4112 = vsel %vm3901, %v3687, %v3688
        %v4113 = vsel %vm3901, %v3686, %v3687
        %v4114 = vsel %vm3901, %v3685, %v3686
        %v4115 = vsel %vm3901, %v3684, %v3685
        %v4116 = vsel %vm3901, %v3683, %v3684
        %v4117 = vsel %vm3901, %v3682, %v3683
        %v4118 = vsel %vm3901, %v3681, %v3682
        %v4119 = vsel %vm3901, %v3680, %v3681
        %v4120 = vsel %vm3901, %v3679, %v3680
        %v4121 = vsel %vm3901, %v3678, %v3679
        %v4122 = vsel %vm3901, %v3677, %v3678
        %v4123 = vsel %vm3901, %v3676, %v3677
        %v4124 = vsel %vm3901, %v3675, %v3676
        %v4125 = vsel %vm3901, %v3674, %v3675
        %v4126 = vsel %vm3901, %v3673, %v3674
        %v4127 = vsel %vm3901, %v3672, %v3673
        %v4128 = vsel %vm3901, %v3671, %v3672
        %v4129 = vsel %vm3901, %v3670, %v3671
        %v4130 = vsel %vm3901, %v3669, %v3670
        %v4131 = vsel %vm3901, %v3668, %v3669
        %v4132 = vsel %vm3901, %v3667, %v3668
        %v4133 = vsel %vm3901, %v3666, %v3667
        %v4134 = vsel %vm3901, %v3665, %v3666
        %v4135 = vsel %vm3901, %v3664, %v3665
        %v4136 = vsel %vm3901, %v3663, %v3664
        %v4137 = vsel %vm3901, %v3662, %v3663
        %v4138 = vsel %vm3901, %v3661, %v3662
        %v4139 = vsel %vm3901, %v3660, %v3661
        %v4140 = vsel %vm3901, %v3659, %v3660
        %v4141 = vsel %vm3901, %v3658, %v3659
        %v4142 = vsel %vm3901, %v3657, %v3658
        %v4143 = vsel %vm3901, %v3656, %v3657
        %v4144 = vsel %vm3901, %v3655, %v3656
        %v4145 = vsel %vm3901, %v3654, %v3655
        %v4146 = vsel %vm3901, %v3653, %v3654
        %v4147 = vsel %vm3901, %v3652, %v3653
        %v4148 = vsel %vm3901, %v3651, %v3652
        %v4149 = vsel %vm3901, %v3650, %v3651
        %v4150 = vsel %vm3901, %v3649, %v3650
        %v4151 = vsel %vm3901, %v3648, %v3649
        %v4152 = vsel %vm3901, %v3647, %v3648
        %v4153 = vsel %vm3901, %v3646, %v3647
        %v4154 = vsel %vm3901, %v3645, %v3646
        %v4155 = vsel %vm3901, %v3644, %v3645
        %v4156 = vsel %vm3901, %v3643, %v3644
        %v4157 = vsel %vm3901, %v3898, %v3643
        %v4158 = vrot.slane %v2621, 2
        %v4159 = vrot.slane %v2624, 2
        %v4160 = vrot.slane %v2629, 2
        %v4161 = vrot.slane %v2632, 2
        %v4162 = vrot.slane %v2637, 2
        %v4163 = vrot.slane %v2640, 2
        %v4164 = vrot.slane %v2645, 2
        %v4165 = vrot.slane %v2648, 2
        %v4166 = vrot.slane %v2653, 2
        %v4167 = vrot.slane %v2656, 2
        %v4168 = vrot.slane %v2661, 2
        %v4169 = vrot.slane %v2664, 2
        %v4170 = vrot.slane %v2669, 2
        %v4171 = vrot.slane %v2672, 2
        %v4172 = vrot.slane %v2677, 2
        %v4173 = vrot.slane %v2680, 2
        %v4174 = vrot.slane %v2685, 2
        %v4175 = vrot.slane %v2688, 2
        %v4176 = vrot.slane %v2693, 2
        %v4177 = vrot.slane %v2696, 2
        %v4178 = vrot.slane %v2701, 2
        %v4179 = vrot.slane %v2704, 2
        %v4180 = vrot.slane %v2709, 2
        %v4181 = vrot.slane %v2712, 2
        %v4182 = vrot.slane %v2717, 2
        %v4183 = vrot.slane %v2720, 2
        %v4184 = vrot.slane %v2725, 2
        %v4185 = vrot.slane %v2728, 2
        %v4186 = vrot.slane %v2733, 2
        %v4187 = vrot.slane %v2736, 2
        %v4188 = vrot.slane %v2741, 2
        %v4189 = vrot.slane %v2744, 2
        %v4190 = vrot.slane %v2749, 2
        %v4191 = vrot.slane %v2752, 2
        %v4192 = vrot.slane %v2757, 2
        %v4193 = vrot.slane %v2760, 2
        %v4194 = vrot.slane %v2765, 2
        %v4195 = vrot.slane %v2768, 2
        %v4196 = vrot.slane %v2773, 2
        %v4197 = vrot.slane %v2776, 2
        %v4198 = vrot.slane %v2781, 2
        %v4199 = vrot.slane %v2784, 2
        %v4200 = vrot.slane %v2789, 2
        %v4201 = vrot.slane %v2792, 2
        %v4202 = vrot.slane %v2797, 2
        %v4203 = vrot.slane %v2800, 2
        %v4204 = vrot.slane %v2805, 2
        %v4205 = vrot.slane %v2808, 2
        %v4206 = vrot.slane %v2813, 2
        %v4207 = vrot.slane %v2816, 2
        %v4208 = vrot.slane %v2821, 2
        %v4209 = vrot.slane %v2824, 2
        %v4210 = vrot.slane %v2829, 2
        %v4211 = vrot.slane %v2832, 2
        %v4212 = vrot.slane %v2837, 2
        %v4213 = vrot.slane %v2840, 2
        %v4214 = vrot.slane %v2845, 2
        %v4215 = vrot.slane %v2848, 2
        %v4216 = vrot.slane %v2853, 2
        %v4217 = vrot.slane %v2856, 2
        %v4218 = vrot.slane %v2861, 2
        %v4219 = vrot.slane %v2864, 2
        %v4220 = vrot.slane %v2869, 2
        %v4221 = vrot.slane %v2872, 2
        %v4222 = vrot.slane %v2877, 2
        %v4223 = vrot.slane %v2880, 2
        %v4224 = vrot.slane %v2885, 2
        %v4225 = vrot.slane %v2888, 2
        %v4226 = vrot.slane %v2893, 2
        %v4227 = vrot.slane %v2896, 2
        %v4228 = vrot.slane %v2901, 2
        %v4229 = vrot.slane %v2904, 2
        %v4230 = vrot.slane %v2909, 2
        %v4231 = vrot.slane %v2912, 2
        %v4232 = vrot.slane %v2917, 2
        %v4233 = vrot.slane %v2920, 2
        %v4234 = vrot.slane %v2925, 2
        %v4235 = vrot.slane %v2928, 2
        %v4236 = vrot.slane %v2933, 2
        %v4237 = vrot.slane %v2936, 2
        %v4238 = vrot.slane %v2941, 2
        %v4239 = vrot.slane %v2944, 2
        %v4240 = vrot.slane %v2949, 2
        %v4241 = vrot.slane %v2952, 2
        %v4242 = vrot.slane %v2957, 2
        %v4243 = vrot.slane %v2960, 2
        %v4244 = vrot.slane %v2965, 2
        %v4245 = vrot.slane %v2968, 2
        %v4246 = vrot.slane %v2973, 2
        %v4247 = vrot.slane %v2976, 2
        %v4248 = vrot.slane %v2981, 2
        %v4249 = vrot.slane %v2984, 2
        %v4250 = vrot.slane %v2989, 2
        %v4251 = vrot.slane %v2992, 2
        %v4252 = vrot.slane %v2997, 2
        %v4253 = vrot.slane %v3000, 2
        %v4254 = vrot.slane %v3005, 2
        %v4255 = vrot.slane %v3008, 2
        %v4256 = vrot.slane %v3013, 2
        %v4257 = vrot.slane %v3016, 2
        %v4258 = vrot.slane %v3021, 2
        %v4259 = vrot.slane %v3024, 2
        %v4260 = vrot.slane %v3029, 2
        %v4261 = vrot.slane %v3032, 2
        %v4262 = vrot.slane %v3037, 2
        %v4263 = vrot.slane %v3040, 2
        %v4264 = vrot.slane %v3045, 2
        %v4265 = vrot.slane %v3048, 2
        %v4266 = vrot.slane %v3053, 2
        %v4267 = vrot.slane %v3056, 2
        %v4268 = vrot.slane %v3061, 2
        %v4269 = vrot.slane %v3064, 2
        %v4270 = vrot.slane %v3069, 2
        %v4271 = vrot.slane %v3072, 2
        %v4272 = vrot.slane %v3077, 2
        %v4273 = vrot.slane %v3080, 2
        %v4274 = vrot.slane %v3085, 2
        %v4275 = vrot.slane %v3088, 2
        %v4276 = vrot.slane %v3093, 2
        %v4277 = vrot.slane %v3096, 2
        %v4278 = vrot.slane %v3101, 2
        %v4279 = vrot.slane %v3104, 2
        %v4280 = vrot.slane %v3109, 2
        %v4281 = vrot.slane %v3112, 2
        %v4282 = vrot.slane %v3117, 2
        %v4283 = vrot.slane %v3120, 2
        %v4284 = vrot.slane %v3125, 2
        %v4285 = vrot.slane %v3128, 2
        %v4286 = vrot.slane %v3133, 2
        %v4287 = vrot.slane %v3136, 2
        %v4288 = vrot.slane %v3141, 2
        %v4289 = vrot.slane %v3144, 2
        %v4290 = vrot.slane %v3149, 2
        %v4291 = vrot.slane %v3152, 2
        %v4292 = vrot.slane %v3157, 2
        %v4293 = vrot.slane %v3160, 2
        %v4294 = vrot.slane %v3165, 2
        %v4295 = vrot.slane %v3168, 2
        %v4296 = vrot.slane %v3173, 2
        %v4297 = vrot.slane %v3176, 2
        %v4298 = vrot.slane %v3181, 2
        %v4299 = vrot.slane %v3184, 2
        %v4300 = vrot.slane %v3189, 2
        %v4301 = vrot.slane %v3192, 2
        %v4302 = vrot.slane %v3197, 2
        %v4303 = vrot.slane %v3200, 2
        %v4304 = vrot.slane %v3205, 2
        %v4305 = vrot.slane %v3208, 2
        %v4306 = vrot.slane %v3213, 2
        %v4307 = vrot.slane %v3216, 2
        %v4308 = vrot.slane %v3221, 2
        %v4309 = vrot.slane %v3224, 2
        %v4310 = vrot.slane %v3229, 2
        %v4311 = vrot.slane %v3232, 2
        %v4312 = vrot.slane %v3237, 2
        %v4313 = vrot.slane %v3240, 2
        %v4314 = vrot.slane %v3245, 2
        %v4315 = vrot.slane %v3248, 2
        %v4316 = vrot.slane %v3253, 2
        %v4317 = vrot.slane %v3256, 2
        %v4318 = vrot.slane %v3261, 2
        %v4319 = vrot.slane %v3264, 2
        %v4320 = vrot.slane %v3269, 2
        %v4321 = vrot.slane %v3272, 2
        %v4322 = vrot.slane %v3277, 2
        %v4323 = vrot.slane %v3280, 2
        %v4324 = vrot.slane %v3285, 2
        %v4325 = vrot.slane %v3288, 2
        %v4326 = vrot.slane %v3293, 2
        %v4327 = vrot.slane %v3296, 2
        %v4328 = vrot.slane %v3301, 2
        %v4329 = vrot.slane %v3304, 2
        %v4330 = vrot.slane %v3309, 2
        %v4331 = vrot.slane %v3312, 2
        %v4332 = vrot.slane %v3317, 2
        %v4333 = vrot.slane %v3320, 2
        %v4334 = vrot.slane %v3325, 2
        %v4335 = vrot.slane %v3328, 2
        %v4336 = vrot.slane %v3333, 2
        %v4337 = vrot.slane %v3336, 2
        %v4338 = vrot.slane %v3341, 2
        %v4339 = vrot.slane %v3344, 2
        %v4340 = vrot.slane %v3349, 2
        %v4341 = vrot.slane %v3352, 2
        %v4342 = vrot.slane %v3357, 2
        %v4343 = vrot.slane %v3360, 2
        %v4344 = vrot.slane %v3365, 2
        %v4345 = vrot.slane %v3368, 2
        %v4346 = vrot.slane %v3373, 2
        %v4347 = vrot.slane %v3376, 2
        %v4348 = vrot.slane %v3381, 2
        %v4349 = vrot.slane %v3384, 2
        %v4350 = vrot.slane %v3389, 2
        %v4351 = vrot.slane %v3392, 2
        %v4352 = vrot.slane %v3397, 2
        %v4353 = vrot.slane %v3400, 2
        %v4354 = vrot.slane %v3405, 2
        %v4355 = vrot.slane %v3408, 2
        %v4356 = vrot.slane %v3413, 2
        %v4357 = vrot.slane %v3416, 2
        %v4358 = vrot.slane %v3421, 2
        %v4359 = vrot.slane %v3424, 2
        %v4360 = vrot.slane %v3429, 2
        %v4361 = vrot.slane %v3432, 2
        %v4362 = vrot.slane %v3437, 2
        %v4363 = vrot.slane %v3440, 2
        %v4364 = vrot.slane %v3445, 2
        %v4365 = vrot.slane %v3448, 2
        %v4366 = vrot.slane %v3453, 2
        %v4367 = vrot.slane %v3456, 2
        %v4368 = vrot.slane %v3461, 2
        %v4369 = vrot.slane %v3464, 2
        %v4370 = vrot.slane %v3469, 2
        %v4371 = vrot.slane %v3472, 2
        %v4372 = vrot.slane %v3477, 2
        %v4373 = vrot.slane %v3480, 2
        %v4374 = vrot.slane %v3485, 2
        %v4375 = vrot.slane %v3488, 2
        %v4376 = vrot.slane %v3493, 2
        %v4377 = vrot.slane %v3496, 2
        %v4378 = vrot.slane %v3501, 2
        %v4379 = vrot.slane %v3504, 2
        %v4380 = vrot.slane %v3509, 2
        %v4381 = vrot.slane %v3512, 2
        %v4382 = vrot.slane %v3517, 2
        %v4383 = vrot.slane %v3520, 2
        %v4384 = vrot.slane %v3525, 2
        %v4385 = vrot.slane %v3528, 2
        %v4386 = vrot.slane %v3533, 2
        %v4387 = vrot.slane %v3536, 2
        %v4388 = vrot.slane %v3541, 2
        %v4389 = vrot.slane %v3544, 2
        %v4390 = vrot.slane %v3549, 2
        %v4391 = vrot.slane %v3552, 2
        %v4392 = vrot.slane %v3557, 2
        %v4393 = vrot.slane %v3560, 2
        %v4394 = vrot.slane %v3565, 2
        %v4395 = vrot.slane %v3568, 2
        %v4396 = vrot.slane %v3573, 2
        %v4397 = vrot.slane %v3576, 2
        %v4398 = vrot.slane %v3581, 2
        %v4399 = vrot.slane %v3584, 2
        %v4400 = vrot.slane %v3589, 2
        %v4401 = vrot.slane %v3592, 2
        %v4402 = vrot.slane %v3597, 2
        %v4403 = vrot.slane %v3600, 2
        %v4404 = vrot.slane %v3605, 2
        %v4405 = vrot.slane %v3608, 2
        %v4406 = vrot.slane %v3613, 2
        %v4407 = vrot.slane %v3616, 2
        %v4408 = vrot.slane %v3621, 2
        %v4409 = vrot.slane %v3624, 2
        %v4410 = vrot.slane %v3629, 2
        %v4411 = vrot.slane %v3632, 2
        %v4412 = vrot.slane %v3637, 2
        %v4413 = vrot.slane %v3640, 2
        %vm4414 = vcmp.lt.s32.totalorder %v3900, 6
        %v4415 = vsel %vm4414, %v4412, %v4413
        %v4416 = vsel %vm4414, %v4411, %v4412
        %v4417 = vsel %vm4414, %v4410, %v4411
        %v4418 = vsel %vm4414, %v4409, %v4410
        %v4419 = vsel %vm4414, %v4408, %v4409
        %v4420 = vsel %vm4414, %v4407, %v4408
        %v4421 = vsel %vm4414, %v4406, %v4407
        %v4422 = vsel %vm4414, %v4405, %v4406
        %v4423 = vsel %vm4414, %v4404, %v4405
        %v4424 = vsel %vm4414, %v4403, %v4404
        %v4425 = vsel %vm4414, %v4402, %v4403
        %v4426 = vsel %vm4414, %v4401, %v4402
        %v4427 = vsel %vm4414, %v4400, %v4401
        %v4428 = vsel %vm4414, %v4399, %v4400
        %v4429 = vsel %vm4414, %v4398, %v4399
        %v4430 = vsel %vm4414, %v4397, %v4398
        %v4431 = vsel %vm4414, %v4396, %v4397
        %v4432 = vsel %vm4414, %v4395, %v4396
        %v4433 = vsel %vm4414, %v4394, %v4395
        %v4434 = vsel %vm4414, %v4393, %v4394
        %v4435 = vsel %vm4414, %v4392, %v4393
        %v4436 = vsel %vm4414, %v4391, %v4392
        %v4437 = vsel %vm4414, %v4390, %v4391
        %v4438 = vsel %vm4414, %v4389, %v4390
        %v4439 = vsel %vm4414, %v4388, %v4389
        %v4440 = vsel %vm4414, %v4387, %v4388
        %v4441 = vsel %vm4414, %v4386, %v4387
        %v4442 = vsel %vm4414, %v4385, %v4386
        %v4443 = vsel %vm4414, %v4384, %v4385
        %v4444 = vsel %vm4414, %v4383, %v4384
        %v4445 = vsel %vm4414, %v4382, %v4383
        %v4446 = vsel %vm4414, %v4381, %v4382
        %v4447 = vsel %vm4414, %v4380, %v4381
        %v4448 = vsel %vm4414, %v4379, %v4380
        %v4449 = vsel %vm4414, %v4378, %v4379
        %v4450 = vsel %vm4414, %v4377, %v4378
        %v4451 = vsel %vm4414, %v4376, %v4377
        %v4452 = vsel %vm4414, %v4375, %v4376
        %v4453 = vsel %vm4414, %v4374, %v4375
        %v4454 = vsel %vm4414, %v4373, %v4374
        %v4455 = vsel %vm4414, %v4372, %v4373
        %v4456 = vsel %vm4414, %v4371, %v4372
        %v4457 = vsel %vm4414, %v4370, %v4371
        %v4458 = vsel %vm4414, %v4369, %v4370
        %v4459 = vsel %vm4414, %v4368, %v4369
        %v4460 = vsel %vm4414, %v4367, %v4368
        %v4461 = vsel %vm4414, %v4366, %v4367
        %v4462 = vsel %vm4414, %v4365, %v4366
        %v4463 = vsel %vm4414, %v4364, %v4365
        %v4464 = vsel %vm4414, %v4363, %v4364
        %v4465 = vsel %vm4414, %v4362, %v4363
        %v4466 = vsel %vm4414, %v4361, %v4362
        %v4467 = vsel %vm4414, %v4360, %v4361
        %v4468 = vsel %vm4414, %v4359, %v4360
        %v4469 = vsel %vm4414, %v4358, %v4359
        %v4470 = vsel %vm4414, %v4357, %v4358
        %v4471 = vsel %vm4414, %v4356, %v4357
        %v4472 = vsel %vm4414, %v4355, %v4356
        %v4473 = vsel %vm4414, %v4354, %v4355
        %v4474 = vsel %vm4414, %v4353, %v4354
        %v4475 = vsel %vm4414, %v4352, %v4353
        %v4476 = vsel %vm4414, %v4351, %v4352
        %v4477 = vsel %vm4414, %v4350, %v4351
        %v4478 = vsel %vm4414, %v4349, %v4350
        %v4479 = vsel %vm4414, %v4348, %v4349
        %v4480 = vsel %vm4414, %v4347, %v4348
        %v4481 = vsel %vm4414, %v4346, %v4347
        %v4482 = vsel %vm4414, %v4345, %v4346
        %v4483 = vsel %vm4414, %v4344, %v4345
        %v4484 = vsel %vm4414, %v4343, %v4344
        %v4485 = vsel %vm4414, %v4342, %v4343
        %v4486 = vsel %vm4414, %v4341, %v4342
        %v4487 = vsel %vm4414, %v4340, %v4341
        %v4488 = vsel %vm4414, %v4339, %v4340
        %v4489 = vsel %vm4414, %v4338, %v4339
        %v4490 = vsel %vm4414, %v4337, %v4338
        %v4491 = vsel %vm4414, %v4336, %v4337
        %v4492 = vsel %vm4414, %v4335, %v4336
        %v4493 = vsel %vm4414, %v4334, %v4335
        %v4494 = vsel %vm4414, %v4333, %v4334
        %v4495 = vsel %vm4414, %v4332, %v4333
        %v4496 = vsel %vm4414, %v4331, %v4332
        %v4497 = vsel %vm4414, %v4330, %v4331
        %v4498 = vsel %vm4414, %v4329, %v4330
        %v4499 = vsel %vm4414, %v4328, %v4329
        %v4500 = vsel %vm4414, %v4327, %v4328
        %v4501 = vsel %vm4414, %v4326, %v4327
        %v4502 = vsel %vm4414, %v4325, %v4326
        %v4503 = vsel %vm4414, %v4324, %v4325
        %v4504 = vsel %vm4414, %v4323, %v4324
        %v4505 = vsel %vm4414, %v4322, %v4323
        %v4506 = vsel %vm4414, %v4321, %v4322
        %v4507 = vsel %vm4414, %v4320, %v4321
        %v4508 = vsel %vm4414, %v4319, %v4320
        %v4509 = vsel %vm4414, %v4318, %v4319
        %v4510 = vsel %vm4414, %v4317, %v4318
        %v4511 = vsel %vm4414, %v4316, %v4317
        %v4512 = vsel %vm4414, %v4315, %v4316
        %v4513 = vsel %vm4414, %v4314, %v4315
        %v4514 = vsel %vm4414, %v4313, %v4314
        %v4515 = vsel %vm4414, %v4312, %v4313
        %v4516 = vsel %vm4414, %v4311, %v4312
        %v4517 = vsel %vm4414, %v4310, %v4311
        %v4518 = vsel %vm4414, %v4309, %v4310
        %v4519 = vsel %vm4414, %v4308, %v4309
        %v4520 = vsel %vm4414, %v4307, %v4308
        %v4521 = vsel %vm4414, %v4306, %v4307
        %v4522 = vsel %vm4414, %v4305, %v4306
        %v4523 = vsel %vm4414, %v4304, %v4305
        %v4524 = vsel %vm4414, %v4303, %v4304
        %v4525 = vsel %vm4414, %v4302, %v4303
        %v4526 = vsel %vm4414, %v4301, %v4302
        %v4527 = vsel %vm4414, %v4300, %v4301
        %v4528 = vsel %vm4414, %v4299, %v4300
        %v4529 = vsel %vm4414, %v4298, %v4299
        %v4530 = vsel %vm4414, %v4297, %v4298
        %v4531 = vsel %vm4414, %v4296, %v4297
        %v4532 = vsel %vm4414, %v4295, %v4296
        %v4533 = vsel %vm4414, %v4294, %v4295
        %v4534 = vsel %vm4414, %v4293, %v4294
        %v4535 = vsel %vm4414, %v4292, %v4293
        %v4536 = vsel %vm4414, %v4291, %v4292
        %v4537 = vsel %vm4414, %v4290, %v4291
        %v4538 = vsel %vm4414, %v4289, %v4290
        %v4539 = vsel %vm4414, %v4288, %v4289
        %v4540 = vsel %vm4414, %v4287, %v4288
        %v4541 = vsel %vm4414, %v4286, %v4287
        %v4542 = vsel %vm4414, %v4285, %v4286
        %v4543 = vsel %vm4414, %v4284, %v4285
        %v4544 = vsel %vm4414, %v4283, %v4284
        %v4545 = vsel %vm4414, %v4282, %v4283
        %v4546 = vsel %vm4414, %v4281, %v4282
        %v4547 = vsel %vm4414, %v4280, %v4281
        %v4548 = vsel %vm4414, %v4279, %v4280
        %v4549 = vsel %vm4414, %v4278, %v4279
        %v4550 = vsel %vm4414, %v4277, %v4278
        %v4551 = vsel %vm4414, %v4276, %v4277
        %v4552 = vsel %vm4414, %v4275, %v4276
        %v4553 = vsel %vm4414, %v4274, %v4275
        %v4554 = vsel %vm4414, %v4273, %v4274
        %v4555 = vsel %vm4414, %v4272, %v4273
        %v4556 = vsel %vm4414, %v4271, %v4272
        %v4557 = vsel %vm4414, %v4270, %v4271
        %v4558 = vsel %vm4414, %v4269, %v4270
        %v4559 = vsel %vm4414, %v4268, %v4269
        %v4560 = vsel %vm4414, %v4267, %v4268
        %v4561 = vsel %vm4414, %v4266, %v4267
        %v4562 = vsel %vm4414, %v4265, %v4266
        %v4563 = vsel %vm4414, %v4264, %v4265
        %v4564 = vsel %vm4414, %v4263, %v4264
        %v4565 = vsel %vm4414, %v4262, %v4263
        %v4566 = vsel %vm4414, %v4261, %v4262
        %v4567 = vsel %vm4414, %v4260, %v4261
        %v4568 = vsel %vm4414, %v4259, %v4260
        %v4569 = vsel %vm4414, %v4258, %v4259
        %v4570 = vsel %vm4414, %v4257, %v4258
        %v4571 = vsel %vm4414, %v4256, %v4257
        %v4572 = vsel %vm4414, %v4255, %v4256
        %v4573 = vsel %vm4414, %v4254, %v4255
        %v4574 = vsel %vm4414, %v4253, %v4254
        %v4575 = vsel %vm4414, %v4252, %v4253
        %v4576 = vsel %vm4414, %v4251, %v4252
        %v4577 = vsel %vm4414, %v4250, %v4251
        %v4578 = vsel %vm4414, %v4249, %v4250
        %v4579 = vsel %vm4414, %v4248, %v4249
        %v4580 = vsel %vm4414, %v4247, %v4248
        %v4581 = vsel %vm4414, %v4246, %v4247
        %v4582 = vsel %vm4414, %v4245, %v4246
        %v4583 = vsel %vm4414, %v4244, %v4245
        %v4584 = vsel %vm4414, %v4243, %v4244
        %v4585 = vsel %vm4414, %v4242, %v4243
        %v4586 = vsel %vm4414, %v4241, %v4242
        %v4587 = vsel %vm4414, %v4240, %v4241
        %v4588 = vsel %vm4414, %v4239, %v4240
        %v4589 = vsel %vm4414, %v4238, %v4239
        %v4590 = vsel %vm4414, %v4237, %v4238
        %v4591 = vsel %vm4414, %v4236, %v4237
        %v4592 = vsel %vm4414, %v4235, %v4236
        %v4593 = vsel %vm4414, %v4234, %v4235
        %v4594 = vsel %vm4414, %v4233, %v4234
        %v4595 = vsel %vm4414, %v4232, %v4233
        %v4596 = vsel %vm4414, %v4231, %v4232
        %v4597 = vsel %vm4414, %v4230, %v4231
        %v4598 = vsel %vm4414, %v4229, %v4230
        %v4599 = vsel %vm4414, %v4228, %v4229
        %v4600 = vsel %vm4414, %v4227, %v4228
        %v4601 = vsel %vm4414, %v4226, %v4227
        %v4602 = vsel %vm4414, %v4225, %v4226
        %v4603 = vsel %vm4414, %v4224, %v4225
        %v4604 = vsel %vm4414, %v4223, %v4224
        %v4605 = vsel %vm4414, %v4222, %v4223
        %v4606 = vsel %vm4414, %v4221, %v4222
        %v4607 = vsel %vm4414, %v4220, %v4221
        %v4608 = vsel %vm4414, %v4219, %v4220
        %v4609 = vsel %vm4414, %v4218, %v4219
        %v4610 = vsel %vm4414, %v4217, %v4218
        %v4611 = vsel %vm4414, %v4216, %v4217
        %v4612 = vsel %vm4414, %v4215, %v4216
        %v4613 = vsel %vm4414, %v4214, %v4215
        %v4614 = vsel %vm4414, %v4213, %v4214
        %v4615 = vsel %vm4414, %v4212, %v4213
        %v4616 = vsel %vm4414, %v4211, %v4212
        %v4617 = vsel %vm4414, %v4210, %v4211
        %v4618 = vsel %vm4414, %v4209, %v4210
        %v4619 = vsel %vm4414, %v4208, %v4209
        %v4620 = vsel %vm4414, %v4207, %v4208
        %v4621 = vsel %vm4414, %v4206, %v4207
        %v4622 = vsel %vm4414, %v4205, %v4206
        %v4623 = vsel %vm4414, %v4204, %v4205
        %v4624 = vsel %vm4414, %v4203, %v4204
        %v4625 = vsel %vm4414, %v4202, %v4203
        %v4626 = vsel %vm4414, %v4201, %v4202
        %v4627 = vsel %vm4414, %v4200, %v4201
        %v4628 = vsel %vm4414, %v4199, %v4200
        %v4629 = vsel %vm4414, %v4198, %v4199
        %v4630 = vsel %vm4414, %v4197, %v4198
        %v4631 = vsel %vm4414, %v4196, %v4197
        %v4632 = vsel %vm4414, %v4195, %v4196
        %v4633 = vsel %vm4414, %v4194, %v4195
        %v4634 = vsel %vm4414, %v4193, %v4194
        %v4635 = vsel %vm4414, %v4192, %v4193
        %v4636 = vsel %vm4414, %v4191, %v4192
        %v4637 = vsel %vm4414, %v4190, %v4191
        %v4638 = vsel %vm4414, %v4189, %v4190
        %v4639 = vsel %vm4414, %v4188, %v4189
        %v4640 = vsel %vm4414, %v4187, %v4188
        %v4641 = vsel %vm4414, %v4186, %v4187
        %v4642 = vsel %vm4414, %v4185, %v4186
        %v4643 = vsel %vm4414, %v4184, %v4185
        %v4644 = vsel %vm4414, %v4183, %v4184
        %v4645 = vsel %vm4414, %v4182, %v4183
        %v4646 = vsel %vm4414, %v4181, %v4182
        %v4647 = vsel %vm4414, %v4180, %v4181
        %v4648 = vsel %vm4414, %v4179, %v4180
        %v4649 = vsel %vm4414, %v4178, %v4179
        %v4650 = vsel %vm4414, %v4177, %v4178
        %v4651 = vsel %vm4414, %v4176, %v4177
        %v4652 = vsel %vm4414, %v4175, %v4176
        %v4653 = vsel %vm4414, %v4174, %v4175
        %v4654 = vsel %vm4414, %v4173, %v4174
        %v4655 = vsel %vm4414, %v4172, %v4173
        %v4656 = vsel %vm4414, %v4171, %v4172
        %v4657 = vsel %vm4414, %v4170, %v4171
        %v4658 = vsel %vm4414, %v4169, %v4170
        %v4659 = vsel %vm4414, %v4168, %v4169
        %v4660 = vsel %vm4414, %v4167, %v4168
        %v4661 = vsel %vm4414, %v4166, %v4167
        %v4662 = vsel %vm4414, %v4165, %v4166
        %v4663 = vsel %vm4414, %v4164, %v4165
        %v4664 = vsel %vm4414, %v4163, %v4164
        %v4665 = vsel %vm4414, %v4162, %v4163
        %v4666 = vsel %vm4414, %v4161, %v4162
        %v4667 = vsel %vm4414, %v4160, %v4161
        %v4668 = vsel %vm4414, %v4159, %v4160
        %v4669 = vsel %vm4414, %v4158, %v4159
        %v4670 = vsel %vm4414, %v4413, %v4158
        %v4671 = vrot.slane %v2621, 3
        %v4672 = vrot.slane %v2624, 3
        %v4673 = vrot.slane %v2629, 3
        %v4674 = vrot.slane %v2632, 3
        %v4675 = vrot.slane %v2637, 3
        %v4676 = vrot.slane %v2640, 3
        %v4677 = vrot.slane %v2645, 3
        %v4678 = vrot.slane %v2648, 3
        %v4679 = vrot.slane %v2653, 3
        %v4680 = vrot.slane %v2656, 3
        %v4681 = vrot.slane %v2661, 3
        %v4682 = vrot.slane %v2664, 3
        %v4683 = vrot.slane %v2669, 3
        %v4684 = vrot.slane %v2672, 3
        %v4685 = vrot.slane %v2677, 3
        %v4686 = vrot.slane %v2680, 3
        %v4687 = vrot.slane %v2685, 3
        %v4688 = vrot.slane %v2688, 3
        %v4689 = vrot.slane %v2693, 3
        %v4690 = vrot.slane %v2696, 3
        %v4691 = vrot.slane %v2701, 3
        %v4692 = vrot.slane %v2704, 3
        %v4693 = vrot.slane %v2709, 3
        %v4694 = vrot.slane %v2712, 3
        %v4695 = vrot.slane %v2717, 3
        %v4696 = vrot.slane %v2720, 3
        %v4697 = vrot.slane %v2725, 3
        %v4698 = vrot.slane %v2728, 3
        %v4699 = vrot.slane %v2733, 3
        %v4700 = vrot.slane %v2736, 3
        %v4701 = vrot.slane %v2741, 3
        %v4702 = vrot.slane %v2744, 3
        %v4703 = vrot.slane %v2749, 3
        %v4704 = vrot.slane %v2752, 3
        %v4705 = vrot.slane %v2757, 3
        %v4706 = vrot.slane %v2760, 3
        %v4707 = vrot.slane %v2765, 3
        %v4708 = vrot.slane %v2768, 3
        %v4709 = vrot.slane %v2773, 3
        %v4710 = vrot.slane %v2776, 3
        %v4711 = vrot.slane %v2781, 3
        %v4712 = vrot.slane %v2784, 3
        %v4713 = vrot.slane %v2789, 3
        %v4714 = vrot.slane %v2792, 3
        %v4715 = vrot.slane %v2797, 3
        %v4716 = vrot.slane %v2800, 3
        %v4717 = vrot.slane %v2805, 3
        %v4718 = vrot.slane %v2808, 3
        %v4719 = vrot.slane %v2813, 3
        %v4720 = vrot.slane %v2816, 3
        %v4721 = vrot.slane %v2821, 3
        %v4722 = vrot.slane %v2824, 3
        %v4723 = vrot.slane %v2829, 3
        %v4724 = vrot.slane %v2832, 3
        %v4725 = vrot.slane %v2837, 3
        %v4726 = vrot.slane %v2840, 3
        %v4727 = vrot.slane %v2845, 3
        %v4728 = vrot.slane %v2848, 3
        %v4729 = vrot.slane %v2853, 3
        %v4730 = vrot.slane %v2856, 3
        %v4731 = vrot.slane %v2861, 3
        %v4732 = vrot.slane %v2864, 3
        %v4733 = vrot.slane %v2869, 3
        %v4734 = vrot.slane %v2872, 3
        %v4735 = vrot.slane %v2877, 3
        %v4736 = vrot.slane %v2880, 3
        %v4737 = vrot.slane %v2885, 3
        %v4738 = vrot.slane %v2888, 3
        %v4739 = vrot.slane %v2893, 3
        %v4740 = vrot.slane %v2896, 3
        %v4741 = vrot.slane %v2901, 3
        %v4742 = vrot.slane %v2904, 3
        %v4743 = vrot.slane %v2909, 3
        %v4744 = vrot.slane %v2912, 3
        %v4745 = vrot.slane %v2917, 3
        %v4746 = vrot.slane %v2920, 3
        %v4747 = vrot.slane %v2925, 3
        %v4748 = vrot.slane %v2928, 3
        %v4749 = vrot.slane %v2933, 3
        %v4750 = vrot.slane %v2936, 3
        %v4751 = vrot.slane %v2941, 3
        %v4752 = vrot.slane %v2944, 3
        %v4753 = vrot.slane %v2949, 3
        %v4754 = vrot.slane %v2952, 3
        %v4755 = vrot.slane %v2957, 3
        %v4756 = vrot.slane %v2960, 3
        %v4757 = vrot.slane %v2965, 3
        %v4758 = vrot.slane %v2968, 3
        %v4759 = vrot.slane %v2973, 3
        %v4760 = vrot.slane %v2976, 3
        %v4761 = vrot.slane %v2981, 3
        %v4762 = vrot.slane %v2984, 3
        %v4763 = vrot.slane %v2989, 3
        %v4764 = vrot.slane %v2992, 3
        %v4765 = vrot.slane %v2997, 3
        %v4766 = vrot.slane %v3000, 3
        %v4767 = vrot.slane %v3005, 3
        %v4768 = vrot.slane %v3008, 3
        %v4769 = vrot.slane %v3013, 3
        %v4770 = vrot.slane %v3016, 3
        %v4771 = vrot.slane %v3021, 3
        %v4772 = vrot.slane %v3024, 3
        %v4773 = vrot.slane %v3029, 3
        %v4774 = vrot.slane %v3032, 3
        %v4775 = vrot.slane %v3037, 3
        %v4776 = vrot.slane %v3040, 3
        %v4777 = vrot.slane %v3045, 3
        %v4778 = vrot.slane %v3048, 3
        %v4779 = vrot.slane %v3053, 3
        %v4780 = vrot.slane %v3056, 3
        %v4781 = vrot.slane %v3061, 3
        %v4782 = vrot.slane %v3064, 3
        %v4783 = vrot.slane %v3069, 3
        %v4784 = vrot.slane %v3072, 3
        %v4785 = vrot.slane %v3077, 3
        %v4786 = vrot.slane %v3080, 3
        %v4787 = vrot.slane %v3085, 3
        %v4788 = vrot.slane %v3088, 3
        %v4789 = vrot.slane %v3093, 3
        %v4790 = vrot.slane %v3096, 3
        %v4791 = vrot.slane %v3101, 3
        %v4792 = vrot.slane %v3104, 3
        %v4793 = vrot.slane %v3109, 3
        %v4794 = vrot.slane %v3112, 3
        %v4795 = vrot.slane %v3117, 3
        %v4796 = vrot.slane %v3120, 3
        %v4797 = vrot.slane %v3125, 3
        %v4798 = vrot.slane %v3128, 3
        %v4799 = vrot.slane %v3133, 3
        %v4800 = vrot.slane %v3136, 3
        %v4801 = vrot.slane %v3141, 3
        %v4802 = vrot.slane %v3144, 3
        %v4803 = vrot.slane %v3149, 3
        %v4804 = vrot.slane %v3152, 3
        %v4805 = vrot.slane %v3157, 3
        %v4806 = vrot.slane %v3160, 3
        %v4807 = vrot.slane %v3165, 3
        %v4808 = vrot.slane %v3168, 3
        %v4809 = vrot.slane %v3173, 3
        %v4810 = vrot.slane %v3176, 3
        %v4811 = vrot.slane %v3181, 3
        %v4812 = vrot.slane %v3184, 3
        %v4813 = vrot.slane %v3189, 3
        %v4814 = vrot.slane %v3192, 3
        %v4815 = vrot.slane %v3197, 3
        %v4816 = vrot.slane %v3200, 3
        %v4817 = vrot.slane %v3205, 3
        %v4818 = vrot.slane %v3208, 3
        %v4819 = vrot.slane %v3213, 3
        %v4820 = vrot.slane %v3216, 3
        %v4821 = vrot.slane %v3221, 3
        %v4822 = vrot.slane %v3224, 3
        %v4823 = vrot.slane %v3229, 3
        %v4824 = vrot.slane %v3232, 3
        %v4825 = vrot.slane %v3237, 3
        %v4826 = vrot.slane %v3240, 3
        %v4827 = vrot.slane %v3245, 3
        %v4828 = vrot.slane %v3248, 3
        %v4829 = vrot.slane %v3253, 3
        %v4830 = vrot.slane %v3256, 3
        %v4831 = vrot.slane %v3261, 3
        %v4832 = vrot.slane %v3264, 3
        %v4833 = vrot.slane %v3269, 3
        %v4834 = vrot.slane %v3272, 3
        %v4835 = vrot.slane %v3277, 3
        %v4836 = vrot.slane %v3280, 3
        %v4837 = vrot.slane %v3285, 3
        %v4838 = vrot.slane %v3288, 3
        %v4839 = vrot.slane %v3293, 3
        %v4840 = vrot.slane %v3296, 3
        %v4841 = vrot.slane %v3301, 3
        %v4842 = vrot.slane %v3304, 3
        %v4843 = vrot.slane %v3309, 3
        %v4844 = vrot.slane %v3312, 3
        %v4845 = vrot.slane %v3317, 3
        %v4846 = vrot.slane %v3320, 3
        %v4847 = vrot.slane %v3325, 3
        %v4848 = vrot.slane %v3328, 3
        %v4849 = vrot.slane %v3333, 3
        %v4850 = vrot.slane %v3336, 3
        %v4851 = vrot.slane %v3341, 3
        %v4852 = vrot.slane %v3344, 3
        %v4853 = vrot.slane %v3349, 3
        %v4854 = vrot.slane %v3352, 3
        %v4855 = vrot.slane %v3357, 3
        %v4856 = vrot.slane %v3360, 3
        %v4857 = vrot.slane %v3365, 3
        %v4858 = vrot.slane %v3368, 3
        %v4859 = vrot.slane %v3373, 3
        %v4860 = vrot.slane %v3376, 3
        %v4861 = vrot.slane %v3381, 3
        %v4862 = vrot.slane %v3384, 3
        %v4863 = vrot.slane %v3389, 3
        %v4864 = vrot.slane %v3392, 3
        %v4865 = vrot.slane %v3397, 3
        %v4866 = vrot.slane %v3400, 3
        %v4867 = vrot.slane %v3405, 3
        %v4868 = vrot.slane %v3408, 3
        %v4869 = vrot.slane %v3413, 3
        %v4870 = vrot.slane %v3416, 3
        %v4871 = vrot.slane %v3421, 3
        %v4872 = vrot.slane %v3424, 3
        %v4873 = vrot.slane %v3429, 3
        %v4874 = vrot.slane %v3432, 3
        %v4875 = vrot.slane %v3437, 3
        %v4876 = vrot.slane %v3440, 3
        %v4877 = vrot.slane %v3445, 3
        %v4878 = vrot.slane %v3448, 3
        %v4879 = vrot.slane %v3453, 3
        %v4880 = vrot.slane %v3456, 3
        %v4881 = vrot.slane %v3461, 3
        %v4882 = vrot.slane %v3464, 3
        %v4883 = vrot.slane %v3469, 3
        %v4884 = vrot.slane %v3472, 3
        %v4885 = vrot.slane %v3477, 3
        %v4886 = vrot.slane %v3480, 3
        %v4887 = vrot.slane %v3485, 3
        %v4888 = vrot.slane %v3488, 3
        %v4889 = vrot.slane %v3493, 3
        %v4890 = vrot.slane %v3496, 3
        %v4891 = vrot.slane %v3501, 3
        %v4892 = vrot.slane %v3504, 3
        %v4893 = vrot.slane %v3509, 3
        %v4894 = vrot.slane %v3512, 3
        %v4895 = vrot.slane %v3517, 3
        %v4896 = vrot.slane %v3520, 3
        %v4897 = vrot.slane %v3525, 3
        %v4898 = vrot.slane %v3528, 3
        %v4899 = vrot.slane %v3533, 3
        %v4900 = vrot.slane %v3536, 3
        %v4901 = vrot.slane %v3541, 3
        %v4902 = vrot.slane %v3544, 3
        %v4903 = vrot.slane %v3549, 3
        %v4904 = vrot.slane %v3552, 3
        %v4905 = vrot.slane %v3557, 3
        %v4906 = vrot.slane %v3560, 3
        %v4907 = vrot.slane %v3565, 3
        %v4908 = vrot.slane %v3568, 3
        %v4909 = vrot.slane %v3573, 3
        %v4910 = vrot.slane %v3576, 3
        %v4911 = vrot.slane %v3581, 3
        %v4912 = vrot.slane %v3584, 3
        %v4913 = vrot.slane %v3589, 3
        %v4914 = vrot.slane %v3592, 3
        %v4915 = vrot.slane %v3597, 3
        %v4916 = vrot.slane %v3600, 3
        %v4917 = vrot.slane %v3605, 3
        %v4918 = vrot.slane %v3608, 3
        %v4919 = vrot.slane %v3613, 3
        %v4920 = vrot.slane %v3616, 3
        %v4921 = vrot.slane %v3621, 3
        %v4922 = vrot.slane %v3624, 3
        %v4923 = vrot.slane %v3629, 3
        %v4924 = vrot.slane %v3632, 3
        %v4925 = vrot.slane %v3637, 3
        %v4926 = vrot.slane %v3640, 3
        %vm4927 = vcmp.lt.s32.totalorder %v3900, 5
        %v4928 = vsel %vm4927, %v4925, %v4926
        %v4929 = vsel %vm4927, %v4924, %v4925
        %v4930 = vsel %vm4927, %v4923, %v4924
        %v4931 = vsel %vm4927, %v4922, %v4923
        %v4932 = vsel %vm4927, %v4921, %v4922
        %v4933 = vsel %vm4927, %v4920, %v4921
        %v4934 = vsel %vm4927, %v4919, %v4920
        %v4935 = vsel %vm4927, %v4918, %v4919
        %v4936 = vsel %vm4927, %v4917, %v4918
        %v4937 = vsel %vm4927, %v4916, %v4917
        %v4938 = vsel %vm4927, %v4915, %v4916
        %v4939 = vsel %vm4927, %v4914, %v4915
        %v4940 = vsel %vm4927, %v4913, %v4914
        %v4941 = vsel %vm4927, %v4912, %v4913
        %v4942 = vsel %vm4927, %v4911, %v4912
        %v4943 = vsel %vm4927, %v4910, %v4911
        %v4944 = vsel %vm4927, %v4909, %v4910
        %v4945 = vsel %vm4927, %v4908, %v4909
        %v4946 = vsel %vm4927, %v4907, %v4908
        %v4947 = vsel %vm4927, %v4906, %v4907
        %v4948 = vsel %vm4927, %v4905, %v4906
        %v4949 = vsel %vm4927, %v4904, %v4905
        %v4950 = vsel %vm4927, %v4903, %v4904
        %v4951 = vsel %vm4927, %v4902, %v4903
        %v4952 = vsel %vm4927, %v4901, %v4902
        %v4953 = vsel %vm4927, %v4900, %v4901
        %v4954 = vsel %vm4927, %v4899, %v4900
        %v4955 = vsel %vm4927, %v4898, %v4899
        %v4956 = vsel %vm4927, %v4897, %v4898
        %v4957 = vsel %vm4927, %v4896, %v4897
        %v4958 = vsel %vm4927, %v4895, %v4896
        %v4959 = vsel %vm4927, %v4894, %v4895
        %v4960 = vsel %vm4927, %v4893, %v4894
        %v4961 = vsel %vm4927, %v4892, %v4893
        %v4962 = vsel %vm4927, %v4891, %v4892
        %v4963 = vsel %vm4927, %v4890, %v4891
        %v4964 = vsel %vm4927, %v4889, %v4890
        %v4965 = vsel %vm4927, %v4888, %v4889
        %v4966 = vsel %vm4927, %v4887, %v4888
        %v4967 = vsel %vm4927, %v4886, %v4887
        %v4968 = vsel %vm4927, %v4885, %v4886
        %v4969 = vsel %vm4927, %v4884, %v4885
        %v4970 = vsel %vm4927, %v4883, %v4884
        %v4971 = vsel %vm4927, %v4882, %v4883
        %v4972 = vsel %vm4927, %v4881, %v4882
        %v4973 = vsel %vm4927, %v4880, %v4881
        %v4974 = vsel %vm4927, %v4879, %v4880
        %v4975 = vsel %vm4927, %v4878, %v4879
        %v4976 = vsel %vm4927, %v4877, %v4878
        %v4977 = vsel %vm4927, %v4876, %v4877
        %v4978 = vsel %vm4927, %v4875, %v4876
        %v4979 = vsel %vm4927, %v4874, %v4875
        %v4980 = vsel %vm4927, %v4873, %v4874
        %v4981 = vsel %vm4927, %v4872, %v4873
        %v4982 = vsel %vm4927, %v4871, %v4872
        %v4983 = vsel %vm4927, %v4870, %v4871
        %v4984 = vsel %vm4927, %v4869, %v4870
        %v4985 = vsel %vm4927, %v4868, %v4869
        %v4986 = vsel %vm4927, %v4867, %v4868
        %v4987 = vsel %vm4927, %v4866, %v4867
        %v4988 = vsel %vm4927, %v4865, %v4866
        %v4989 = vsel %vm4927, %v4864, %v4865
        %v4990 = vsel %vm4927, %v4863, %v4864
        %v4991 = vsel %vm4927, %v4862, %v4863
        %v4992 = vsel %vm4927, %v4861, %v4862
        %v4993 = vsel %vm4927, %v4860, %v4861
        %v4994 = vsel %vm4927, %v4859, %v4860
        %v4995 = vsel %vm4927, %v4858, %v4859
        %v4996 = vsel %vm4927, %v4857, %v4858
        %v4997 = vsel %vm4927, %v4856, %v4857
        %v4998 = vsel %vm4927, %v4855, %v4856
        %v4999 = vsel %vm4927, %v4854, %v4855
        %v5000 = vsel %vm4927, %v4853, %v4854
        %v5001 = vsel %vm4927, %v4852, %v4853
        %v5002 = vsel %vm4927, %v4851, %v4852
        %v5003 = vsel %vm4927, %v4850, %v4851
        %v5004 = vsel %vm4927, %v4849, %v4850
        %v5005 = vsel %vm4927, %v4848, %v4849
        %v5006 = vsel %vm4927, %v4847, %v4848
        %v5007 = vsel %vm4927, %v4846, %v4847
        %v5008 = vsel %vm4927, %v4845, %v4846
        %v5009 = vsel %vm4927, %v4844, %v4845
        %v5010 = vsel %vm4927, %v4843, %v4844
        %v5011 = vsel %vm4927, %v4842, %v4843
        %v5012 = vsel %vm4927, %v4841, %v4842
        %v5013 = vsel %vm4927, %v4840, %v4841
        %v5014 = vsel %vm4927, %v4839, %v4840
        %v5015 = vsel %vm4927, %v4838, %v4839
        %v5016 = vsel %vm4927, %v4837, %v4838
        %v5017 = vsel %vm4927, %v4836, %v4837
        %v5018 = vsel %vm4927, %v4835, %v4836
        %v5019 = vsel %vm4927, %v4834, %v4835
        %v5020 = vsel %vm4927, %v4833, %v4834
        %v5021 = vsel %vm4927, %v4832, %v4833
        %v5022 = vsel %vm4927, %v4831, %v4832
        %v5023 = vsel %vm4927, %v4830, %v4831
        %v5024 = vsel %vm4927, %v4829, %v4830
        %v5025 = vsel %vm4927, %v4828, %v4829
        %v5026 = vsel %vm4927, %v4827, %v4828
        %v5027 = vsel %vm4927, %v4826, %v4827
        %v5028 = vsel %vm4927, %v4825, %v4826
        %v5029 = vsel %vm4927, %v4824, %v4825
        %v5030 = vsel %vm4927, %v4823, %v4824
        %v5031 = vsel %vm4927, %v4822, %v4823
        %v5032 = vsel %vm4927, %v4821, %v4822
        %v5033 = vsel %vm4927, %v4820, %v4821
        %v5034 = vsel %vm4927, %v4819, %v4820
        %v5035 = vsel %vm4927, %v4818, %v4819
        %v5036 = vsel %vm4927, %v4817, %v4818
        %v5037 = vsel %vm4927, %v4816, %v4817
        %v5038 = vsel %vm4927, %v4815, %v4816
        %v5039 = vsel %vm4927, %v4814, %v4815
        %v5040 = vsel %vm4927, %v4813, %v4814
        %v5041 = vsel %vm4927, %v4812, %v4813
        %v5042 = vsel %vm4927, %v4811, %v4812
        %v5043 = vsel %vm4927, %v4810, %v4811
        %v5044 = vsel %vm4927, %v4809, %v4810
        %v5045 = vsel %vm4927, %v4808, %v4809
        %v5046 = vsel %vm4927, %v4807, %v4808
        %v5047 = vsel %vm4927, %v4806, %v4807
        %v5048 = vsel %vm4927, %v4805, %v4806
        %v5049 = vsel %vm4927, %v4804, %v4805
        %v5050 = vsel %vm4927, %v4803, %v4804
        %v5051 = vsel %vm4927, %v4802, %v4803
        %v5052 = vsel %vm4927, %v4801, %v4802
        %v5053 = vsel %vm4927, %v4800, %v4801
        %v5054 = vsel %vm4927, %v4799, %v4800
        %v5055 = vsel %vm4927, %v4798, %v4799
        %v5056 = vsel %vm4927, %v4797, %v4798
        %v5057 = vsel %vm4927, %v4796, %v4797
        %v5058 = vsel %vm4927, %v4795, %v4796
        %v5059 = vsel %vm4927, %v4794, %v4795
        %v5060 = vsel %vm4927, %v4793, %v4794
        %v5061 = vsel %vm4927, %v4792, %v4793
        %v5062 = vsel %vm4927, %v4791, %v4792
        %v5063 = vsel %vm4927, %v4790, %v4791
        %v5064 = vsel %vm4927, %v4789, %v4790
        %v5065 = vsel %vm4927, %v4788, %v4789
        %v5066 = vsel %vm4927, %v4787, %v4788
        %v5067 = vsel %vm4927, %v4786, %v4787
        %v5068 = vsel %vm4927, %v4785, %v4786
        %v5069 = vsel %vm4927, %v4784, %v4785
        %v5070 = vsel %vm4927, %v4783, %v4784
        %v5071 = vsel %vm4927, %v4782, %v4783
        %v5072 = vsel %vm4927, %v4781, %v4782
        %v5073 = vsel %vm4927, %v4780, %v4781
        %v5074 = vsel %vm4927, %v4779, %v4780
        %v5075 = vsel %vm4927, %v4778, %v4779
        %v5076 = vsel %vm4927, %v4777, %v4778
        %v5077 = vsel %vm4927, %v4776, %v4777
        %v5078 = vsel %vm4927, %v4775, %v4776
        %v5079 = vsel %vm4927, %v4774, %v4775
        %v5080 = vsel %vm4927, %v4773, %v4774
        %v5081 = vsel %vm4927, %v4772, %v4773
        %v5082 = vsel %vm4927, %v4771, %v4772
        %v5083 = vsel %vm4927, %v4770, %v4771
        %v5084 = vsel %vm4927, %v4769, %v4770
        %v5085 = vsel %vm4927, %v4768, %v4769
        %v5086 = vsel %vm4927, %v4767, %v4768
        %v5087 = vsel %vm4927, %v4766, %v4767
        %v5088 = vsel %vm4927, %v4765, %v4766
        %v5089 = vsel %vm4927, %v4764, %v4765
        %v5090 = vsel %vm4927, %v4763, %v4764
        %v5091 = vsel %vm4927, %v4762, %v4763
        %v5092 = vsel %vm4927, %v4761, %v4762
        %v5093 = vsel %vm4927, %v4760, %v4761
        %v5094 = vsel %vm4927, %v4759, %v4760
        %v5095 = vsel %vm4927, %v4758, %v4759
        %v5096 = vsel %vm4927, %v4757, %v4758
        %v5097 = vsel %vm4927, %v4756, %v4757
        %v5098 = vsel %vm4927, %v4755, %v4756
        %v5099 = vsel %vm4927, %v4754, %v4755
        %v5100 = vsel %vm4927, %v4753, %v4754
        %v5101 = vsel %vm4927, %v4752, %v4753
        %v5102 = vsel %vm4927, %v4751, %v4752
        %v5103 = vsel %vm4927, %v4750, %v4751
        %v5104 = vsel %vm4927, %v4749, %v4750
        %v5105 = vsel %vm4927, %v4748, %v4749
        %v5106 = vsel %vm4927, %v4747, %v4748
        %v5107 = vsel %vm4927, %v4746, %v4747
        %v5108 = vsel %vm4927, %v4745, %v4746
        %v5109 = vsel %vm4927, %v4744, %v4745
        %v5110 = vsel %vm4927, %v4743, %v4744
        %v5111 = vsel %vm4927, %v4742, %v4743
        %v5112 = vsel %vm4927, %v4741, %v4742
        %v5113 = vsel %vm4927, %v4740, %v4741
        %v5114 = vsel %vm4927, %v4739, %v4740
        %v5115 = vsel %vm4927, %v4738, %v4739
        %v5116 = vsel %vm4927, %v4737, %v4738
        %v5117 = vsel %vm4927, %v4736, %v4737
        %v5118 = vsel %vm4927, %v4735, %v4736
        %v5119 = vsel %vm4927, %v4734, %v4735
        %v5120 = vsel %vm4927, %v4733, %v4734
        %v5121 = vsel %vm4927, %v4732, %v4733
        %v5122 = vsel %vm4927, %v4731, %v4732
        %v5123 = vsel %vm4927, %v4730, %v4731
        %v5124 = vsel %vm4927, %v4729, %v4730
        %v5125 = vsel %vm4927, %v4728, %v4729
        %v5126 = vsel %vm4927, %v4727, %v4728
        %v5127 = vsel %vm4927, %v4726, %v4727
        %v5128 = vsel %vm4927, %v4725, %v4726
        %v5129 = vsel %vm4927, %v4724, %v4725
        %v5130 = vsel %vm4927, %v4723, %v4724
        %v5131 = vsel %vm4927, %v4722, %v4723
        %v5132 = vsel %vm4927, %v4721, %v4722
        %v5133 = vsel %vm4927, %v4720, %v4721
        %v5134 = vsel %vm4927, %v4719, %v4720
        %v5135 = vsel %vm4927, %v4718, %v4719
        %v5136 = vsel %vm4927, %v4717, %v4718
        %v5137 = vsel %vm4927, %v4716, %v4717
        %v5138 = vsel %vm4927, %v4715, %v4716
        %v5139 = vsel %vm4927, %v4714, %v4715
        %v5140 = vsel %vm4927, %v4713, %v4714
        %v5141 = vsel %vm4927, %v4712, %v4713
        %v5142 = vsel %vm4927, %v4711, %v4712
        %v5143 = vsel %vm4927, %v4710, %v4711
        %v5144 = vsel %vm4927, %v4709, %v4710
        %v5145 = vsel %vm4927, %v4708, %v4709
        %v5146 = vsel %vm4927, %v4707, %v4708
        %v5147 = vsel %vm4927, %v4706, %v4707
        %v5148 = vsel %vm4927, %v4705, %v4706
        %v5149 = vsel %vm4927, %v4704, %v4705
        %v5150 = vsel %vm4927, %v4703, %v4704
        %v5151 = vsel %vm4927, %v4702, %v4703
        %v5152 = vsel %vm4927, %v4701, %v4702
        %v5153 = vsel %vm4927, %v4700, %v4701
        %v5154 = vsel %vm4927, %v4699, %v4700
        %v5155 = vsel %vm4927, %v4698, %v4699
        %v5156 = vsel %vm4927, %v4697, %v4698
        %v5157 = vsel %vm4927, %v4696, %v4697
        %v5158 = vsel %vm4927, %v4695, %v4696
        %v5159 = vsel %vm4927, %v4694, %v4695
        %v5160 = vsel %vm4927, %v4693, %v4694
        %v5161 = vsel %vm4927, %v4692, %v4693
        %v5162 = vsel %vm4927, %v4691, %v4692
        %v5163 = vsel %vm4927, %v4690, %v4691
        %v5164 = vsel %vm4927, %v4689, %v4690
        %v5165 = vsel %vm4927, %v4688, %v4689
        %v5166 = vsel %vm4927, %v4687, %v4688
        %v5167 = vsel %vm4927, %v4686, %v4687
        %v5168 = vsel %vm4927, %v4685, %v4686
        %v5169 = vsel %vm4927, %v4684, %v4685
        %v5170 = vsel %vm4927, %v4683, %v4684
        %v5171 = vsel %vm4927, %v4682, %v4683
        %v5172 = vsel %vm4927, %v4681, %v4682
        %v5173 = vsel %vm4927, %v4680, %v4681
        %v5174 = vsel %vm4927, %v4679, %v4680
        %v5175 = vsel %vm4927, %v4678, %v4679
        %v5176 = vsel %vm4927, %v4677, %v4678
        %v5177 = vsel %vm4927, %v4676, %v4677
        %v5178 = vsel %vm4927, %v4675, %v4676
        %v5179 = vsel %vm4927, %v4674, %v4675
        %v5180 = vsel %vm4927, %v4673, %v4674
        %v5181 = vsel %vm4927, %v4672, %v4673
        %v5182 = vsel %vm4927, %v4671, %v4672
        %v5183 = vsel %vm4927, %v4926, %v4671
        %v5184 = vrot.slane %v2621, 4
        %v5185 = vrot.slane %v2624, 4
        %v5186 = vrot.slane %v2629, 4
        %v5187 = vrot.slane %v2632, 4
        %v5188 = vrot.slane %v2637, 4
        %v5189 = vrot.slane %v2640, 4
        %v5190 = vrot.slane %v2645, 4
        %v5191 = vrot.slane %v2648, 4
        %v5192 = vrot.slane %v2653, 4
        %v5193 = vrot.slane %v2656, 4
        %v5194 = vrot.slane %v2661, 4
        %v5195 = vrot.slane %v2664, 4
        %v5196 = vrot.slane %v2669, 4
        %v5197 = vrot.slane %v2672, 4
        %v5198 = vrot.slane %v2677, 4
        %v5199 = vrot.slane %v2680, 4
        %v5200 = vrot.slane %v2685, 4
        %v5201 = vrot.slane %v2688, 4
        %v5202 = vrot.slane %v2693, 4
        %v5203 = vrot.slane %v2696, 4
        %v5204 = vrot.slane %v2701, 4
        %v5205 = vrot.slane %v2704, 4
        %v5206 = vrot.slane %v2709, 4
        %v5207 = vrot.slane %v2712, 4
        %v5208 = vrot.slane %v2717, 4
        %v5209 = vrot.slane %v2720, 4
        %v5210 = vrot.slane %v2725, 4
        %v5211 = vrot.slane %v2728, 4
        %v5212 = vrot.slane %v2733, 4
        %v5213 = vrot.slane %v2736, 4
        %v5214 = vrot.slane %v2741, 4
        %v5215 = vrot.slane %v2744, 4
        %v5216 = vrot.slane %v2749, 4
        %v5217 = vrot.slane %v2752, 4
        %v5218 = vrot.slane %v2757, 4
        %v5219 = vrot.slane %v2760, 4
        %v5220 = vrot.slane %v2765, 4
        %v5221 = vrot.slane %v2768, 4
        %v5222 = vrot.slane %v2773, 4
        %v5223 = vrot.slane %v2776, 4
        %v5224 = vrot.slane %v2781, 4
        %v5225 = vrot.slane %v2784, 4
        %v5226 = vrot.slane %v2789, 4
        %v5227 = vrot.slane %v2792, 4
        %v5228 = vrot.slane %v2797, 4
        %v5229 = vrot.slane %v2800, 4
        %v5230 = vrot.slane %v2805, 4
        %v5231 = vrot.slane %v2808, 4
        %v5232 = vrot.slane %v2813, 4
        %v5233 = vrot.slane %v2816, 4
        %v5234 = vrot.slane %v2821, 4
        %v5235 = vrot.slane %v2824, 4
        %v5236 = vrot.slane %v2829, 4
        %v5237 = vrot.slane %v2832, 4
        %v5238 = vrot.slane %v2837, 4
        %v5239 = vrot.slane %v2840, 4
        %v5240 = vrot.slane %v2845, 4
        %v5241 = vrot.slane %v2848, 4
        %v5242 = vrot.slane %v2853, 4
        %v5243 = vrot.slane %v2856, 4
        %v5244 = vrot.slane %v2861, 4
        %v5245 = vrot.slane %v2864, 4
        %v5246 = vrot.slane %v2869, 4
        %v5247 = vrot.slane %v2872, 4
        %v5248 = vrot.slane %v2877, 4
        %v5249 = vrot.slane %v2880, 4
        %v5250 = vrot.slane %v2885, 4
        %v5251 = vrot.slane %v2888, 4
        %v5252 = vrot.slane %v2893, 4
        %v5253 = vrot.slane %v2896, 4
        %v5254 = vrot.slane %v2901, 4
        %v5255 = vrot.slane %v2904, 4
        %v5256 = vrot.slane %v2909, 4
        %v5257 = vrot.slane %v2912, 4
        %v5258 = vrot.slane %v2917, 4
        %v5259 = vrot.slane %v2920, 4
        %v5260 = vrot.slane %v2925, 4
        %v5261 = vrot.slane %v2928, 4
        %v5262 = vrot.slane %v2933, 4
        %v5263 = vrot.slane %v2936, 4
        %v5264 = vrot.slane %v2941, 4
        %v5265 = vrot.slane %v2944, 4
        %v5266 = vrot.slane %v2949, 4
        %v5267 = vrot.slane %v2952, 4
        %v5268 = vrot.slane %v2957, 4
        %v5269 = vrot.slane %v2960, 4
        %v5270 = vrot.slane %v2965, 4
        %v5271 = vrot.slane %v2968, 4
        %v5272 = vrot.slane %v2973, 4
        %v5273 = vrot.slane %v2976, 4
        %v5274 = vrot.slane %v2981, 4
        %v5275 = vrot.slane %v2984, 4
        %v5276 = vrot.slane %v2989, 4
        %v5277 = vrot.slane %v2992, 4
        %v5278 = vrot.slane %v2997, 4
        %v5279 = vrot.slane %v3000, 4
        %v5280 = vrot.slane %v3005, 4
        %v5281 = vrot.slane %v3008, 4
        %v5282 = vrot.slane %v3013, 4
        %v5283 = vrot.slane %v3016, 4
        %v5284 = vrot.slane %v3021, 4
        %v5285 = vrot.slane %v3024, 4
        %v5286 = vrot.slane %v3029, 4
        %v5287 = vrot.slane %v3032, 4
        %v5288 = vrot.slane %v3037, 4
        %v5289 = vrot.slane %v3040, 4
        %v5290 = vrot.slane %v3045, 4
        %v5291 = vrot.slane %v3048, 4
        %v5292 = vrot.slane %v3053, 4
        %v5293 = vrot.slane %v3056, 4
        %v5294 = vrot.slane %v3061, 4
        %v5295 = vrot.slane %v3064, 4
        %v5296 = vrot.slane %v3069, 4
        %v5297 = vrot.slane %v3072, 4
        %v5298 = vrot.slane %v3077, 4
        %v5299 = vrot.slane %v3080, 4
        %v5300 = vrot.slane %v3085, 4
        %v5301 = vrot.slane %v3088, 4
        %v5302 = vrot.slane %v3093, 4
        %v5303 = vrot.slane %v3096, 4
        %v5304 = vrot.slane %v3101, 4
        %v5305 = vrot.slane %v3104, 4
        %v5306 = vrot.slane %v3109, 4
        %v5307 = vrot.slane %v3112, 4
        %v5308 = vrot.slane %v3117, 4
        %v5309 = vrot.slane %v3120, 4
        %v5310 = vrot.slane %v3125, 4
        %v5311 = vrot.slane %v3128, 4
        %v5312 = vrot.slane %v3133, 4
        %v5313 = vrot.slane %v3136, 4
        %v5314 = vrot.slane %v3141, 4
        %v5315 = vrot.slane %v3144, 4
        %v5316 = vrot.slane %v3149, 4
        %v5317 = vrot.slane %v3152, 4
        %v5318 = vrot.slane %v3157, 4
        %v5319 = vrot.slane %v3160, 4
        %v5320 = vrot.slane %v3165, 4
        %v5321 = vrot.slane %v3168, 4
        %v5322 = vrot.slane %v3173, 4
        %v5323 = vrot.slane %v3176, 4
        %v5324 = vrot.slane %v3181, 4
        %v5325 = vrot.slane %v3184, 4
        %v5326 = vrot.slane %v3189, 4
        %v5327 = vrot.slane %v3192, 4
        %v5328 = vrot.slane %v3197, 4
        %v5329 = vrot.slane %v3200, 4
        %v5330 = vrot.slane %v3205, 4
        %v5331 = vrot.slane %v3208, 4
        %v5332 = vrot.slane %v3213, 4
        %v5333 = vrot.slane %v3216, 4
        %v5334 = vrot.slane %v3221, 4
        %v5335 = vrot.slane %v3224, 4
        %v5336 = vrot.slane %v3229, 4
        %v5337 = vrot.slane %v3232, 4
        %v5338 = vrot.slane %v3237, 4
        %v5339 = vrot.slane %v3240, 4
        %v5340 = vrot.slane %v3245, 4
        %v5341 = vrot.slane %v3248, 4
        %v5342 = vrot.slane %v3253, 4
        %v5343 = vrot.slane %v3256, 4
        %v5344 = vrot.slane %v3261, 4
        %v5345 = vrot.slane %v3264, 4
        %v5346 = vrot.slane %v3269, 4
        %v5347 = vrot.slane %v3272, 4
        %v5348 = vrot.slane %v3277, 4
        %v5349 = vrot.slane %v3280, 4
        %v5350 = vrot.slane %v3285, 4
        %v5351 = vrot.slane %v3288, 4
        %v5352 = vrot.slane %v3293, 4
        %v5353 = vrot.slane %v3296, 4
        %v5354 = vrot.slane %v3301, 4
        %v5355 = vrot.slane %v3304, 4
        %v5356 = vrot.slane %v3309, 4
        %v5357 = vrot.slane %v3312, 4
        %v5358 = vrot.slane %v3317, 4
        %v5359 = vrot.slane %v3320, 4
        %v5360 = vrot.slane %v3325, 4
        %v5361 = vrot.slane %v3328, 4
        %v5362 = vrot.slane %v3333, 4
        %v5363 = vrot.slane %v3336, 4
        %v5364 = vrot.slane %v3341, 4
        %v5365 = vrot.slane %v3344, 4
        %v5366 = vrot.slane %v3349, 4
        %v5367 = vrot.slane %v3352, 4
        %v5368 = vrot.slane %v3357, 4
        %v5369 = vrot.slane %v3360, 4
        %v5370 = vrot.slane %v3365, 4
        %v5371 = vrot.slane %v3368, 4
        %v5372 = vrot.slane %v3373, 4
        %v5373 = vrot.slane %v3376, 4
        %v5374 = vrot.slane %v3381, 4
        %v5375 = vrot.slane %v3384, 4
        %v5376 = vrot.slane %v3389, 4
        %v5377 = vrot.slane %v3392, 4
        %v5378 = vrot.slane %v3397, 4
        %v5379 = vrot.slane %v3400, 4
        %v5380 = vrot.slane %v3405, 4
        %v5381 = vrot.slane %v3408, 4
        %v5382 = vrot.slane %v3413, 4
        %v5383 = vrot.slane %v3416, 4
        %v5384 = vrot.slane %v3421, 4
        %v5385 = vrot.slane %v3424, 4
        %v5386 = vrot.slane %v3429, 4
        %v5387 = vrot.slane %v3432, 4
        %v5388 = vrot.slane %v3437, 4
        %v5389 = vrot.slane %v3440, 4
        %v5390 = vrot.slane %v3445, 4
        %v5391 = vrot.slane %v3448, 4
        %v5392 = vrot.slane %v3453, 4
        %v5393 = vrot.slane %v3456, 4
        %v5394 = vrot.slane %v3461, 4
        %v5395 = vrot.slane %v3464, 4
        %v5396 = vrot.slane %v3469, 4
        %v5397 = vrot.slane %v3472, 4
        %v5398 = vrot.slane %v3477, 4
        %v5399 = vrot.slane %v3480, 4
        %v5400 = vrot.slane %v3485, 4
        %v5401 = vrot.slane %v3488, 4
        %v5402 = vrot.slane %v3493, 4
        %v5403 = vrot.slane %v3496, 4
        %v5404 = vrot.slane %v3501, 4
        %v5405 = vrot.slane %v3504, 4
        %v5406 = vrot.slane %v3509, 4
        %v5407 = vrot.slane %v3512, 4
        %v5408 = vrot.slane %v3517, 4
        %v5409 = vrot.slane %v3520, 4
        %v5410 = vrot.slane %v3525, 4
        %v5411 = vrot.slane %v3528, 4
        %v5412 = vrot.slane %v3533, 4
        %v5413 = vrot.slane %v3536, 4
        %v5414 = vrot.slane %v3541, 4
        %v5415 = vrot.slane %v3544, 4
        %v5416 = vrot.slane %v3549, 4
        %v5417 = vrot.slane %v3552, 4
        %v5418 = vrot.slane %v3557, 4
        %v5419 = vrot.slane %v3560, 4
        %v5420 = vrot.slane %v3565, 4
        %v5421 = vrot.slane %v3568, 4
        %v5422 = vrot.slane %v3573, 4
        %v5423 = vrot.slane %v3576, 4
        %v5424 = vrot.slane %v3581, 4
        %v5425 = vrot.slane %v3584, 4
        %v5426 = vrot.slane %v3589, 4
        %v5427 = vrot.slane %v3592, 4
        %v5428 = vrot.slane %v3597, 4
        %v5429 = vrot.slane %v3600, 4
        %v5430 = vrot.slane %v3605, 4
        %v5431 = vrot.slane %v3608, 4
        %v5432 = vrot.slane %v3613, 4
        %v5433 = vrot.slane %v3616, 4
        %v5434 = vrot.slane %v3621, 4
        %v5435 = vrot.slane %v3624, 4
        %v5436 = vrot.slane %v3629, 4
        %v5437 = vrot.slane %v3632, 4
        %v5438 = vrot.slane %v3637, 4
        %v5439 = vrot.slane %v3640, 4
        %vm5440 = vcmp.lt.s32.totalorder %v3900, 4
        %v5441 = vsel %vm5440, %v5438, %v5439
        %v5442 = vsel %vm5440, %v5437, %v5438
        %v5443 = vsel %vm5440, %v5436, %v5437
        %v5444 = vsel %vm5440, %v5435, %v5436
        %v5445 = vsel %vm5440, %v5434, %v5435
        %v5446 = vsel %vm5440, %v5433, %v5434
        %v5447 = vsel %vm5440, %v5432, %v5433
        %v5448 = vsel %vm5440, %v5431, %v5432
        %v5449 = vsel %vm5440, %v5430, %v5431
        %v5450 = vsel %vm5440, %v5429, %v5430
        %v5451 = vsel %vm5440, %v5428, %v5429
        %v5452 = vsel %vm5440, %v5427, %v5428
        %v5453 = vsel %vm5440, %v5426, %v5427
        %v5454 = vsel %vm5440, %v5425, %v5426
        %v5455 = vsel %vm5440, %v5424, %v5425
        %v5456 = vsel %vm5440, %v5423, %v5424
        %v5457 = vsel %vm5440, %v5422, %v5423
        %v5458 = vsel %vm5440, %v5421, %v5422
        %v5459 = vsel %vm5440, %v5420, %v5421
        %v5460 = vsel %vm5440, %v5419, %v5420
        %v5461 = vsel %vm5440, %v5418, %v5419
        %v5462 = vsel %vm5440, %v5417, %v5418
        %v5463 = vsel %vm5440, %v5416, %v5417
        %v5464 = vsel %vm5440, %v5415, %v5416
        %v5465 = vsel %vm5440, %v5414, %v5415
        %v5466 = vsel %vm5440, %v5413, %v5414
        %v5467 = vsel %vm5440, %v5412, %v5413
        %v5468 = vsel %vm5440, %v5411, %v5412
        %v5469 = vsel %vm5440, %v5410, %v5411
        %v5470 = vsel %vm5440, %v5409, %v5410
        %v5471 = vsel %vm5440, %v5408, %v5409
        %v5472 = vsel %vm5440, %v5407, %v5408
        %v5473 = vsel %vm5440, %v5406, %v5407
        %v5474 = vsel %vm5440, %v5405, %v5406
        %v5475 = vsel %vm5440, %v5404, %v5405
        %v5476 = vsel %vm5440, %v5403, %v5404
        %v5477 = vsel %vm5440, %v5402, %v5403
        %v5478 = vsel %vm5440, %v5401, %v5402
        %v5479 = vsel %vm5440, %v5400, %v5401
        %v5480 = vsel %vm5440, %v5399, %v5400
        %v5481 = vsel %vm5440, %v5398, %v5399
        %v5482 = vsel %vm5440, %v5397, %v5398
        %v5483 = vsel %vm5440, %v5396, %v5397
        %v5484 = vsel %vm5440, %v5395, %v5396
        %v5485 = vsel %vm5440, %v5394, %v5395
        %v5486 = vsel %vm5440, %v5393, %v5394
        %v5487 = vsel %vm5440, %v5392, %v5393
        %v5488 = vsel %vm5440, %v5391, %v5392
        %v5489 = vsel %vm5440, %v5390, %v5391
        %v5490 = vsel %vm5440, %v5389, %v5390
        %v5491 = vsel %vm5440, %v5388, %v5389
        %v5492 = vsel %vm5440, %v5387, %v5388
        %v5493 = vsel %vm5440, %v5386, %v5387
        %v5494 = vsel %vm5440, %v5385, %v5386
        %v5495 = vsel %vm5440, %v5384, %v5385
        %v5496 = vsel %vm5440, %v5383, %v5384
        %v5497 = vsel %vm5440, %v5382, %v5383
        %v5498 = vsel %vm5440, %v5381, %v5382
        %v5499 = vsel %vm5440, %v5380, %v5381
        %v5500 = vsel %vm5440, %v5379, %v5380
        %v5501 = vsel %vm5440, %v5378, %v5379
        %v5502 = vsel %vm5440, %v5377, %v5378
        %v5503 = vsel %vm5440, %v5376, %v5377
        %v5504 = vsel %vm5440, %v5375, %v5376
        %v5505 = vsel %vm5440, %v5374, %v5375
        %v5506 = vsel %vm5440, %v5373, %v5374
        %v5507 = vsel %vm5440, %v5372, %v5373
        %v5508 = vsel %vm5440, %v5371, %v5372
        %v5509 = vsel %vm5440, %v5370, %v5371
        %v5510 = vsel %vm5440, %v5369, %v5370
        %v5511 = vsel %vm5440, %v5368, %v5369
        %v5512 = vsel %vm5440, %v5367, %v5368
        %v5513 = vsel %vm5440, %v5366, %v5367
        %v5514 = vsel %vm5440, %v5365, %v5366
        %v5515 = vsel %vm5440, %v5364, %v5365
        %v5516 = vsel %vm5440, %v5363, %v5364
        %v5517 = vsel %vm5440, %v5362, %v5363
        %v5518 = vsel %vm5440, %v5361, %v5362
        %v5519 = vsel %vm5440, %v5360, %v5361
        %v5520 = vsel %vm5440, %v5359, %v5360
        %v5521 = vsel %vm5440, %v5358, %v5359
        %v5522 = vsel %vm5440, %v5357, %v5358
        %v5523 = vsel %vm5440, %v5356, %v5357
        %v5524 = vsel %vm5440, %v5355, %v5356
        %v5525 = vsel %vm5440, %v5354, %v5355
        %v5526 = vsel %vm5440, %v5353, %v5354
        %v5527 = vsel %vm5440, %v5352, %v5353
        %v5528 = vsel %vm5440, %v5351, %v5352
        %v5529 = vsel %vm5440, %v5350, %v5351
        %v5530 = vsel %vm5440, %v5349, %v5350
        %v5531 = vsel %vm5440, %v5348, %v5349
        %v5532 = vsel %vm5440, %v5347, %v5348
        %v5533 = vsel %vm5440, %v5346, %v5347
        %v5534 = vsel %vm5440, %v5345, %v5346
        %v5535 = vsel %vm5440, %v5344, %v5345
        %v5536 = vsel %vm5440, %v5343, %v5344
        %v5537 = vsel %vm5440, %v5342, %v5343
        %v5538 = vsel %vm5440, %v5341, %v5342
        %v5539 = vsel %vm5440, %v5340, %v5341
        %v5540 = vsel %vm5440, %v5339, %v5340
        %v5541 = vsel %vm5440, %v5338, %v5339
        %v5542 = vsel %vm5440, %v5337, %v5338
        %v5543 = vsel %vm5440, %v5336, %v5337
        %v5544 = vsel %vm5440, %v5335, %v5336
        %v5545 = vsel %vm5440, %v5334, %v5335
        %v5546 = vsel %vm5440, %v5333, %v5334
        %v5547 = vsel %vm5440, %v5332, %v5333
        %v5548 = vsel %vm5440, %v5331, %v5332
        %v5549 = vsel %vm5440, %v5330, %v5331
        %v5550 = vsel %vm5440, %v5329, %v5330
        %v5551 = vsel %vm5440, %v5328, %v5329
        %v5552 = vsel %vm5440, %v5327, %v5328
        %v5553 = vsel %vm5440, %v5326, %v5327
        %v5554 = vsel %vm5440, %v5325, %v5326
        %v5555 = vsel %vm5440, %v5324, %v5325
        %v5556 = vsel %vm5440, %v5323, %v5324
        %v5557 = vsel %vm5440, %v5322, %v5323
        %v5558 = vsel %vm5440, %v5321, %v5322
        %v5559 = vsel %vm5440, %v5320, %v5321
        %v5560 = vsel %vm5440, %v5319, %v5320
        %v5561 = vsel %vm5440, %v5318, %v5319
        %v5562 = vsel %vm5440, %v5317, %v5318
        %v5563 = vsel %vm5440, %v5316, %v5317
        %v5564 = vsel %vm5440, %v5315, %v5316
        %v5565 = vsel %vm5440, %v5314, %v5315
        %v5566 = vsel %vm5440, %v5313, %v5314
        %v5567 = vsel %vm5440, %v5312, %v5313
        %v5568 = vsel %vm5440, %v5311, %v5312
        %v5569 = vsel %vm5440, %v5310, %v5311
        %v5570 = vsel %vm5440, %v5309, %v5310
        %v5571 = vsel %vm5440, %v5308, %v5309
        %v5572 = vsel %vm5440, %v5307, %v5308
        %v5573 = vsel %vm5440, %v5306, %v5307
        %v5574 = vsel %vm5440, %v5305, %v5306
        %v5575 = vsel %vm5440, %v5304, %v5305
        %v5576 = vsel %vm5440, %v5303, %v5304
        %v5577 = vsel %vm5440, %v5302, %v5303
        %v5578 = vsel %vm5440, %v5301, %v5302
        %v5579 = vsel %vm5440, %v5300, %v5301
        %v5580 = vsel %vm5440, %v5299, %v5300
        %v5581 = vsel %vm5440, %v5298, %v5299
        %v5582 = vsel %vm5440, %v5297, %v5298
        %v5583 = vsel %vm5440, %v5296, %v5297
        %v5584 = vsel %vm5440, %v5295, %v5296
        %v5585 = vsel %vm5440, %v5294, %v5295
        %v5586 = vsel %vm5440, %v5293, %v5294
        %v5587 = vsel %vm5440, %v5292, %v5293
        %v5588 = vsel %vm5440, %v5291, %v5292
        %v5589 = vsel %vm5440, %v5290, %v5291
        %v5590 = vsel %vm5440, %v5289, %v5290
        %v5591 = vsel %vm5440, %v5288, %v5289
        %v5592 = vsel %vm5440, %v5287, %v5288
        %v5593 = vsel %vm5440, %v5286, %v5287
        %v5594 = vsel %vm5440, %v5285, %v5286
        %v5595 = vsel %vm5440, %v5284, %v5285
        %v5596 = vsel %vm5440, %v5283, %v5284
        %v5597 = vsel %vm5440, %v5282, %v5283
        %v5598 = vsel %vm5440, %v5281, %v5282
        %v5599 = vsel %vm5440, %v5280, %v5281
        %v5600 = vsel %vm5440, %v5279, %v5280
        %v5601 = vsel %vm5440, %v5278, %v5279
        %v5602 = vsel %vm5440, %v5277, %v5278
        %v5603 = vsel %vm5440, %v5276, %v5277
        %v5604 = vsel %vm5440, %v5275, %v5276
        %v5605 = vsel %vm5440, %v5274, %v5275
        %v5606 = vsel %vm5440, %v5273, %v5274
        %v5607 = vsel %vm5440, %v5272, %v5273
        %v5608 = vsel %vm5440, %v5271, %v5272
        %v5609 = vsel %vm5440, %v5270, %v5271
        %v5610 = vsel %vm5440, %v5269, %v5270
        %v5611 = vsel %vm5440, %v5268, %v5269
        %v5612 = vsel %vm5440, %v5267, %v5268
        %v5613 = vsel %vm5440, %v5266, %v5267
        %v5614 = vsel %vm5440, %v5265, %v5266
        %v5615 = vsel %vm5440, %v5264, %v5265
        %v5616 = vsel %vm5440, %v5263, %v5264
        %v5617 = vsel %vm5440, %v5262, %v5263
        %v5618 = vsel %vm5440, %v5261, %v5262
        %v5619 = vsel %vm5440, %v5260, %v5261
        %v5620 = vsel %vm5440, %v5259, %v5260
        %v5621 = vsel %vm5440, %v5258, %v5259
        %v5622 = vsel %vm5440, %v5257, %v5258
        %v5623 = vsel %vm5440, %v5256, %v5257
        %v5624 = vsel %vm5440, %v5255, %v5256
        %v5625 = vsel %vm5440, %v5254, %v5255
        %v5626 = vsel %vm5440, %v5253, %v5254
        %v5627 = vsel %vm5440, %v5252, %v5253
        %v5628 = vsel %vm5440, %v5251, %v5252
        %v5629 = vsel %vm5440, %v5250, %v5251
        %v5630 = vsel %vm5440, %v5249, %v5250
        %v5631 = vsel %vm5440, %v5248, %v5249
        %v5632 = vsel %vm5440, %v5247, %v5248
        %v5633 = vsel %vm5440, %v5246, %v5247
        %v5634 = vsel %vm5440, %v5245, %v5246
        %v5635 = vsel %vm5440, %v5244, %v5245
        %v5636 = vsel %vm5440, %v5243, %v5244
        %v5637 = vsel %vm5440, %v5242, %v5243
        %v5638 = vsel %vm5440, %v5241, %v5242
        %v5639 = vsel %vm5440, %v5240, %v5241
        %v5640 = vsel %vm5440, %v5239, %v5240
        %v5641 = vsel %vm5440, %v5238, %v5239
        %v5642 = vsel %vm5440, %v5237, %v5238
        %v5643 = vsel %vm5440, %v5236, %v5237
        %v5644 = vsel %vm5440, %v5235, %v5236
        %v5645 = vsel %vm5440, %v5234, %v5235
        %v5646 = vsel %vm5440, %v5233, %v5234
        %v5647 = vsel %vm5440, %v5232, %v5233
        %v5648 = vsel %vm5440, %v5231, %v5232
        %v5649 = vsel %vm5440, %v5230, %v5231
        %v5650 = vsel %vm5440, %v5229, %v5230
        %v5651 = vsel %vm5440, %v5228, %v5229
        %v5652 = vsel %vm5440, %v5227, %v5228
        %v5653 = vsel %vm5440, %v5226, %v5227
        %v5654 = vsel %vm5440, %v5225, %v5226
        %v5655 = vsel %vm5440, %v5224, %v5225
        %v5656 = vsel %vm5440, %v5223, %v5224
        %v5657 = vsel %vm5440, %v5222, %v5223
        %v5658 = vsel %vm5440, %v5221, %v5222
        %v5659 = vsel %vm5440, %v5220, %v5221
        %v5660 = vsel %vm5440, %v5219, %v5220
        %v5661 = vsel %vm5440, %v5218, %v5219
        %v5662 = vsel %vm5440, %v5217, %v5218
        %v5663 = vsel %vm5440, %v5216, %v5217
        %v5664 = vsel %vm5440, %v5215, %v5216
        %v5665 = vsel %vm5440, %v5214, %v5215
        %v5666 = vsel %vm5440, %v5213, %v5214
        %v5667 = vsel %vm5440, %v5212, %v5213
        %v5668 = vsel %vm5440, %v5211, %v5212
        %v5669 = vsel %vm5440, %v5210, %v5211
        %v5670 = vsel %vm5440, %v5209, %v5210
        %v5671 = vsel %vm5440, %v5208, %v5209
        %v5672 = vsel %vm5440, %v5207, %v5208
        %v5673 = vsel %vm5440, %v5206, %v5207
        %v5674 = vsel %vm5440, %v5205, %v5206
        %v5675 = vsel %vm5440, %v5204, %v5205
        %v5676 = vsel %vm5440, %v5203, %v5204
        %v5677 = vsel %vm5440, %v5202, %v5203
        %v5678 = vsel %vm5440, %v5201, %v5202
        %v5679 = vsel %vm5440, %v5200, %v5201
        %v5680 = vsel %vm5440, %v5199, %v5200
        %v5681 = vsel %vm5440, %v5198, %v5199
        %v5682 = vsel %vm5440, %v5197, %v5198
        %v5683 = vsel %vm5440, %v5196, %v5197
        %v5684 = vsel %vm5440, %v5195, %v5196
        %v5685 = vsel %vm5440, %v5194, %v5195
        %v5686 = vsel %vm5440, %v5193, %v5194
        %v5687 = vsel %vm5440, %v5192, %v5193
        %v5688 = vsel %vm5440, %v5191, %v5192
        %v5689 = vsel %vm5440, %v5190, %v5191
        %v5690 = vsel %vm5440, %v5189, %v5190
        %v5691 = vsel %vm5440, %v5188, %v5189
        %v5692 = vsel %vm5440, %v5187, %v5188
        %v5693 = vsel %vm5440, %v5186, %v5187
        %v5694 = vsel %vm5440, %v5185, %v5186
        %v5695 = vsel %vm5440, %v5184, %v5185
        %v5696 = vsel %vm5440, %v5439, %v5184
        %5953 = vrot.lane.b32.xlu0 %v4156, 32
        %v5954 = vpop.permute.xlu0 %5953
        %5955 = vrot.lane.b32.xlu0 %v4155, 32
        %v5956 = vpop.permute.xlu0 %5955
        %5957 = vrot.lane.b32.xlu0 %v4154, 32
        %v5958 = vpop.permute.xlu0 %5957
        %5959 = vrot.lane.b32.xlu0 %v4153, 32
        %v5960 = vpop.permute.xlu0 %5959
        %5961 = vrot.lane.b32.xlu0 %v4152, 32
        %v5962 = vpop.permute.xlu0 %5961
        %5963 = vrot.lane.b32.xlu0 %v4151, 32
        %v5964 = vpop.permute.xlu0 %5963
        %5965 = vrot.lane.b32.xlu0 %v4150, 32
        %v5966 = vpop.permute.xlu0 %5965
        %5967 = vrot.lane.b32.xlu0 %v4149, 32
        %v5968 = vpop.permute.xlu0 %5967
        %5969 = vrot.lane.b32.xlu0 %v4148, 32
        %v5970 = vpop.permute.xlu0 %5969
        %5971 = vrot.lane.b32.xlu0 %v4147, 32
        %v5972 = vpop.permute.xlu0 %5971
        %5973 = vrot.lane.b32.xlu0 %v4146, 32
        %v5974 = vpop.permute.xlu0 %5973
        %5975 = vrot.lane.b32.xlu0 %v4145, 32
        %v5976 = vpop.permute.xlu0 %5975
        %5977 = vrot.lane.b32.xlu0 %v4144, 32
        %v5978 = vpop.permute.xlu0 %5977
        %5979 = vrot.lane.b32.xlu0 %v4143, 32
        %v5980 = vpop.permute.xlu0 %5979
        %5981 = vrot.lane.b32.xlu0 %v4142, 32
        %v5982 = vpop.permute.xlu0 %5981
        %5983 = vrot.lane.b32.xlu0 %v4141, 32
        %v5984 = vpop.permute.xlu0 %5983
        %5985 = vrot.lane.b32.xlu0 %v4140, 32
        %v5986 = vpop.permute.xlu0 %5985
        %5987 = vrot.lane.b32.xlu0 %v4139, 32
        %v5988 = vpop.permute.xlu0 %5987
        %5989 = vrot.lane.b32.xlu0 %v4138, 32
        %v5990 = vpop.permute.xlu0 %5989
        %5991 = vrot.lane.b32.xlu0 %v4137, 32
        %v5992 = vpop.permute.xlu0 %5991
        %5993 = vrot.lane.b32.xlu0 %v4136, 32
        %v5994 = vpop.permute.xlu0 %5993
        %5995 = vrot.lane.b32.xlu0 %v4135, 32
        %v5996 = vpop.permute.xlu0 %5995
        %5997 = vrot.lane.b32.xlu0 %v4134, 32
        %v5998 = vpop.permute.xlu0 %5997
        %5999 = vrot.lane.b32.xlu0 %v4133, 32
        %v6000 = vpop.permute.xlu0 %5999
        %6001 = vrot.lane.b32.xlu0 %v4132, 32
        %v6002 = vpop.permute.xlu0 %6001
        %6003 = vrot.lane.b32.xlu0 %v4131, 32
        %v6004 = vpop.permute.xlu0 %6003
        %6005 = vrot.lane.b32.xlu0 %v4130, 32
        %v6006 = vpop.permute.xlu0 %6005
        %6007 = vrot.lane.b32.xlu0 %v4129, 32
        %v6008 = vpop.permute.xlu0 %6007
        %6009 = vrot.lane.b32.xlu0 %v4128, 32
        %v6010 = vpop.permute.xlu0 %6009
        %6011 = vrot.lane.b32.xlu0 %v4127, 32
        %v6012 = vpop.permute.xlu0 %6011
        %6013 = vrot.lane.b32.xlu0 %v4126, 32
        %v6014 = vpop.permute.xlu0 %6013
        %6015 = vrot.lane.b32.xlu0 %v4125, 32
        %v6016 = vpop.permute.xlu0 %6015
        %6017 = vrot.lane.b32.xlu0 %v4124, 32
        %v6018 = vpop.permute.xlu0 %6017
        %6019 = vrot.lane.b32.xlu0 %v4123, 32
        %v6020 = vpop.permute.xlu0 %6019
        %6021 = vrot.lane.b32.xlu0 %v4122, 32
        %v6022 = vpop.permute.xlu0 %6021
        %6023 = vrot.lane.b32.xlu0 %v4121, 32
        %v6024 = vpop.permute.xlu0 %6023
        %6025 = vrot.lane.b32.xlu0 %v4120, 32
        %v6026 = vpop.permute.xlu0 %6025
        %6027 = vrot.lane.b32.xlu0 %v4119, 32
        %v6028 = vpop.permute.xlu0 %6027
        %6029 = vrot.lane.b32.xlu0 %v4118, 32
        %v6030 = vpop.permute.xlu0 %6029
        %6031 = vrot.lane.b32.xlu0 %v4117, 32
        %v6032 = vpop.permute.xlu0 %6031
        %6033 = vrot.lane.b32.xlu0 %v4116, 32
        %v6034 = vpop.permute.xlu0 %6033
        %6035 = vrot.lane.b32.xlu0 %v4115, 32
        %v6036 = vpop.permute.xlu0 %6035
        %6037 = vrot.lane.b32.xlu0 %v4114, 32
        %v6038 = vpop.permute.xlu0 %6037
        %6039 = vrot.lane.b32.xlu0 %v4113, 32
        %v6040 = vpop.permute.xlu0 %6039
        %6041 = vrot.lane.b32.xlu0 %v4112, 32
        %v6042 = vpop.permute.xlu0 %6041
        %6043 = vrot.lane.b32.xlu0 %v4111, 32
        %v6044 = vpop.permute.xlu0 %6043
        %6045 = vrot.lane.b32.xlu0 %v4110, 32
        %v6046 = vpop.permute.xlu0 %6045
        %6047 = vrot.lane.b32.xlu0 %v4109, 32
        %v6048 = vpop.permute.xlu0 %6047
        %6049 = vrot.lane.b32.xlu0 %v4108, 32
        %v6050 = vpop.permute.xlu0 %6049
        %6051 = vrot.lane.b32.xlu0 %v4107, 32
        %v6052 = vpop.permute.xlu0 %6051
        %6053 = vrot.lane.b32.xlu0 %v4106, 32
        %v6054 = vpop.permute.xlu0 %6053
        %6055 = vrot.lane.b32.xlu0 %v4105, 32
        %v6056 = vpop.permute.xlu0 %6055
        %6057 = vrot.lane.b32.xlu0 %v4104, 32
        %v6058 = vpop.permute.xlu0 %6057
        %6059 = vrot.lane.b32.xlu0 %v4103, 32
        %v6060 = vpop.permute.xlu0 %6059
        %6061 = vrot.lane.b32.xlu0 %v4102, 32
        %v6062 = vpop.permute.xlu0 %6061
        %6063 = vrot.lane.b32.xlu0 %v4101, 32
        %v6064 = vpop.permute.xlu0 %6063
        %6065 = vrot.lane.b32.xlu0 %v4100, 32
        %v6066 = vpop.permute.xlu0 %6065
        %6067 = vrot.lane.b32.xlu0 %v4099, 32
        %v6068 = vpop.permute.xlu0 %6067
        %6069 = vrot.lane.b32.xlu0 %v4098, 32
        %v6070 = vpop.permute.xlu0 %6069
        %6071 = vrot.lane.b32.xlu0 %v4097, 32
        %v6072 = vpop.permute.xlu0 %6071
        %6073 = vrot.lane.b32.xlu0 %v4096, 32
        %v6074 = vpop.permute.xlu0 %6073
        %6075 = vrot.lane.b32.xlu0 %v4095, 32
        %v6076 = vpop.permute.xlu0 %6075
        %6077 = vrot.lane.b32.xlu0 %v4094, 32
        %v6078 = vpop.permute.xlu0 %6077
        %6079 = vrot.lane.b32.xlu0 %v4093, 32
        %v6080 = vpop.permute.xlu0 %6079
        %6081 = vrot.lane.b32.xlu0 %v4092, 32
        %v6082 = vpop.permute.xlu0 %6081
        %6083 = vrot.lane.b32.xlu0 %v4091, 32
        %v6084 = vpop.permute.xlu0 %6083
        %6085 = vrot.lane.b32.xlu0 %v4090, 32
        %v6086 = vpop.permute.xlu0 %6085
        %6087 = vrot.lane.b32.xlu0 %v4089, 32
        %v6088 = vpop.permute.xlu0 %6087
        %6089 = vrot.lane.b32.xlu0 %v4088, 32
        %v6090 = vpop.permute.xlu0 %6089
        %6091 = vrot.lane.b32.xlu0 %v4087, 32
        %v6092 = vpop.permute.xlu0 %6091
        %6093 = vrot.lane.b32.xlu0 %v4086, 32
        %v6094 = vpop.permute.xlu0 %6093
        %6095 = vrot.lane.b32.xlu0 %v4085, 32
        %v6096 = vpop.permute.xlu0 %6095
        %6097 = vrot.lane.b32.xlu0 %v4084, 32
        %v6098 = vpop.permute.xlu0 %6097
        %6099 = vrot.lane.b32.xlu0 %v4083, 32
        %v6100 = vpop.permute.xlu0 %6099
        %6101 = vrot.lane.b32.xlu0 %v4082, 32
        %v6102 = vpop.permute.xlu0 %6101
        %6103 = vrot.lane.b32.xlu0 %v4081, 32
        %v6104 = vpop.permute.xlu0 %6103
        %6105 = vrot.lane.b32.xlu0 %v4080, 32
        %v6106 = vpop.permute.xlu0 %6105
        %6107 = vrot.lane.b32.xlu0 %v4079, 32
        %v6108 = vpop.permute.xlu0 %6107
        %6109 = vrot.lane.b32.xlu0 %v4078, 32
        %v6110 = vpop.permute.xlu0 %6109
        %6111 = vrot.lane.b32.xlu0 %v4077, 32
        %v6112 = vpop.permute.xlu0 %6111
        %6113 = vrot.lane.b32.xlu0 %v4076, 32
        %v6114 = vpop.permute.xlu0 %6113
        %6115 = vrot.lane.b32.xlu0 %v4075, 32
        %v6116 = vpop.permute.xlu0 %6115
        %6117 = vrot.lane.b32.xlu0 %v4074, 32
        %v6118 = vpop.permute.xlu0 %6117
        %6119 = vrot.lane.b32.xlu0 %v4073, 32
        %v6120 = vpop.permute.xlu0 %6119
        %6121 = vrot.lane.b32.xlu0 %v4072, 32
        %v6122 = vpop.permute.xlu0 %6121
        %6123 = vrot.lane.b32.xlu0 %v4071, 32
        %v6124 = vpop.permute.xlu0 %6123
        %6125 = vrot.lane.b32.xlu0 %v4070, 32
        %v6126 = vpop.permute.xlu0 %6125
        %6127 = vrot.lane.b32.xlu0 %v4069, 32
        %v6128 = vpop.permute.xlu0 %6127
        %6129 = vrot.lane.b32.xlu0 %v4068, 32
        %v6130 = vpop.permute.xlu0 %6129
        %6131 = vrot.lane.b32.xlu0 %v4067, 32
        %v6132 = vpop.permute.xlu0 %6131
        %6133 = vrot.lane.b32.xlu0 %v4066, 32
        %v6134 = vpop.permute.xlu0 %6133
        %6135 = vrot.lane.b32.xlu0 %v4065, 32
        %v6136 = vpop.permute.xlu0 %6135
        %6137 = vrot.lane.b32.xlu0 %v4064, 32
        %v6138 = vpop.permute.xlu0 %6137
        %6139 = vrot.lane.b32.xlu0 %v4063, 32
        %v6140 = vpop.permute.xlu0 %6139
        %6141 = vrot.lane.b32.xlu0 %v4062, 32
        %v6142 = vpop.permute.xlu0 %6141
        %6143 = vrot.lane.b32.xlu0 %v4061, 32
        %v6144 = vpop.permute.xlu0 %6143
        %6145 = vrot.lane.b32.xlu0 %v4060, 32
        %v6146 = vpop.permute.xlu0 %6145
        %6147 = vrot.lane.b32.xlu0 %v4059, 32
        %v6148 = vpop.permute.xlu0 %6147
        %6149 = vrot.lane.b32.xlu0 %v4058, 32
        %v6150 = vpop.permute.xlu0 %6149
        %6151 = vrot.lane.b32.xlu0 %v4057, 32
        %v6152 = vpop.permute.xlu0 %6151
        %6153 = vrot.lane.b32.xlu0 %v4056, 32
        %v6154 = vpop.permute.xlu0 %6153
        %6155 = vrot.lane.b32.xlu0 %v4055, 32
        %v6156 = vpop.permute.xlu0 %6155
        %6157 = vrot.lane.b32.xlu0 %v4054, 32
        %v6158 = vpop.permute.xlu0 %6157
        %6159 = vrot.lane.b32.xlu0 %v4053, 32
        %v6160 = vpop.permute.xlu0 %6159
        %6161 = vrot.lane.b32.xlu0 %v4052, 32
        %v6162 = vpop.permute.xlu0 %6161
        %6163 = vrot.lane.b32.xlu0 %v4051, 32
        %v6164 = vpop.permute.xlu0 %6163
        %6165 = vrot.lane.b32.xlu0 %v4050, 32
        %v6166 = vpop.permute.xlu0 %6165
        %6167 = vrot.lane.b32.xlu0 %v4049, 32
        %v6168 = vpop.permute.xlu0 %6167
        %6169 = vrot.lane.b32.xlu0 %v4048, 32
        %v6170 = vpop.permute.xlu0 %6169
        %6171 = vrot.lane.b32.xlu0 %v4047, 32
        %v6172 = vpop.permute.xlu0 %6171
        %6173 = vrot.lane.b32.xlu0 %v4046, 32
        %v6174 = vpop.permute.xlu0 %6173
        %6175 = vrot.lane.b32.xlu0 %v4045, 32
        %v6176 = vpop.permute.xlu0 %6175
        %6177 = vrot.lane.b32.xlu0 %v4044, 32
        %v6178 = vpop.permute.xlu0 %6177
        %6179 = vrot.lane.b32.xlu0 %v4043, 32
        %v6180 = vpop.permute.xlu0 %6179
        %6181 = vrot.lane.b32.xlu0 %v4042, 32
        %v6182 = vpop.permute.xlu0 %6181
        %6183 = vrot.lane.b32.xlu0 %v4041, 32
        %v6184 = vpop.permute.xlu0 %6183
        %6185 = vrot.lane.b32.xlu0 %v4040, 32
        %v6186 = vpop.permute.xlu0 %6185
        %6187 = vrot.lane.b32.xlu0 %v4039, 32
        %v6188 = vpop.permute.xlu0 %6187
        %6189 = vrot.lane.b32.xlu0 %v4038, 32
        %v6190 = vpop.permute.xlu0 %6189
        %6191 = vrot.lane.b32.xlu0 %v4037, 32
        %v6192 = vpop.permute.xlu0 %6191
        %6193 = vrot.lane.b32.xlu0 %v4036, 32
        %v6194 = vpop.permute.xlu0 %6193
        %6195 = vrot.lane.b32.xlu0 %v4035, 32
        %v6196 = vpop.permute.xlu0 %6195
        %6197 = vrot.lane.b32.xlu0 %v4034, 32
        %v6198 = vpop.permute.xlu0 %6197
        %6199 = vrot.lane.b32.xlu0 %v4033, 32
        %v6200 = vpop.permute.xlu0 %6199
        %6201 = vrot.lane.b32.xlu0 %v4032, 32
        %v6202 = vpop.permute.xlu0 %6201
        %6203 = vrot.lane.b32.xlu0 %v4031, 32
        %v6204 = vpop.permute.xlu0 %6203
        %6205 = vrot.lane.b32.xlu0 %v4030, 32
        %v6206 = vpop.permute.xlu0 %6205
        %6207 = vrot.lane.b32.xlu0 %v4029, 32
        %v6208 = vpop.permute.xlu0 %6207
        %6209 = vrot.lane.b32.xlu0 %v4028, 32
        %v6210 = vpop.permute.xlu0 %6209
        %6211 = vrot.lane.b32.xlu0 %v4027, 32
        %v6212 = vpop.permute.xlu0 %6211
        %6213 = vrot.lane.b32.xlu0 %v4026, 32
        %v6214 = vpop.permute.xlu0 %6213
        %6215 = vrot.lane.b32.xlu0 %v4025, 32
        %v6216 = vpop.permute.xlu0 %6215
        %6217 = vrot.lane.b32.xlu0 %v4024, 32
        %v6218 = vpop.permute.xlu0 %6217
        %6219 = vrot.lane.b32.xlu0 %v4023, 32
        %v6220 = vpop.permute.xlu0 %6219
        %6221 = vrot.lane.b32.xlu0 %v4022, 32
        %v6222 = vpop.permute.xlu0 %6221
        %6223 = vrot.lane.b32.xlu0 %v4021, 32
        %v6224 = vpop.permute.xlu0 %6223
        %6225 = vrot.lane.b32.xlu0 %v4020, 32
        %v6226 = vpop.permute.xlu0 %6225
        %6227 = vrot.lane.b32.xlu0 %v4019, 32
        %v6228 = vpop.permute.xlu0 %6227
        %6229 = vrot.lane.b32.xlu0 %v4018, 32
        %v6230 = vpop.permute.xlu0 %6229
        %6231 = vrot.lane.b32.xlu0 %v4017, 32
        %v6232 = vpop.permute.xlu0 %6231
        %6233 = vrot.lane.b32.xlu0 %v4016, 32
        %v6234 = vpop.permute.xlu0 %6233
        %6235 = vrot.lane.b32.xlu0 %v4015, 32
        %v6236 = vpop.permute.xlu0 %6235
        %6237 = vrot.lane.b32.xlu0 %v4014, 32
        %v6238 = vpop.permute.xlu0 %6237
        %6239 = vrot.lane.b32.xlu0 %v4013, 32
        %v6240 = vpop.permute.xlu0 %6239
        %6241 = vrot.lane.b32.xlu0 %v4012, 32
        %v6242 = vpop.permute.xlu0 %6241
        %6243 = vrot.lane.b32.xlu0 %v4011, 32
        %v6244 = vpop.permute.xlu0 %6243
        %6245 = vrot.lane.b32.xlu0 %v4010, 32
        %v6246 = vpop.permute.xlu0 %6245
        %6247 = vrot.lane.b32.xlu0 %v4009, 32
        %v6248 = vpop.permute.xlu0 %6247
        %6249 = vrot.lane.b32.xlu0 %v4008, 32
        %v6250 = vpop.permute.xlu0 %6249
        %6251 = vrot.lane.b32.xlu0 %v4007, 32
        %v6252 = vpop.permute.xlu0 %6251
        %6253 = vrot.lane.b32.xlu0 %v4006, 32
        %v6254 = vpop.permute.xlu0 %6253
        %6255 = vrot.lane.b32.xlu0 %v4005, 32
        %v6256 = vpop.permute.xlu0 %6255
        %6257 = vrot.lane.b32.xlu0 %v4004, 32
        %v6258 = vpop.permute.xlu0 %6257
        %6259 = vrot.lane.b32.xlu0 %v4003, 32
        %v6260 = vpop.permute.xlu0 %6259
        %6261 = vrot.lane.b32.xlu0 %v4002, 32
        %v6262 = vpop.permute.xlu0 %6261
        %6263 = vrot.lane.b32.xlu0 %v4001, 32
        %v6264 = vpop.permute.xlu0 %6263
        %6265 = vrot.lane.b32.xlu0 %v4000, 32
        %v6266 = vpop.permute.xlu0 %6265
        %6267 = vrot.lane.b32.xlu0 %v3999, 32
        %v6268 = vpop.permute.xlu0 %6267
        %6269 = vrot.lane.b32.xlu0 %v3998, 32
        %v6270 = vpop.permute.xlu0 %6269
        %6271 = vrot.lane.b32.xlu0 %v3997, 32
        %v6272 = vpop.permute.xlu0 %6271
        %6273 = vrot.lane.b32.xlu0 %v3996, 32
        %v6274 = vpop.permute.xlu0 %6273
        %6275 = vrot.lane.b32.xlu0 %v3995, 32
        %v6276 = vpop.permute.xlu0 %6275
        %6277 = vrot.lane.b32.xlu0 %v3994, 32
        %v6278 = vpop.permute.xlu0 %6277
        %6279 = vrot.lane.b32.xlu0 %v3993, 32
        %v6280 = vpop.permute.xlu0 %6279
        %6281 = vrot.lane.b32.xlu0 %v3992, 32
        %v6282 = vpop.permute.xlu0 %6281
        %6283 = vrot.lane.b32.xlu0 %v3991, 32
        %v6284 = vpop.permute.xlu0 %6283
        %6285 = vrot.lane.b32.xlu0 %v3990, 32
        %v6286 = vpop.permute.xlu0 %6285
        %6287 = vrot.lane.b32.xlu0 %v3989, 32
        %v6288 = vpop.permute.xlu0 %6287
        %6289 = vrot.lane.b32.xlu0 %v3988, 32
        %v6290 = vpop.permute.xlu0 %6289
        %6291 = vrot.lane.b32.xlu0 %v3987, 32
        %v6292 = vpop.permute.xlu0 %6291
        %6293 = vrot.lane.b32.xlu0 %v3986, 32
        %v6294 = vpop.permute.xlu0 %6293
        %6295 = vrot.lane.b32.xlu0 %v3985, 32
        %v6296 = vpop.permute.xlu0 %6295
        %6297 = vrot.lane.b32.xlu0 %v3984, 32
        %v6298 = vpop.permute.xlu0 %6297
        %6299 = vrot.lane.b32.xlu0 %v3983, 32
        %v6300 = vpop.permute.xlu0 %6299
        %6301 = vrot.lane.b32.xlu0 %v3982, 32
        %v6302 = vpop.permute.xlu0 %6301
        %6303 = vrot.lane.b32.xlu0 %v3981, 32
        %v6304 = vpop.permute.xlu0 %6303
        %6305 = vrot.lane.b32.xlu0 %v3980, 32
        %v6306 = vpop.permute.xlu0 %6305
        %6307 = vrot.lane.b32.xlu0 %v3979, 32
        %v6308 = vpop.permute.xlu0 %6307
        %6309 = vrot.lane.b32.xlu0 %v3978, 32
        %v6310 = vpop.permute.xlu0 %6309
        %6311 = vrot.lane.b32.xlu0 %v3977, 32
        %v6312 = vpop.permute.xlu0 %6311
        %6313 = vrot.lane.b32.xlu0 %v3976, 32
        %v6314 = vpop.permute.xlu0 %6313
        %6315 = vrot.lane.b32.xlu0 %v3975, 32
        %v6316 = vpop.permute.xlu0 %6315
        %6317 = vrot.lane.b32.xlu0 %v3974, 32
        %v6318 = vpop.permute.xlu0 %6317
        %6319 = vrot.lane.b32.xlu0 %v3973, 32
        %v6320 = vpop.permute.xlu0 %6319
        %6321 = vrot.lane.b32.xlu0 %v3972, 32
        %v6322 = vpop.permute.xlu0 %6321
        %6323 = vrot.lane.b32.xlu0 %v3971, 32
        %v6324 = vpop.permute.xlu0 %6323
        %6325 = vrot.lane.b32.xlu0 %v3970, 32
        %v6326 = vpop.permute.xlu0 %6325
        %6327 = vrot.lane.b32.xlu0 %v3969, 32
        %v6328 = vpop.permute.xlu0 %6327
        %6329 = vrot.lane.b32.xlu0 %v3968, 32
        %v6330 = vpop.permute.xlu0 %6329
        %6331 = vrot.lane.b32.xlu0 %v3967, 32
        %v6332 = vpop.permute.xlu0 %6331
        %6333 = vrot.lane.b32.xlu0 %v3966, 32
        %v6334 = vpop.permute.xlu0 %6333
        %6335 = vrot.lane.b32.xlu0 %v3965, 32
        %v6336 = vpop.permute.xlu0 %6335
        %6337 = vrot.lane.b32.xlu0 %v3964, 32
        %v6338 = vpop.permute.xlu0 %6337
        %6339 = vrot.lane.b32.xlu0 %v3963, 32
        %v6340 = vpop.permute.xlu0 %6339
        %6341 = vrot.lane.b32.xlu0 %v3962, 32
        %v6342 = vpop.permute.xlu0 %6341
        %6343 = vrot.lane.b32.xlu0 %v3961, 32
        %v6344 = vpop.permute.xlu0 %6343
        %6345 = vrot.lane.b32.xlu0 %v3960, 32
        %v6346 = vpop.permute.xlu0 %6345
        %6347 = vrot.lane.b32.xlu0 %v3959, 32
        %v6348 = vpop.permute.xlu0 %6347
        %6349 = vrot.lane.b32.xlu0 %v3958, 32
        %v6350 = vpop.permute.xlu0 %6349
        %6351 = vrot.lane.b32.xlu0 %v3957, 32
        %v6352 = vpop.permute.xlu0 %6351
        %6353 = vrot.lane.b32.xlu0 %v3956, 32
        %v6354 = vpop.permute.xlu0 %6353
        %6355 = vrot.lane.b32.xlu0 %v3955, 32
        %v6356 = vpop.permute.xlu0 %6355
        %6357 = vrot.lane.b32.xlu0 %v3954, 32
        %v6358 = vpop.permute.xlu0 %6357
        %6359 = vrot.lane.b32.xlu0 %v3953, 32
        %v6360 = vpop.permute.xlu0 %6359
        %6361 = vrot.lane.b32.xlu0 %v3952, 32
        %v6362 = vpop.permute.xlu0 %6361
        %6363 = vrot.lane.b32.xlu0 %v3951, 32
        %v6364 = vpop.permute.xlu0 %6363
        %6365 = vrot.lane.b32.xlu0 %v3950, 32
        %v6366 = vpop.permute.xlu0 %6365
        %6367 = vrot.lane.b32.xlu0 %v3949, 32
        %v6368 = vpop.permute.xlu0 %6367
        %6369 = vrot.lane.b32.xlu0 %v3948, 32
        %v6370 = vpop.permute.xlu0 %6369
        %6371 = vrot.lane.b32.xlu0 %v3947, 32
        %v6372 = vpop.permute.xlu0 %6371
        %6373 = vrot.lane.b32.xlu0 %v3946, 32
        %v6374 = vpop.permute.xlu0 %6373
        %6375 = vrot.lane.b32.xlu0 %v3945, 32
        %v6376 = vpop.permute.xlu0 %6375
        %6377 = vrot.lane.b32.xlu0 %v3944, 32
        %v6378 = vpop.permute.xlu0 %6377
        %6379 = vrot.lane.b32.xlu0 %v3943, 32
        %v6380 = vpop.permute.xlu0 %6379
        %6381 = vrot.lane.b32.xlu0 %v3942, 32
        %v6382 = vpop.permute.xlu0 %6381
        %6383 = vrot.lane.b32.xlu0 %v3941, 32
        %v6384 = vpop.permute.xlu0 %6383
        %6385 = vrot.lane.b32.xlu0 %v3940, 32
        %v6386 = vpop.permute.xlu0 %6385
        %6387 = vrot.lane.b32.xlu0 %v3939, 32
        %v6388 = vpop.permute.xlu0 %6387
        %6389 = vrot.lane.b32.xlu0 %v3938, 32
        %v6390 = vpop.permute.xlu0 %6389
        %6391 = vrot.lane.b32.xlu0 %v3937, 32
        %v6392 = vpop.permute.xlu0 %6391
        %6393 = vrot.lane.b32.xlu0 %v3936, 32
        %v6394 = vpop.permute.xlu0 %6393
        %6395 = vrot.lane.b32.xlu0 %v3935, 32
        %v6396 = vpop.permute.xlu0 %6395
        %6397 = vrot.lane.b32.xlu0 %v3934, 32
        %v6398 = vpop.permute.xlu0 %6397
        %6399 = vrot.lane.b32.xlu0 %v3933, 32
        %v6400 = vpop.permute.xlu0 %6399
        %6401 = vrot.lane.b32.xlu0 %v3932, 32
        %v6402 = vpop.permute.xlu0 %6401
        %6403 = vrot.lane.b32.xlu0 %v3931, 32
        %v6404 = vpop.permute.xlu0 %6403
        %6405 = vrot.lane.b32.xlu0 %v3930, 32
        %v6406 = vpop.permute.xlu0 %6405
        %6407 = vrot.lane.b32.xlu0 %v3929, 32
        %v6408 = vpop.permute.xlu0 %6407
        %6409 = vrot.lane.b32.xlu0 %v3928, 32
        %v6410 = vpop.permute.xlu0 %6409
        %6411 = vrot.lane.b32.xlu0 %v3927, 32
        %v6412 = vpop.permute.xlu0 %6411
        %6413 = vrot.lane.b32.xlu0 %v3926, 32
        %v6414 = vpop.permute.xlu0 %6413
        %6415 = vrot.lane.b32.xlu0 %v3925, 32
        %v6416 = vpop.permute.xlu0 %6415
        %6417 = vrot.lane.b32.xlu0 %v3924, 32
        %v6418 = vpop.permute.xlu0 %6417
        %6419 = vrot.lane.b32.xlu0 %v3923, 32
        %v6420 = vpop.permute.xlu0 %6419
        %6421 = vrot.lane.b32.xlu0 %v3922, 32
        %v6422 = vpop.permute.xlu0 %6421
        %6423 = vrot.lane.b32.xlu0 %v3921, 32
        %v6424 = vpop.permute.xlu0 %6423
        %6425 = vrot.lane.b32.xlu0 %v3920, 32
        %v6426 = vpop.permute.xlu0 %6425
        %6427 = vrot.lane.b32.xlu0 %v3919, 32
        %v6428 = vpop.permute.xlu0 %6427
        %6429 = vrot.lane.b32.xlu0 %v3918, 32
        %v6430 = vpop.permute.xlu0 %6429
        %6431 = vrot.lane.b32.xlu0 %v3917, 32
        %v6432 = vpop.permute.xlu0 %6431
        %6433 = vrot.lane.b32.xlu0 %v3916, 32
        %v6434 = vpop.permute.xlu0 %6433
        %6435 = vrot.lane.b32.xlu0 %v3915, 32
        %v6436 = vpop.permute.xlu0 %6435
        %6437 = vrot.lane.b32.xlu0 %v3914, 32
        %v6438 = vpop.permute.xlu0 %6437
        %6439 = vrot.lane.b32.xlu0 %v3913, 32
        %v6440 = vpop.permute.xlu0 %6439
        %6441 = vrot.lane.b32.xlu0 %v3912, 32
        %v6442 = vpop.permute.xlu0 %6441
        %6443 = vrot.lane.b32.xlu0 %v3911, 32
        %v6444 = vpop.permute.xlu0 %6443
        %6445 = vrot.lane.b32.xlu0 %v3910, 32
        %v6446 = vpop.permute.xlu0 %6445
        %6447 = vrot.lane.b32.xlu0 %v3909, 32
        %v6448 = vpop.permute.xlu0 %6447
        %6449 = vrot.lane.b32.xlu0 %v3908, 32
        %v6450 = vpop.permute.xlu0 %6449
        %6451 = vrot.lane.b32.xlu0 %v3907, 32
        %v6452 = vpop.permute.xlu0 %6451
        %6453 = vrot.lane.b32.xlu0 %v3906, 32
        %v6454 = vpop.permute.xlu0 %6453
        %6455 = vrot.lane.b32.xlu0 %v3905, 32
        %v6456 = vpop.permute.xlu0 %6455
        %6457 = vrot.lane.b32.xlu0 %v3904, 32
        %v6458 = vpop.permute.xlu0 %6457
        %6459 = vrot.lane.b32.xlu0 %v3903, 32
        %v6460 = vpop.permute.xlu0 %6459
        %6461 = vrot.lane.b32.xlu0 %v3902, 32
        %v6462 = vpop.permute.xlu0 %6461
        %6463 = vrot.lane.b32.xlu0 %v4157, 32
        %v6464 = vpop.permute.xlu0 %6463
        %6977 = vrot.lane.b32.xlu0 %v4669, 64
        %v6978 = vpop.permute.xlu0 %6977
        %6979 = vrot.lane.b32.xlu0 %v4668, 64
        %v6980 = vpop.permute.xlu0 %6979
        %6981 = vrot.lane.b32.xlu0 %v4667, 64
        %v6982 = vpop.permute.xlu0 %6981
        %6983 = vrot.lane.b32.xlu0 %v4666, 64
        %v6984 = vpop.permute.xlu0 %6983
        %6985 = vrot.lane.b32.xlu0 %v4665, 64
        %v6986 = vpop.permute.xlu0 %6985
        %6987 = vrot.lane.b32.xlu0 %v4664, 64
        %v6988 = vpop.permute.xlu0 %6987
        %6989 = vrot.lane.b32.xlu0 %v4663, 64
        %v6990 = vpop.permute.xlu0 %6989
        %6991 = vrot.lane.b32.xlu0 %v4662, 64
        %v6992 = vpop.permute.xlu0 %6991
        %6993 = vrot.lane.b32.xlu0 %v4661, 64
        %v6994 = vpop.permute.xlu0 %6993
        %6995 = vrot.lane.b32.xlu0 %v4660, 64
        %v6996 = vpop.permute.xlu0 %6995
        %6997 = vrot.lane.b32.xlu0 %v4659, 64
        %v6998 = vpop.permute.xlu0 %6997
        %6999 = vrot.lane.b32.xlu0 %v4658, 64
        %v7000 = vpop.permute.xlu0 %6999
        %7001 = vrot.lane.b32.xlu0 %v4657, 64
        %v7002 = vpop.permute.xlu0 %7001
        %7003 = vrot.lane.b32.xlu0 %v4656, 64
        %v7004 = vpop.permute.xlu0 %7003
        %7005 = vrot.lane.b32.xlu0 %v4655, 64
        %v7006 = vpop.permute.xlu0 %7005
        %7007 = vrot.lane.b32.xlu0 %v4654, 64
        %v7008 = vpop.permute.xlu0 %7007
        %7009 = vrot.lane.b32.xlu0 %v4653, 64
        %v7010 = vpop.permute.xlu0 %7009
        %7011 = vrot.lane.b32.xlu0 %v4652, 64
        %v7012 = vpop.permute.xlu0 %7011
        %7013 = vrot.lane.b32.xlu0 %v4651, 64
        %v7014 = vpop.permute.xlu0 %7013
        %7015 = vrot.lane.b32.xlu0 %v4650, 64
        %v7016 = vpop.permute.xlu0 %7015
        %7017 = vrot.lane.b32.xlu0 %v4649, 64
        %v7018 = vpop.permute.xlu0 %7017
        %7019 = vrot.lane.b32.xlu0 %v4648, 64
        %v7020 = vpop.permute.xlu0 %7019
        %7021 = vrot.lane.b32.xlu0 %v4647, 64
        %v7022 = vpop.permute.xlu0 %7021
        %7023 = vrot.lane.b32.xlu0 %v4646, 64
        %v7024 = vpop.permute.xlu0 %7023
        %7025 = vrot.lane.b32.xlu0 %v4645, 64
        %v7026 = vpop.permute.xlu0 %7025
        %7027 = vrot.lane.b32.xlu0 %v4644, 64
        %v7028 = vpop.permute.xlu0 %7027
        %7029 = vrot.lane.b32.xlu0 %v4643, 64
        %v7030 = vpop.permute.xlu0 %7029
        %7031 = vrot.lane.b32.xlu0 %v4642, 64
        %v7032 = vpop.permute.xlu0 %7031
        %7033 = vrot.lane.b32.xlu0 %v4641, 64
        %v7034 = vpop.permute.xlu0 %7033
        %7035 = vrot.lane.b32.xlu0 %v4640, 64
        %v7036 = vpop.permute.xlu0 %7035
        %7037 = vrot.lane.b32.xlu0 %v4639, 64
        %v7038 = vpop.permute.xlu0 %7037
        %7039 = vrot.lane.b32.xlu0 %v4638, 64
        %v7040 = vpop.permute.xlu0 %7039
        %7041 = vrot.lane.b32.xlu0 %v4637, 64
        %v7042 = vpop.permute.xlu0 %7041
        %7043 = vrot.lane.b32.xlu0 %v4636, 64
        %v7044 = vpop.permute.xlu0 %7043
        %7045 = vrot.lane.b32.xlu0 %v4635, 64
        %v7046 = vpop.permute.xlu0 %7045
        %7047 = vrot.lane.b32.xlu0 %v4634, 64
        %v7048 = vpop.permute.xlu0 %7047
        %7049 = vrot.lane.b32.xlu0 %v4633, 64
        %v7050 = vpop.permute.xlu0 %7049
        %7051 = vrot.lane.b32.xlu0 %v4632, 64
        %v7052 = vpop.permute.xlu0 %7051
        %7053 = vrot.lane.b32.xlu0 %v4631, 64
        %v7054 = vpop.permute.xlu0 %7053
        %7055 = vrot.lane.b32.xlu0 %v4630, 64
        %v7056 = vpop.permute.xlu0 %7055
        %7057 = vrot.lane.b32.xlu0 %v4629, 64
        %v7058 = vpop.permute.xlu0 %7057
        %7059 = vrot.lane.b32.xlu0 %v4628, 64
        %v7060 = vpop.permute.xlu0 %7059
        %7061 = vrot.lane.b32.xlu0 %v4627, 64
        %v7062 = vpop.permute.xlu0 %7061
        %7063 = vrot.lane.b32.xlu0 %v4626, 64
        %v7064 = vpop.permute.xlu0 %7063
        %7065 = vrot.lane.b32.xlu0 %v4625, 64
        %v7066 = vpop.permute.xlu0 %7065
        %7067 = vrot.lane.b32.xlu0 %v4624, 64
        %v7068 = vpop.permute.xlu0 %7067
        %7069 = vrot.lane.b32.xlu0 %v4623, 64
        %v7070 = vpop.permute.xlu0 %7069
        %7071 = vrot.lane.b32.xlu0 %v4622, 64
        %v7072 = vpop.permute.xlu0 %7071
        %7073 = vrot.lane.b32.xlu0 %v4621, 64
        %v7074 = vpop.permute.xlu0 %7073
        %7075 = vrot.lane.b32.xlu0 %v4620, 64
        %v7076 = vpop.permute.xlu0 %7075
        %7077 = vrot.lane.b32.xlu0 %v4619, 64
        %v7078 = vpop.permute.xlu0 %7077
        %7079 = vrot.lane.b32.xlu0 %v4618, 64
        %v7080 = vpop.permute.xlu0 %7079
        %7081 = vrot.lane.b32.xlu0 %v4617, 64
        %v7082 = vpop.permute.xlu0 %7081
        %7083 = vrot.lane.b32.xlu0 %v4616, 64
        %v7084 = vpop.permute.xlu0 %7083
        %7085 = vrot.lane.b32.xlu0 %v4615, 64
        %v7086 = vpop.permute.xlu0 %7085
        %7087 = vrot.lane.b32.xlu0 %v4614, 64
        %v7088 = vpop.permute.xlu0 %7087
        %7089 = vrot.lane.b32.xlu0 %v4613, 64
        %v7090 = vpop.permute.xlu0 %7089
        %7091 = vrot.lane.b32.xlu0 %v4612, 64
        %v7092 = vpop.permute.xlu0 %7091
        %7093 = vrot.lane.b32.xlu0 %v4611, 64
        %v7094 = vpop.permute.xlu0 %7093
        %7095 = vrot.lane.b32.xlu0 %v4610, 64
        %v7096 = vpop.permute.xlu0 %7095
        %7097 = vrot.lane.b32.xlu0 %v4609, 64
        %v7098 = vpop.permute.xlu0 %7097
        %7099 = vrot.lane.b32.xlu0 %v4608, 64
        %v7100 = vpop.permute.xlu0 %7099
        %7101 = vrot.lane.b32.xlu0 %v4607, 64
        %v7102 = vpop.permute.xlu0 %7101
        %7103 = vrot.lane.b32.xlu0 %v4606, 64
        %v7104 = vpop.permute.xlu0 %7103
        %7105 = vrot.lane.b32.xlu0 %v4605, 64
        %v7106 = vpop.permute.xlu0 %7105
        %7107 = vrot.lane.b32.xlu0 %v4604, 64
        %v7108 = vpop.permute.xlu0 %7107
        %7109 = vrot.lane.b32.xlu0 %v4603, 64
        %v7110 = vpop.permute.xlu0 %7109
        %7111 = vrot.lane.b32.xlu0 %v4602, 64
        %v7112 = vpop.permute.xlu0 %7111
        %7113 = vrot.lane.b32.xlu0 %v4601, 64
        %v7114 = vpop.permute.xlu0 %7113
        %7115 = vrot.lane.b32.xlu0 %v4600, 64
        %v7116 = vpop.permute.xlu0 %7115
        %7117 = vrot.lane.b32.xlu0 %v4599, 64
        %v7118 = vpop.permute.xlu0 %7117
        %7119 = vrot.lane.b32.xlu0 %v4598, 64
        %v7120 = vpop.permute.xlu0 %7119
        %7121 = vrot.lane.b32.xlu0 %v4597, 64
        %v7122 = vpop.permute.xlu0 %7121
        %7123 = vrot.lane.b32.xlu0 %v4596, 64
        %v7124 = vpop.permute.xlu0 %7123
        %7125 = vrot.lane.b32.xlu0 %v4595, 64
        %v7126 = vpop.permute.xlu0 %7125
        %7127 = vrot.lane.b32.xlu0 %v4594, 64
        %v7128 = vpop.permute.xlu0 %7127
        %7129 = vrot.lane.b32.xlu0 %v4593, 64
        %v7130 = vpop.permute.xlu0 %7129
        %7131 = vrot.lane.b32.xlu0 %v4592, 64
        %v7132 = vpop.permute.xlu0 %7131
        %7133 = vrot.lane.b32.xlu0 %v4591, 64
        %v7134 = vpop.permute.xlu0 %7133
        %7135 = vrot.lane.b32.xlu0 %v4590, 64
        %v7136 = vpop.permute.xlu0 %7135
        %7137 = vrot.lane.b32.xlu0 %v4589, 64
        %v7138 = vpop.permute.xlu0 %7137
        %7139 = vrot.lane.b32.xlu0 %v4588, 64
        %v7140 = vpop.permute.xlu0 %7139
        %7141 = vrot.lane.b32.xlu0 %v4587, 64
        %v7142 = vpop.permute.xlu0 %7141
        %7143 = vrot.lane.b32.xlu0 %v4586, 64
        %v7144 = vpop.permute.xlu0 %7143
        %7145 = vrot.lane.b32.xlu0 %v4585, 64
        %v7146 = vpop.permute.xlu0 %7145
        %7147 = vrot.lane.b32.xlu0 %v4584, 64
        %v7148 = vpop.permute.xlu0 %7147
        %7149 = vrot.lane.b32.xlu0 %v4583, 64
        %v7150 = vpop.permute.xlu0 %7149
        %7151 = vrot.lane.b32.xlu0 %v4582, 64
        %v7152 = vpop.permute.xlu0 %7151
        %7153 = vrot.lane.b32.xlu0 %v4581, 64
        %v7154 = vpop.permute.xlu0 %7153
        %7155 = vrot.lane.b32.xlu0 %v4580, 64
        %v7156 = vpop.permute.xlu0 %7155
        %7157 = vrot.lane.b32.xlu0 %v4579, 64
        %v7158 = vpop.permute.xlu0 %7157
        %7159 = vrot.lane.b32.xlu0 %v4578, 64
        %v7160 = vpop.permute.xlu0 %7159
        %7161 = vrot.lane.b32.xlu0 %v4577, 64
        %v7162 = vpop.permute.xlu0 %7161
        %7163 = vrot.lane.b32.xlu0 %v4576, 64
        %v7164 = vpop.permute.xlu0 %7163
        %7165 = vrot.lane.b32.xlu0 %v4575, 64
        %v7166 = vpop.permute.xlu0 %7165
        %7167 = vrot.lane.b32.xlu0 %v4574, 64
        %v7168 = vpop.permute.xlu0 %7167
        %7169 = vrot.lane.b32.xlu0 %v4573, 64
        %v7170 = vpop.permute.xlu0 %7169
        %7171 = vrot.lane.b32.xlu0 %v4572, 64
        %v7172 = vpop.permute.xlu0 %7171
        %7173 = vrot.lane.b32.xlu0 %v4571, 64
        %v7174 = vpop.permute.xlu0 %7173
        %7175 = vrot.lane.b32.xlu0 %v4570, 64
        %v7176 = vpop.permute.xlu0 %7175
        %7177 = vrot.lane.b32.xlu0 %v4569, 64
        %v7178 = vpop.permute.xlu0 %7177
        %7179 = vrot.lane.b32.xlu0 %v4568, 64
        %v7180 = vpop.permute.xlu0 %7179
        %7181 = vrot.lane.b32.xlu0 %v4567, 64
        %v7182 = vpop.permute.xlu0 %7181
        %7183 = vrot.lane.b32.xlu0 %v4566, 64
        %v7184 = vpop.permute.xlu0 %7183
        %7185 = vrot.lane.b32.xlu0 %v4565, 64
        %v7186 = vpop.permute.xlu0 %7185
        %7187 = vrot.lane.b32.xlu0 %v4564, 64
        %v7188 = vpop.permute.xlu0 %7187
        %7189 = vrot.lane.b32.xlu0 %v4563, 64
        %v7190 = vpop.permute.xlu0 %7189
        %7191 = vrot.lane.b32.xlu0 %v4562, 64
        %v7192 = vpop.permute.xlu0 %7191
        %7193 = vrot.lane.b32.xlu0 %v4561, 64
        %v7194 = vpop.permute.xlu0 %7193
        %7195 = vrot.lane.b32.xlu0 %v4560, 64
        %v7196 = vpop.permute.xlu0 %7195
        %7197 = vrot.lane.b32.xlu0 %v4559, 64
        %v7198 = vpop.permute.xlu0 %7197
        %7199 = vrot.lane.b32.xlu0 %v4558, 64
        %v7200 = vpop.permute.xlu0 %7199
        %7201 = vrot.lane.b32.xlu0 %v4557, 64
        %v7202 = vpop.permute.xlu0 %7201
        %7203 = vrot.lane.b32.xlu0 %v4556, 64
        %v7204 = vpop.permute.xlu0 %7203
        %7205 = vrot.lane.b32.xlu0 %v4555, 64
        %v7206 = vpop.permute.xlu0 %7205
        %7207 = vrot.lane.b32.xlu0 %v4554, 64
        %v7208 = vpop.permute.xlu0 %7207
        %7209 = vrot.lane.b32.xlu0 %v4553, 64
        %v7210 = vpop.permute.xlu0 %7209
        %7211 = vrot.lane.b32.xlu0 %v4552, 64
        %v7212 = vpop.permute.xlu0 %7211
        %7213 = vrot.lane.b32.xlu0 %v4551, 64
        %v7214 = vpop.permute.xlu0 %7213
        %7215 = vrot.lane.b32.xlu0 %v4550, 64
        %v7216 = vpop.permute.xlu0 %7215
        %7217 = vrot.lane.b32.xlu0 %v4549, 64
        %v7218 = vpop.permute.xlu0 %7217
        %7219 = vrot.lane.b32.xlu0 %v4548, 64
        %v7220 = vpop.permute.xlu0 %7219
        %7221 = vrot.lane.b32.xlu0 %v4547, 64
        %v7222 = vpop.permute.xlu0 %7221
        %7223 = vrot.lane.b32.xlu0 %v4546, 64
        %v7224 = vpop.permute.xlu0 %7223
        %7225 = vrot.lane.b32.xlu0 %v4545, 64
        %v7226 = vpop.permute.xlu0 %7225
        %7227 = vrot.lane.b32.xlu0 %v4544, 64
        %v7228 = vpop.permute.xlu0 %7227
        %7229 = vrot.lane.b32.xlu0 %v4543, 64
        %v7230 = vpop.permute.xlu0 %7229
        %7231 = vrot.lane.b32.xlu0 %v4542, 64
        %v7232 = vpop.permute.xlu0 %7231
        %7233 = vrot.lane.b32.xlu0 %v4541, 64
        %v7234 = vpop.permute.xlu0 %7233
        %7235 = vrot.lane.b32.xlu0 %v4540, 64
        %v7236 = vpop.permute.xlu0 %7235
        %7237 = vrot.lane.b32.xlu0 %v4539, 64
        %v7238 = vpop.permute.xlu0 %7237
        %7239 = vrot.lane.b32.xlu0 %v4538, 64
        %v7240 = vpop.permute.xlu0 %7239
        %7241 = vrot.lane.b32.xlu0 %v4537, 64
        %v7242 = vpop.permute.xlu0 %7241
        %7243 = vrot.lane.b32.xlu0 %v4536, 64
        %v7244 = vpop.permute.xlu0 %7243
        %7245 = vrot.lane.b32.xlu0 %v4535, 64
        %v7246 = vpop.permute.xlu0 %7245
        %7247 = vrot.lane.b32.xlu0 %v4534, 64
        %v7248 = vpop.permute.xlu0 %7247
        %7249 = vrot.lane.b32.xlu0 %v4533, 64
        %v7250 = vpop.permute.xlu0 %7249
        %7251 = vrot.lane.b32.xlu0 %v4532, 64
        %v7252 = vpop.permute.xlu0 %7251
        %7253 = vrot.lane.b32.xlu0 %v4531, 64
        %v7254 = vpop.permute.xlu0 %7253
        %7255 = vrot.lane.b32.xlu0 %v4530, 64
        %v7256 = vpop.permute.xlu0 %7255
        %7257 = vrot.lane.b32.xlu0 %v4529, 64
        %v7258 = vpop.permute.xlu0 %7257
        %7259 = vrot.lane.b32.xlu0 %v4528, 64
        %v7260 = vpop.permute.xlu0 %7259
        %7261 = vrot.lane.b32.xlu0 %v4527, 64
        %v7262 = vpop.permute.xlu0 %7261
        %7263 = vrot.lane.b32.xlu0 %v4526, 64
        %v7264 = vpop.permute.xlu0 %7263
        %7265 = vrot.lane.b32.xlu0 %v4525, 64
        %v7266 = vpop.permute.xlu0 %7265
        %7267 = vrot.lane.b32.xlu0 %v4524, 64
        %v7268 = vpop.permute.xlu0 %7267
        %7269 = vrot.lane.b32.xlu0 %v4523, 64
        %v7270 = vpop.permute.xlu0 %7269
        %7271 = vrot.lane.b32.xlu0 %v4522, 64
        %v7272 = vpop.permute.xlu0 %7271
        %7273 = vrot.lane.b32.xlu0 %v4521, 64
        %v7274 = vpop.permute.xlu0 %7273
        %7275 = vrot.lane.b32.xlu0 %v4520, 64
        %v7276 = vpop.permute.xlu0 %7275
        %7277 = vrot.lane.b32.xlu0 %v4519, 64
        %v7278 = vpop.permute.xlu0 %7277
        %7279 = vrot.lane.b32.xlu0 %v4518, 64
        %v7280 = vpop.permute.xlu0 %7279
        %7281 = vrot.lane.b32.xlu0 %v4517, 64
        %v7282 = vpop.permute.xlu0 %7281
        %7283 = vrot.lane.b32.xlu0 %v4516, 64
        %v7284 = vpop.permute.xlu0 %7283
        %7285 = vrot.lane.b32.xlu0 %v4515, 64
        %v7286 = vpop.permute.xlu0 %7285
        %7287 = vrot.lane.b32.xlu0 %v4514, 64
        %v7288 = vpop.permute.xlu0 %7287
        %7289 = vrot.lane.b32.xlu0 %v4513, 64
        %v7290 = vpop.permute.xlu0 %7289
        %7291 = vrot.lane.b32.xlu0 %v4512, 64
        %v7292 = vpop.permute.xlu0 %7291
        %7293 = vrot.lane.b32.xlu0 %v4511, 64
        %v7294 = vpop.permute.xlu0 %7293
        %7295 = vrot.lane.b32.xlu0 %v4510, 64
        %v7296 = vpop.permute.xlu0 %7295
        %7297 = vrot.lane.b32.xlu0 %v4509, 64
        %v7298 = vpop.permute.xlu0 %7297
        %7299 = vrot.lane.b32.xlu0 %v4508, 64
        %v7300 = vpop.permute.xlu0 %7299
        %7301 = vrot.lane.b32.xlu0 %v4507, 64
        %v7302 = vpop.permute.xlu0 %7301
        %7303 = vrot.lane.b32.xlu0 %v4506, 64
        %v7304 = vpop.permute.xlu0 %7303
        %7305 = vrot.lane.b32.xlu0 %v4505, 64
        %v7306 = vpop.permute.xlu0 %7305
        %7307 = vrot.lane.b32.xlu0 %v4504, 64
        %v7308 = vpop.permute.xlu0 %7307
        %7309 = vrot.lane.b32.xlu0 %v4503, 64
        %v7310 = vpop.permute.xlu0 %7309
        %7311 = vrot.lane.b32.xlu0 %v4502, 64
        %v7312 = vpop.permute.xlu0 %7311
        %7313 = vrot.lane.b32.xlu0 %v4501, 64
        %v7314 = vpop.permute.xlu0 %7313
        %7315 = vrot.lane.b32.xlu0 %v4500, 64
        %v7316 = vpop.permute.xlu0 %7315
        %7317 = vrot.lane.b32.xlu0 %v4499, 64
        %v7318 = vpop.permute.xlu0 %7317
        %7319 = vrot.lane.b32.xlu0 %v4498, 64
        %v7320 = vpop.permute.xlu0 %7319
        %7321 = vrot.lane.b32.xlu0 %v4497, 64
        %v7322 = vpop.permute.xlu0 %7321
        %7323 = vrot.lane.b32.xlu0 %v4496, 64
        %v7324 = vpop.permute.xlu0 %7323
        %7325 = vrot.lane.b32.xlu0 %v4495, 64
        %v7326 = vpop.permute.xlu0 %7325
        %7327 = vrot.lane.b32.xlu0 %v4494, 64
        %v7328 = vpop.permute.xlu0 %7327
        %7329 = vrot.lane.b32.xlu0 %v4493, 64
        %v7330 = vpop.permute.xlu0 %7329
        %7331 = vrot.lane.b32.xlu0 %v4492, 64
        %v7332 = vpop.permute.xlu0 %7331
        %7333 = vrot.lane.b32.xlu0 %v4491, 64
        %v7334 = vpop.permute.xlu0 %7333
        %7335 = vrot.lane.b32.xlu0 %v4490, 64
        %v7336 = vpop.permute.xlu0 %7335
        %7337 = vrot.lane.b32.xlu0 %v4489, 64
        %v7338 = vpop.permute.xlu0 %7337
        %7339 = vrot.lane.b32.xlu0 %v4488, 64
        %v7340 = vpop.permute.xlu0 %7339
        %7341 = vrot.lane.b32.xlu0 %v4487, 64
        %v7342 = vpop.permute.xlu0 %7341
        %7343 = vrot.lane.b32.xlu0 %v4486, 64
        %v7344 = vpop.permute.xlu0 %7343
        %7345 = vrot.lane.b32.xlu0 %v4485, 64
        %v7346 = vpop.permute.xlu0 %7345
        %7347 = vrot.lane.b32.xlu0 %v4484, 64
        %v7348 = vpop.permute.xlu0 %7347
        %7349 = vrot.lane.b32.xlu0 %v4483, 64
        %v7350 = vpop.permute.xlu0 %7349
        %7351 = vrot.lane.b32.xlu0 %v4482, 64
        %v7352 = vpop.permute.xlu0 %7351
        %7353 = vrot.lane.b32.xlu0 %v4481, 64
        %v7354 = vpop.permute.xlu0 %7353
        %7355 = vrot.lane.b32.xlu0 %v4480, 64
        %v7356 = vpop.permute.xlu0 %7355
        %7357 = vrot.lane.b32.xlu0 %v4479, 64
        %v7358 = vpop.permute.xlu0 %7357
        %7359 = vrot.lane.b32.xlu0 %v4478, 64
        %v7360 = vpop.permute.xlu0 %7359
        %7361 = vrot.lane.b32.xlu0 %v4477, 64
        %v7362 = vpop.permute.xlu0 %7361
        %7363 = vrot.lane.b32.xlu0 %v4476, 64
        %v7364 = vpop.permute.xlu0 %7363
        %7365 = vrot.lane.b32.xlu0 %v4475, 64
        %v7366 = vpop.permute.xlu0 %7365
        %7367 = vrot.lane.b32.xlu0 %v4474, 64
        %v7368 = vpop.permute.xlu0 %7367
        %7369 = vrot.lane.b32.xlu0 %v4473, 64
        %v7370 = vpop.permute.xlu0 %7369
        %7371 = vrot.lane.b32.xlu0 %v4472, 64
        %v7372 = vpop.permute.xlu0 %7371
        %7373 = vrot.lane.b32.xlu0 %v4471, 64
        %v7374 = vpop.permute.xlu0 %7373
        %7375 = vrot.lane.b32.xlu0 %v4470, 64
        %v7376 = vpop.permute.xlu0 %7375
        %7377 = vrot.lane.b32.xlu0 %v4469, 64
        %v7378 = vpop.permute.xlu0 %7377
        %7379 = vrot.lane.b32.xlu0 %v4468, 64
        %v7380 = vpop.permute.xlu0 %7379
        %7381 = vrot.lane.b32.xlu0 %v4467, 64
        %v7382 = vpop.permute.xlu0 %7381
        %7383 = vrot.lane.b32.xlu0 %v4466, 64
        %v7384 = vpop.permute.xlu0 %7383
        %7385 = vrot.lane.b32.xlu0 %v4465, 64
        %v7386 = vpop.permute.xlu0 %7385
        %7387 = vrot.lane.b32.xlu0 %v4464, 64
        %v7388 = vpop.permute.xlu0 %7387
        %7389 = vrot.lane.b32.xlu0 %v4463, 64
        %v7390 = vpop.permute.xlu0 %7389
        %7391 = vrot.lane.b32.xlu0 %v4462, 64
        %v7392 = vpop.permute.xlu0 %7391
        %7393 = vrot.lane.b32.xlu0 %v4461, 64
        %v7394 = vpop.permute.xlu0 %7393
        %7395 = vrot.lane.b32.xlu0 %v4460, 64
        %v7396 = vpop.permute.xlu0 %7395
        %7397 = vrot.lane.b32.xlu0 %v4459, 64
        %v7398 = vpop.permute.xlu0 %7397
        %7399 = vrot.lane.b32.xlu0 %v4458, 64
        %v7400 = vpop.permute.xlu0 %7399
        %7401 = vrot.lane.b32.xlu0 %v4457, 64
        %v7402 = vpop.permute.xlu0 %7401
        %7403 = vrot.lane.b32.xlu0 %v4456, 64
        %v7404 = vpop.permute.xlu0 %7403
        %7405 = vrot.lane.b32.xlu0 %v4455, 64
        %v7406 = vpop.permute.xlu0 %7405
        %7407 = vrot.lane.b32.xlu0 %v4454, 64
        %v7408 = vpop.permute.xlu0 %7407
        %7409 = vrot.lane.b32.xlu0 %v4453, 64
        %v7410 = vpop.permute.xlu0 %7409
        %7411 = vrot.lane.b32.xlu0 %v4452, 64
        %v7412 = vpop.permute.xlu0 %7411
        %7413 = vrot.lane.b32.xlu0 %v4451, 64
        %v7414 = vpop.permute.xlu0 %7413
        %7415 = vrot.lane.b32.xlu0 %v4450, 64
        %v7416 = vpop.permute.xlu0 %7415
        %7417 = vrot.lane.b32.xlu0 %v4449, 64
        %v7418 = vpop.permute.xlu0 %7417
        %7419 = vrot.lane.b32.xlu0 %v4448, 64
        %v7420 = vpop.permute.xlu0 %7419
        %7421 = vrot.lane.b32.xlu0 %v4447, 64
        %v7422 = vpop.permute.xlu0 %7421
        %7423 = vrot.lane.b32.xlu0 %v4446, 64
        %v7424 = vpop.permute.xlu0 %7423
        %7425 = vrot.lane.b32.xlu0 %v4445, 64
        %v7426 = vpop.permute.xlu0 %7425
        %7427 = vrot.lane.b32.xlu0 %v4444, 64
        %v7428 = vpop.permute.xlu0 %7427
        %7429 = vrot.lane.b32.xlu0 %v4443, 64
        %v7430 = vpop.permute.xlu0 %7429
        %7431 = vrot.lane.b32.xlu0 %v4442, 64
        %v7432 = vpop.permute.xlu0 %7431
        %7433 = vrot.lane.b32.xlu0 %v4441, 64
        %v7434 = vpop.permute.xlu0 %7433
        %7435 = vrot.lane.b32.xlu0 %v4440, 64
        %v7436 = vpop.permute.xlu0 %7435
        %7437 = vrot.lane.b32.xlu0 %v4439, 64
        %v7438 = vpop.permute.xlu0 %7437
        %7439 = vrot.lane.b32.xlu0 %v4438, 64
        %v7440 = vpop.permute.xlu0 %7439
        %7441 = vrot.lane.b32.xlu0 %v4437, 64
        %v7442 = vpop.permute.xlu0 %7441
        %7443 = vrot.lane.b32.xlu0 %v4436, 64
        %v7444 = vpop.permute.xlu0 %7443
        %7445 = vrot.lane.b32.xlu0 %v4435, 64
        %v7446 = vpop.permute.xlu0 %7445
        %7447 = vrot.lane.b32.xlu0 %v4434, 64
        %v7448 = vpop.permute.xlu0 %7447
        %7449 = vrot.lane.b32.xlu0 %v4433, 64
        %v7450 = vpop.permute.xlu0 %7449
        %7451 = vrot.lane.b32.xlu0 %v4432, 64
        %v7452 = vpop.permute.xlu0 %7451
        %7453 = vrot.lane.b32.xlu0 %v4431, 64
        %v7454 = vpop.permute.xlu0 %7453
        %7455 = vrot.lane.b32.xlu0 %v4430, 64
        %v7456 = vpop.permute.xlu0 %7455
        %7457 = vrot.lane.b32.xlu0 %v4429, 64
        %v7458 = vpop.permute.xlu0 %7457
        %7459 = vrot.lane.b32.xlu0 %v4428, 64
        %v7460 = vpop.permute.xlu0 %7459
        %7461 = vrot.lane.b32.xlu0 %v4427, 64
        %v7462 = vpop.permute.xlu0 %7461
        %7463 = vrot.lane.b32.xlu0 %v4426, 64
        %v7464 = vpop.permute.xlu0 %7463
        %7465 = vrot.lane.b32.xlu0 %v4425, 64
        %v7466 = vpop.permute.xlu0 %7465
        %7467 = vrot.lane.b32.xlu0 %v4424, 64
        %v7468 = vpop.permute.xlu0 %7467
        %7469 = vrot.lane.b32.xlu0 %v4423, 64
        %v7470 = vpop.permute.xlu0 %7469
        %7471 = vrot.lane.b32.xlu0 %v4422, 64
        %v7472 = vpop.permute.xlu0 %7471
        %7473 = vrot.lane.b32.xlu0 %v4421, 64
        %v7474 = vpop.permute.xlu0 %7473
        %7475 = vrot.lane.b32.xlu0 %v4420, 64
        %v7476 = vpop.permute.xlu0 %7475
        %7477 = vrot.lane.b32.xlu0 %v4419, 64
        %v7478 = vpop.permute.xlu0 %7477
        %7479 = vrot.lane.b32.xlu0 %v4418, 64
        %v7480 = vpop.permute.xlu0 %7479
        %7481 = vrot.lane.b32.xlu0 %v4417, 64
        %v7482 = vpop.permute.xlu0 %7481
        %7483 = vrot.lane.b32.xlu0 %v4416, 64
        %v7484 = vpop.permute.xlu0 %7483
        %7485 = vrot.lane.b32.xlu0 %v4415, 64
        %v7486 = vpop.permute.xlu0 %7485
        %7487 = vrot.lane.b32.xlu0 %v4670, 64
        %v7488 = vpop.permute.xlu0 %7487
        %8001 = vrot.lane.b32.xlu0 %v5182, 96
        %v8002 = vpop.permute.xlu0 %8001
        %8003 = vrot.lane.b32.xlu0 %v5181, 96
        %v8004 = vpop.permute.xlu0 %8003
        %8005 = vrot.lane.b32.xlu0 %v5180, 96
        %v8006 = vpop.permute.xlu0 %8005
        %8007 = vrot.lane.b32.xlu0 %v5179, 96
        %v8008 = vpop.permute.xlu0 %8007
        %8009 = vrot.lane.b32.xlu0 %v5178, 96
        %v8010 = vpop.permute.xlu0 %8009
        %8011 = vrot.lane.b32.xlu0 %v5177, 96
        %v8012 = vpop.permute.xlu0 %8011
        %8013 = vrot.lane.b32.xlu0 %v5176, 96
        %v8014 = vpop.permute.xlu0 %8013
        %8015 = vrot.lane.b32.xlu0 %v5175, 96
        %v8016 = vpop.permute.xlu0 %8015
        %8017 = vrot.lane.b32.xlu0 %v5174, 96
        %v8018 = vpop.permute.xlu0 %8017
        %8019 = vrot.lane.b32.xlu0 %v5173, 96
        %v8020 = vpop.permute.xlu0 %8019
        %8021 = vrot.lane.b32.xlu0 %v5172, 96
        %v8022 = vpop.permute.xlu0 %8021
        %8023 = vrot.lane.b32.xlu0 %v5171, 96
        %v8024 = vpop.permute.xlu0 %8023
        %8025 = vrot.lane.b32.xlu0 %v5170, 96
        %v8026 = vpop.permute.xlu0 %8025
        %8027 = vrot.lane.b32.xlu0 %v5169, 96
        %v8028 = vpop.permute.xlu0 %8027
        %8029 = vrot.lane.b32.xlu0 %v5168, 96
        %v8030 = vpop.permute.xlu0 %8029
        %8031 = vrot.lane.b32.xlu0 %v5167, 96
        %v8032 = vpop.permute.xlu0 %8031
        %8033 = vrot.lane.b32.xlu0 %v5166, 96
        %v8034 = vpop.permute.xlu0 %8033
        %8035 = vrot.lane.b32.xlu0 %v5165, 96
        %v8036 = vpop.permute.xlu0 %8035
        %8037 = vrot.lane.b32.xlu0 %v5164, 96
        %v8038 = vpop.permute.xlu0 %8037
        %8039 = vrot.lane.b32.xlu0 %v5163, 96
        %v8040 = vpop.permute.xlu0 %8039
        %8041 = vrot.lane.b32.xlu0 %v5162, 96
        %v8042 = vpop.permute.xlu0 %8041
        %8043 = vrot.lane.b32.xlu0 %v5161, 96
        %v8044 = vpop.permute.xlu0 %8043
        %8045 = vrot.lane.b32.xlu0 %v5160, 96
        %v8046 = vpop.permute.xlu0 %8045
        %8047 = vrot.lane.b32.xlu0 %v5159, 96
        %v8048 = vpop.permute.xlu0 %8047
        %8049 = vrot.lane.b32.xlu0 %v5158, 96
        %v8050 = vpop.permute.xlu0 %8049
        %8051 = vrot.lane.b32.xlu0 %v5157, 96
        %v8052 = vpop.permute.xlu0 %8051
        %8053 = vrot.lane.b32.xlu0 %v5156, 96
        %v8054 = vpop.permute.xlu0 %8053
        %8055 = vrot.lane.b32.xlu0 %v5155, 96
        %v8056 = vpop.permute.xlu0 %8055
        %8057 = vrot.lane.b32.xlu0 %v5154, 96
        %v8058 = vpop.permute.xlu0 %8057
        %8059 = vrot.lane.b32.xlu0 %v5153, 96
        %v8060 = vpop.permute.xlu0 %8059
        %8061 = vrot.lane.b32.xlu0 %v5152, 96
        %v8062 = vpop.permute.xlu0 %8061
        %8063 = vrot.lane.b32.xlu0 %v5151, 96
        %v8064 = vpop.permute.xlu0 %8063
        %8065 = vrot.lane.b32.xlu0 %v5150, 96
        %v8066 = vpop.permute.xlu0 %8065
        %8067 = vrot.lane.b32.xlu0 %v5149, 96
        %v8068 = vpop.permute.xlu0 %8067
        %8069 = vrot.lane.b32.xlu0 %v5148, 96
        %v8070 = vpop.permute.xlu0 %8069
        %8071 = vrot.lane.b32.xlu0 %v5147, 96
        %v8072 = vpop.permute.xlu0 %8071
        %8073 = vrot.lane.b32.xlu0 %v5146, 96
        %v8074 = vpop.permute.xlu0 %8073
        %8075 = vrot.lane.b32.xlu0 %v5145, 96
        %v8076 = vpop.permute.xlu0 %8075
        %8077 = vrot.lane.b32.xlu0 %v5144, 96
        %v8078 = vpop.permute.xlu0 %8077
        %8079 = vrot.lane.b32.xlu0 %v5143, 96
        %v8080 = vpop.permute.xlu0 %8079
        %8081 = vrot.lane.b32.xlu0 %v5142, 96
        %v8082 = vpop.permute.xlu0 %8081
        %8083 = vrot.lane.b32.xlu0 %v5141, 96
        %v8084 = vpop.permute.xlu0 %8083
        %8085 = vrot.lane.b32.xlu0 %v5140, 96
        %v8086 = vpop.permute.xlu0 %8085
        %8087 = vrot.lane.b32.xlu0 %v5139, 96
        %v8088 = vpop.permute.xlu0 %8087
        %8089 = vrot.lane.b32.xlu0 %v5138, 96
        %v8090 = vpop.permute.xlu0 %8089
        %8091 = vrot.lane.b32.xlu0 %v5137, 96
        %v8092 = vpop.permute.xlu0 %8091
        %8093 = vrot.lane.b32.xlu0 %v5136, 96
        %v8094 = vpop.permute.xlu0 %8093
        %8095 = vrot.lane.b32.xlu0 %v5135, 96
        %v8096 = vpop.permute.xlu0 %8095
        %8097 = vrot.lane.b32.xlu0 %v5134, 96
        %v8098 = vpop.permute.xlu0 %8097
        %8099 = vrot.lane.b32.xlu0 %v5133, 96
        %v8100 = vpop.permute.xlu0 %8099
        %8101 = vrot.lane.b32.xlu0 %v5132, 96
        %v8102 = vpop.permute.xlu0 %8101
        %8103 = vrot.lane.b32.xlu0 %v5131, 96
        %v8104 = vpop.permute.xlu0 %8103
        %8105 = vrot.lane.b32.xlu0 %v5130, 96
        %v8106 = vpop.permute.xlu0 %8105
        %8107 = vrot.lane.b32.xlu0 %v5129, 96
        %v8108 = vpop.permute.xlu0 %8107
        %8109 = vrot.lane.b32.xlu0 %v5128, 96
        %v8110 = vpop.permute.xlu0 %8109
        %8111 = vrot.lane.b32.xlu0 %v5127, 96
        %v8112 = vpop.permute.xlu0 %8111
        %8113 = vrot.lane.b32.xlu0 %v5126, 96
        %v8114 = vpop.permute.xlu0 %8113
        %8115 = vrot.lane.b32.xlu0 %v5125, 96
        %v8116 = vpop.permute.xlu0 %8115
        %8117 = vrot.lane.b32.xlu0 %v5124, 96
        %v8118 = vpop.permute.xlu0 %8117
        %8119 = vrot.lane.b32.xlu0 %v5123, 96
        %v8120 = vpop.permute.xlu0 %8119
        %8121 = vrot.lane.b32.xlu0 %v5122, 96
        %v8122 = vpop.permute.xlu0 %8121
        %8123 = vrot.lane.b32.xlu0 %v5121, 96
        %v8124 = vpop.permute.xlu0 %8123
        %8125 = vrot.lane.b32.xlu0 %v5120, 96
        %v8126 = vpop.permute.xlu0 %8125
        %8127 = vrot.lane.b32.xlu0 %v5119, 96
        %v8128 = vpop.permute.xlu0 %8127
        %8129 = vrot.lane.b32.xlu0 %v5118, 96
        %v8130 = vpop.permute.xlu0 %8129
        %8131 = vrot.lane.b32.xlu0 %v5117, 96
        %v8132 = vpop.permute.xlu0 %8131
        %8133 = vrot.lane.b32.xlu0 %v5116, 96
        %v8134 = vpop.permute.xlu0 %8133
        %8135 = vrot.lane.b32.xlu0 %v5115, 96
        %v8136 = vpop.permute.xlu0 %8135
        %8137 = vrot.lane.b32.xlu0 %v5114, 96
        %v8138 = vpop.permute.xlu0 %8137
        %8139 = vrot.lane.b32.xlu0 %v5113, 96
        %v8140 = vpop.permute.xlu0 %8139
        %8141 = vrot.lane.b32.xlu0 %v5112, 96
        %v8142 = vpop.permute.xlu0 %8141
        %8143 = vrot.lane.b32.xlu0 %v5111, 96
        %v8144 = vpop.permute.xlu0 %8143
        %8145 = vrot.lane.b32.xlu0 %v5110, 96
        %v8146 = vpop.permute.xlu0 %8145
        %8147 = vrot.lane.b32.xlu0 %v5109, 96
        %v8148 = vpop.permute.xlu0 %8147
        %8149 = vrot.lane.b32.xlu0 %v5108, 96
        %v8150 = vpop.permute.xlu0 %8149
        %8151 = vrot.lane.b32.xlu0 %v5107, 96
        %v8152 = vpop.permute.xlu0 %8151
        %8153 = vrot.lane.b32.xlu0 %v5106, 96
        %v8154 = vpop.permute.xlu0 %8153
        %8155 = vrot.lane.b32.xlu0 %v5105, 96
        %v8156 = vpop.permute.xlu0 %8155
        %8157 = vrot.lane.b32.xlu0 %v5104, 96
        %v8158 = vpop.permute.xlu0 %8157
        %8159 = vrot.lane.b32.xlu0 %v5103, 96
        %v8160 = vpop.permute.xlu0 %8159
        %8161 = vrot.lane.b32.xlu0 %v5102, 96
        %v8162 = vpop.permute.xlu0 %8161
        %8163 = vrot.lane.b32.xlu0 %v5101, 96
        %v8164 = vpop.permute.xlu0 %8163
        %8165 = vrot.lane.b32.xlu0 %v5100, 96
        %v8166 = vpop.permute.xlu0 %8165
        %8167 = vrot.lane.b32.xlu0 %v5099, 96
        %v8168 = vpop.permute.xlu0 %8167
        %8169 = vrot.lane.b32.xlu0 %v5098, 96
        %v8170 = vpop.permute.xlu0 %8169
        %8171 = vrot.lane.b32.xlu0 %v5097, 96
        %v8172 = vpop.permute.xlu0 %8171
        %8173 = vrot.lane.b32.xlu0 %v5096, 96
        %v8174 = vpop.permute.xlu0 %8173
        %8175 = vrot.lane.b32.xlu0 %v5095, 96
        %v8176 = vpop.permute.xlu0 %8175
        %8177 = vrot.lane.b32.xlu0 %v5094, 96
        %v8178 = vpop.permute.xlu0 %8177
        %8179 = vrot.lane.b32.xlu0 %v5093, 96
        %v8180 = vpop.permute.xlu0 %8179
        %8181 = vrot.lane.b32.xlu0 %v5092, 96
        %v8182 = vpop.permute.xlu0 %8181
        %8183 = vrot.lane.b32.xlu0 %v5091, 96
        %v8184 = vpop.permute.xlu0 %8183
        %8185 = vrot.lane.b32.xlu0 %v5090, 96
        %v8186 = vpop.permute.xlu0 %8185
        %8187 = vrot.lane.b32.xlu0 %v5089, 96
        %v8188 = vpop.permute.xlu0 %8187
        %8189 = vrot.lane.b32.xlu0 %v5088, 96
        %v8190 = vpop.permute.xlu0 %8189
        %8191 = vrot.lane.b32.xlu0 %v5087, 96
        %v8192 = vpop.permute.xlu0 %8191
        %8193 = vrot.lane.b32.xlu0 %v5086, 96
        %v8194 = vpop.permute.xlu0 %8193
        %8195 = vrot.lane.b32.xlu0 %v5085, 96
        %v8196 = vpop.permute.xlu0 %8195
        %8197 = vrot.lane.b32.xlu0 %v5084, 96
        %v8198 = vpop.permute.xlu0 %8197
        %8199 = vrot.lane.b32.xlu0 %v5083, 96
        %v8200 = vpop.permute.xlu0 %8199
        %8201 = vrot.lane.b32.xlu0 %v5082, 96
        %v8202 = vpop.permute.xlu0 %8201
        %8203 = vrot.lane.b32.xlu0 %v5081, 96
        %v8204 = vpop.permute.xlu0 %8203
        %8205 = vrot.lane.b32.xlu0 %v5080, 96
        %v8206 = vpop.permute.xlu0 %8205
        %8207 = vrot.lane.b32.xlu0 %v5079, 96
        %v8208 = vpop.permute.xlu0 %8207
        %8209 = vrot.lane.b32.xlu0 %v5078, 96
        %v8210 = vpop.permute.xlu0 %8209
        %8211 = vrot.lane.b32.xlu0 %v5077, 96
        %v8212 = vpop.permute.xlu0 %8211
        %8213 = vrot.lane.b32.xlu0 %v5076, 96
        %v8214 = vpop.permute.xlu0 %8213
        %8215 = vrot.lane.b32.xlu0 %v5075, 96
        %v8216 = vpop.permute.xlu0 %8215
        %8217 = vrot.lane.b32.xlu0 %v5074, 96
        %v8218 = vpop.permute.xlu0 %8217
        %8219 = vrot.lane.b32.xlu0 %v5073, 96
        %v8220 = vpop.permute.xlu0 %8219
        %8221 = vrot.lane.b32.xlu0 %v5072, 96
        %v8222 = vpop.permute.xlu0 %8221
        %8223 = vrot.lane.b32.xlu0 %v5071, 96
        %v8224 = vpop.permute.xlu0 %8223
        %8225 = vrot.lane.b32.xlu0 %v5070, 96
        %v8226 = vpop.permute.xlu0 %8225
        %8227 = vrot.lane.b32.xlu0 %v5069, 96
        %v8228 = vpop.permute.xlu0 %8227
        %8229 = vrot.lane.b32.xlu0 %v5068, 96
        %v8230 = vpop.permute.xlu0 %8229
        %8231 = vrot.lane.b32.xlu0 %v5067, 96
        %v8232 = vpop.permute.xlu0 %8231
        %8233 = vrot.lane.b32.xlu0 %v5066, 96
        %v8234 = vpop.permute.xlu0 %8233
        %8235 = vrot.lane.b32.xlu0 %v5065, 96
        %v8236 = vpop.permute.xlu0 %8235
        %8237 = vrot.lane.b32.xlu0 %v5064, 96
        %v8238 = vpop.permute.xlu0 %8237
        %8239 = vrot.lane.b32.xlu0 %v5063, 96
        %v8240 = vpop.permute.xlu0 %8239
        %8241 = vrot.lane.b32.xlu0 %v5062, 96
        %v8242 = vpop.permute.xlu0 %8241
        %8243 = vrot.lane.b32.xlu0 %v5061, 96
        %v8244 = vpop.permute.xlu0 %8243
        %8245 = vrot.lane.b32.xlu0 %v5060, 96
        %v8246 = vpop.permute.xlu0 %8245
        %8247 = vrot.lane.b32.xlu0 %v5059, 96
        %v8248 = vpop.permute.xlu0 %8247
        %8249 = vrot.lane.b32.xlu0 %v5058, 96
        %v8250 = vpop.permute.xlu0 %8249
        %8251 = vrot.lane.b32.xlu0 %v5057, 96
        %v8252 = vpop.permute.xlu0 %8251
        %8253 = vrot.lane.b32.xlu0 %v5056, 96
        %v8254 = vpop.permute.xlu0 %8253
        %8255 = vrot.lane.b32.xlu0 %v5055, 96
        %v8256 = vpop.permute.xlu0 %8255
        %8257 = vrot.lane.b32.xlu0 %v5054, 96
        %v8258 = vpop.permute.xlu0 %8257
        %8259 = vrot.lane.b32.xlu0 %v5053, 96
        %v8260 = vpop.permute.xlu0 %8259
        %8261 = vrot.lane.b32.xlu0 %v5052, 96
        %v8262 = vpop.permute.xlu0 %8261
        %8263 = vrot.lane.b32.xlu0 %v5051, 96
        %v8264 = vpop.permute.xlu0 %8263
        %8265 = vrot.lane.b32.xlu0 %v5050, 96
        %v8266 = vpop.permute.xlu0 %8265
        %8267 = vrot.lane.b32.xlu0 %v5049, 96
        %v8268 = vpop.permute.xlu0 %8267
        %8269 = vrot.lane.b32.xlu0 %v5048, 96
        %v8270 = vpop.permute.xlu0 %8269
        %8271 = vrot.lane.b32.xlu0 %v5047, 96
        %v8272 = vpop.permute.xlu0 %8271
        %8273 = vrot.lane.b32.xlu0 %v5046, 96
        %v8274 = vpop.permute.xlu0 %8273
        %8275 = vrot.lane.b32.xlu0 %v5045, 96
        %v8276 = vpop.permute.xlu0 %8275
        %8277 = vrot.lane.b32.xlu0 %v5044, 96
        %v8278 = vpop.permute.xlu0 %8277
        %8279 = vrot.lane.b32.xlu0 %v5043, 96
        %v8280 = vpop.permute.xlu0 %8279
        %8281 = vrot.lane.b32.xlu0 %v5042, 96
        %v8282 = vpop.permute.xlu0 %8281
        %8283 = vrot.lane.b32.xlu0 %v5041, 96
        %v8284 = vpop.permute.xlu0 %8283
        %8285 = vrot.lane.b32.xlu0 %v5040, 96
        %v8286 = vpop.permute.xlu0 %8285
        %8287 = vrot.lane.b32.xlu0 %v5039, 96
        %v8288 = vpop.permute.xlu0 %8287
        %8289 = vrot.lane.b32.xlu0 %v5038, 96
        %v8290 = vpop.permute.xlu0 %8289
        %8291 = vrot.lane.b32.xlu0 %v5037, 96
        %v8292 = vpop.permute.xlu0 %8291
        %8293 = vrot.lane.b32.xlu0 %v5036, 96
        %v8294 = vpop.permute.xlu0 %8293
        %8295 = vrot.lane.b32.xlu0 %v5035, 96
        %v8296 = vpop.permute.xlu0 %8295
        %8297 = vrot.lane.b32.xlu0 %v5034, 96
        %v8298 = vpop.permute.xlu0 %8297
        %8299 = vrot.lane.b32.xlu0 %v5033, 96
        %v8300 = vpop.permute.xlu0 %8299
        %8301 = vrot.lane.b32.xlu0 %v5032, 96
        %v8302 = vpop.permute.xlu0 %8301
        %8303 = vrot.lane.b32.xlu0 %v5031, 96
        %v8304 = vpop.permute.xlu0 %8303
        %8305 = vrot.lane.b32.xlu0 %v5030, 96
        %v8306 = vpop.permute.xlu0 %8305
        %8307 = vrot.lane.b32.xlu0 %v5029, 96
        %v8308 = vpop.permute.xlu0 %8307
        %8309 = vrot.lane.b32.xlu0 %v5028, 96
        %v8310 = vpop.permute.xlu0 %8309
        %8311 = vrot.lane.b32.xlu0 %v5027, 96
        %v8312 = vpop.permute.xlu0 %8311
        %8313 = vrot.lane.b32.xlu0 %v5026, 96
        %v8314 = vpop.permute.xlu0 %8313
        %8315 = vrot.lane.b32.xlu0 %v5025, 96
        %v8316 = vpop.permute.xlu0 %8315
        %8317 = vrot.lane.b32.xlu0 %v5024, 96
        %v8318 = vpop.permute.xlu0 %8317
        %8319 = vrot.lane.b32.xlu0 %v5023, 96
        %v8320 = vpop.permute.xlu0 %8319
        %8321 = vrot.lane.b32.xlu0 %v5022, 96
        %v8322 = vpop.permute.xlu0 %8321
        %8323 = vrot.lane.b32.xlu0 %v5021, 96
        %v8324 = vpop.permute.xlu0 %8323
        %8325 = vrot.lane.b32.xlu0 %v5020, 96
        %v8326 = vpop.permute.xlu0 %8325
        %8327 = vrot.lane.b32.xlu0 %v5019, 96
        %v8328 = vpop.permute.xlu0 %8327
        %8329 = vrot.lane.b32.xlu0 %v5018, 96
        %v8330 = vpop.permute.xlu0 %8329
        %8331 = vrot.lane.b32.xlu0 %v5017, 96
        %v8332 = vpop.permute.xlu0 %8331
        %8333 = vrot.lane.b32.xlu0 %v5016, 96
        %v8334 = vpop.permute.xlu0 %8333
        %8335 = vrot.lane.b32.xlu0 %v5015, 96
        %v8336 = vpop.permute.xlu0 %8335
        %8337 = vrot.lane.b32.xlu0 %v5014, 96
        %v8338 = vpop.permute.xlu0 %8337
        %8339 = vrot.lane.b32.xlu0 %v5013, 96
        %v8340 = vpop.permute.xlu0 %8339
        %8341 = vrot.lane.b32.xlu0 %v5012, 96
        %v8342 = vpop.permute.xlu0 %8341
        %8343 = vrot.lane.b32.xlu0 %v5011, 96
        %v8344 = vpop.permute.xlu0 %8343
        %8345 = vrot.lane.b32.xlu0 %v5010, 96
        %v8346 = vpop.permute.xlu0 %8345
        %8347 = vrot.lane.b32.xlu0 %v5009, 96
        %v8348 = vpop.permute.xlu0 %8347
        %8349 = vrot.lane.b32.xlu0 %v5008, 96
        %v8350 = vpop.permute.xlu0 %8349
        %8351 = vrot.lane.b32.xlu0 %v5007, 96
        %v8352 = vpop.permute.xlu0 %8351
        %8353 = vrot.lane.b32.xlu0 %v5006, 96
        %v8354 = vpop.permute.xlu0 %8353
        %8355 = vrot.lane.b32.xlu0 %v5005, 96
        %v8356 = vpop.permute.xlu0 %8355
        %8357 = vrot.lane.b32.xlu0 %v5004, 96
        %v8358 = vpop.permute.xlu0 %8357
        %8359 = vrot.lane.b32.xlu0 %v5003, 96
        %v8360 = vpop.permute.xlu0 %8359
        %8361 = vrot.lane.b32.xlu0 %v5002, 96
        %v8362 = vpop.permute.xlu0 %8361
        %8363 = vrot.lane.b32.xlu0 %v5001, 96
        %v8364 = vpop.permute.xlu0 %8363
        %8365 = vrot.lane.b32.xlu0 %v5000, 96
        %v8366 = vpop.permute.xlu0 %8365
        %8367 = vrot.lane.b32.xlu0 %v4999, 96
        %v8368 = vpop.permute.xlu0 %8367
        %8369 = vrot.lane.b32.xlu0 %v4998, 96
        %v8370 = vpop.permute.xlu0 %8369
        %8371 = vrot.lane.b32.xlu0 %v4997, 96
        %v8372 = vpop.permute.xlu0 %8371
        %8373 = vrot.lane.b32.xlu0 %v4996, 96
        %v8374 = vpop.permute.xlu0 %8373
        %8375 = vrot.lane.b32.xlu0 %v4995, 96
        %v8376 = vpop.permute.xlu0 %8375
        %8377 = vrot.lane.b32.xlu0 %v4994, 96
        %v8378 = vpop.permute.xlu0 %8377
        %8379 = vrot.lane.b32.xlu0 %v4993, 96
        %v8380 = vpop.permute.xlu0 %8379
        %8381 = vrot.lane.b32.xlu0 %v4992, 96
        %v8382 = vpop.permute.xlu0 %8381
        %8383 = vrot.lane.b32.xlu0 %v4991, 96
        %v8384 = vpop.permute.xlu0 %8383
        %8385 = vrot.lane.b32.xlu0 %v4990, 96
        %v8386 = vpop.permute.xlu0 %8385
        %8387 = vrot.lane.b32.xlu0 %v4989, 96
        %v8388 = vpop.permute.xlu0 %8387
        %8389 = vrot.lane.b32.xlu0 %v4988, 96
        %v8390 = vpop.permute.xlu0 %8389
        %8391 = vrot.lane.b32.xlu0 %v4987, 96
        %v8392 = vpop.permute.xlu0 %8391
        %8393 = vrot.lane.b32.xlu0 %v4986, 96
        %v8394 = vpop.permute.xlu0 %8393
        %8395 = vrot.lane.b32.xlu0 %v4985, 96
        %v8396 = vpop.permute.xlu0 %8395
        %8397 = vrot.lane.b32.xlu0 %v4984, 96
        %v8398 = vpop.permute.xlu0 %8397
        %8399 = vrot.lane.b32.xlu0 %v4983, 96
        %v8400 = vpop.permute.xlu0 %8399
        %8401 = vrot.lane.b32.xlu0 %v4982, 96
        %v8402 = vpop.permute.xlu0 %8401
        %8403 = vrot.lane.b32.xlu0 %v4981, 96
        %v8404 = vpop.permute.xlu0 %8403
        %8405 = vrot.lane.b32.xlu0 %v4980, 96
        %v8406 = vpop.permute.xlu0 %8405
        %8407 = vrot.lane.b32.xlu0 %v4979, 96
        %v8408 = vpop.permute.xlu0 %8407
        %8409 = vrot.lane.b32.xlu0 %v4978, 96
        %v8410 = vpop.permute.xlu0 %8409
        %8411 = vrot.lane.b32.xlu0 %v4977, 96
        %v8412 = vpop.permute.xlu0 %8411
        %8413 = vrot.lane.b32.xlu0 %v4976, 96
        %v8414 = vpop.permute.xlu0 %8413
        %8415 = vrot.lane.b32.xlu0 %v4975, 96
        %v8416 = vpop.permute.xlu0 %8415
        %8417 = vrot.lane.b32.xlu0 %v4974, 96
        %v8418 = vpop.permute.xlu0 %8417
        %8419 = vrot.lane.b32.xlu0 %v4973, 96
        %v8420 = vpop.permute.xlu0 %8419
        %8421 = vrot.lane.b32.xlu0 %v4972, 96
        %v8422 = vpop.permute.xlu0 %8421
        %8423 = vrot.lane.b32.xlu0 %v4971, 96
        %v8424 = vpop.permute.xlu0 %8423
        %8425 = vrot.lane.b32.xlu0 %v4970, 96
        %v8426 = vpop.permute.xlu0 %8425
        %8427 = vrot.lane.b32.xlu0 %v4969, 96
        %v8428 = vpop.permute.xlu0 %8427
        %8429 = vrot.lane.b32.xlu0 %v4968, 96
        %v8430 = vpop.permute.xlu0 %8429
        %8431 = vrot.lane.b32.xlu0 %v4967, 96
        %v8432 = vpop.permute.xlu0 %8431
        %8433 = vrot.lane.b32.xlu0 %v4966, 96
        %v8434 = vpop.permute.xlu0 %8433
        %8435 = vrot.lane.b32.xlu0 %v4965, 96
        %v8436 = vpop.permute.xlu0 %8435
        %8437 = vrot.lane.b32.xlu0 %v4964, 96
        %v8438 = vpop.permute.xlu0 %8437
        %8439 = vrot.lane.b32.xlu0 %v4963, 96
        %v8440 = vpop.permute.xlu0 %8439
        %8441 = vrot.lane.b32.xlu0 %v4962, 96
        %v8442 = vpop.permute.xlu0 %8441
        %8443 = vrot.lane.b32.xlu0 %v4961, 96
        %v8444 = vpop.permute.xlu0 %8443
        %8445 = vrot.lane.b32.xlu0 %v4960, 96
        %v8446 = vpop.permute.xlu0 %8445
        %8447 = vrot.lane.b32.xlu0 %v4959, 96
        %v8448 = vpop.permute.xlu0 %8447
        %8449 = vrot.lane.b32.xlu0 %v4958, 96
        %v8450 = vpop.permute.xlu0 %8449
        %8451 = vrot.lane.b32.xlu0 %v4957, 96
        %v8452 = vpop.permute.xlu0 %8451
        %8453 = vrot.lane.b32.xlu0 %v4956, 96
        %v8454 = vpop.permute.xlu0 %8453
        %8455 = vrot.lane.b32.xlu0 %v4955, 96
        %v8456 = vpop.permute.xlu0 %8455
        %8457 = vrot.lane.b32.xlu0 %v4954, 96
        %v8458 = vpop.permute.xlu0 %8457
        %8459 = vrot.lane.b32.xlu0 %v4953, 96
        %v8460 = vpop.permute.xlu0 %8459
        %8461 = vrot.lane.b32.xlu0 %v4952, 96
        %v8462 = vpop.permute.xlu0 %8461
        %8463 = vrot.lane.b32.xlu0 %v4951, 96
        %v8464 = vpop.permute.xlu0 %8463
        %8465 = vrot.lane.b32.xlu0 %v4950, 96
        %v8466 = vpop.permute.xlu0 %8465
        %8467 = vrot.lane.b32.xlu0 %v4949, 96
        %v8468 = vpop.permute.xlu0 %8467
        %8469 = vrot.lane.b32.xlu0 %v4948, 96
        %v8470 = vpop.permute.xlu0 %8469
        %8471 = vrot.lane.b32.xlu0 %v4947, 96
        %v8472 = vpop.permute.xlu0 %8471
        %8473 = vrot.lane.b32.xlu0 %v4946, 96
        %v8474 = vpop.permute.xlu0 %8473
        %8475 = vrot.lane.b32.xlu0 %v4945, 96
        %v8476 = vpop.permute.xlu0 %8475
        %8477 = vrot.lane.b32.xlu0 %v4944, 96
        %v8478 = vpop.permute.xlu0 %8477
        %8479 = vrot.lane.b32.xlu0 %v4943, 96
        %v8480 = vpop.permute.xlu0 %8479
        %8481 = vrot.lane.b32.xlu0 %v4942, 96
        %v8482 = vpop.permute.xlu0 %8481
        %8483 = vrot.lane.b32.xlu0 %v4941, 96
        %v8484 = vpop.permute.xlu0 %8483
        %8485 = vrot.lane.b32.xlu0 %v4940, 96
        %v8486 = vpop.permute.xlu0 %8485
        %8487 = vrot.lane.b32.xlu0 %v4939, 96
        %v8488 = vpop.permute.xlu0 %8487
        %8489 = vrot.lane.b32.xlu0 %v4938, 96
        %v8490 = vpop.permute.xlu0 %8489
        %8491 = vrot.lane.b32.xlu0 %v4937, 96
        %v8492 = vpop.permute.xlu0 %8491
        %8493 = vrot.lane.b32.xlu0 %v4936, 96
        %v8494 = vpop.permute.xlu0 %8493
        %8495 = vrot.lane.b32.xlu0 %v4935, 96
        %v8496 = vpop.permute.xlu0 %8495
        %8497 = vrot.lane.b32.xlu0 %v4934, 96
        %v8498 = vpop.permute.xlu0 %8497
        %8499 = vrot.lane.b32.xlu0 %v4933, 96
        %v8500 = vpop.permute.xlu0 %8499
        %8501 = vrot.lane.b32.xlu0 %v4932, 96
        %v8502 = vpop.permute.xlu0 %8501
        %8503 = vrot.lane.b32.xlu0 %v4931, 96
        %v8504 = vpop.permute.xlu0 %8503
        %8505 = vrot.lane.b32.xlu0 %v4930, 96
        %v8506 = vpop.permute.xlu0 %8505
        %8507 = vrot.lane.b32.xlu0 %v4929, 96
        %v8508 = vpop.permute.xlu0 %8507
        %8509 = vrot.lane.b32.xlu0 %v4928, 96
        %v8510 = vpop.permute.xlu0 %8509
        %8511 = vrot.lane.b32.xlu0 %v5183, 96
        %v8512 = vpop.permute.xlu0 %8511
        %vm8769 = vcmask 261120
        %v8770 = vsel %vm8769, %v2621, %v5954
        %v8771 = vsel %vm8769, %v2624, %v5956
        %v8772 = vsel %vm8769, %v2629, %v5958
        %v8773 = vsel %vm8769, %v2632, %v5960
        %v8774 = vsel %vm8769, %v2637, %v5962
        %v8775 = vsel %vm8769, %v2640, %v5964
        %v8776 = vsel %vm8769, %v2645, %v5966
        %v8777 = vsel %vm8769, %v2648, %v5968
        %v8778 = vsel %vm8769, %v2653, %v5970
        %v8779 = vsel %vm8769, %v2656, %v5972
        %v8780 = vsel %vm8769, %v2661, %v5974
        %v8781 = vsel %vm8769, %v2664, %v5976
        %v8782 = vsel %vm8769, %v2669, %v5978
        %v8783 = vsel %vm8769, %v2672, %v5980
        %v8784 = vsel %vm8769, %v2677, %v5982
        %v8785 = vsel %vm8769, %v2680, %v5984
        %v8786 = vsel %vm8769, %v2685, %v5986
        %v8787 = vsel %vm8769, %v2688, %v5988
        %v8788 = vsel %vm8769, %v2693, %v5990
        %v8789 = vsel %vm8769, %v2696, %v5992
        %v8790 = vsel %vm8769, %v2701, %v5994
        %v8791 = vsel %vm8769, %v2704, %v5996
        %v8792 = vsel %vm8769, %v2709, %v5998
        %v8793 = vsel %vm8769, %v2712, %v6000
        %v8794 = vsel %vm8769, %v2717, %v6002
        %v8795 = vsel %vm8769, %v2720, %v6004
        %v8796 = vsel %vm8769, %v2725, %v6006
        %v8797 = vsel %vm8769, %v2728, %v6008
        %v8798 = vsel %vm8769, %v2733, %v6010
        %v8799 = vsel %vm8769, %v2736, %v6012
        %v8800 = vsel %vm8769, %v2741, %v6014
        %v8801 = vsel %vm8769, %v2744, %v6016
        %v8802 = vsel %vm8769, %v2749, %v6018
        %v8803 = vsel %vm8769, %v2752, %v6020
        %v8804 = vsel %vm8769, %v2757, %v6022
        %v8805 = vsel %vm8769, %v2760, %v6024
        %v8806 = vsel %vm8769, %v2765, %v6026
        %v8807 = vsel %vm8769, %v2768, %v6028
        %v8808 = vsel %vm8769, %v2773, %v6030
        %v8809 = vsel %vm8769, %v2776, %v6032
        %v8810 = vsel %vm8769, %v2781, %v6034
        %v8811 = vsel %vm8769, %v2784, %v6036
        %v8812 = vsel %vm8769, %v2789, %v6038
        %v8813 = vsel %vm8769, %v2792, %v6040
        %v8814 = vsel %vm8769, %v2797, %v6042
        %v8815 = vsel %vm8769, %v2800, %v6044
        %v8816 = vsel %vm8769, %v2805, %v6046
        %v8817 = vsel %vm8769, %v2808, %v6048
        %v8818 = vsel %vm8769, %v2813, %v6050
        %v8819 = vsel %vm8769, %v2816, %v6052
        %v8820 = vsel %vm8769, %v2821, %v6054
        %v8821 = vsel %vm8769, %v2824, %v6056
        %v8822 = vsel %vm8769, %v2829, %v6058
        %v8823 = vsel %vm8769, %v2832, %v6060
        %v8824 = vsel %vm8769, %v2837, %v6062
        %v8825 = vsel %vm8769, %v2840, %v6064
        %v8826 = vsel %vm8769, %v2845, %v6066
        %v8827 = vsel %vm8769, %v2848, %v6068
        %v8828 = vsel %vm8769, %v2853, %v6070
        %v8829 = vsel %vm8769, %v2856, %v6072
        %v8830 = vsel %vm8769, %v2861, %v6074
        %v8831 = vsel %vm8769, %v2864, %v6076
        %v8832 = vsel %vm8769, %v2869, %v6078
        %v8833 = vsel %vm8769, %v2872, %v6080
        %v8834 = vsel %vm8769, %v2877, %v6082
        %v8835 = vsel %vm8769, %v2880, %v6084
        %v8836 = vsel %vm8769, %v2885, %v6086
        %v8837 = vsel %vm8769, %v2888, %v6088
        %v8838 = vsel %vm8769, %v2893, %v6090
        %v8839 = vsel %vm8769, %v2896, %v6092
        %v8840 = vsel %vm8769, %v2901, %v6094
        %v8841 = vsel %vm8769, %v2904, %v6096
        %v8842 = vsel %vm8769, %v2909, %v6098
        %v8843 = vsel %vm8769, %v2912, %v6100
        %v8844 = vsel %vm8769, %v2917, %v6102
        %v8845 = vsel %vm8769, %v2920, %v6104
        %v8846 = vsel %vm8769, %v2925, %v6106
        %v8847 = vsel %vm8769, %v2928, %v6108
        %v8848 = vsel %vm8769, %v2933, %v6110
        %v8849 = vsel %vm8769, %v2936, %v6112
        %v8850 = vsel %vm8769, %v2941, %v6114
        %v8851 = vsel %vm8769, %v2944, %v6116
        %v8852 = vsel %vm8769, %v2949, %v6118
        %v8853 = vsel %vm8769, %v2952, %v6120
        %v8854 = vsel %vm8769, %v2957, %v6122
        %v8855 = vsel %vm8769, %v2960, %v6124
        %v8856 = vsel %vm8769, %v2965, %v6126
        %v8857 = vsel %vm8769, %v2968, %v6128
        %v8858 = vsel %vm8769, %v2973, %v6130
        %v8859 = vsel %vm8769, %v2976, %v6132
        %v8860 = vsel %vm8769, %v2981, %v6134
        %v8861 = vsel %vm8769, %v2984, %v6136
        %v8862 = vsel %vm8769, %v2989, %v6138
        %v8863 = vsel %vm8769, %v2992, %v6140
        %v8864 = vsel %vm8769, %v2997, %v6142
        %v8865 = vsel %vm8769, %v3000, %v6144
        %v8866 = vsel %vm8769, %v3005, %v6146
        %v8867 = vsel %vm8769, %v3008, %v6148
        %v8868 = vsel %vm8769, %v3013, %v6150
        %v8869 = vsel %vm8769, %v3016, %v6152
        %v8870 = vsel %vm8769, %v3021, %v6154
        %v8871 = vsel %vm8769, %v3024, %v6156
        %v8872 = vsel %vm8769, %v3029, %v6158
        %v8873 = vsel %vm8769, %v3032, %v6160
        %v8874 = vsel %vm8769, %v3037, %v6162
        %v8875 = vsel %vm8769, %v3040, %v6164
        %v8876 = vsel %vm8769, %v3045, %v6166
        %v8877 = vsel %vm8769, %v3048, %v6168
        %v8878 = vsel %vm8769, %v3053, %v6170
        %v8879 = vsel %vm8769, %v3056, %v6172
        %v8880 = vsel %vm8769, %v3061, %v6174
        %v8881 = vsel %vm8769, %v3064, %v6176
        %v8882 = vsel %vm8769, %v3069, %v6178
        %v8883 = vsel %vm8769, %v3072, %v6180
        %v8884 = vsel %vm8769, %v3077, %v6182
        %v8885 = vsel %vm8769, %v3080, %v6184
        %v8886 = vsel %vm8769, %v3085, %v6186
        %v8887 = vsel %vm8769, %v3088, %v6188
        %v8888 = vsel %vm8769, %v3093, %v6190
        %v8889 = vsel %vm8769, %v3096, %v6192
        %v8890 = vsel %vm8769, %v3101, %v6194
        %v8891 = vsel %vm8769, %v3104, %v6196
        %v8892 = vsel %vm8769, %v3109, %v6198
        %v8893 = vsel %vm8769, %v3112, %v6200
        %v8894 = vsel %vm8769, %v3117, %v6202
        %v8895 = vsel %vm8769, %v3120, %v6204
        %v8896 = vsel %vm8769, %v3125, %v6206
        %v8897 = vsel %vm8769, %v3128, %v6208
        %v8898 = vsel %vm8769, %v3133, %v6210
        %v8899 = vsel %vm8769, %v3136, %v6212
        %v8900 = vsel %vm8769, %v3141, %v6214
        %v8901 = vsel %vm8769, %v3144, %v6216
        %v8902 = vsel %vm8769, %v3149, %v6218
        %v8903 = vsel %vm8769, %v3152, %v6220
        %v8904 = vsel %vm8769, %v3157, %v6222
        %v8905 = vsel %vm8769, %v3160, %v6224
        %v8906 = vsel %vm8769, %v3165, %v6226
        %v8907 = vsel %vm8769, %v3168, %v6228
        %v8908 = vsel %vm8769, %v3173, %v6230
        %v8909 = vsel %vm8769, %v3176, %v6232
        %v8910 = vsel %vm8769, %v3181, %v6234
        %v8911 = vsel %vm8769, %v3184, %v6236
        %v8912 = vsel %vm8769, %v3189, %v6238
        %v8913 = vsel %vm8769, %v3192, %v6240
        %v8914 = vsel %vm8769, %v3197, %v6242
        %v8915 = vsel %vm8769, %v3200, %v6244
        %v8916 = vsel %vm8769, %v3205, %v6246
        %v8917 = vsel %vm8769, %v3208, %v6248
        %v8918 = vsel %vm8769, %v3213, %v6250
        %v8919 = vsel %vm8769, %v3216, %v6252
        %v8920 = vsel %vm8769, %v3221, %v6254
        %v8921 = vsel %vm8769, %v3224, %v6256
        %v8922 = vsel %vm8769, %v3229, %v6258
        %v8923 = vsel %vm8769, %v3232, %v6260
        %v8924 = vsel %vm8769, %v3237, %v6262
        %v8925 = vsel %vm8769, %v3240, %v6264
        %v8926 = vsel %vm8769, %v3245, %v6266
        %v8927 = vsel %vm8769, %v3248, %v6268
        %v8928 = vsel %vm8769, %v3253, %v6270
        %v8929 = vsel %vm8769, %v3256, %v6272
        %v8930 = vsel %vm8769, %v3261, %v6274
        %v8931 = vsel %vm8769, %v3264, %v6276
        %v8932 = vsel %vm8769, %v3269, %v6278
        %v8933 = vsel %vm8769, %v3272, %v6280
        %v8934 = vsel %vm8769, %v3277, %v6282
        %v8935 = vsel %vm8769, %v3280, %v6284
        %v8936 = vsel %vm8769, %v3285, %v6286
        %v8937 = vsel %vm8769, %v3288, %v6288
        %v8938 = vsel %vm8769, %v3293, %v6290
        %v8939 = vsel %vm8769, %v3296, %v6292
        %v8940 = vsel %vm8769, %v3301, %v6294
        %v8941 = vsel %vm8769, %v3304, %v6296
        %v8942 = vsel %vm8769, %v3309, %v6298
        %v8943 = vsel %vm8769, %v3312, %v6300
        %v8944 = vsel %vm8769, %v3317, %v6302
        %v8945 = vsel %vm8769, %v3320, %v6304
        %v8946 = vsel %vm8769, %v3325, %v6306
        %v8947 = vsel %vm8769, %v3328, %v6308
        %v8948 = vsel %vm8769, %v3333, %v6310
        %v8949 = vsel %vm8769, %v3336, %v6312
        %v8950 = vsel %vm8769, %v3341, %v6314
        %v8951 = vsel %vm8769, %v3344, %v6316
        %v8952 = vsel %vm8769, %v3349, %v6318
        %v8953 = vsel %vm8769, %v3352, %v6320
        %v8954 = vsel %vm8769, %v3357, %v6322
        %v8955 = vsel %vm8769, %v3360, %v6324
        %v8956 = vsel %vm8769, %v3365, %v6326
        %v8957 = vsel %vm8769, %v3368, %v6328
        %v8958 = vsel %vm8769, %v3373, %v6330
        %v8959 = vsel %vm8769, %v3376, %v6332
        %v8960 = vsel %vm8769, %v3381, %v6334
        %v8961 = vsel %vm8769, %v3384, %v6336
        %v8962 = vsel %vm8769, %v3389, %v6338
        %v8963 = vsel %vm8769, %v3392, %v6340
        %v8964 = vsel %vm8769, %v3397, %v6342
        %v8965 = vsel %vm8769, %v3400, %v6344
        %v8966 = vsel %vm8769, %v3405, %v6346
        %v8967 = vsel %vm8769, %v3408, %v6348
        %v8968 = vsel %vm8769, %v3413, %v6350
        %v8969 = vsel %vm8769, %v3416, %v6352
        %v8970 = vsel %vm8769, %v3421, %v6354
        %v8971 = vsel %vm8769, %v3424, %v6356
        %v8972 = vsel %vm8769, %v3429, %v6358
        %v8973 = vsel %vm8769, %v3432, %v6360
        %v8974 = vsel %vm8769, %v3437, %v6362
        %v8975 = vsel %vm8769, %v3440, %v6364
        %v8976 = vsel %vm8769, %v3445, %v6366
        %v8977 = vsel %vm8769, %v3448, %v6368
        %v8978 = vsel %vm8769, %v3453, %v6370
        %v8979 = vsel %vm8769, %v3456, %v6372
        %v8980 = vsel %vm8769, %v3461, %v6374
        %v8981 = vsel %vm8769, %v3464, %v6376
        %v8982 = vsel %vm8769, %v3469, %v6378
        %v8983 = vsel %vm8769, %v3472, %v6380
        %v8984 = vsel %vm8769, %v3477, %v6382
        %v8985 = vsel %vm8769, %v3480, %v6384
        %v8986 = vsel %vm8769, %v3485, %v6386
        %v8987 = vsel %vm8769, %v3488, %v6388
        %v8988 = vsel %vm8769, %v3493, %v6390
        %v8989 = vsel %vm8769, %v3496, %v6392
        %v8990 = vsel %vm8769, %v3501, %v6394
        %v8991 = vsel %vm8769, %v3504, %v6396
        %v8992 = vsel %vm8769, %v3509, %v6398
        %v8993 = vsel %vm8769, %v3512, %v6400
        %v8994 = vsel %vm8769, %v3517, %v6402
        %v8995 = vsel %vm8769, %v3520, %v6404
        %v8996 = vsel %vm8769, %v3525, %v6406
        %v8997 = vsel %vm8769, %v3528, %v6408
        %v8998 = vsel %vm8769, %v3533, %v6410
        %v8999 = vsel %vm8769, %v3536, %v6412
        %v9000 = vsel %vm8769, %v3541, %v6414
        %v9001 = vsel %vm8769, %v3544, %v6416
        %v9002 = vsel %vm8769, %v3549, %v6418
        %v9003 = vsel %vm8769, %v3552, %v6420
        %v9004 = vsel %vm8769, %v3557, %v6422
        %v9005 = vsel %vm8769, %v3560, %v6424
        %v9006 = vsel %vm8769, %v3565, %v6426
        %v9007 = vsel %vm8769, %v3568, %v6428
        %v9008 = vsel %vm8769, %v3573, %v6430
        %v9009 = vsel %vm8769, %v3576, %v6432
        %v9010 = vsel %vm8769, %v3581, %v6434
        %v9011 = vsel %vm8769, %v3584, %v6436
        %v9012 = vsel %vm8769, %v3589, %v6438
        %v9013 = vsel %vm8769, %v3592, %v6440
        %v9014 = vsel %vm8769, %v3597, %v6442
        %v9015 = vsel %vm8769, %v3600, %v6444
        %v9016 = vsel %vm8769, %v3605, %v6446
        %v9017 = vsel %vm8769, %v3608, %v6448
        %v9018 = vsel %vm8769, %v3613, %v6450
        %v9019 = vsel %vm8769, %v3616, %v6452
        %v9020 = vsel %vm8769, %v3621, %v6454
        %v9021 = vsel %vm8769, %v3624, %v6456
        %v9022 = vsel %vm8769, %v3629, %v6458
        %v9023 = vsel %vm8769, %v3632, %v6460
        %v9024 = vsel %vm8769, %v3637, %v6462
        %v9025 = vsel %vm8769, %v3640, %v6464
        %vm9026 = vcmask 523264
        %v9027 = vsel %vm9026, %v8770, %v6978
        %v9028 = vsel %vm9026, %v8771, %v6980
        %v9029 = vsel %vm9026, %v8772, %v6982
        %v9030 = vsel %vm9026, %v8773, %v6984
        %v9031 = vsel %vm9026, %v8774, %v6986
        %v9032 = vsel %vm9026, %v8775, %v6988
        %v9033 = vsel %vm9026, %v8776, %v6990
        %v9034 = vsel %vm9026, %v8777, %v6992
        %v9035 = vsel %vm9026, %v8778, %v6994
        %v9036 = vsel %vm9026, %v8779, %v6996
        %v9037 = vsel %vm9026, %v8780, %v6998
        %v9038 = vsel %vm9026, %v8781, %v7000
        %v9039 = vsel %vm9026, %v8782, %v7002
        %v9040 = vsel %vm9026, %v8783, %v7004
        %v9041 = vsel %vm9026, %v8784, %v7006
        %v9042 = vsel %vm9026, %v8785, %v7008
        %v9043 = vsel %vm9026, %v8786, %v7010
        %v9044 = vsel %vm9026, %v8787, %v7012
        %v9045 = vsel %vm9026, %v8788, %v7014
        %v9046 = vsel %vm9026, %v8789, %v7016
        %v9047 = vsel %vm9026, %v8790, %v7018
        %v9048 = vsel %vm9026, %v8791, %v7020
        %v9049 = vsel %vm9026, %v8792, %v7022
        %v9050 = vsel %vm9026, %v8793, %v7024
        %v9051 = vsel %vm9026, %v8794, %v7026
        %v9052 = vsel %vm9026, %v8795, %v7028
        %v9053 = vsel %vm9026, %v8796, %v7030
        %v9054 = vsel %vm9026, %v8797, %v7032
        %v9055 = vsel %vm9026, %v8798, %v7034
        %v9056 = vsel %vm9026, %v8799, %v7036
        %v9057 = vsel %vm9026, %v8800, %v7038
        %v9058 = vsel %vm9026, %v8801, %v7040
        %v9059 = vsel %vm9026, %v8802, %v7042
        %v9060 = vsel %vm9026, %v8803, %v7044
        %v9061 = vsel %vm9026, %v8804, %v7046
        %v9062 = vsel %vm9026, %v8805, %v7048
        %v9063 = vsel %vm9026, %v8806, %v7050
        %v9064 = vsel %vm9026, %v8807, %v7052
        %v9065 = vsel %vm9026, %v8808, %v7054
        %v9066 = vsel %vm9026, %v8809, %v7056
        %v9067 = vsel %vm9026, %v8810, %v7058
        %v9068 = vsel %vm9026, %v8811, %v7060
        %v9069 = vsel %vm9026, %v8812, %v7062
        %v9070 = vsel %vm9026, %v8813, %v7064
        %v9071 = vsel %vm9026, %v8814, %v7066
        %v9072 = vsel %vm9026, %v8815, %v7068
        %v9073 = vsel %vm9026, %v8816, %v7070
        %v9074 = vsel %vm9026, %v8817, %v7072
        %v9075 = vsel %vm9026, %v8818, %v7074
        %v9076 = vsel %vm9026, %v8819, %v7076
        %v9077 = vsel %vm9026, %v8820, %v7078
        %v9078 = vsel %vm9026, %v8821, %v7080
        %v9079 = vsel %vm9026, %v8822, %v7082
        %v9080 = vsel %vm9026, %v8823, %v7084
        %v9081 = vsel %vm9026, %v8824, %v7086
        %v9082 = vsel %vm9026, %v8825, %v7088
        %v9083 = vsel %vm9026, %v8826, %v7090
        %v9084 = vsel %vm9026, %v8827, %v7092
        %v9085 = vsel %vm9026, %v8828, %v7094
        %v9086 = vsel %vm9026, %v8829, %v7096
        %v9087 = vsel %vm9026, %v8830, %v7098
        %v9088 = vsel %vm9026, %v8831, %v7100
        %v9089 = vsel %vm9026, %v8832, %v7102
        %v9090 = vsel %vm9026, %v8833, %v7104
        %v9091 = vsel %vm9026, %v8834, %v7106
        %v9092 = vsel %vm9026, %v8835, %v7108
        %v9093 = vsel %vm9026, %v8836, %v7110
        %v9094 = vsel %vm9026, %v8837, %v7112
        %v9095 = vsel %vm9026, %v8838, %v7114
        %v9096 = vsel %vm9026, %v8839, %v7116
        %v9097 = vsel %vm9026, %v8840, %v7118
        %v9098 = vsel %vm9026, %v8841, %v7120
        %v9099 = vsel %vm9026, %v8842, %v7122
        %v9100 = vsel %vm9026, %v8843, %v7124
        %v9101 = vsel %vm9026, %v8844, %v7126
        %v9102 = vsel %vm9026, %v8845, %v7128
        %v9103 = vsel %vm9026, %v8846, %v7130
        %v9104 = vsel %vm9026, %v8847, %v7132
        %v9105 = vsel %vm9026, %v8848, %v7134
        %v9106 = vsel %vm9026, %v8849, %v7136
        %v9107 = vsel %vm9026, %v8850, %v7138
        %v9108 = vsel %vm9026, %v8851, %v7140
        %v9109 = vsel %vm9026, %v8852, %v7142
        %v9110 = vsel %vm9026, %v8853, %v7144
        %v9111 = vsel %vm9026, %v8854, %v7146
        %v9112 = vsel %vm9026, %v8855, %v7148
        %v9113 = vsel %vm9026, %v8856, %v7150
        %v9114 = vsel %vm9026, %v8857, %v7152
        %v9115 = vsel %vm9026, %v8858, %v7154
        %v9116 = vsel %vm9026, %v8859, %v7156
        %v9117 = vsel %vm9026, %v8860, %v7158
        %v9118 = vsel %vm9026, %v8861, %v7160
        %v9119 = vsel %vm9026, %v8862, %v7162
        %v9120 = vsel %vm9026, %v8863, %v7164
        %v9121 = vsel %vm9026, %v8864, %v7166
        %v9122 = vsel %vm9026, %v8865, %v7168
        %v9123 = vsel %vm9026, %v8866, %v7170
        %v9124 = vsel %vm9026, %v8867, %v7172
        %v9125 = vsel %vm9026, %v8868, %v7174
        %v9126 = vsel %vm9026, %v8869, %v7176
        %v9127 = vsel %vm9026, %v8870, %v7178
        %v9128 = vsel %vm9026, %v8871, %v7180
        %v9129 = vsel %vm9026, %v8872, %v7182
        %v9130 = vsel %vm9026, %v8873, %v7184
        %v9131 = vsel %vm9026, %v8874, %v7186
        %v9132 = vsel %vm9026, %v8875, %v7188
        %v9133 = vsel %vm9026, %v8876, %v7190
        %v9134 = vsel %vm9026, %v8877, %v7192
        %v9135 = vsel %vm9026, %v8878, %v7194
        %v9136 = vsel %vm9026, %v8879, %v7196
        %v9137 = vsel %vm9026, %v8880, %v7198
        %v9138 = vsel %vm9026, %v8881, %v7200
        %v9139 = vsel %vm9026, %v8882, %v7202
        %v9140 = vsel %vm9026, %v8883, %v7204
        %v9141 = vsel %vm9026, %v8884, %v7206
        %v9142 = vsel %vm9026, %v8885, %v7208
        %v9143 = vsel %vm9026, %v8886, %v7210
        %v9144 = vsel %vm9026, %v8887, %v7212
        %v9145 = vsel %vm9026, %v8888, %v7214
        %v9146 = vsel %vm9026, %v8889, %v7216
        %v9147 = vsel %vm9026, %v8890, %v7218
        %v9148 = vsel %vm9026, %v8891, %v7220
        %v9149 = vsel %vm9026, %v8892, %v7222
        %v9150 = vsel %vm9026, %v8893, %v7224
        %v9151 = vsel %vm9026, %v8894, %v7226
        %v9152 = vsel %vm9026, %v8895, %v7228
        %v9153 = vsel %vm9026, %v8896, %v7230
        %v9154 = vsel %vm9026, %v8897, %v7232
        %v9155 = vsel %vm9026, %v8898, %v7234
        %v9156 = vsel %vm9026, %v8899, %v7236
        %v9157 = vsel %vm9026, %v8900, %v7238
        %v9158 = vsel %vm9026, %v8901, %v7240
        %v9159 = vsel %vm9026, %v8902, %v7242
        %v9160 = vsel %vm9026, %v8903, %v7244
        %v9161 = vsel %vm9026, %v8904, %v7246
        %v9162 = vsel %vm9026, %v8905, %v7248
        %v9163 = vsel %vm9026, %v8906, %v7250
        %v9164 = vsel %vm9026, %v8907, %v7252
        %v9165 = vsel %vm9026, %v8908, %v7254
        %v9166 = vsel %vm9026, %v8909, %v7256
        %v9167 = vsel %vm9026, %v8910, %v7258
        %v9168 = vsel %vm9026, %v8911, %v7260
        %v9169 = vsel %vm9026, %v8912, %v7262
        %v9170 = vsel %vm9026, %v8913, %v7264
        %v9171 = vsel %vm9026, %v8914, %v7266
        %v9172 = vsel %vm9026, %v8915, %v7268
        %v9173 = vsel %vm9026, %v8916, %v7270
        %v9174 = vsel %vm9026, %v8917, %v7272
        %v9175 = vsel %vm9026, %v8918, %v7274
        %v9176 = vsel %vm9026, %v8919, %v7276
        %v9177 = vsel %vm9026, %v8920, %v7278
        %v9178 = vsel %vm9026, %v8921, %v7280
        %v9179 = vsel %vm9026, %v8922, %v7282
        %v9180 = vsel %vm9026, %v8923, %v7284
        %v9181 = vsel %vm9026, %v8924, %v7286
        %v9182 = vsel %vm9026, %v8925, %v7288
        %v9183 = vsel %vm9026, %v8926, %v7290
        %v9184 = vsel %vm9026, %v8927, %v7292
        %v9185 = vsel %vm9026, %v8928, %v7294
        %v9186 = vsel %vm9026, %v8929, %v7296
        %v9187 = vsel %vm9026, %v8930, %v7298
        %v9188 = vsel %vm9026, %v8931, %v7300
        %v9189 = vsel %vm9026, %v8932, %v7302
        %v9190 = vsel %vm9026, %v8933, %v7304
        %v9191 = vsel %vm9026, %v8934, %v7306
        %v9192 = vsel %vm9026, %v8935, %v7308
        %v9193 = vsel %vm9026, %v8936, %v7310
        %v9194 = vsel %vm9026, %v8937, %v7312
        %v9195 = vsel %vm9026, %v8938, %v7314
        %v9196 = vsel %vm9026, %v8939, %v7316
        %v9197 = vsel %vm9026, %v8940, %v7318
        %v9198 = vsel %vm9026, %v8941, %v7320
        %v9199 = vsel %vm9026, %v8942, %v7322
        %v9200 = vsel %vm9026, %v8943, %v7324
        %v9201 = vsel %vm9026, %v8944, %v7326
        %v9202 = vsel %vm9026, %v8945, %v7328
        %v9203 = vsel %vm9026, %v8946, %v7330
        %v9204 = vsel %vm9026, %v8947, %v7332
        %v9205 = vsel %vm9026, %v8948, %v7334
        %v9206 = vsel %vm9026, %v8949, %v7336
        %v9207 = vsel %vm9026, %v8950, %v7338
        %v9208 = vsel %vm9026, %v8951, %v7340
        %v9209 = vsel %vm9026, %v8952, %v7342
        %v9210 = vsel %vm9026, %v8953, %v7344
        %v9211 = vsel %vm9026, %v8954, %v7346
        %v9212 = vsel %vm9026, %v8955, %v7348
        %v9213 = vsel %vm9026, %v8956, %v7350
        %v9214 = vsel %vm9026, %v8957, %v7352
        %v9215 = vsel %vm9026, %v8958, %v7354
        %v9216 = vsel %vm9026, %v8959, %v7356
        %v9217 = vsel %vm9026, %v8960, %v7358
        %v9218 = vsel %vm9026, %v8961, %v7360
        %v9219 = vsel %vm9026, %v8962, %v7362
        %v9220 = vsel %vm9026, %v8963, %v7364
        %v9221 = vsel %vm9026, %v8964, %v7366
        %v9222 = vsel %vm9026, %v8965, %v7368
        %v9223 = vsel %vm9026, %v8966, %v7370
        %v9224 = vsel %vm9026, %v8967, %v7372
        %v9225 = vsel %vm9026, %v8968, %v7374
        %v9226 = vsel %vm9026, %v8969, %v7376
        %v9227 = vsel %vm9026, %v8970, %v7378
        %v9228 = vsel %vm9026, %v8971, %v7380
        %v9229 = vsel %vm9026, %v8972, %v7382
        %v9230 = vsel %vm9026, %v8973, %v7384
        %v9231 = vsel %vm9026, %v8974, %v7386
        %v9232 = vsel %vm9026, %v8975, %v7388
        %v9233 = vsel %vm9026, %v8976, %v7390
        %v9234 = vsel %vm9026, %v8977, %v7392
        %v9235 = vsel %vm9026, %v8978, %v7394
        %v9236 = vsel %vm9026, %v8979, %v7396
        %v9237 = vsel %vm9026, %v8980, %v7398
        %v9238 = vsel %vm9026, %v8981, %v7400
        %v9239 = vsel %vm9026, %v8982, %v7402
        %v9240 = vsel %vm9026, %v8983, %v7404
        %v9241 = vsel %vm9026, %v8984, %v7406
        %v9242 = vsel %vm9026, %v8985, %v7408
        %v9243 = vsel %vm9026, %v8986, %v7410
        %v9244 = vsel %vm9026, %v8987, %v7412
        %v9245 = vsel %vm9026, %v8988, %v7414
        %v9246 = vsel %vm9026, %v8989, %v7416
        %v9247 = vsel %vm9026, %v8990, %v7418
        %v9248 = vsel %vm9026, %v8991, %v7420
        %v9249 = vsel %vm9026, %v8992, %v7422
        %v9250 = vsel %vm9026, %v8993, %v7424
        %v9251 = vsel %vm9026, %v8994, %v7426
        %v9252 = vsel %vm9026, %v8995, %v7428
        %v9253 = vsel %vm9026, %v8996, %v7430
        %v9254 = vsel %vm9026, %v8997, %v7432
        %v9255 = vsel %vm9026, %v8998, %v7434
        %v9256 = vsel %vm9026, %v8999, %v7436
        %v9257 = vsel %vm9026, %v9000, %v7438
        %v9258 = vsel %vm9026, %v9001, %v7440
        %v9259 = vsel %vm9026, %v9002, %v7442
        %v9260 = vsel %vm9026, %v9003, %v7444
        %v9261 = vsel %vm9026, %v9004, %v7446
        %v9262 = vsel %vm9026, %v9005, %v7448
        %v9263 = vsel %vm9026, %v9006, %v7450
        %v9264 = vsel %vm9026, %v9007, %v7452
        %v9265 = vsel %vm9026, %v9008, %v7454
        %v9266 = vsel %vm9026, %v9009, %v7456
        %v9267 = vsel %vm9026, %v9010, %v7458
        %v9268 = vsel %vm9026, %v9011, %v7460
        %v9269 = vsel %vm9026, %v9012, %v7462
        %v9270 = vsel %vm9026, %v9013, %v7464
        %v9271 = vsel %vm9026, %v9014, %v7466
        %v9272 = vsel %vm9026, %v9015, %v7468
        %v9273 = vsel %vm9026, %v9016, %v7470
        %v9274 = vsel %vm9026, %v9017, %v7472
        %v9275 = vsel %vm9026, %v9018, %v7474
        %v9276 = vsel %vm9026, %v9019, %v7476
        %v9277 = vsel %vm9026, %v9020, %v7478
        %v9278 = vsel %vm9026, %v9021, %v7480
        %v9279 = vsel %vm9026, %v9022, %v7482
        %v9280 = vsel %vm9026, %v9023, %v7484
        %v9281 = vsel %vm9026, %v9024, %v7486
        %v9282 = vsel %vm9026, %v9025, %v7488
        %vm9283 = vcmask 785408
        %v9284 = vsel %vm9283, %v9027, %v8002
        %v9285 = vsel %vm9283, %v9028, %v8004
        %v9286 = vsel %vm9283, %v9029, %v8006
        %v9287 = vsel %vm9283, %v9030, %v8008
        %v9288 = vsel %vm9283, %v9031, %v8010
        %v9289 = vsel %vm9283, %v9032, %v8012
        %v9290 = vsel %vm9283, %v9033, %v8014
        %v9291 = vsel %vm9283, %v9034, %v8016
        %v9292 = vsel %vm9283, %v9035, %v8018
        %v9293 = vsel %vm9283, %v9036, %v8020
        %v9294 = vsel %vm9283, %v9037, %v8022
        %v9295 = vsel %vm9283, %v9038, %v8024
        %v9296 = vsel %vm9283, %v9039, %v8026
        %v9297 = vsel %vm9283, %v9040, %v8028
        %v9298 = vsel %vm9283, %v9041, %v8030
        %v9299 = vsel %vm9283, %v9042, %v8032
        %v9300 = vsel %vm9283, %v9043, %v8034
        %v9301 = vsel %vm9283, %v9044, %v8036
        %v9302 = vsel %vm9283, %v9045, %v8038
        %v9303 = vsel %vm9283, %v9046, %v8040
        %v9304 = vsel %vm9283, %v9047, %v8042
        %v9305 = vsel %vm9283, %v9048, %v8044
        %v9306 = vsel %vm9283, %v9049, %v8046
        %v9307 = vsel %vm9283, %v9050, %v8048
        %v9308 = vsel %vm9283, %v9051, %v8050
        %v9309 = vsel %vm9283, %v9052, %v8052
        %v9310 = vsel %vm9283, %v9053, %v8054
        %v9311 = vsel %vm9283, %v9054, %v8056
        %v9312 = vsel %vm9283, %v9055, %v8058
        %v9313 = vsel %vm9283, %v9056, %v8060
        %v9314 = vsel %vm9283, %v9057, %v8062
        %v9315 = vsel %vm9283, %v9058, %v8064
        %v9316 = vsel %vm9283, %v9059, %v8066
        %v9317 = vsel %vm9283, %v9060, %v8068
        %v9318 = vsel %vm9283, %v9061, %v8070
        %v9319 = vsel %vm9283, %v9062, %v8072
        %v9320 = vsel %vm9283, %v9063, %v8074
        %v9321 = vsel %vm9283, %v9064, %v8076
        %v9322 = vsel %vm9283, %v9065, %v8078
        %v9323 = vsel %vm9283, %v9066, %v8080
        %v9324 = vsel %vm9283, %v9067, %v8082
        %v9325 = vsel %vm9283, %v9068, %v8084
        %v9326 = vsel %vm9283, %v9069, %v8086
        %v9327 = vsel %vm9283, %v9070, %v8088
        %v9328 = vsel %vm9283, %v9071, %v8090
        %v9329 = vsel %vm9283, %v9072, %v8092
        %v9330 = vsel %vm9283, %v9073, %v8094
        %v9331 = vsel %vm9283, %v9074, %v8096
        %v9332 = vsel %vm9283, %v9075, %v8098
        %v9333 = vsel %vm9283, %v9076, %v8100
        %v9334 = vsel %vm9283, %v9077, %v8102
        %v9335 = vsel %vm9283, %v9078, %v8104
        %v9336 = vsel %vm9283, %v9079, %v8106
        %v9337 = vsel %vm9283, %v9080, %v8108
        %v9338 = vsel %vm9283, %v9081, %v8110
        %v9339 = vsel %vm9283, %v9082, %v8112
        %v9340 = vsel %vm9283, %v9083, %v8114
        %v9341 = vsel %vm9283, %v9084, %v8116
        %v9342 = vsel %vm9283, %v9085, %v8118
        %v9343 = vsel %vm9283, %v9086, %v8120
        %v9344 = vsel %vm9283, %v9087, %v8122
        %v9345 = vsel %vm9283, %v9088, %v8124
        %v9346 = vsel %vm9283, %v9089, %v8126
        %v9347 = vsel %vm9283, %v9090, %v8128
        %v9348 = vsel %vm9283, %v9091, %v8130
        %v9349 = vsel %vm9283, %v9092, %v8132
        %v9350 = vsel %vm9283, %v9093, %v8134
        %v9351 = vsel %vm9283, %v9094, %v8136
        %v9352 = vsel %vm9283, %v9095, %v8138
        %v9353 = vsel %vm9283, %v9096, %v8140
        %v9354 = vsel %vm9283, %v9097, %v8142
        %v9355 = vsel %vm9283, %v9098, %v8144
        %v9356 = vsel %vm9283, %v9099, %v8146
        %v9357 = vsel %vm9283, %v9100, %v8148
        %v9358 = vsel %vm9283, %v9101, %v8150
        %v9359 = vsel %vm9283, %v9102, %v8152
        %v9360 = vsel %vm9283, %v9103, %v8154
        %v9361 = vsel %vm9283, %v9104, %v8156
        %v9362 = vsel %vm9283, %v9105, %v8158
        %v9363 = vsel %vm9283, %v9106, %v8160
        %v9364 = vsel %vm9283, %v9107, %v8162
        %v9365 = vsel %vm9283, %v9108, %v8164
        %v9366 = vsel %vm9283, %v9109, %v8166
        %v9367 = vsel %vm9283, %v9110, %v8168
        %v9368 = vsel %vm9283, %v9111, %v8170
        %v9369 = vsel %vm9283, %v9112, %v8172
        %v9370 = vsel %vm9283, %v9113, %v8174
        %v9371 = vsel %vm9283, %v9114, %v8176
        %v9372 = vsel %vm9283, %v9115, %v8178
        %v9373 = vsel %vm9283, %v9116, %v8180
        %v9374 = vsel %vm9283, %v9117, %v8182
        %v9375 = vsel %vm9283, %v9118, %v8184
        %v9376 = vsel %vm9283, %v9119, %v8186
        %v9377 = vsel %vm9283, %v9120, %v8188
        %v9378 = vsel %vm9283, %v9121, %v8190
        %v9379 = vsel %vm9283, %v9122, %v8192
        %v9380 = vsel %vm9283, %v9123, %v8194
        %v9381 = vsel %vm9283, %v9124, %v8196
        %v9382 = vsel %vm9283, %v9125, %v8198
        %v9383 = vsel %vm9283, %v9126, %v8200
        %v9384 = vsel %vm9283, %v9127, %v8202
        %v9385 = vsel %vm9283, %v9128, %v8204
        %v9386 = vsel %vm9283, %v9129, %v8206
        %v9387 = vsel %vm9283, %v9130, %v8208
        %v9388 = vsel %vm9283, %v9131, %v8210
        %v9389 = vsel %vm9283, %v9132, %v8212
        %v9390 = vsel %vm9283, %v9133, %v8214
        %v9391 = vsel %vm9283, %v9134, %v8216
        %v9392 = vsel %vm9283, %v9135, %v8218
        %v9393 = vsel %vm9283, %v9136, %v8220
        %v9394 = vsel %vm9283, %v9137, %v8222
        %v9395 = vsel %vm9283, %v9138, %v8224
        %v9396 = vsel %vm9283, %v9139, %v8226
        %v9397 = vsel %vm9283, %v9140, %v8228
        %v9398 = vsel %vm9283, %v9141, %v8230
        %v9399 = vsel %vm9283, %v9142, %v8232
        %v9400 = vsel %vm9283, %v9143, %v8234
        %v9401 = vsel %vm9283, %v9144, %v8236
        %v9402 = vsel %vm9283, %v9145, %v8238
        %v9403 = vsel %vm9283, %v9146, %v8240
        %v9404 = vsel %vm9283, %v9147, %v8242
        %v9405 = vsel %vm9283, %v9148, %v8244
        %v9406 = vsel %vm9283, %v9149, %v8246
        %v9407 = vsel %vm9283, %v9150, %v8248
        %v9408 = vsel %vm9283, %v9151, %v8250
        %v9409 = vsel %vm9283, %v9152, %v8252
        %v9410 = vsel %vm9283, %v9153, %v8254
        %v9411 = vsel %vm9283, %v9154, %v8256
        %v9412 = vsel %vm9283, %v9155, %v8258
        %v9413 = vsel %vm9283, %v9156, %v8260
        %v9414 = vsel %vm9283, %v9157, %v8262
        %v9415 = vsel %vm9283, %v9158, %v8264
        %v9416 = vsel %vm9283, %v9159, %v8266
        %v9417 = vsel %vm9283, %v9160, %v8268
        %v9418 = vsel %vm9283, %v9161, %v8270
        %v9419 = vsel %vm9283, %v9162, %v8272
        %v9420 = vsel %vm9283, %v9163, %v8274
        %v9421 = vsel %vm9283, %v9164, %v8276
        %v9422 = vsel %vm9283, %v9165, %v8278
        %v9423 = vsel %vm9283, %v9166, %v8280
        %v9424 = vsel %vm9283, %v9167, %v8282
        %v9425 = vsel %vm9283, %v9168, %v8284
        %v9426 = vsel %vm9283, %v9169, %v8286
        %v9427 = vsel %vm9283, %v9170, %v8288
        %v9428 = vsel %vm9283, %v9171, %v8290
        %v9429 = vsel %vm9283, %v9172, %v8292
        %v9430 = vsel %vm9283, %v9173, %v8294
        %v9431 = vsel %vm9283, %v9174, %v8296
        %v9432 = vsel %vm9283, %v9175, %v8298
        %v9433 = vsel %vm9283, %v9176, %v8300
        %v9434 = vsel %vm9283, %v9177, %v8302
        %v9435 = vsel %vm9283, %v9178, %v8304
        %v9436 = vsel %vm9283, %v9179, %v8306
        %v9437 = vsel %vm9283, %v9180, %v8308
        %v9438 = vsel %vm9283, %v9181, %v8310
        %v9439 = vsel %vm9283, %v9182, %v8312
        %v9440 = vsel %vm9283, %v9183, %v8314
        %v9441 = vsel %vm9283, %v9184, %v8316
        %v9442 = vsel %vm9283, %v9185, %v8318
        %v9443 = vsel %vm9283, %v9186, %v8320
        %v9444 = vsel %vm9283, %v9187, %v8322
        %v9445 = vsel %vm9283, %v9188, %v8324
        %v9446 = vsel %vm9283, %v9189, %v8326
        %v9447 = vsel %vm9283, %v9190, %v8328
        %v9448 = vsel %vm9283, %v9191, %v8330
        %v9449 = vsel %vm9283, %v9192, %v8332
        %v9450 = vsel %vm9283, %v9193, %v8334
        %v9451 = vsel %vm9283, %v9194, %v8336
        %v9452 = vsel %vm9283, %v9195, %v8338
        %v9453 = vsel %vm9283, %v9196, %v8340
        %v9454 = vsel %vm9283, %v9197, %v8342
        %v9455 = vsel %vm9283, %v9198, %v8344
        %v9456 = vsel %vm9283, %v9199, %v8346
        %v9457 = vsel %vm9283, %v9200, %v8348
        %v9458 = vsel %vm9283, %v9201, %v8350
        %v9459 = vsel %vm9283, %v9202, %v8352
        %v9460 = vsel %vm9283, %v9203, %v8354
        %v9461 = vsel %vm9283, %v9204, %v8356
        %v9462 = vsel %vm9283, %v9205, %v8358
        %v9463 = vsel %vm9283, %v9206, %v8360
        %v9464 = vsel %vm9283, %v9207, %v8362
        %v9465 = vsel %vm9283, %v9208, %v8364
        %v9466 = vsel %vm9283, %v9209, %v8366
        %v9467 = vsel %vm9283, %v9210, %v8368
        %v9468 = vsel %vm9283, %v9211, %v8370
        %v9469 = vsel %vm9283, %v9212, %v8372
        %v9470 = vsel %vm9283, %v9213, %v8374
        %v9471 = vsel %vm9283, %v9214, %v8376
        %v9472 = vsel %vm9283, %v9215, %v8378
        %v9473 = vsel %vm9283, %v9216, %v8380
        %v9474 = vsel %vm9283, %v9217, %v8382
        %v9475 = vsel %vm9283, %v9218, %v8384
        %v9476 = vsel %vm9283, %v9219, %v8386
        %v9477 = vsel %vm9283, %v9220, %v8388
        %v9478 = vsel %vm9283, %v9221, %v8390
        %v9479 = vsel %vm9283, %v9222, %v8392
        %v9480 = vsel %vm9283, %v9223, %v8394
        %v9481 = vsel %vm9283, %v9224, %v8396
        %v9482 = vsel %vm9283, %v9225, %v8398
        %v9483 = vsel %vm9283, %v9226, %v8400
        %v9484 = vsel %vm9283, %v9227, %v8402
        %v9485 = vsel %vm9283, %v9228, %v8404
        %v9486 = vsel %vm9283, %v9229, %v8406
        %v9487 = vsel %vm9283, %v9230, %v8408
        %v9488 = vsel %vm9283, %v9231, %v8410
        %v9489 = vsel %vm9283, %v9232, %v8412
        %v9490 = vsel %vm9283, %v9233, %v8414
        %v9491 = vsel %vm9283, %v9234, %v8416
        %v9492 = vsel %vm9283, %v9235, %v8418
        %v9493 = vsel %vm9283, %v9236, %v8420
        %v9494 = vsel %vm9283, %v9237, %v8422
        %v9495 = vsel %vm9283, %v9238, %v8424
        %v9496 = vsel %vm9283, %v9239, %v8426
        %v9497 = vsel %vm9283, %v9240, %v8428
        %v9498 = vsel %vm9283, %v9241, %v8430
        %v9499 = vsel %vm9283, %v9242, %v8432
        %v9500 = vsel %vm9283, %v9243, %v8434
        %v9501 = vsel %vm9283, %v9244, %v8436
        %v9502 = vsel %vm9283, %v9245, %v8438
        %v9503 = vsel %vm9283, %v9246, %v8440
        %v9504 = vsel %vm9283, %v9247, %v8442
        %v9505 = vsel %vm9283, %v9248, %v8444
        %v9506 = vsel %vm9283, %v9249, %v8446
        %v9507 = vsel %vm9283, %v9250, %v8448
        %v9508 = vsel %vm9283, %v9251, %v8450
        %v9509 = vsel %vm9283, %v9252, %v8452
        %v9510 = vsel %vm9283, %v9253, %v8454
        %v9511 = vsel %vm9283, %v9254, %v8456
        %v9512 = vsel %vm9283, %v9255, %v8458
        %v9513 = vsel %vm9283, %v9256, %v8460
        %v9514 = vsel %vm9283, %v9257, %v8462
        %v9515 = vsel %vm9283, %v9258, %v8464
        %v9516 = vsel %vm9283, %v9259, %v8466
        %v9517 = vsel %vm9283, %v9260, %v8468
        %v9518 = vsel %vm9283, %v9261, %v8470
        %v9519 = vsel %vm9283, %v9262, %v8472
        %v9520 = vsel %vm9283, %v9263, %v8474
        %v9521 = vsel %vm9283, %v9264, %v8476
        %v9522 = vsel %vm9283, %v9265, %v8478
        %v9523 = vsel %vm9283, %v9266, %v8480
        %v9524 = vsel %vm9283, %v9267, %v8482
        %v9525 = vsel %vm9283, %v9268, %v8484
        %v9526 = vsel %vm9283, %v9269, %v8486
        %v9527 = vsel %vm9283, %v9270, %v8488
        %v9528 = vsel %vm9283, %v9271, %v8490
        %v9529 = vsel %vm9283, %v9272, %v8492
        %v9530 = vsel %vm9283, %v9273, %v8494
        %v9531 = vsel %vm9283, %v9274, %v8496
        %v9532 = vsel %vm9283, %v9275, %v8498
        %v9533 = vsel %vm9283, %v9276, %v8500
        %v9534 = vsel %vm9283, %v9277, %v8502
        %v9535 = vsel %vm9283, %v9278, %v8504
        %v9536 = vsel %vm9283, %v9279, %v8506
        %v9537 = vsel %vm9283, %v9280, %v8508
        %v9538 = vsel %vm9283, %v9281, %v8510
        %v9539 = vsel %vm9283, %v9282, %v8512
        %v9540 = vpack.c.bf16 %v9285, %v9284
        %v9541 = vpack.c.bf16 %v5694, %v5695
        %v9542 = vpack.c.bf16 %v9287, %v9286
        %v9543 = vpack.c.bf16 %v5692, %v5693
        %v9544 = vpack.c.bf16 %v9289, %v9288
        %v9545 = vpack.c.bf16 %v5690, %v5691
        %v9546 = vpack.c.bf16 %v9291, %v9290
        %v9547 = vpack.c.bf16 %v5688, %v5689
        %v9548 = vpack.c.bf16 %v9293, %v9292
        %v9549 = vpack.c.bf16 %v5686, %v5687
        %v9550 = vpack.c.bf16 %v9295, %v9294
        %v9551 = vpack.c.bf16 %v5684, %v5685
        %v9552 = vpack.c.bf16 %v9297, %v9296
        %v9553 = vpack.c.bf16 %v5682, %v5683
        %v9554 = vpack.c.bf16 %v9299, %v9298
        %v9555 = vpack.c.bf16 %v5680, %v5681
        %v9556 = vpack.c.bf16 %v9301, %v9300
        %v9557 = vpack.c.bf16 %v5678, %v5679
        %v9558 = vpack.c.bf16 %v9303, %v9302
        %v9559 = vpack.c.bf16 %v5676, %v5677
        %v9560 = vpack.c.bf16 %v9305, %v9304
        %v9561 = vpack.c.bf16 %v5674, %v5675
        %v9562 = vpack.c.bf16 %v9307, %v9306
        %v9563 = vpack.c.bf16 %v5672, %v5673
        %v9564 = vpack.c.bf16 %v9309, %v9308
        %v9565 = vpack.c.bf16 %v5670, %v5671
        %v9566 = vpack.c.bf16 %v9311, %v9310
        %v9567 = vpack.c.bf16 %v5668, %v5669
        %v9568 = vpack.c.bf16 %v9313, %v9312
        %v9569 = vpack.c.bf16 %v5666, %v5667
        %v9570 = vpack.c.bf16 %v9315, %v9314
        %v9571 = vpack.c.bf16 %v5664, %v5665
        %v9572 = vpack.c.bf16 %v9317, %v9316
        %v9573 = vpack.c.bf16 %v5662, %v5663
        %v9574 = vpack.c.bf16 %v9319, %v9318
        %v9575 = vpack.c.bf16 %v5660, %v5661
        %v9576 = vpack.c.bf16 %v9321, %v9320
        %v9577 = vpack.c.bf16 %v5658, %v5659
        %v9578 = vpack.c.bf16 %v9323, %v9322
        %v9579 = vpack.c.bf16 %v5656, %v5657
        %v9580 = vpack.c.bf16 %v9325, %v9324
        %v9581 = vpack.c.bf16 %v5654, %v5655
        %v9582 = vpack.c.bf16 %v9327, %v9326
        %v9583 = vpack.c.bf16 %v5652, %v5653
        %v9584 = vpack.c.bf16 %v9329, %v9328
        %v9585 = vpack.c.bf16 %v5650, %v5651
        %v9586 = vpack.c.bf16 %v9331, %v9330
        %v9587 = vpack.c.bf16 %v5648, %v5649
        %v9588 = vpack.c.bf16 %v9333, %v9332
        %v9589 = vpack.c.bf16 %v5646, %v5647
        %v9590 = vpack.c.bf16 %v9335, %v9334
        %v9591 = vpack.c.bf16 %v5644, %v5645
        %v9592 = vpack.c.bf16 %v9337, %v9336
        %v9593 = vpack.c.bf16 %v5642, %v5643
        %v9594 = vpack.c.bf16 %v9339, %v9338
        %v9595 = vpack.c.bf16 %v5640, %v5641
        %v9596 = vpack.c.bf16 %v9341, %v9340
        %v9597 = vpack.c.bf16 %v5638, %v5639
        %v9598 = vpack.c.bf16 %v9343, %v9342
        %v9599 = vpack.c.bf16 %v5636, %v5637
        %v9600 = vpack.c.bf16 %v9345, %v9344
        %v9601 = vpack.c.bf16 %v5634, %v5635
        %v9602 = vpack.c.bf16 %v9347, %v9346
        %v9603 = vpack.c.bf16 %v5632, %v5633
        %v9604 = vpack.c.bf16 %v9349, %v9348
        %v9605 = vpack.c.bf16 %v5630, %v5631
        %v9606 = vpack.c.bf16 %v9351, %v9350
        %v9607 = vpack.c.bf16 %v5628, %v5629
        %v9608 = vpack.c.bf16 %v9353, %v9352
        %v9609 = vpack.c.bf16 %v5626, %v5627
        %v9610 = vpack.c.bf16 %v9355, %v9354
        %v9611 = vpack.c.bf16 %v5624, %v5625
        %v9612 = vpack.c.bf16 %v9357, %v9356
        %v9613 = vpack.c.bf16 %v5622, %v5623
        %v9614 = vpack.c.bf16 %v9359, %v9358
        %v9615 = vpack.c.bf16 %v5620, %v5621
        %v9616 = vpack.c.bf16 %v9361, %v9360
        %v9617 = vpack.c.bf16 %v5618, %v5619
        %v9618 = vpack.c.bf16 %v9363, %v9362
        %v9619 = vpack.c.bf16 %v5616, %v5617
        %v9620 = vpack.c.bf16 %v9365, %v9364
        %v9621 = vpack.c.bf16 %v5614, %v5615
        %v9622 = vpack.c.bf16 %v9367, %v9366
        %v9623 = vpack.c.bf16 %v5612, %v5613
        %v9624 = vpack.c.bf16 %v9369, %v9368
        %v9625 = vpack.c.bf16 %v5610, %v5611
        %v9626 = vpack.c.bf16 %v9371, %v9370
        %v9627 = vpack.c.bf16 %v5608, %v5609
        %v9628 = vpack.c.bf16 %v9373, %v9372
        %v9629 = vpack.c.bf16 %v5606, %v5607
        %v9630 = vpack.c.bf16 %v9375, %v9374
        %v9631 = vpack.c.bf16 %v5604, %v5605
        %v9632 = vpack.c.bf16 %v9377, %v9376
        %v9633 = vpack.c.bf16 %v5602, %v5603
        %v9634 = vpack.c.bf16 %v9379, %v9378
        %v9635 = vpack.c.bf16 %v5600, %v5601
        %v9636 = vpack.c.bf16 %v9381, %v9380
        %v9637 = vpack.c.bf16 %v5598, %v5599
        %v9638 = vpack.c.bf16 %v9383, %v9382
        %v9639 = vpack.c.bf16 %v5596, %v5597
        %v9640 = vpack.c.bf16 %v9385, %v9384
        %v9641 = vpack.c.bf16 %v5594, %v5595
        %v9642 = vpack.c.bf16 %v9387, %v9386
        %v9643 = vpack.c.bf16 %v5592, %v5593
        %v9644 = vpack.c.bf16 %v9389, %v9388
        %v9645 = vpack.c.bf16 %v5590, %v5591
        %v9646 = vpack.c.bf16 %v9391, %v9390
        %v9647 = vpack.c.bf16 %v5588, %v5589
        %v9648 = vpack.c.bf16 %v9393, %v9392
        %v9649 = vpack.c.bf16 %v5586, %v5587
        %v9650 = vpack.c.bf16 %v9395, %v9394
        %v9651 = vpack.c.bf16 %v5584, %v5585
        %v9652 = vpack.c.bf16 %v9397, %v9396
        %v9653 = vpack.c.bf16 %v5582, %v5583
        %v9654 = vpack.c.bf16 %v9399, %v9398
        %v9655 = vpack.c.bf16 %v5580, %v5581
        %v9656 = vpack.c.bf16 %v9401, %v9400
        %v9657 = vpack.c.bf16 %v5578, %v5579
        %v9658 = vpack.c.bf16 %v9403, %v9402
        %v9659 = vpack.c.bf16 %v5576, %v5577
        %v9660 = vpack.c.bf16 %v9405, %v9404
        %v9661 = vpack.c.bf16 %v5574, %v5575
        %v9662 = vpack.c.bf16 %v9407, %v9406
        %v9663 = vpack.c.bf16 %v5572, %v5573
        %v9664 = vpack.c.bf16 %v9409, %v9408
        %v9665 = vpack.c.bf16 %v5570, %v5571
        %v9666 = vpack.c.bf16 %v9411, %v9410
        %v9667 = vpack.c.bf16 %v5568, %v5569
        %v9668 = vpack.c.bf16 %v9413, %v9412
        %v9669 = vpack.c.bf16 %v5566, %v5567
        %v9670 = vpack.c.bf16 %v9415, %v9414
        %v9671 = vpack.c.bf16 %v5564, %v5565
        %v9672 = vpack.c.bf16 %v9417, %v9416
        %v9673 = vpack.c.bf16 %v5562, %v5563
        %v9674 = vpack.c.bf16 %v9419, %v9418
        %v9675 = vpack.c.bf16 %v5560, %v5561
        %v9676 = vpack.c.bf16 %v9421, %v9420
        %v9677 = vpack.c.bf16 %v5558, %v5559
        %v9678 = vpack.c.bf16 %v9423, %v9422
        %v9679 = vpack.c.bf16 %v5556, %v5557
        %v9680 = vpack.c.bf16 %v9425, %v9424
        %v9681 = vpack.c.bf16 %v5554, %v5555
        %v9682 = vpack.c.bf16 %v9427, %v9426
        %v9683 = vpack.c.bf16 %v5552, %v5553
        %v9684 = vpack.c.bf16 %v9429, %v9428
        %v9685 = vpack.c.bf16 %v5550, %v5551
        %v9686 = vpack.c.bf16 %v9431, %v9430
        %v9687 = vpack.c.bf16 %v5548, %v5549
        %v9688 = vpack.c.bf16 %v9433, %v9432
        %v9689 = vpack.c.bf16 %v5546, %v5547
        %v9690 = vpack.c.bf16 %v9435, %v9434
        %v9691 = vpack.c.bf16 %v5544, %v5545
        %v9692 = vpack.c.bf16 %v9437, %v9436
        %v9693 = vpack.c.bf16 %v5542, %v5543
        %v9694 = vpack.c.bf16 %v9439, %v9438
        %v9695 = vpack.c.bf16 %v5540, %v5541
        %v9696 = vpack.c.bf16 %v9441, %v9440
        %v9697 = vpack.c.bf16 %v5538, %v5539
        %v9698 = vpack.c.bf16 %v9443, %v9442
        %v9699 = vpack.c.bf16 %v5536, %v5537
        %v9700 = vpack.c.bf16 %v9445, %v9444
        %v9701 = vpack.c.bf16 %v5534, %v5535
        %v9702 = vpack.c.bf16 %v9447, %v9446
        %v9703 = vpack.c.bf16 %v5532, %v5533
        %v9704 = vpack.c.bf16 %v9449, %v9448
        %v9705 = vpack.c.bf16 %v5530, %v5531
        %v9706 = vpack.c.bf16 %v9451, %v9450
        %v9707 = vpack.c.bf16 %v5528, %v5529
        %v9708 = vpack.c.bf16 %v9453, %v9452
        %v9709 = vpack.c.bf16 %v5526, %v5527
        %v9710 = vpack.c.bf16 %v9455, %v9454
        %v9711 = vpack.c.bf16 %v5524, %v5525
        %v9712 = vpack.c.bf16 %v9457, %v9456
        %v9713 = vpack.c.bf16 %v5522, %v5523
        %v9714 = vpack.c.bf16 %v9459, %v9458
        %v9715 = vpack.c.bf16 %v5520, %v5521
        %v9716 = vpack.c.bf16 %v9461, %v9460
        %v9717 = vpack.c.bf16 %v5518, %v5519
        %v9718 = vpack.c.bf16 %v9463, %v9462
        %v9719 = vpack.c.bf16 %v5516, %v5517
        %v9720 = vpack.c.bf16 %v9465, %v9464
        %v9721 = vpack.c.bf16 %v5514, %v5515
        %v9722 = vpack.c.bf16 %v9467, %v9466
        %v9723 = vpack.c.bf16 %v5512, %v5513
        %v9724 = vpack.c.bf16 %v9469, %v9468
        %v9725 = vpack.c.bf16 %v5510, %v5511
        %v9726 = vpack.c.bf16 %v9471, %v9470
        %v9727 = vpack.c.bf16 %v5508, %v5509
        %v9728 = vpack.c.bf16 %v9473, %v9472
        %v9729 = vpack.c.bf16 %v5506, %v5507
        %v9730 = vpack.c.bf16 %v9475, %v9474
        %v9731 = vpack.c.bf16 %v5504, %v5505
        %v9732 = vpack.c.bf16 %v9477, %v9476
        %v9733 = vpack.c.bf16 %v5502, %v5503
        %v9734 = vpack.c.bf16 %v9479, %v9478
        %v9735 = vpack.c.bf16 %v5500, %v5501
        %v9736 = vpack.c.bf16 %v9481, %v9480
        %v9737 = vpack.c.bf16 %v5498, %v5499
        %v9738 = vpack.c.bf16 %v9483, %v9482
        %v9739 = vpack.c.bf16 %v5496, %v5497
        %v9740 = vpack.c.bf16 %v9485, %v9484
        %v9741 = vpack.c.bf16 %v5494, %v5495
        %v9742 = vpack.c.bf16 %v9487, %v9486
        %v9743 = vpack.c.bf16 %v5492, %v5493
        %v9744 = vpack.c.bf16 %v9489, %v9488
        %v9745 = vpack.c.bf16 %v5490, %v5491
        %v9746 = vpack.c.bf16 %v9491, %v9490
        %v9747 = vpack.c.bf16 %v5488, %v5489
        %v9748 = vpack.c.bf16 %v9493, %v9492
        %v9749 = vpack.c.bf16 %v5486, %v5487
        %v9750 = vpack.c.bf16 %v9495, %v9494
        %v9751 = vpack.c.bf16 %v5484, %v5485
        %v9752 = vpack.c.bf16 %v9497, %v9496
        %v9753 = vpack.c.bf16 %v5482, %v5483
        %v9754 = vpack.c.bf16 %v9499, %v9498
        %v9755 = vpack.c.bf16 %v5480, %v5481
        %v9756 = vpack.c.bf16 %v9501, %v9500
        %v9757 = vpack.c.bf16 %v5478, %v5479
        %v9758 = vpack.c.bf16 %v9503, %v9502
        %v9759 = vpack.c.bf16 %v5476, %v5477
        %v9760 = vpack.c.bf16 %v9505, %v9504
        %v9761 = vpack.c.bf16 %v5474, %v5475
        %v9762 = vpack.c.bf16 %v9507, %v9506
        %v9763 = vpack.c.bf16 %v5472, %v5473
        %v9764 = vpack.c.bf16 %v9509, %v9508
        %v9765 = vpack.c.bf16 %v5470, %v5471
        %v9766 = vpack.c.bf16 %v9511, %v9510
        %v9767 = vpack.c.bf16 %v5468, %v5469
        %v9768 = vpack.c.bf16 %v9513, %v9512
        %v9769 = vpack.c.bf16 %v5466, %v5467
        %v9770 = vpack.c.bf16 %v9515, %v9514
        %v9771 = vpack.c.bf16 %v5464, %v5465
        %v9772 = vpack.c.bf16 %v9517, %v9516
        %v9773 = vpack.c.bf16 %v5462, %v5463
        %v9774 = vpack.c.bf16 %v9519, %v9518
        %v9775 = vpack.c.bf16 %v5460, %v5461
        %v9776 = vpack.c.bf16 %v9521, %v9520
        %v9777 = vpack.c.bf16 %v5458, %v5459
        %v9778 = vpack.c.bf16 %v9523, %v9522
        %v9779 = vpack.c.bf16 %v5456, %v5457
        %v9780 = vpack.c.bf16 %v9525, %v9524
        %v9781 = vpack.c.bf16 %v5454, %v5455
        %v9782 = vpack.c.bf16 %v9527, %v9526
        %v9783 = vpack.c.bf16 %v5452, %v5453
        %v9784 = vpack.c.bf16 %v9529, %v9528
        %v9785 = vpack.c.bf16 %v5450, %v5451
        %v9786 = vpack.c.bf16 %v9531, %v9530
        %v9787 = vpack.c.bf16 %v5448, %v5449
        %v9788 = vpack.c.bf16 %v9533, %v9532
        %v9789 = vpack.c.bf16 %v5446, %v5447
        %v9790 = vpack.c.bf16 %v9535, %v9534
        %v9791 = vpack.c.bf16 %v5444, %v5445
        %v9792 = vpack.c.bf16 %v9537, %v9536
        %v9793 = vpack.c.bf16 %v5442, %v5443
        %v9794 = vpack.c.bf16 %v9539, %v9538
        %v9795 = vpack.c.bf16 %v5696, %v5441
        %v9796 = vld [vmem:[%s2] sm:$0xf]
        %v9797 = vld [vmem:[%s2 + $0x4] sm:$0xf]
        %v9798 = vld [vmem:[%s2 + $0x8] sm:$0xf]
        %v9799 = vld [vmem:[%s2 + $0xc] sm:$0xf]
        %v9800 = vld [vmem:[%s2 + $0x10] sm:$0xf]
        %v9801 = vld [vmem:[%s2 + $0x14] sm:$0xf]
        %v9802 = vld [vmem:[%s2 + $0x18] sm:$0xf]
        %v9803 = vld [vmem:[%s2 + $0x1c] sm:$0xf]
        %v9804 = vld [vmem:[%s2 + $0x20] sm:$0xf]
        %v9805 = vld [vmem:[%s2 + $0x24] sm:$0xf]
        %v9806 = vld [vmem:[%s2 + $0x28] sm:$0xf]
        %v9807 = vld [vmem:[%s2 + $0x2c] sm:$0xf]
        %v9808 = vld [vmem:[%s2 + $0x30] sm:$0xf]
        %v9809 = vld [vmem:[%s2 + $0x34] sm:$0xf]
        %v9810 = vld [vmem:[%s2 + $0x38] sm:$0xf]
        %v9811 = vld [vmem:[%s2 + $0x3c] sm:$0xf]
        %v9812 = vld [vmem:[%s2 + $0x40] sm:$0xf]
        %v9813 = vld [vmem:[%s2 + $0x44] sm:$0xf]
        %v9814 = vld [vmem:[%s2 + $0x48] sm:$0xf]
        %v9815 = vld [vmem:[%s2 + $0x4c] sm:$0xf]
        %v9816 = vld [vmem:[%s3] sm:$0x1]
        %v9818 = vlaneseq
        %v9819 = vshrl.u32 %v9818, 7
        %v9820 = vsub.s32 0, %v9819
        %v9821 = vrot.slane %v9816, %v9820
        %v9843 = vunpack.c.l.b16 %v9796
        %v9844 = vunpack.c.l.b16 %v9797
        %v9845 = vunpack.c.l.b16 %v9798
        %v9846 = vunpack.c.l.b16 %v9799
        %v9847 = vunpack.c.l.b16 %v9800
        %v9848 = vunpack.c.l.b16 %v9801
        %v9849 = vunpack.c.l.b16 %v9802
        %v9850 = vunpack.c.l.b16 %v9803
        %v9851 = vunpack.c.l.b16 %v9804
        %v9852 = vunpack.c.l.b16 %v9805
        %v9853 = vunpack.c.l.b16 %v9806
        %v9854 = vunpack.c.l.b16 %v9807
        %v9855 = vunpack.c.l.b16 %v9808
        %v9856 = vunpack.c.l.b16 %v9809
        %v9857 = vunpack.c.l.b16 %v9810
        %v9858 = vunpack.c.l.b16 %v9811
        %v9859 = vunpack.c.l.b16 %v9812
        %v9860 = vunpack.c.l.b16 %v9813
        %v9861 = vunpack.c.l.b16 %v9814
        %v9862 = vunpack.c.l.b16 %v9815
        %v9863 = vpack.c.b16 %v9844, %v9843
        %v9864 = vpack.c.b16 %v9846, %v9845
        %v9865 = vpack.c.b16 %v9848, %v9847
        %v9866 = vpack.c.b16 %v9850, %v9849
        %v9867 = vpack.c.b16 %v9852, %v9851
        %v9868 = vpack.c.b16 %v9854, %v9853
        %v9869 = vpack.c.b16 %v9856, %v9855
        %v9870 = vpack.c.b16 %v9858, %v9857
        %v9871 = vpack.c.b16 %v9860, %v9859
        %v9872 = vpack.c.b16 %v9862, %v9861
        %v9884 = vsel %vm8769, %v9541, 0
        %v9887 = vsel %vm8769, %v9543, 0
        %v9890 = vsel %vm8769, %v9545, 0
        %v9893 = vsel %vm8769, %v9547, 0
        %v9896 = vsel %vm8769, %v9549, 0
        %v9899 = vsel %vm8769, %v9551, 0
        %v9902 = vsel %vm8769, %v9553, 0
        %v9905 = vsel %vm8769, %v9555, 0
        %v9908 = vsel %vm8769, %v9557, 0
        %v9911 = vsel %vm8769, %v9559, 0
        %v9914 = vsel %vm8769, %v9561, 0
        %v9917 = vsel %vm8769, %v9563, 0
        %v9920 = vsel %vm8769, %v9565, 0
        %v9923 = vsel %vm8769, %v9567, 0
        %v9926 = vsel %vm8769, %v9569, 0
        %v9929 = vsel %vm8769, %v9571, 0
        %v9932 = vsel %vm8769, %v9573, 0
        %v9935 = vsel %vm8769, %v9575, 0
        %v9938 = vsel %vm8769, %v9577, 0
        %v9941 = vsel %vm8769, %v9579, 0
        %v9944 = vsel %vm8769, %v9581, 0
        %v9947 = vsel %vm8769, %v9583, 0
        %v9950 = vsel %vm8769, %v9585, 0
        %v9953 = vsel %vm8769, %v9587, 0
        %v9956 = vsel %vm8769, %v9589, 0
        %v9959 = vsel %vm8769, %v9591, 0
        %v9962 = vsel %vm8769, %v9593, 0
        %v9965 = vsel %vm8769, %v9595, 0
        %v9968 = vsel %vm8769, %v9597, 0
        %v9971 = vsel %vm8769, %v9599, 0
        %v9974 = vsel %vm8769, %v9601, 0
        %v9977 = vsel %vm8769, %v9603, 0
        %v9980 = vsel %vm8769, %v9605, 0
        %v9983 = vsel %vm8769, %v9607, 0
        %v9986 = vsel %vm8769, %v9609, 0
        %v9989 = vsel %vm8769, %v9611, 0
        %v9992 = vsel %vm8769, %v9613, 0
        %v9995 = vsel %vm8769, %v9615, 0
        %v9998 = vsel %vm8769, %v9617, 0
        %v10001 = vsel %vm8769, %v9619, 0
        %v10004 = vsel %vm8769, %v9621, 0
        %v10007 = vsel %vm8769, %v9623, 0
        %v10010 = vsel %vm8769, %v9625, 0
        %v10013 = vsel %vm8769, %v9627, 0
        %v10016 = vsel %vm8769, %v9629, 0
        %v10019 = vsel %vm8769, %v9631, 0
        %v10022 = vsel %vm8769, %v9633, 0
        %v10025 = vsel %vm8769, %v9635, 0
        %v10028 = vsel %vm8769, %v9637, 0
        %v10031 = vsel %vm8769, %v9639, 0
        %v10034 = vsel %vm8769, %v9641, 0
        %v10037 = vsel %vm8769, %v9643, 0
        %v10040 = vsel %vm8769, %v9645, 0
        %v10043 = vsel %vm8769, %v9647, 0
        %v10046 = vsel %vm8769, %v9649, 0
        %v10049 = vsel %vm8769, %v9651, 0
        %v10052 = vsel %vm8769, %v9653, 0
        %v10055 = vsel %vm8769, %v9655, 0
        %v10058 = vsel %vm8769, %v9657, 0
        %v10061 = vsel %vm8769, %v9659, 0
        %v10064 = vsel %vm8769, %v9661, 0
        %v10067 = vsel %vm8769, %v9663, 0
        %v10070 = vsel %vm8769, %v9665, 0
        %v10073 = vsel %vm8769, %v9667, 0
        %v10076 = vsel %vm8769, %v9669, 0
        %v10079 = vsel %vm8769, %v9671, 0
        %v10082 = vsel %vm8769, %v9673, 0
        %v10085 = vsel %vm8769, %v9675, 0
        %v10088 = vsel %vm8769, %v9677, 0
        %v10091 = vsel %vm8769, %v9679, 0
        %v10094 = vsel %vm8769, %v9681, 0
        %v10097 = vsel %vm8769, %v9683, 0
        %v10100 = vsel %vm8769, %v9685, 0
        %v10103 = vsel %vm8769, %v9687, 0
        %v10106 = vsel %vm8769, %v9689, 0
        %v10109 = vsel %vm8769, %v9691, 0
        %v10112 = vsel %vm8769, %v9693, 0
        %v10115 = vsel %vm8769, %v9695, 0
        %v10118 = vsel %vm8769, %v9697, 0
        %v10121 = vsel %vm8769, %v9699, 0
        %v10124 = vsel %vm8769, %v9701, 0
        %v10127 = vsel %vm8769, %v9703, 0
        %v10130 = vsel %vm8769, %v9705, 0
        %v10133 = vsel %vm8769, %v9707, 0
        %v10136 = vsel %vm8769, %v9709, 0
        %v10139 = vsel %vm8769, %v9711, 0
        %v10142 = vsel %vm8769, %v9713, 0
        %v10145 = vsel %vm8769, %v9715, 0
        %v10148 = vsel %vm8769, %v9717, 0
        %v10151 = vsel %vm8769, %v9719, 0
        %v10154 = vsel %vm8769, %v9721, 0
        %v10157 = vsel %vm8769, %v9723, 0
        %v10160 = vsel %vm8769, %v9725, 0
        %v10163 = vsel %vm8769, %v9727, 0
        %v10166 = vsel %vm8769, %v9729, 0
        %v10169 = vsel %vm8769, %v9731, 0
        %v10172 = vsel %vm8769, %v9733, 0
        %v10175 = vsel %vm8769, %v9735, 0
        %v10178 = vsel %vm8769, %v9737, 0
        %v10181 = vsel %vm8769, %v9739, 0
        %v10184 = vsel %vm8769, %v9741, 0
        %v10187 = vsel %vm8769, %v9743, 0
        %v10190 = vsel %vm8769, %v9745, 0
        %v10193 = vsel %vm8769, %v9747, 0
        %v10196 = vsel %vm8769, %v9749, 0
        %v10199 = vsel %vm8769, %v9751, 0
        %v10202 = vsel %vm8769, %v9753, 0
        %v10205 = vsel %vm8769, %v9755, 0
        %v10208 = vsel %vm8769, %v9757, 0
        %v10211 = vsel %vm8769, %v9759, 0
        %v10214 = vsel %vm8769, %v9761, 0
        %v10217 = vsel %vm8769, %v9763, 0
        %v10220 = vsel %vm8769, %v9765, 0
        %v10223 = vsel %vm8769, %v9767, 0
        %v10226 = vsel %vm8769, %v9769, 0
        %v10229 = vsel %vm8769, %v9771, 0
        %v10232 = vsel %vm8769, %v9773, 0
        %v10235 = vsel %vm8769, %v9775, 0
        %v10238 = vsel %vm8769, %v9777, 0
        %v10241 = vsel %vm8769, %v9779, 0
        %v10244 = vsel %vm8769, %v9781, 0
        %v10247 = vsel %vm8769, %v9783, 0
        %v10250 = vsel %vm8769, %v9785, 0
        %v10253 = vsel %vm8769, %v9787, 0
        %v10256 = vsel %vm8769, %v9789, 0
        %v10259 = vsel %vm8769, %v9791, 0
        %v10262 = vsel %vm8769, %v9793, 0
        %v10265 = vsel %vm8769, %v9795, 0
        %10267 = vmatprep.subr.bf16.mxu0 0
        %10268 = vmatpush1.bf16.msra.mxu0 %v9863
        %10269 = vmatprep.subr.bf16.mxu0 0
        %10270 = vmatpush1.bf16.msra.mxu0 %v9864
        %10271 = vmatprep.subr.bf16.mxu0 0
        %10272 = vmatpush1.bf16.msra.mxu0 %v9865
        %10273 = vmatprep.subr.bf16.mxu0 0
        %10274 = vmatpush1.bf16.msra.mxu0 %v9866
        %10275 = vmatprep.subr.bf16.mxu0 0
        %10276 = vmatpush1.bf16.msra.mxu0 %v9867
        %10277 = vmatprep.subr.bf16.mxu0 0
        %10278 = vmatpush1.bf16.msra.mxu0 %v9868
        %10279 = vmatprep.subr.bf16.mxu0 0
        %10280 = vmatpush1.bf16.msra.mxu0 %v9869
        %10281 = vmatprep.subr.bf16.mxu0 0
        %10282 = vmatpush1.bf16.msra.mxu0 %v9870
        %10283 = vmatprep.subr.bf16.mxu0 0
        %10284 = vmatpush1.bf16.msra.mxu0 %v9871
        %10285 = vmatprep.subr.bf16.mxu0 0
        %10286 = vmatpush1.bf16.msra.mxu0 %v9872
        %10287 = vmatprep.subr.bf16.mxu0 0
        %10288 = vmatpush1.bf16.msra.mxu0 0
        %10289 = vmatprep.subr.bf16.mxu0 0
        %10290 = vmatpush1.bf16.msra.mxu0 0
        %10291 = vmatprep.subr.bf16.mxu0 0
        %10292 = vmatpush1.bf16.msra.mxu0 0
        %10293 = vmatprep.subr.bf16.mxu0 0
        %10294 = vmatpush1.bf16.msra.mxu0 0
        %10295 = vmatprep.subr.bf16.mxu0 0
        %10296 = vmatpush1.bf16.msra.mxu0 0
        %10297 = vmatprep.subr.bf16.mxu0 0
        %10298 = vmatpush1.bf16.msra.mxu0 0
        %10299 = vmatprep.mubr.bf16.mxu0 %v9884
        %10300 = vmatmul.mubr.bf16.gmra.mrb[0].mxu0 %v9540
        %v10301 = vpop.f32.mrb[0].mxu0
        %v10302 = vadd.f32 %v9821, %v10301
        %v10303 = vpop.f32.mrb[0].mxu0
        %v10304 = vpop.f32.mrb[0].mxu0
        %v10305 = vadd.f32 %v9821, %v10304
        %v10306 = vpop.f32.mrb[0].mxu0
        %10307 = vmatprep.mubr.bf16.mxu0 %v9887
        %10308 = vmatmul.mubr.bf16.gmra.mrb[0].mxu0 %v9542
        %v10309 = vpop.f32.mrb[0].mxu0
        %v10310 = vadd.f32 %v9821, %v10309
        %v10311 = vpop.f32.mrb[0].mxu0
        %v10312 = vpop.f32.mrb[0].mxu0
        %v10313 = vadd.f32 %v9821, %v10312
        %v10314 = vpop.f32.mrb[0].mxu0
        %10315 = vmatprep.mubr.bf16.mxu0 %v9890
        %10316 = vmatmul.mubr.bf16.gmra.mrb[0].mxu0 %v9544
        %v10317 = vpop.f32.mrb[0].mxu0
        %v10318 = vadd.f32 %v9821, %v10317
        %v10319 = vpop.f32.mrb[0].mxu0
        %v10320 = vpop.f32.mrb[0].mxu0
        %v10321 = vadd.f32 %v9821, %v10320
        %v10322 = vpop.f32.mrb[0].mxu0
        %10323 = vmatprep.mubr.bf16.mxu0 %v9893
        %10324 = vmatmul.mubr.bf16.gmra.mrb[0].mxu0 %v9546
        %v10325 = vpop.f32.mrb[0].mxu0
        %v10326 = vadd.f32 %v9821, %v10325
        %v10327 = vpop.f32.mrb[0].mxu0
        %v10328 = vpop.f32.mrb[0].mxu0
        %v10329 = vadd.f32 %v9821, %v10328
        %v10330 = vpop.f32.mrb[0].mxu0
        %10331 = vmatprep.mubr.bf16.mxu0 %v9896
        %10332 = vmatmul.mubr.bf16.gmra.mrb[0].mxu0 %v9548
        %v10333 = vpop.f32.mrb[0].mxu0
        %v10334 = vadd.f32 %v9821, %v10333
        %v10335 = vpop.f32.mrb[0].mxu0
        %v10336 = vpop.f32.mrb[0].mxu0
        %v10337 = vadd.f32 %v9821, %v10336
        %v10338 = vpop.f32.mrb[0].mxu0
        %10339 = vmatprep.mubr.bf16.mxu0 %v9899
        %10340 = vmatmul.mubr.bf16.gmra.mrb[0].mxu0 %v9550
        %v10341 = vpop.f32.mrb[0].mxu0
        %v10342 = vadd.f32 %v9821, %v10341
        %v10343 = vpop.f32.mrb[0].mxu0
        %v10344 = vpop.f32.mrb[0].mxu0
        %v10345 = vadd.f32 %v9821, %v10344
        %v10346 = vpop.f32.mrb[0].mxu0
        %10347 = vmatprep.mubr.bf16.mxu0 %v9902
        %10348 = vmatmul.mubr.bf16.gmra.mrb[0].mxu0 %v9552
        %v10349 = vpop.f32.mrb[0].mxu0
        %v10350 = vadd.f32 %v9821, %v10349
        %v10351 = vpop.f32.mrb[0].mxu0
        %v10352 = vpop.f32.mrb[0].mxu0
        %v10353 = vadd.f32 %v9821, %v10352
        %v10354 = vpop.f32.mrb[0].mxu0
        %10355 = vmatprep.mubr.bf16.mxu0 %v9905
        %10356 = vmatmul.mubr.bf16.gmra.mrb[0].mxu0 %v9554
        %v10357 = vpop.f32.mrb[0].mxu0
        %v10358 = vadd.f32 %v9821, %v10357
        %v10359 = vpop.f32.mrb[0].mxu0
        %v10360 = vpop.f32.mrb[0].mxu0
        %v10361 = vadd.f32 %v9821, %v10360
        %v10362 = vpop.f32.mrb[0].mxu0
        %10363 = vmatprep.mubr.bf16.mxu0 %v9908
        %10364 = vmatmul.mubr.bf16.gmra.mrb[0].mxu0 %v9556
        %v10365 = vpop.f32.mrb[0].mxu0
        %v10366 = vadd.f32 %v9821, %v10365
        %v10367 = vpop.f32.mrb[0].mxu0
        %v10368 = vpop.f32.mrb[0].mxu0
        %v10369 = vadd.f32 %v9821, %v10368
        %v10370 = vpop.f32.mrb[0].mxu0
        %10371 = vmatprep.mubr.bf16.mxu0 %v9911
        %10372 = vmatmul.mubr.bf16.gmra.mrb[0].mxu0 %v9558
        %v10373 = vpop.f32.mrb[0].mxu0
        %v10374 = vadd.f32 %v9821, %v10373
        %v10375 = vpop.f32.mrb[0].mxu0
        %v10376 = vpop.f32.mrb[0].mxu0
        %v10377 = vadd.f32 %v9821, %v10376
        %v10378 = vpop.f32.mrb[0].mxu0
        %10379 = vmatprep.mubr.bf16.mxu0 %v9914
        %10380 = vmatmul.mubr.bf16.gmra.mrb[0].mxu0 %v9560
        %v10381 = vpop.f32.mrb[0].mxu0
        %v10382 = vadd.f32 %v9821, %v10381
        %v10383 = vpop.f32.mrb[0].mxu0
        %v10384 = vpop.f32.mrb[0].mxu0
        %v10385 = vadd.f32 %v9821, %v10384
        %v10386 = vpop.f32.mrb[0].mxu0
        %10387 = vmatprep.mubr.bf16.mxu0 %v9917
        %10388 = vmatmul.mubr.bf16.gmra.mrb[0].mxu0 %v9562
        %v10389 = vpop.f32.mrb[0].mxu0
        %v10390 = vadd.f32 %v9821, %v10389
        %v10391 = vpop.f32.mrb[0].mxu0
        %v10392 = vpop.f32.mrb[0].mxu0
        %v10393 = vadd.f32 %v9821, %v10392
        %v10394 = vpop.f32.mrb[0].mxu0
        %10395 = vmatprep.mubr.bf16.mxu0 %v9920
        %10396 = vmatmul.mubr.bf16.gmra.mrb[0].mxu0 %v9564
        %v10397 = vpop.f32.mrb[0].mxu0
        %v10398 = vadd.f32 %v9821, %v10397
        %v10399 = vpop.f32.mrb[0].mxu0
        %v10400 = vpop.f32.mrb[0].mxu0
        %v10401 = vadd.f32 %v9821, %v10400
        %v10402 = vpop.f32.mrb[0].mxu0
        %10403 = vmatprep.mubr.bf16.mxu0 %v9923
        %10404 = vmatmul.mubr.bf16.gmra.mrb[0].mxu0 %v9566
        %v10405 = vpop.f32.mrb[0].mxu0
        %v10406 = vadd.f32 %v9821, %v10405
        %v10407 = vpop.f32.mrb[0].mxu0
        %v10408 = vpop.f32.mrb[0].mxu0
        %v10409 = vadd.f32 %v9821, %v10408
        %v10410 = vpop.f32.mrb[0].mxu0
        %10411 = vmatprep.mubr.bf16.mxu0 %v9926
        %10412 = vmatmul.mubr.bf16.gmra.mrb[0].mxu0 %v9568
        %v10413 = vpop.f32.mrb[0].mxu0
        %v10414 = vadd.f32 %v9821, %v10413
        %v10415 = vpop.f32.mrb[0].mxu0
        %v10416 = vpop.f32.mrb[0].mxu0
        %v10417 = vadd.f32 %v9821, %v10416
        %v10418 = vpop.f32.mrb[0].mxu0
        %10419 = vmatprep.mubr.bf16.mxu0 %v9929
        %10420 = vmatmul.mubr.bf16.gmra.mrb[0].mxu0 %v9570
        %v10421 = vpop.f32.mrb[0].mxu0
        %v10422 = vadd.f32 %v9821, %v10421
        %v10423 = vpop.f32.mrb[0].mxu0
        %v10424 = vpop.f32.mrb[0].mxu0
        %v10425 = vadd.f32 %v9821, %v10424
        %v10426 = vpop.f32.mrb[0].mxu0
        %10427 = vmatprep.mubr.bf16.mxu0 %v9932
        %10428 = vmatmul.mubr.bf16.gmra.mrb[0].mxu0 %v9572
        %v10429 = vpop.f32.mrb[0].mxu0
        %v10430 = vadd.f32 %v9821, %v10429
        %v10431 = vpop.f32.mrb[0].mxu0
        %v10432 = vpop.f32.mrb[0].mxu0
        %v10433 = vadd.f32 %v9821, %v10432
        %v10434 = vpop.f32.mrb[0].mxu0
        %10435 = vmatprep.mubr.bf16.mxu0 %v9935
        %10436 = vmatmul.mubr.bf16.gmra.mrb[0].mxu0 %v9574
        %v10437 = vpop.f32.mrb[0].mxu0
        %v10438 = vadd.f32 %v9821, %v10437
        %v10439 = vpop.f32.mrb[0].mxu0
        %v10440 = vpop.f32.mrb[0].mxu0
        %v10441 = vadd.f32 %v9821, %v10440
        %v10442 = vpop.f32.mrb[0].mxu0
        %10443 = vmatprep.mubr.bf16.mxu0 %v9938
        %10444 = vmatmul.mubr.bf16.gmra.mrb[0].mxu0 %v9576
        %v10445 = vpop.f32.mrb[0].mxu0
        %v10446 = vadd.f32 %v9821, %v10445
        %v10447 = vpop.f32.mrb[0].mxu0
        %v10448 = vpop.f32.mrb[0].mxu0
        %v10449 = vadd.f32 %v9821, %v10448
        %v10450 = vpop.f32.mrb[0].mxu0
        %10451 = vmatprep.mubr.bf16.mxu0 %v9941
        %10452 = vmatmul.mubr.bf16.gmra.mrb[0].mxu0 %v9578
        %v10453 = vpop.f32.mrb[0].mxu0
        %v10454 = vadd.f32 %v9821, %v10453
        %v10455 = vpop.f32.mrb[0].mxu0
        %v10456 = vpop.f32.mrb[0].mxu0
        %v10457 = vadd.f32 %v9821, %v10456
        %v10458 = vpop.f32.mrb[0].mxu0
        %10459 = vmatprep.mubr.bf16.mxu0 %v9944
        %10460 = vmatmul.mubr.bf16.gmra.mrb[0].mxu0 %v9580
        %v10461 = vpop.f32.mrb[0].mxu0
        %v10462 = vadd.f32 %v9821, %v10461
        %v10463 = vpop.f32.mrb[0].mxu0
        %v10464 = vpop.f32.mrb[0].mxu0
        %v10465 = vadd.f32 %v9821, %v10464
        %v10466 = vpop.f32.mrb[0].mxu0
        %10467 = vmatprep.mubr.bf16.mxu0 %v9947
        %10468 = vmatmul.mubr.bf16.gmra.mrb[0].mxu0 %v9582
        %v10469 = vpop.f32.mrb[0].mxu0
        %v10470 = vadd.f32 %v9821, %v10469
        %v10471 = vpop.f32.mrb[0].mxu0
        %v10472 = vpop.f32.mrb[0].mxu0
        %v10473 = vadd.f32 %v9821, %v10472
        %v10474 = vpop.f32.mrb[0].mxu0
        %10475 = vmatprep.mubr.bf16.mxu0 %v9950
        %10476 = vmatmul.mubr.bf16.gmra.mrb[0].mxu0 %v9584
        %v10477 = vpop.f32.mrb[0].mxu0
        %v10478 = vadd.f32 %v9821, %v10477
        %v10479 = vpop.f32.mrb[0].mxu0
        %v10480 = vpop.f32.mrb[0].mxu0
        %v10481 = vadd.f32 %v9821, %v10480
        %v10482 = vpop.f32.mrb[0].mxu0
        %10483 = vmatprep.mubr.bf16.mxu0 %v9953
        %10484 = vmatmul.mubr.bf16.gmra.mrb[0].mxu0 %v9586
        %v10485 = vpop.f32.mrb[0].mxu0
        %v10486 = vadd.f32 %v9821, %v10485
        %v10487 = vpop.f32.mrb[0].mxu0
        %v10488 = vpop.f32.mrb[0].mxu0
        %v10489 = vadd.f32 %v9821, %v10488
        %v10490 = vpop.f32.mrb[0].mxu0
        %10491 = vmatprep.mubr.bf16.mxu0 %v9956
        %10492 = vmatmul.mubr.bf16.gmra.mrb[0].mxu0 %v9588
        %v10493 = vpop.f32.mrb[0].mxu0
        %v10494 = vadd.f32 %v9821, %v10493
        %v10495 = vpop.f32.mrb[0].mxu0
        %v10496 = vpop.f32.mrb[0].mxu0
        %v10497 = vadd.f32 %v9821, %v10496
        %v10498 = vpop.f32.mrb[0].mxu0
        %10499 = vmatprep.mubr.bf16.mxu0 %v9959
        %10500 = vmatmul.mubr.bf16.gmra.mrb[0].mxu0 %v9590
        %v10501 = vpop.f32.mrb[0].mxu0
        %v10502 = vadd.f32 %v9821, %v10501
        %v10503 = vpop.f32.mrb[0].mxu0
        %v10504 = vpop.f32.mrb[0].mxu0
        %v10505 = vadd.f32 %v9821, %v10504
        %v10506 = vpop.f32.mrb[0].mxu0
        %10507 = vmatprep.mubr.bf16.mxu0 %v9962
        %10508 = vmatmul.mubr.bf16.gmra.mrb[0].mxu0 %v9592
        %v10509 = vpop.f32.mrb[0].mxu0
        %v10510 = vadd.f32 %v9821, %v10509
        %v10511 = vpop.f32.mrb[0].mxu0
        %v10512 = vpop.f32.mrb[0].mxu0
        %v10513 = vadd.f32 %v9821, %v10512
        %v10514 = vpop.f32.mrb[0].mxu0
        %10515 = vmatprep.mubr.bf16.mxu0 %v9965
        %10516 = vmatmul.mubr.bf16.gmra.mrb[0].mxu0 %v9594
        %v10517 = vpop.f32.mrb[0].mxu0
        %v10518 = vadd.f32 %v9821, %v10517
        %v10519 = vpop.f32.mrb[0].mxu0
        %v10520 = vpop.f32.mrb[0].mxu0
        %v10521 = vadd.f32 %v9821, %v10520
        %v10522 = vpop.f32.mrb[0].mxu0
        %10523 = vmatprep.mubr.bf16.mxu0 %v9968
        %10524 = vmatmul.mubr.bf16.gmra.mrb[0].mxu0 %v9596
        %v10525 = vpop.f32.mrb[0].mxu0
        %v10526 = vadd.f32 %v9821, %v10525
        %v10527 = vpop.f32.mrb[0].mxu0
        %v10528 = vpop.f32.mrb[0].mxu0
        %v10529 = vadd.f32 %v9821, %v10528
        %v10530 = vpop.f32.mrb[0].mxu0
        %10531 = vmatprep.mubr.bf16.mxu0 %v9971
        %10532 = vmatmul.mubr.bf16.gmra.mrb[0].mxu0 %v9598
        %v10533 = vpop.f32.mrb[0].mxu0
        %v10534 = vadd.f32 %v9821, %v10533
        %v10535 = vpop.f32.mrb[0].mxu0
        %v10536 = vpop.f32.mrb[0].mxu0
        %v10537 = vadd.f32 %v9821, %v10536
        %v10538 = vpop.f32.mrb[0].mxu0
        %10539 = vmatprep.mubr.bf16.mxu0 %v9974
        %10540 = vmatmul.mubr.bf16.gmra.mrb[0].mxu0 %v9600
        %v10541 = vpop.f32.mrb[0].mxu0
        %v10542 = vadd.f32 %v9821, %v10541
        %v10543 = vpop.f32.mrb[0].mxu0
        %v10544 = vpop.f32.mrb[0].mxu0
        %v10545 = vadd.f32 %v9821, %v10544
        %v10546 = vpop.f32.mrb[0].mxu0
        %10547 = vmatprep.mubr.bf16.mxu0 %v9977
        %10548 = vmatmul.mubr.bf16.gmra.mrb[0].mxu0 %v9602
        %v10549 = vpop.f32.mrb[0].mxu0
        %v10550 = vadd.f32 %v9821, %v10549
        %v10551 = vpop.f32.mrb[0].mxu0
        %v10552 = vpop.f32.mrb[0].mxu0
        %v10553 = vadd.f32 %v9821, %v10552
        %v10554 = vpop.f32.mrb[0].mxu0
        %10555 = vmatprep.mubr.bf16.mxu0 %v9980
        %10556 = vmatmul.mubr.bf16.gmra.mrb[0].mxu0 %v9604
        %v10557 = vpop.f32.mrb[0].mxu0
        %v10558 = vadd.f32 %v9821, %v10557
        %v10559 = vpop.f32.mrb[0].mxu0
        %v10560 = vpop.f32.mrb[0].mxu0
        %v10561 = vadd.f32 %v9821, %v10560
        %v10562 = vpop.f32.mrb[0].mxu0
        %10563 = vmatprep.mubr.bf16.mxu0 %v9983
        %10564 = vmatmul.mubr.bf16.gmra.mrb[0].mxu0 %v9606
        %v10565 = vpop.f32.mrb[0].mxu0
        %v10566 = vadd.f32 %v9821, %v10565
        %v10567 = vpop.f32.mrb[0].mxu0
        %v10568 = vpop.f32.mrb[0].mxu0
        %v10569 = vadd.f32 %v9821, %v10568
        %v10570 = vpop.f32.mrb[0].mxu0
        %10571 = vmatprep.mubr.bf16.mxu0 %v9986
        %10572 = vmatmul.mubr.bf16.gmra.mrb[0].mxu0 %v9608
        %v10573 = vpop.f32.mrb[0].mxu0
        %v10574 = vadd.f32 %v9821, %v10573
        %v10575 = vpop.f32.mrb[0].mxu0
        %v10576 = vpop.f32.mrb[0].mxu0
        %v10577 = vadd.f32 %v9821, %v10576
        %v10578 = vpop.f32.mrb[0].mxu0
        %10579 = vmatprep.mubr.bf16.mxu0 %v9989
        %10580 = vmatmul.mubr.bf16.gmra.mrb[0].mxu0 %v9610
        %v10581 = vpop.f32.mrb[0].mxu0
        %v10582 = vadd.f32 %v9821, %v10581
        %v10583 = vpop.f32.mrb[0].mxu0
        %v10584 = vpop.f32.mrb[0].mxu0
        %v10585 = vadd.f32 %v9821, %v10584
        %v10586 = vpop.f32.mrb[0].mxu0
        %10587 = vmatprep.mubr.bf16.mxu0 %v9992
        %10588 = vmatmul.mubr.bf16.gmra.mrb[0].mxu0 %v9612
        %v10589 = vpop.f32.mrb[0].mxu0
        %v10590 = vadd.f32 %v9821, %v10589
        %v10591 = vpop.f32.mrb[0].mxu0
        %v10592 = vpop.f32.mrb[0].mxu0
        %v10593 = vadd.f32 %v9821, %v10592
        %v10594 = vpop.f32.mrb[0].mxu0
        %10595 = vmatprep.mubr.bf16.mxu0 %v9995
        %10596 = vmatmul.mubr.bf16.gmra.mrb[0].mxu0 %v9614
        %v10597 = vpop.f32.mrb[0].mxu0
        %v10598 = vadd.f32 %v9821, %v10597
        %v10599 = vpop.f32.mrb[0].mxu0
        %v10600 = vpop.f32.mrb[0].mxu0
        %v10601 = vadd.f32 %v9821, %v10600
        %v10602 = vpop.f32.mrb[0].mxu0
        %10603 = vmatprep.mubr.bf16.mxu0 %v9998
        %10604 = vmatmul.mubr.bf16.gmra.mrb[0].mxu0 %v9616
        %v10605 = vpop.f32.mrb[0].mxu0
        %v10606 = vadd.f32 %v9821, %v10605
        %v10607 = vpop.f32.mrb[0].mxu0
        %v10608 = vpop.f32.mrb[0].mxu0
        %v10609 = vadd.f32 %v9821, %v10608
        %v10610 = vpop.f32.mrb[0].mxu0
        %10611 = vmatprep.mubr.bf16.mxu0 %v10001
        %10612 = vmatmul.mubr.bf16.gmra.mrb[0].mxu0 %v9618
        %v10613 = vpop.f32.mrb[0].mxu0
        %v10614 = vadd.f32 %v9821, %v10613
        %v10615 = vpop.f32.mrb[0].mxu0
        %v10616 = vpop.f32.mrb[0].mxu0
        %v10617 = vadd.f32 %v9821, %v10616
        %v10618 = vpop.f32.mrb[0].mxu0
        %10619 = vmatprep.mubr.bf16.mxu0 %v10004
        %10620 = vmatmul.mubr.bf16.gmra.mrb[0].mxu0 %v9620
        %v10621 = vpop.f32.mrb[0].mxu0
        %v10622 = vadd.f32 %v9821, %v10621
        %v10623 = vpop.f32.mrb[0].mxu0
        %v10624 = vpop.f32.mrb[0].mxu0
        %v10625 = vadd.f32 %v9821, %v10624
        %v10626 = vpop.f32.mrb[0].mxu0
        %10627 = vmatprep.mubr.bf16.mxu0 %v10007
        %10628 = vmatmul.mubr.bf16.gmra.mrb[0].mxu0 %v9622
        %v10629 = vpop.f32.mrb[0].mxu0
        %v10630 = vadd.f32 %v9821, %v10629
        %v10631 = vpop.f32.mrb[0].mxu0
        %v10632 = vpop.f32.mrb[0].mxu0
        %v10633 = vadd.f32 %v9821, %v10632
        %v10634 = vpop.f32.mrb[0].mxu0
        %10635 = vmatprep.mubr.bf16.mxu0 %v10010
        %10636 = vmatmul.mubr.bf16.gmra.mrb[0].mxu0 %v9624
        %v10637 = vpop.f32.mrb[0].mxu0
        %v10638 = vadd.f32 %v9821, %v10637
        %v10639 = vpop.f32.mrb[0].mxu0
        %v10640 = vpop.f32.mrb[0].mxu0
        %v10641 = vadd.f32 %v9821, %v10640
        %v10642 = vpop.f32.mrb[0].mxu0
        %10643 = vmatprep.mubr.bf16.mxu0 %v10013
        %10644 = vmatmul.mubr.bf16.gmra.mrb[0].mxu0 %v9626
        %v10645 = vpop.f32.mrb[0].mxu0
        %v10646 = vadd.f32 %v9821, %v10645
        %v10647 = vpop.f32.mrb[0].mxu0
        %v10648 = vpop.f32.mrb[0].mxu0
        %v10649 = vadd.f32 %v9821, %v10648
        %v10650 = vpop.f32.mrb[0].mxu0
        %10651 = vmatprep.mubr.bf16.mxu0 %v10016
        %10652 = vmatmul.mubr.bf16.gmra.mrb[0].mxu0 %v9628
        %v10653 = vpop.f32.mrb[0].mxu0
        %v10654 = vadd.f32 %v9821, %v10653
        %v10655 = vpop.f32.mrb[0].mxu0
        %v10656 = vpop.f32.mrb[0].mxu0
        %v10657 = vadd.f32 %v9821, %v10656
        %v10658 = vpop.f32.mrb[0].mxu0
        %10659 = vmatprep.mubr.bf16.mxu0 %v10019
        %10660 = vmatmul.mubr.bf16.gmra.mrb[0].mxu0 %v9630
        %v10661 = vpop.f32.mrb[0].mxu0
        %v10662 = vadd.f32 %v9821, %v10661
        %v10663 = vpop.f32.mrb[0].mxu0
        %v10664 = vpop.f32.mrb[0].mxu0
        %v10665 = vadd.f32 %v9821, %v10664
        %v10666 = vpop.f32.mrb[0].mxu0
        %10667 = vmatprep.mubr.bf16.mxu0 %v10022
        %10668 = vmatmul.mubr.bf16.gmra.mrb[0].mxu0 %v9632
        %v10669 = vpop.f32.mrb[0].mxu0
        %v10670 = vadd.f32 %v9821, %v10669
        %v10671 = vpop.f32.mrb[0].mxu0
        %v10672 = vpop.f32.mrb[0].mxu0
        %v10673 = vadd.f32 %v9821, %v10672
        %v10674 = vpop.f32.mrb[0].mxu0
        %10675 = vmatprep.mubr.bf16.mxu0 %v10025
        %10676 = vmatmul.mubr.bf16.gmra.mrb[0].mxu0 %v9634
        %v10677 = vpop.f32.mrb[0].mxu0
        %v10678 = vadd.f32 %v9821, %v10677
        %v10679 = vpop.f32.mrb[0].mxu0
        %v10680 = vpop.f32.mrb[0].mxu0
        %v10681 = vadd.f32 %v9821, %v10680
        %v10682 = vpop.f32.mrb[0].mxu0
        %10683 = vmatprep.mubr.bf16.mxu0 %v10028
        %10684 = vmatmul.mubr.bf16.gmra.mrb[0].mxu0 %v9636
        %v10685 = vpop.f32.mrb[0].mxu0
        %v10686 = vadd.f32 %v9821, %v10685
        %v10687 = vpop.f32.mrb[0].mxu0
        %v10688 = vpop.f32.mrb[0].mxu0
        %v10689 = vadd.f32 %v9821, %v10688
        %v10690 = vpop.f32.mrb[0].mxu0
        %10691 = vmatprep.mubr.bf16.mxu0 %v10031
        %10692 = vmatmul.mubr.bf16.gmra.mrb[0].mxu0 %v9638
        %v10693 = vpop.f32.mrb[0].mxu0
        %v10694 = vadd.f32 %v9821, %v10693
        %v10695 = vpop.f32.mrb[0].mxu0
        %v10696 = vpop.f32.mrb[0].mxu0
        %v10697 = vadd.f32 %v9821, %v10696
        %v10698 = vpop.f32.mrb[0].mxu0
        %10699 = vmatprep.mubr.bf16.mxu0 %v10034
        %10700 = vmatmul.mubr.bf16.gmra.mrb[0].mxu0 %v9640
        %v10701 = vpop.f32.mrb[0].mxu0
        %v10702 = vadd.f32 %v9821, %v10701
        %v10703 = vpop.f32.mrb[0].mxu0
        %v10704 = vpop.f32.mrb[0].mxu0
        %v10705 = vadd.f32 %v9821, %v10704
        %v10706 = vpop.f32.mrb[0].mxu0
        %10707 = vmatprep.mubr.bf16.mxu0 %v10037
        %10708 = vmatmul.mubr.bf16.gmra.mrb[0].mxu0 %v9642
        %v10709 = vpop.f32.mrb[0].mxu0
        %v10710 = vadd.f32 %v9821, %v10709
        %v10711 = vpop.f32.mrb[0].mxu0
        %v10712 = vpop.f32.mrb[0].mxu0
        %v10713 = vadd.f32 %v9821, %v10712
        %v10714 = vpop.f32.mrb[0].mxu0
        %10715 = vmatprep.mubr.bf16.mxu0 %v10040
        %10716 = vmatmul.mubr.bf16.gmra.mrb[0].mxu0 %v9644
        %v10717 = vpop.f32.mrb[0].mxu0
        %v10718 = vadd.f32 %v9821, %v10717
        %v10719 = vpop.f32.mrb[0].mxu0
        %v10720 = vpop.f32.mrb[0].mxu0
        %v10721 = vadd.f32 %v9821, %v10720
        %v10722 = vpop.f32.mrb[0].mxu0
        %10723 = vmatprep.mubr.bf16.mxu0 %v10043
        %10724 = vmatmul.mubr.bf16.gmra.mrb[0].mxu0 %v9646
        %v10725 = vpop.f32.mrb[0].mxu0
        %v10726 = vadd.f32 %v9821, %v10725
        %v10727 = vpop.f32.mrb[0].mxu0
        %v10728 = vpop.f32.mrb[0].mxu0
        %v10729 = vadd.f32 %v9821, %v10728
        %v10730 = vpop.f32.mrb[0].mxu0
        %10731 = vmatprep.mubr.bf16.mxu0 %v10046
        %10732 = vmatmul.mubr.bf16.gmra.mrb[0].mxu0 %v9648
        %v10733 = vpop.f32.mrb[0].mxu0
        %v10734 = vadd.f32 %v9821, %v10733
        %v10735 = vpop.f32.mrb[0].mxu0
        %v10736 = vpop.f32.mrb[0].mxu0
        %v10737 = vadd.f32 %v9821, %v10736
        %v10738 = vpop.f32.mrb[0].mxu0
        %10739 = vmatprep.mubr.bf16.mxu0 %v10049
        %10740 = vmatmul.mubr.bf16.gmra.mrb[0].mxu0 %v9650
        %v10741 = vpop.f32.mrb[0].mxu0
        %v10742 = vadd.f32 %v9821, %v10741
        %v10743 = vpop.f32.mrb[0].mxu0
        %v10744 = vpop.f32.mrb[0].mxu0
        %v10745 = vadd.f32 %v9821, %v10744
        %v10746 = vpop.f32.mrb[0].mxu0
        %10747 = vmatprep.mubr.bf16.mxu0 %v10052
        %10748 = vmatmul.mubr.bf16.gmra.mrb[0].mxu0 %v9652
        %v10749 = vpop.f32.mrb[0].mxu0
        %v10750 = vadd.f32 %v9821, %v10749
        %v10751 = vpop.f32.mrb[0].mxu0
        %v10752 = vpop.f32.mrb[0].mxu0
        %v10753 = vadd.f32 %v9821, %v10752
        %v10754 = vpop.f32.mrb[0].mxu0
        %10755 = vmatprep.mubr.bf16.mxu0 %v10055
        %10756 = vmatmul.mubr.bf16.gmra.mrb[0].mxu0 %v9654
        %v10757 = vpop.f32.mrb[0].mxu0
        %v10758 = vadd.f32 %v9821, %v10757
        %v10759 = vpop.f32.mrb[0].mxu0
        %v10760 = vpop.f32.mrb[0].mxu0
        %v10761 = vadd.f32 %v9821, %v10760
        %v10762 = vpop.f32.mrb[0].mxu0
        %10763 = vmatprep.mubr.bf16.mxu0 %v10058
        %10764 = vmatmul.mubr.bf16.gmra.mrb[0].mxu0 %v9656
        %v10765 = vpop.f32.mrb[0].mxu0
        %v10766 = vadd.f32 %v9821, %v10765
        %v10767 = vpop.f32.mrb[0].mxu0
        %v10768 = vpop.f32.mrb[0].mxu0
        %v10769 = vadd.f32 %v9821, %v10768
        %v10770 = vpop.f32.mrb[0].mxu0
        %10771 = vmatprep.mubr.bf16.mxu0 %v10061
        %10772 = vmatmul.mubr.bf16.gmra.mrb[0].mxu0 %v9658
        %v10773 = vpop.f32.mrb[0].mxu0
        %v10774 = vadd.f32 %v9821, %v10773
        %v10775 = vpop.f32.mrb[0].mxu0
        %v10776 = vpop.f32.mrb[0].mxu0
        %v10777 = vadd.f32 %v9821, %v10776
        %v10778 = vpop.f32.mrb[0].mxu0
        %10779 = vmatprep.mubr.bf16.mxu0 %v10064
        %10780 = vmatmul.mubr.bf16.gmra.mrb[0].mxu0 %v9660
        %v10781 = vpop.f32.mrb[0].mxu0
        %v10782 = vadd.f32 %v9821, %v10781
        %v10783 = vpop.f32.mrb[0].mxu0
        %v10784 = vpop.f32.mrb[0].mxu0
        %v10785 = vadd.f32 %v9821, %v10784
        %v10786 = vpop.f32.mrb[0].mxu0
        %10787 = vmatprep.mubr.bf16.mxu0 %v10067
        %10788 = vmatmul.mubr.bf16.gmra.mrb[0].mxu0 %v9662
        %v10789 = vpop.f32.mrb[0].mxu0
        %v10790 = vadd.f32 %v9821, %v10789
        %v10791 = vpop.f32.mrb[0].mxu0
        %v10792 = vpop.f32.mrb[0].mxu0
        %v10793 = vadd.f32 %v9821, %v10792
        %v10794 = vpop.f32.mrb[0].mxu0
        %10795 = vmatprep.mubr.bf16.mxu0 %v10070
        %10796 = vmatmul.mubr.bf16.gmra.mrb[0].mxu0 %v9664
        %v10797 = vpop.f32.mrb[0].mxu0
        %v10798 = vadd.f32 %v9821, %v10797
        %v10799 = vpop.f32.mrb[0].mxu0
        %v10800 = vpop.f32.mrb[0].mxu0
        %v10801 = vadd.f32 %v9821, %v10800
        %v10802 = vpop.f32.mrb[0].mxu0
        %10803 = vmatprep.mubr.bf16.mxu0 %v10073
        %10804 = vmatmul.mubr.bf16.gmra.mrb[0].mxu0 %v9666
        %v10805 = vpop.f32.mrb[0].mxu0
        %v10806 = vadd.f32 %v9821, %v10805
        %v10807 = vpop.f32.mrb[0].mxu0
        %v10808 = vpop.f32.mrb[0].mxu0
        %v10809 = vadd.f32 %v9821, %v10808
        %v10810 = vpop.f32.mrb[0].mxu0
        %10811 = vmatprep.mubr.bf16.mxu0 %v10076
        %10812 = vmatmul.mubr.bf16.gmra.mrb[0].mxu0 %v9668
        %v10813 = vpop.f32.mrb[0].mxu0
        %v10814 = vadd.f32 %v9821, %v10813
        %v10815 = vpop.f32.mrb[0].mxu0
        %v10816 = vpop.f32.mrb[0].mxu0
        %v10817 = vadd.f32 %v9821, %v10816
        %v10818 = vpop.f32.mrb[0].mxu0
        %10819 = vmatprep.mubr.bf16.mxu0 %v10079
        %10820 = vmatmul.mubr.bf16.gmra.mrb[0].mxu0 %v9670
        %v10821 = vpop.f32.mrb[0].mxu0
        %v10822 = vadd.f32 %v9821, %v10821
        %v10823 = vpop.f32.mrb[0].mxu0
        %v10824 = vpop.f32.mrb[0].mxu0
        %v10825 = vadd.f32 %v9821, %v10824
        %v10826 = vpop.f32.mrb[0].mxu0
        %10827 = vmatprep.mubr.bf16.mxu0 %v10082
        %10828 = vmatmul.mubr.bf16.gmra.mrb[0].mxu0 %v9672
        %v10829 = vpop.f32.mrb[0].mxu0
        %v10830 = vadd.f32 %v9821, %v10829
        %v10831 = vpop.f32.mrb[0].mxu0
        %v10832 = vpop.f32.mrb[0].mxu0
        %v10833 = vadd.f32 %v9821, %v10832
        %v10834 = vpop.f32.mrb[0].mxu0
        %10835 = vmatprep.mubr.bf16.mxu0 %v10085
        %10836 = vmatmul.mubr.bf16.gmra.mrb[0].mxu0 %v9674
        %v10837 = vpop.f32.mrb[0].mxu0
        %v10838 = vadd.f32 %v9821, %v10837
        %v10839 = vpop.f32.mrb[0].mxu0
        %v10840 = vpop.f32.mrb[0].mxu0
        %v10841 = vadd.f32 %v9821, %v10840
        %v10842 = vpop.f32.mrb[0].mxu0
        %10843 = vmatprep.mubr.bf16.mxu0 %v10088
        %10844 = vmatmul.mubr.bf16.gmra.mrb[0].mxu0 %v9676
        %v10845 = vpop.f32.mrb[0].mxu0
        %v10846 = vadd.f32 %v9821, %v10845
        %v10847 = vpop.f32.mrb[0].mxu0
        %v10848 = vpop.f32.mrb[0].mxu0
        %v10849 = vadd.f32 %v9821, %v10848
        %v10850 = vpop.f32.mrb[0].mxu0
        %10851 = vmatprep.mubr.bf16.mxu0 %v10091
        %10852 = vmatmul.mubr.bf16.gmra.mrb[0].mxu0 %v9678
        %v10853 = vpop.f32.mrb[0].mxu0
        %v10854 = vadd.f32 %v9821, %v10853
        %v10855 = vpop.f32.mrb[0].mxu0
        %v10856 = vpop.f32.mrb[0].mxu0
        %v10857 = vadd.f32 %v9821, %v10856
        %v10858 = vpop.f32.mrb[0].mxu0
        %10859 = vmatprep.mubr.bf16.mxu0 %v10094
        %10860 = vmatmul.mubr.bf16.gmra.mrb[0].mxu0 %v9680
        %v10861 = vpop.f32.mrb[0].mxu0
        %v10862 = vadd.f32 %v9821, %v10861
        %v10863 = vpop.f32.mrb[0].mxu0
        %v10864 = vpop.f32.mrb[0].mxu0
        %v10865 = vadd.f32 %v9821, %v10864
        %v10866 = vpop.f32.mrb[0].mxu0
        %10867 = vmatprep.mubr.bf16.mxu0 %v10097
        %10868 = vmatmul.mubr.bf16.gmra.mrb[0].mxu0 %v9682
        %v10869 = vpop.f32.mrb[0].mxu0
        %v10870 = vadd.f32 %v9821, %v10869
        %v10871 = vpop.f32.mrb[0].mxu0
        %v10872 = vpop.f32.mrb[0].mxu0
        %v10873 = vadd.f32 %v9821, %v10872
        %v10874 = vpop.f32.mrb[0].mxu0
        %10875 = vmatprep.mubr.bf16.mxu0 %v10100
        %10876 = vmatmul.mubr.bf16.gmra.mrb[0].mxu0 %v9684
        %v10877 = vpop.f32.mrb[0].mxu0
        %v10878 = vadd.f32 %v9821, %v10877
        %v10879 = vpop.f32.mrb[0].mxu0
        %v10880 = vpop.f32.mrb[0].mxu0
        %v10881 = vadd.f32 %v9821, %v10880
        %v10882 = vpop.f32.mrb[0].mxu0
        %10883 = vmatprep.mubr.bf16.mxu0 %v10103
        %10884 = vmatmul.mubr.bf16.gmra.mrb[0].mxu0 %v9686
        %v10885 = vpop.f32.mrb[0].mxu0
        %v10886 = vadd.f32 %v9821, %v10885
        %v10887 = vpop.f32.mrb[0].mxu0
        %v10888 = vpop.f32.mrb[0].mxu0
        %v10889 = vadd.f32 %v9821, %v10888
        %v10890 = vpop.f32.mrb[0].mxu0
        %10891 = vmatprep.mubr.bf16.mxu0 %v10106
        %10892 = vmatmul.mubr.bf16.gmra.mrb[0].mxu0 %v9688
        %v10893 = vpop.f32.mrb[0].mxu0
        %v10894 = vadd.f32 %v9821, %v10893
        %v10895 = vpop.f32.mrb[0].mxu0
        %v10896 = vpop.f32.mrb[0].mxu0
        %v10897 = vadd.f32 %v9821, %v10896
        %v10898 = vpop.f32.mrb[0].mxu0
        %10899 = vmatprep.mubr.bf16.mxu0 %v10109
        %10900 = vmatmul.mubr.bf16.gmra.mrb[0].mxu0 %v9690
        %v10901 = vpop.f32.mrb[0].mxu0
        %v10902 = vadd.f32 %v9821, %v10901
        %v10903 = vpop.f32.mrb[0].mxu0
        %v10904 = vpop.f32.mrb[0].mxu0
        %v10905 = vadd.f32 %v9821, %v10904
        %v10906 = vpop.f32.mrb[0].mxu0
        %10907 = vmatprep.mubr.bf16.mxu0 %v10112
        %10908 = vmatmul.mubr.bf16.gmra.mrb[0].mxu0 %v9692
        %v10909 = vpop.f32.mrb[0].mxu0
        %v10910 = vadd.f32 %v9821, %v10909
        %v10911 = vpop.f32.mrb[0].mxu0
        %v10912 = vpop.f32.mrb[0].mxu0
        %v10913 = vadd.f32 %v9821, %v10912
        %v10914 = vpop.f32.mrb[0].mxu0
        %10915 = vmatprep.mubr.bf16.mxu0 %v10115
        %10916 = vmatmul.mubr.bf16.gmra.mrb[0].mxu0 %v9694
        %v10917 = vpop.f32.mrb[0].mxu0
        %v10918 = vadd.f32 %v9821, %v10917
        %v10919 = vpop.f32.mrb[0].mxu0
        %v10920 = vpop.f32.mrb[0].mxu0
        %v10921 = vadd.f32 %v9821, %v10920
        %v10922 = vpop.f32.mrb[0].mxu0
        %10923 = vmatprep.mubr.bf16.mxu0 %v10118
        %10924 = vmatmul.mubr.bf16.gmra.mrb[0].mxu0 %v9696
        %v10925 = vpop.f32.mrb[0].mxu0
        %v10926 = vadd.f32 %v9821, %v10925
        %v10927 = vpop.f32.mrb[0].mxu0
        %v10928 = vpop.f32.mrb[0].mxu0
        %v10929 = vadd.f32 %v9821, %v10928
        %v10930 = vpop.f32.mrb[0].mxu0
        %10931 = vmatprep.mubr.bf16.mxu0 %v10121
        %10932 = vmatmul.mubr.bf16.gmra.mrb[0].mxu0 %v9698
        %v10933 = vpop.f32.mrb[0].mxu0
        %v10934 = vadd.f32 %v9821, %v10933
        %v10935 = vpop.f32.mrb[0].mxu0
        %v10936 = vpop.f32.mrb[0].mxu0
        %v10937 = vadd.f32 %v9821, %v10936
        %v10938 = vpop.f32.mrb[0].mxu0
        %10939 = vmatprep.mubr.bf16.mxu0 %v10124
        %10940 = vmatmul.mubr.bf16.gmra.mrb[0].mxu0 %v9700
        %v10941 = vpop.f32.mrb[0].mxu0
        %v10942 = vadd.f32 %v9821, %v10941
        %v10943 = vpop.f32.mrb[0].mxu0
        %v10944 = vpop.f32.mrb[0].mxu0
        %v10945 = vadd.f32 %v9821, %v10944
        %v10946 = vpop.f32.mrb[0].mxu0
        %10947 = vmatprep.mubr.bf16.mxu0 %v10127
        %10948 = vmatmul.mubr.bf16.gmra.mrb[0].mxu0 %v9702
        %v10949 = vpop.f32.mrb[0].mxu0
        %v10950 = vadd.f32 %v9821, %v10949
        %v10951 = vpop.f32.mrb[0].mxu0
        %v10952 = vpop.f32.mrb[0].mxu0
        %v10953 = vadd.f32 %v9821, %v10952
        %v10954 = vpop.f32.mrb[0].mxu0
        %10955 = vmatprep.mubr.bf16.mxu0 %v10130
        %10956 = vmatmul.mubr.bf16.gmra.mrb[0].mxu0 %v9704
        %v10957 = vpop.f32.mrb[0].mxu0
        %v10958 = vadd.f32 %v9821, %v10957
        %v10959 = vpop.f32.mrb[0].mxu0
        %v10960 = vpop.f32.mrb[0].mxu0
        %v10961 = vadd.f32 %v9821, %v10960
        %v10962 = vpop.f32.mrb[0].mxu0
        %10963 = vmatprep.mubr.bf16.mxu0 %v10133
        %10964 = vmatmul.mubr.bf16.gmra.mrb[0].mxu0 %v9706
        %v10965 = vpop.f32.mrb[0].mxu0
        %v10966 = vadd.f32 %v9821, %v10965
        %v10967 = vpop.f32.mrb[0].mxu0
        %v10968 = vpop.f32.mrb[0].mxu0
        %v10969 = vadd.f32 %v9821, %v10968
        %v10970 = vpop.f32.mrb[0].mxu0
        %10971 = vmatprep.mubr.bf16.mxu0 %v10136
        %10972 = vmatmul.mubr.bf16.gmra.mrb[0].mxu0 %v9708
        %v10973 = vpop.f32.mrb[0].mxu0
        %v10974 = vadd.f32 %v9821, %v10973
        %v10975 = vpop.f32.mrb[0].mxu0
        %v10976 = vpop.f32.mrb[0].mxu0
        %v10977 = vadd.f32 %v9821, %v10976
        %v10978 = vpop.f32.mrb[0].mxu0
        %10979 = vmatprep.mubr.bf16.mxu0 %v10139
        %10980 = vmatmul.mubr.bf16.gmra.mrb[0].mxu0 %v9710
        %v10981 = vpop.f32.mrb[0].mxu0
        %v10982 = vadd.f32 %v9821, %v10981
        %v10983 = vpop.f32.mrb[0].mxu0
        %v10984 = vpop.f32.mrb[0].mxu0
        %v10985 = vadd.f32 %v9821, %v10984
        %v10986 = vpop.f32.mrb[0].mxu0
        %10987 = vmatprep.mubr.bf16.mxu0 %v10142
        %10988 = vmatmul.mubr.bf16.gmra.mrb[0].mxu0 %v9712
        %v10989 = vpop.f32.mrb[0].mxu0
        %v10990 = vadd.f32 %v9821, %v10989
        %v10991 = vpop.f32.mrb[0].mxu0
        %v10992 = vpop.f32.mrb[0].mxu0
        %v10993 = vadd.f32 %v9821, %v10992
        %v10994 = vpop.f32.mrb[0].mxu0
        %10995 = vmatprep.mubr.bf16.mxu0 %v10145
        %10996 = vmatmul.mubr.bf16.gmra.mrb[0].mxu0 %v9714
        %v10997 = vpop.f32.mrb[0].mxu0
        %v10998 = vadd.f32 %v9821, %v10997
        %v10999 = vpop.f32.mrb[0].mxu0
        %v11000 = vpop.f32.mrb[0].mxu0
        %v11001 = vadd.f32 %v9821, %v11000
        %v11002 = vpop.f32.mrb[0].mxu0
        %11003 = vmatprep.mubr.bf16.mxu0 %v10148
        %11004 = vmatmul.mubr.bf16.gmra.mrb[0].mxu0 %v9716
        %v11005 = vpop.f32.mrb[0].mxu0
        %v11006 = vadd.f32 %v9821, %v11005
        %v11007 = vpop.f32.mrb[0].mxu0
        %v11008 = vpop.f32.mrb[0].mxu0
        %v11009 = vadd.f32 %v9821, %v11008
        %v11010 = vpop.f32.mrb[0].mxu0
        %11011 = vmatprep.mubr.bf16.mxu0 %v10151
        %11012 = vmatmul.mubr.bf16.gmra.mrb[0].mxu0 %v9718
        %v11013 = vpop.f32.mrb[0].mxu0
        %v11014 = vadd.f32 %v9821, %v11013
        %v11015 = vpop.f32.mrb[0].mxu0
        %v11016 = vpop.f32.mrb[0].mxu0
        %v11017 = vadd.f32 %v9821, %v11016
        %v11018 = vpop.f32.mrb[0].mxu0
        %11019 = vmatprep.mubr.bf16.mxu0 %v10154
        %11020 = vmatmul.mubr.bf16.gmra.mrb[0].mxu0 %v9720
        %v11021 = vpop.f32.mrb[0].mxu0
        %v11022 = vadd.f32 %v9821, %v11021
        %v11023 = vpop.f32.mrb[0].mxu0
        %v11024 = vpop.f32.mrb[0].mxu0
        %v11025 = vadd.f32 %v9821, %v11024
        %v11026 = vpop.f32.mrb[0].mxu0
        %11027 = vmatprep.mubr.bf16.mxu0 %v10157
        %11028 = vmatmul.mubr.bf16.gmra.mrb[0].mxu0 %v9722
        %v11029 = vpop.f32.mrb[0].mxu0
        %v11030 = vadd.f32 %v9821, %v11029
        %v11031 = vpop.f32.mrb[0].mxu0
        %v11032 = vpop.f32.mrb[0].mxu0
        %v11033 = vadd.f32 %v9821, %v11032
        %v11034 = vpop.f32.mrb[0].mxu0
        %11035 = vmatprep.mubr.bf16.mxu0 %v10160
        %11036 = vmatmul.mubr.bf16.gmra.mrb[0].mxu0 %v9724
        %v11037 = vpop.f32.mrb[0].mxu0
        %v11038 = vadd.f32 %v9821, %v11037
        %v11039 = vpop.f32.mrb[0].mxu0
        %v11040 = vpop.f32.mrb[0].mxu0
        %v11041 = vadd.f32 %v9821, %v11040
        %v11042 = vpop.f32.mrb[0].mxu0
        %11043 = vmatprep.mubr.bf16.mxu0 %v10163
        %11044 = vmatmul.mubr.bf16.gmra.mrb[0].mxu0 %v9726
        %v11045 = vpop.f32.mrb[0].mxu0
        %v11046 = vadd.f32 %v9821, %v11045
        %v11047 = vpop.f32.mrb[0].mxu0
        %v11048 = vpop.f32.mrb[0].mxu0
        %v11049 = vadd.f32 %v9821, %v11048
        %v11050 = vpop.f32.mrb[0].mxu0
        %11051 = vmatprep.mubr.bf16.mxu0 %v10166
        %11052 = vmatmul.mubr.bf16.gmra.mrb[0].mxu0 %v9728
        %v11053 = vpop.f32.mrb[0].mxu0
        %v11054 = vadd.f32 %v9821, %v11053
        %v11055 = vpop.f32.mrb[0].mxu0
        %v11056 = vpop.f32.mrb[0].mxu0
        %v11057 = vadd.f32 %v9821, %v11056
        %v11058 = vpop.f32.mrb[0].mxu0
        %11059 = vmatprep.mubr.bf16.mxu0 %v10169
        %11060 = vmatmul.mubr.bf16.gmra.mrb[0].mxu0 %v9730
        %v11061 = vpop.f32.mrb[0].mxu0
        %v11062 = vadd.f32 %v9821, %v11061
        %v11063 = vpop.f32.mrb[0].mxu0
        %v11064 = vpop.f32.mrb[0].mxu0
        %v11065 = vadd.f32 %v9821, %v11064
        %v11066 = vpop.f32.mrb[0].mxu0
        %11067 = vmatprep.mubr.bf16.mxu0 %v10172
        %11068 = vmatmul.mubr.bf16.gmra.mrb[0].mxu0 %v9732
        %v11069 = vpop.f32.mrb[0].mxu0
        %v11070 = vadd.f32 %v9821, %v11069
        %v11071 = vpop.f32.mrb[0].mxu0
        %v11072 = vpop.f32.mrb[0].mxu0
        %v11073 = vadd.f32 %v9821, %v11072
        %v11074 = vpop.f32.mrb[0].mxu0
        %11075 = vmatprep.mubr.bf16.mxu0 %v10175
        %11076 = vmatmul.mubr.bf16.gmra.mrb[0].mxu0 %v9734
        %v11077 = vpop.f32.mrb[0].mxu0
        %v11078 = vadd.f32 %v9821, %v11077
        %v11079 = vpop.f32.mrb[0].mxu0
        %v11080 = vpop.f32.mrb[0].mxu0
        %v11081 = vadd.f32 %v9821, %v11080
        %v11082 = vpop.f32.mrb[0].mxu0
        %11083 = vmatprep.mubr.bf16.mxu0 %v10178
        %11084 = vmatmul.mubr.bf16.gmra.mrb[0].mxu0 %v9736
        %v11085 = vpop.f32.mrb[0].mxu0
        %v11086 = vadd.f32 %v9821, %v11085
        %v11087 = vpop.f32.mrb[0].mxu0
        %v11088 = vpop.f32.mrb[0].mxu0
        %v11089 = vadd.f32 %v9821, %v11088
        %v11090 = vpop.f32.mrb[0].mxu0
        %11091 = vmatprep.mubr.bf16.mxu0 %v10181
        %11092 = vmatmul.mubr.bf16.gmra.mrb[0].mxu0 %v9738
        %v11093 = vpop.f32.mrb[0].mxu0
        %v11094 = vadd.f32 %v9821, %v11093
        %v11095 = vpop.f32.mrb[0].mxu0
        %v11096 = vpop.f32.mrb[0].mxu0
        %v11097 = vadd.f32 %v9821, %v11096
        %v11098 = vpop.f32.mrb[0].mxu0
        %11099 = vmatprep.mubr.bf16.mxu0 %v10184
        %11100 = vmatmul.mubr.bf16.gmra.mrb[0].mxu0 %v9740
        %v11101 = vpop.f32.mrb[0].mxu0
        %v11102 = vadd.f32 %v9821, %v11101
        %v11103 = vpop.f32.mrb[0].mxu0
        %v11104 = vpop.f32.mrb[0].mxu0
        %v11105 = vadd.f32 %v9821, %v11104
        %v11106 = vpop.f32.mrb[0].mxu0
        %11107 = vmatprep.mubr.bf16.mxu0 %v10187
        %11108 = vmatmul.mubr.bf16.gmra.mrb[0].mxu0 %v9742
        %v11109 = vpop.f32.mrb[0].mxu0
        %v11110 = vadd.f32 %v9821, %v11109
        %v11111 = vpop.f32.mrb[0].mxu0
        %v11112 = vpop.f32.mrb[0].mxu0
        %v11113 = vadd.f32 %v9821, %v11112
        %v11114 = vpop.f32.mrb[0].mxu0
        %11115 = vmatprep.mubr.bf16.mxu0 %v10190
        %11116 = vmatmul.mubr.bf16.gmra.mrb[0].mxu0 %v9744
        %v11117 = vpop.f32.mrb[0].mxu0
        %v11118 = vadd.f32 %v9821, %v11117
        %v11119 = vpop.f32.mrb[0].mxu0
        %v11120 = vpop.f32.mrb[0].mxu0
        %v11121 = vadd.f32 %v9821, %v11120
        %v11122 = vpop.f32.mrb[0].mxu0
        %11123 = vmatprep.mubr.bf16.mxu0 %v10193
        %11124 = vmatmul.mubr.bf16.gmra.mrb[0].mxu0 %v9746
        %v11125 = vpop.f32.mrb[0].mxu0
        %v11126 = vadd.f32 %v9821, %v11125
        %v11127 = vpop.f32.mrb[0].mxu0
        %v11128 = vpop.f32.mrb[0].mxu0
        %v11129 = vadd.f32 %v9821, %v11128
        %v11130 = vpop.f32.mrb[0].mxu0
        %11131 = vmatprep.mubr.bf16.mxu0 %v10196
        %11132 = vmatmul.mubr.bf16.gmra.mrb[0].mxu0 %v9748
        %v11133 = vpop.f32.mrb[0].mxu0
        %v11134 = vadd.f32 %v9821, %v11133
        %v11135 = vpop.f32.mrb[0].mxu0
        %v11136 = vpop.f32.mrb[0].mxu0
        %v11137 = vadd.f32 %v9821, %v11136
        %v11138 = vpop.f32.mrb[0].mxu0
        %11139 = vmatprep.mubr.bf16.mxu0 %v10199
        %11140 = vmatmul.mubr.bf16.gmra.mrb[0].mxu0 %v9750
        %v11141 = vpop.f32.mrb[0].mxu0
        %v11142 = vadd.f32 %v9821, %v11141
        %v11143 = vpop.f32.mrb[0].mxu0
        %v11144 = vpop.f32.mrb[0].mxu0
        %v11145 = vadd.f32 %v9821, %v11144
        %v11146 = vpop.f32.mrb[0].mxu0
        %11147 = vmatprep.mubr.bf16.mxu0 %v10202
        %11148 = vmatmul.mubr.bf16.gmra.mrb[0].mxu0 %v9752
        %v11149 = vpop.f32.mrb[0].mxu0
        %v11150 = vadd.f32 %v9821, %v11149
        %v11151 = vpop.f32.mrb[0].mxu0
        %v11152 = vpop.f32.mrb[0].mxu0
        %v11153 = vadd.f32 %v9821, %v11152
        %v11154 = vpop.f32.mrb[0].mxu0
        %11155 = vmatprep.mubr.bf16.mxu0 %v10205
        %11156 = vmatmul.mubr.bf16.gmra.mrb[0].mxu0 %v9754
        %v11157 = vpop.f32.mrb[0].mxu0
        %v11158 = vadd.f32 %v9821, %v11157
        %v11159 = vpop.f32.mrb[0].mxu0
        %v11160 = vpop.f32.mrb[0].mxu0
        %v11161 = vadd.f32 %v9821, %v11160
        %v11162 = vpop.f32.mrb[0].mxu0
        %11163 = vmatprep.mubr.bf16.mxu0 %v10208
        %11164 = vmatmul.mubr.bf16.gmra.mrb[0].mxu0 %v9756
        %v11165 = vpop.f32.mrb[0].mxu0
        %v11166 = vadd.f32 %v9821, %v11165
        %v11167 = vpop.f32.mrb[0].mxu0
        %v11168 = vpop.f32.mrb[0].mxu0
        %v11169 = vadd.f32 %v9821, %v11168
        %v11170 = vpop.f32.mrb[0].mxu0
        %11171 = vmatprep.mubr.bf16.mxu0 %v10211
        %11172 = vmatmul.mubr.bf16.gmra.mrb[0].mxu0 %v9758
        %v11173 = vpop.f32.mrb[0].mxu0
        %v11174 = vadd.f32 %v9821, %v11173
        %v11175 = vpop.f32.mrb[0].mxu0
        %v11176 = vpop.f32.mrb[0].mxu0
        %v11177 = vadd.f32 %v9821, %v11176
        %v11178 = vpop.f32.mrb[0].mxu0
        %11179 = vmatprep.mubr.bf16.mxu0 %v10214
        %11180 = vmatmul.mubr.bf16.gmra.mrb[0].mxu0 %v9760
        %v11181 = vpop.f32.mrb[0].mxu0
        %v11182 = vadd.f32 %v9821, %v11181
        %v11183 = vpop.f32.mrb[0].mxu0
        %v11184 = vpop.f32.mrb[0].mxu0
        %v11185 = vadd.f32 %v9821, %v11184
        %v11186 = vpop.f32.mrb[0].mxu0
        %11187 = vmatprep.mubr.bf16.mxu0 %v10217
        %11188 = vmatmul.mubr.bf16.gmra.mrb[0].mxu0 %v9762
        %v11189 = vpop.f32.mrb[0].mxu0
        %v11190 = vadd.f32 %v9821, %v11189
        %v11191 = vpop.f32.mrb[0].mxu0
        %v11192 = vpop.f32.mrb[0].mxu0
        %v11193 = vadd.f32 %v9821, %v11192
        %v11194 = vpop.f32.mrb[0].mxu0
        %11195 = vmatprep.mubr.bf16.mxu0 %v10220
        %11196 = vmatmul.mubr.bf16.gmra.mrb[0].mxu0 %v9764
        %v11197 = vpop.f32.mrb[0].mxu0
        %v11198 = vadd.f32 %v9821, %v11197
        %v11199 = vpop.f32.mrb[0].mxu0
        %v11200 = vpop.f32.mrb[0].mxu0
        %v11201 = vadd.f32 %v9821, %v11200
        %v11202 = vpop.f32.mrb[0].mxu0
        %11203 = vmatprep.mubr.bf16.mxu0 %v10223
        %11204 = vmatmul.mubr.bf16.gmra.mrb[0].mxu0 %v9766
        %v11205 = vpop.f32.mrb[0].mxu0
        %v11206 = vadd.f32 %v9821, %v11205
        %v11207 = vpop.f32.mrb[0].mxu0
        %v11208 = vpop.f32.mrb[0].mxu0
        %v11209 = vadd.f32 %v9821, %v11208
        %v11210 = vpop.f32.mrb[0].mxu0
        %11211 = vmatprep.mubr.bf16.mxu0 %v10226
        %11212 = vmatmul.mubr.bf16.gmra.mrb[0].mxu0 %v9768
        %v11213 = vpop.f32.mrb[0].mxu0
        %v11214 = vadd.f32 %v9821, %v11213
        %v11215 = vpop.f32.mrb[0].mxu0
        %v11216 = vpop.f32.mrb[0].mxu0
        %v11217 = vadd.f32 %v9821, %v11216
        %v11218 = vpop.f32.mrb[0].mxu0
        %11219 = vmatprep.mubr.bf16.mxu0 %v10229
        %11220 = vmatmul.mubr.bf16.gmra.mrb[0].mxu0 %v9770
        %v11221 = vpop.f32.mrb[0].mxu0
        %v11222 = vadd.f32 %v9821, %v11221
        %v11223 = vpop.f32.mrb[0].mxu0
        %v11224 = vpop.f32.mrb[0].mxu0
        %v11225 = vadd.f32 %v9821, %v11224
        %v11226 = vpop.f32.mrb[0].mxu0
        %11227 = vmatprep.mubr.bf16.mxu0 %v10232
        %11228 = vmatmul.mubr.bf16.gmra.mrb[0].mxu0 %v9772
        %v11229 = vpop.f32.mrb[0].mxu0
        %v11230 = vadd.f32 %v9821, %v11229
        %v11231 = vpop.f32.mrb[0].mxu0
        %v11232 = vpop.f32.mrb[0].mxu0
        %v11233 = vadd.f32 %v9821, %v11232
        %v11234 = vpop.f32.mrb[0].mxu0
        %11235 = vmatprep.mubr.bf16.mxu0 %v10235
        %11236 = vmatmul.mubr.bf16.gmra.mrb[0].mxu0 %v9774
        %v11237 = vpop.f32.mrb[0].mxu0
        %v11238 = vadd.f32 %v9821, %v11237
        %v11239 = vpop.f32.mrb[0].mxu0
        %v11240 = vpop.f32.mrb[0].mxu0
        %v11241 = vadd.f32 %v9821, %v11240
        %v11242 = vpop.f32.mrb[0].mxu0
        %11243 = vmatprep.mubr.bf16.mxu0 %v10238
        %11244 = vmatmul.mubr.bf16.gmra.mrb[0].mxu0 %v9776
        %v11245 = vpop.f32.mrb[0].mxu0
        %v11246 = vadd.f32 %v9821, %v11245
        %v11247 = vpop.f32.mrb[0].mxu0
        %v11248 = vpop.f32.mrb[0].mxu0
        %v11249 = vadd.f32 %v9821, %v11248
        %v11250 = vpop.f32.mrb[0].mxu0
        %11251 = vmatprep.mubr.bf16.mxu0 %v10241
        %11252 = vmatmul.mubr.bf16.gmra.mrb[0].mxu0 %v9778
        %v11253 = vpop.f32.mrb[0].mxu0
        %v11254 = vadd.f32 %v9821, %v11253
        %v11255 = vpop.f32.mrb[0].mxu0
        %v11256 = vpop.f32.mrb[0].mxu0
        %v11257 = vadd.f32 %v9821, %v11256
        %v11258 = vpop.f32.mrb[0].mxu0
        %11259 = vmatprep.mubr.bf16.mxu0 %v10244
        %11260 = vmatmul.mubr.bf16.gmra.mrb[0].mxu0 %v9780
        %v11261 = vpop.f32.mrb[0].mxu0
        %v11262 = vadd.f32 %v9821, %v11261
        %v11263 = vpop.f32.mrb[0].mxu0
        %v11264 = vpop.f32.mrb[0].mxu0
        %v11265 = vadd.f32 %v9821, %v11264
        %v11266 = vpop.f32.mrb[0].mxu0
        %11267 = vmatprep.mubr.bf16.mxu0 %v10247
        %11268 = vmatmul.mubr.bf16.gmra.mrb[0].mxu0 %v9782
        %v11269 = vpop.f32.mrb[0].mxu0
        %v11270 = vadd.f32 %v9821, %v11269
        %v11271 = vpop.f32.mrb[0].mxu0
        %v11272 = vpop.f32.mrb[0].mxu0
        %v11273 = vadd.f32 %v9821, %v11272
        %v11274 = vpop.f32.mrb[0].mxu0
        %11275 = vmatprep.mubr.bf16.mxu0 %v10250
        %11276 = vmatmul.mubr.bf16.gmra.mrb[0].mxu0 %v9784
        %v11277 = vpop.f32.mrb[0].mxu0
        %v11278 = vadd.f32 %v9821, %v11277
        %v11279 = vpop.f32.mrb[0].mxu0
        %v11280 = vpop.f32.mrb[0].mxu0
        %v11281 = vadd.f32 %v9821, %v11280
        %v11282 = vpop.f32.mrb[0].mxu0
        %11283 = vmatprep.mubr.bf16.mxu0 %v10253
        %11284 = vmatmul.mubr.bf16.gmra.mrb[0].mxu0 %v9786
        %v11285 = vpop.f32.mrb[0].mxu0
        %v11286 = vadd.f32 %v9821, %v11285
        %v11287 = vpop.f32.mrb[0].mxu0
        %v11288 = vpop.f32.mrb[0].mxu0
        %v11289 = vadd.f32 %v9821, %v11288
        %v11290 = vpop.f32.mrb[0].mxu0
        %11291 = vmatprep.mubr.bf16.mxu0 %v10256
        %11292 = vmatmul.mubr.bf16.gmra.mrb[0].mxu0 %v9788
        %v11293 = vpop.f32.mrb[0].mxu0
        %v11294 = vadd.f32 %v9821, %v11293
        %v11295 = vpop.f32.mrb[0].mxu0
        %v11296 = vpop.f32.mrb[0].mxu0
        %v11297 = vadd.f32 %v9821, %v11296
        %v11298 = vpop.f32.mrb[0].mxu0
        %11299 = vmatprep.mubr.bf16.mxu0 %v10259
        %11300 = vmatmul.mubr.bf16.gmra.mrb[0].mxu0 %v9790
        %v11301 = vpop.f32.mrb[0].mxu0
        %v11302 = vadd.f32 %v9821, %v11301
        %v11303 = vpop.f32.mrb[0].mxu0
        %v11304 = vpop.f32.mrb[0].mxu0
        %v11305 = vadd.f32 %v9821, %v11304
        %v11306 = vpop.f32.mrb[0].mxu0
        %11307 = vmatprep.mubr.bf16.mxu0 %v10262
        %11308 = vmatmul.mubr.bf16.gmra.mrb[0].mxu0 %v9792
        %v11309 = vpop.f32.mrb[0].mxu0
        %v11310 = vadd.f32 %v9821, %v11309
        %v11311 = vpop.f32.mrb[0].mxu0
        %v11312 = vpop.f32.mrb[0].mxu0
        %v11313 = vadd.f32 %v9821, %v11312
        %v11314 = vpop.f32.mrb[0].mxu0
        %11315 = vmatprep.mubr.bf16.mxu0 %v10265
        %11316 = vmatmul.mubr.bf16.gmra.mrb[0].mxu0 %v9794
        %v11317 = vpop.f32.mrb[0].mxu0
        %v11318 = vadd.f32 %v9821, %v11317
        %v11319 = vpop.f32.mrb[0].mxu0
        %v11320 = vpop.f32.mrb[0].mxu0
        %v11321 = vadd.f32 %v9821, %v11320
        %v11322 = vpop.f32.mrb[0].mxu0
        %11323 = vdwg.mxu0
        %v11324 = vmax.f32 %v10302, 0.0
        %v11325 = vmax.f32 %v10305, 0.0
        %v11326 = vmax.f32 %v10310, 0.0
        %v11327 = vmax.f32 %v10313, 0.0
        %v11328 = vmax.f32 %v10318, 0.0
        %v11329 = vmax.f32 %v10321, 0.0
        %v11330 = vmax.f32 %v10326, 0.0
        %v11331 = vmax.f32 %v10329, 0.0
        %v11332 = vmax.f32 %v10334, 0.0
        %v11333 = vmax.f32 %v10337, 0.0
        %v11334 = vmax.f32 %v10342, 0.0
        %v11335 = vmax.f32 %v10345, 0.0
        %v11336 = vmax.f32 %v10350, 0.0
        %v11337 = vmax.f32 %v10353, 0.0
        %v11338 = vmax.f32 %v10358, 0.0
        %v11339 = vmax.f32 %v10361, 0.0
        %v11340 = vmax.f32 %v10366, 0.0
        %v11341 = vmax.f32 %v10369, 0.0
        %v11342 = vmax.f32 %v10374, 0.0
        %v11343 = vmax.f32 %v10377, 0.0
        %v11344 = vmax.f32 %v10382, 0.0
        %v11345 = vmax.f32 %v10385, 0.0
        %v11346 = vmax.f32 %v10390, 0.0
        %v11347 = vmax.f32 %v10393, 0.0
        %v11348 = vmax.f32 %v10398, 0.0
        %v11349 = vmax.f32 %v10401, 0.0
        %v11350 = vmax.f32 %v10406, 0.0
        %v11351 = vmax.f32 %v10409, 0.0
        %v11352 = vmax.f32 %v10414, 0.0
        %v11353 = vmax.f32 %v10417, 0.0
        %v11354 = vmax.f32 %v10422, 0.0
        %v11355 = vmax.f32 %v10425, 0.0
        %v11356 = vmax.f32 %v10430, 0.0
        %v11357 = vmax.f32 %v10433, 0.0
        %v11358 = vmax.f32 %v10438, 0.0
        %v11359 = vmax.f32 %v10441, 0.0
        %v11360 = vmax.f32 %v10446, 0.0
        %v11361 = vmax.f32 %v10449, 0.0
        %v11362 = vmax.f32 %v10454, 0.0
        %v11363 = vmax.f32 %v10457, 0.0
        %v11364 = vmax.f32 %v10462, 0.0
        %v11365 = vmax.f32 %v10465, 0.0
        %v11366 = vmax.f32 %v10470, 0.0
        %v11367 = vmax.f32 %v10473, 0.0
        %v11368 = vmax.f32 %v10478, 0.0
        %v11369 = vmax.f32 %v10481, 0.0
        %v11370 = vmax.f32 %v10486, 0.0
        %v11371 = vmax.f32 %v10489, 0.0
        %v11372 = vmax.f32 %v10494, 0.0
        %v11373 = vmax.f32 %v10497, 0.0
        %v11374 = vmax.f32 %v10502, 0.0
        %v11375 = vmax.f32 %v10505, 0.0
        %v11376 = vmax.f32 %v10510, 0.0
        %v11377 = vmax.f32 %v10513, 0.0
        %v11378 = vmax.f32 %v10518, 0.0
        %v11379 = vmax.f32 %v10521, 0.0
        %v11380 = vmax.f32 %v10526, 0.0
        %v11381 = vmax.f32 %v10529, 0.0
        %v11382 = vmax.f32 %v10534, 0.0
        %v11383 = vmax.f32 %v10537, 0.0
        %v11384 = vmax.f32 %v10542, 0.0
        %v11385 = vmax.f32 %v10545, 0.0
        %v11386 = vmax.f32 %v10550, 0.0
        %v11387 = vmax.f32 %v10553, 0.0
        %v11388 = vmax.f32 %v10558, 0.0
        %v11389 = vmax.f32 %v10561, 0.0
        %v11390 = vmax.f32 %v10566, 0.0
        %v11391 = vmax.f32 %v10569, 0.0
        %v11392 = vmax.f32 %v10574, 0.0
        %v11393 = vmax.f32 %v10577, 0.0
        %v11394 = vmax.f32 %v10582, 0.0
        %v11395 = vmax.f32 %v10585, 0.0
        %v11396 = vmax.f32 %v10590, 0.0
        %v11397 = vmax.f32 %v10593, 0.0
        %v11398 = vmax.f32 %v10598, 0.0
        %v11399 = vmax.f32 %v10601, 0.0
        %v11400 = vmax.f32 %v10606, 0.0
        %v11401 = vmax.f32 %v10609, 0.0
        %v11402 = vmax.f32 %v10614, 0.0
        %v11403 = vmax.f32 %v10617, 0.0
        %v11404 = vmax.f32 %v10622, 0.0
        %v11405 = vmax.f32 %v10625, 0.0
        %v11406 = vmax.f32 %v10630, 0.0
        %v11407 = vmax.f32 %v10633, 0.0
        %v11408 = vmax.f32 %v10638, 0.0
        %v11409 = vmax.f32 %v10641, 0.0
        %v11410 = vmax.f32 %v10646, 0.0
        %v11411 = vmax.f32 %v10649, 0.0
        %v11412 = vmax.f32 %v10654, 0.0
        %v11413 = vmax.f32 %v10657, 0.0
        %v11414 = vmax.f32 %v10662, 0.0
        %v11415 = vmax.f32 %v10665, 0.0
        %v11416 = vmax.f32 %v10670, 0.0
        %v11417 = vmax.f32 %v10673, 0.0
        %v11418 = vmax.f32 %v10678, 0.0
        %v11419 = vmax.f32 %v10681, 0.0
        %v11420 = vmax.f32 %v10686, 0.0
        %v11421 = vmax.f32 %v10689, 0.0
        %v11422 = vmax.f32 %v10694, 0.0
        %v11423 = vmax.f32 %v10697, 0.0
        %v11424 = vmax.f32 %v10702, 0.0
        %v11425 = vmax.f32 %v10705, 0.0
        %v11426 = vmax.f32 %v10710, 0.0
        %v11427 = vmax.f32 %v10713, 0.0
        %v11428 = vmax.f32 %v10718, 0.0
        %v11429 = vmax.f32 %v10721, 0.0
        %v11430 = vmax.f32 %v10726, 0.0
        %v11431 = vmax.f32 %v10729, 0.0
        %v11432 = vmax.f32 %v10734, 0.0
        %v11433 = vmax.f32 %v10737, 0.0
        %v11434 = vmax.f32 %v10742, 0.0
        %v11435 = vmax.f32 %v10745, 0.0
        %v11436 = vmax.f32 %v10750, 0.0
        %v11437 = vmax.f32 %v10753, 0.0
        %v11438 = vmax.f32 %v10758, 0.0
        %v11439 = vmax.f32 %v10761, 0.0
        %v11440 = vmax.f32 %v10766, 0.0
        %v11441 = vmax.f32 %v10769, 0.0
        %v11442 = vmax.f32 %v10774, 0.0
        %v11443 = vmax.f32 %v10777, 0.0
        %v11444 = vmax.f32 %v10782, 0.0
        %v11445 = vmax.f32 %v10785, 0.0
        %v11446 = vmax.f32 %v10790, 0.0
        %v11447 = vmax.f32 %v10793, 0.0
        %v11448 = vmax.f32 %v10798, 0.0
        %v11449 = vmax.f32 %v10801, 0.0
        %v11450 = vmax.f32 %v10806, 0.0
        %v11451 = vmax.f32 %v10809, 0.0
        %v11452 = vmax.f32 %v10814, 0.0
        %v11453 = vmax.f32 %v10817, 0.0
        %v11454 = vmax.f32 %v10822, 0.0
        %v11455 = vmax.f32 %v10825, 0.0
        %v11456 = vmax.f32 %v10830, 0.0
        %v11457 = vmax.f32 %v10833, 0.0
        %v11458 = vmax.f32 %v10838, 0.0
        %v11459 = vmax.f32 %v10841, 0.0
        %v11460 = vmax.f32 %v10846, 0.0
        %v11461 = vmax.f32 %v10849, 0.0
        %v11462 = vmax.f32 %v10854, 0.0
        %v11463 = vmax.f32 %v10857, 0.0
        %v11464 = vmax.f32 %v10862, 0.0
        %v11465 = vmax.f32 %v10865, 0.0
        %v11466 = vmax.f32 %v10870, 0.0
        %v11467 = vmax.f32 %v10873, 0.0
        %v11468 = vmax.f32 %v10878, 0.0
        %v11469 = vmax.f32 %v10881, 0.0
        %v11470 = vmax.f32 %v10886, 0.0
        %v11471 = vmax.f32 %v10889, 0.0
        %v11472 = vmax.f32 %v10894, 0.0
        %v11473 = vmax.f32 %v10897, 0.0
        %v11474 = vmax.f32 %v10902, 0.0
        %v11475 = vmax.f32 %v10905, 0.0
        %v11476 = vmax.f32 %v10910, 0.0
        %v11477 = vmax.f32 %v10913, 0.0
        %v11478 = vmax.f32 %v10918, 0.0
        %v11479 = vmax.f32 %v10921, 0.0
        %v11480 = vmax.f32 %v10926, 0.0
        %v11481 = vmax.f32 %v10929, 0.0
        %v11482 = vmax.f32 %v10934, 0.0
        %v11483 = vmax.f32 %v10937, 0.0
        %v11484 = vmax.f32 %v10942, 0.0
        %v11485 = vmax.f32 %v10945, 0.0
        %v11486 = vmax.f32 %v10950, 0.0
        %v11487 = vmax.f32 %v10953, 0.0
        %v11488 = vmax.f32 %v10958, 0.0
        %v11489 = vmax.f32 %v10961, 0.0
        %v11490 = vmax.f32 %v10966, 0.0
        %v11491 = vmax.f32 %v10969, 0.0
        %v11492 = vmax.f32 %v10974, 0.0
        %v11493 = vmax.f32 %v10977, 0.0
        %v11494 = vmax.f32 %v10982, 0.0
        %v11495 = vmax.f32 %v10985, 0.0
        %v11496 = vmax.f32 %v10990, 0.0
        %v11497 = vmax.f32 %v10993, 0.0
        %v11498 = vmax.f32 %v10998, 0.0
        %v11499 = vmax.f32 %v11001, 0.0
        %v11500 = vmax.f32 %v11006, 0.0
        %v11501 = vmax.f32 %v11009, 0.0
        %v11502 = vmax.f32 %v11014, 0.0
        %v11503 = vmax.f32 %v11017, 0.0
        %v11504 = vmax.f32 %v11022, 0.0
        %v11505 = vmax.f32 %v11025, 0.0
        %v11506 = vmax.f32 %v11030, 0.0
        %v11507 = vmax.f32 %v11033, 0.0
        %v11508 = vmax.f32 %v11038, 0.0
        %v11509 = vmax.f32 %v11041, 0.0
        %v11510 = vmax.f32 %v11046, 0.0
        %v11511 = vmax.f32 %v11049, 0.0
        %v11512 = vmax.f32 %v11054, 0.0
        %v11513 = vmax.f32 %v11057, 0.0
        %v11514 = vmax.f32 %v11062, 0.0
        %v11515 = vmax.f32 %v11065, 0.0
        %v11516 = vmax.f32 %v11070, 0.0
        %v11517 = vmax.f32 %v11073, 0.0
        %v11518 = vmax.f32 %v11078, 0.0
        %v11519 = vmax.f32 %v11081, 0.0
        %v11520 = vmax.f32 %v11086, 0.0
        %v11521 = vmax.f32 %v11089, 0.0
        %v11522 = vmax.f32 %v11094, 0.0
        %v11523 = vmax.f32 %v11097, 0.0
        %v11524 = vmax.f32 %v11102, 0.0
        %v11525 = vmax.f32 %v11105, 0.0
        %v11526 = vmax.f32 %v11110, 0.0
        %v11527 = vmax.f32 %v11113, 0.0
        %v11528 = vmax.f32 %v11118, 0.0
        %v11529 = vmax.f32 %v11121, 0.0
        %v11530 = vmax.f32 %v11126, 0.0
        %v11531 = vmax.f32 %v11129, 0.0
        %v11532 = vmax.f32 %v11134, 0.0
        %v11533 = vmax.f32 %v11137, 0.0
        %v11534 = vmax.f32 %v11142, 0.0
        %v11535 = vmax.f32 %v11145, 0.0
        %v11536 = vmax.f32 %v11150, 0.0
        %v11537 = vmax.f32 %v11153, 0.0
        %v11538 = vmax.f32 %v11158, 0.0
        %v11539 = vmax.f32 %v11161, 0.0
        %v11540 = vmax.f32 %v11166, 0.0
        %v11541 = vmax.f32 %v11169, 0.0
        %v11542 = vmax.f32 %v11174, 0.0
        %v11543 = vmax.f32 %v11177, 0.0
        %v11544 = vmax.f32 %v11182, 0.0
        %v11545 = vmax.f32 %v11185, 0.0
        %v11546 = vmax.f32 %v11190, 0.0
        %v11547 = vmax.f32 %v11193, 0.0
        %v11548 = vmax.f32 %v11198, 0.0
        %v11549 = vmax.f32 %v11201, 0.0
        %v11550 = vmax.f32 %v11206, 0.0
        %v11551 = vmax.f32 %v11209, 0.0
        %v11552 = vmax.f32 %v11214, 0.0
        %v11553 = vmax.f32 %v11217, 0.0
        %v11554 = vmax.f32 %v11222, 0.0
        %v11555 = vmax.f32 %v11225, 0.0
        %v11556 = vmax.f32 %v11230, 0.0
        %v11557 = vmax.f32 %v11233, 0.0
        %v11558 = vmax.f32 %v11238, 0.0
        %v11559 = vmax.f32 %v11241, 0.0
        %v11560 = vmax.f32 %v11246, 0.0
        %v11561 = vmax.f32 %v11249, 0.0
        %v11562 = vmax.f32 %v11254, 0.0
        %v11563 = vmax.f32 %v11257, 0.0
        %v11564 = vmax.f32 %v11262, 0.0
        %v11565 = vmax.f32 %v11265, 0.0
        %v11566 = vmax.f32 %v11270, 0.0
        %v11567 = vmax.f32 %v11273, 0.0
        %v11568 = vmax.f32 %v11278, 0.0
        %v11569 = vmax.f32 %v11281, 0.0
        %v11570 = vmax.f32 %v11286, 0.0
        %v11571 = vmax.f32 %v11289, 0.0
        %v11572 = vmax.f32 %v11294, 0.0
        %v11573 = vmax.f32 %v11297, 0.0
        %v11574 = vmax.f32 %v11302, 0.0
        %v11575 = vmax.f32 %v11305, 0.0
        %v11576 = vmax.f32 %v11310, 0.0
        %v11577 = vmax.f32 %v11313, 0.0
        %v11578 = vmax.f32 %v11318, 0.0
        %v11579 = vmax.f32 %v11321, 0.0
        %vm11580 = vcmask 1043456
        %v11581 = vsel %vm11580, %v11325, -inf
        %v11582 = vmax.f32 %v11324, %v11581
        %v11583 = vrot.slane %v11582, 4
        %v11584 = vmax.f32 %v11582, %v11583
        %v11585 = vrot.slane %v11584, 2
        %v11586 = vmax.f32 %v11584, %v11585
        %v11587 = vrot.slane %v11586, 1
        %v11588 = vmax.f32 %v11586, %v11587
        %v11589 = vsel %vm11580, %v11327, -inf
        %v11590 = vmax.f32 %v11326, %v11589
        %v11591 = vrot.slane %v11590, 4
        %v11592 = vmax.f32 %v11590, %v11591
        %v11593 = vrot.slane %v11592, 2
        %v11594 = vmax.f32 %v11592, %v11593
        %v11595 = vrot.slane %v11594, 1
        %v11596 = vmax.f32 %v11594, %v11595
        %v11597 = vsel %vm11580, %v11329, -inf
        %v11598 = vmax.f32 %v11328, %v11597
        %v11599 = vrot.slane %v11598, 4
        %v11600 = vmax.f32 %v11598, %v11599
        %v11601 = vrot.slane %v11600, 2
        %v11602 = vmax.f32 %v11600, %v11601
        %v11603 = vrot.slane %v11602, 1
        %v11604 = vmax.f32 %v11602, %v11603
        %v11605 = vsel %vm11580, %v11331, -inf
        %v11606 = vmax.f32 %v11330, %v11605
        %v11607 = vrot.slane %v11606, 4
        %v11608 = vmax.f32 %v11606, %v11607
        %v11609 = vrot.slane %v11608, 2
        %v11610 = vmax.f32 %v11608, %v11609
        %v11611 = vrot.slane %v11610, 1
        %v11612 = vmax.f32 %v11610, %v11611
        %v11613 = vsel %vm11580, %v11333, -inf
        %v11614 = vmax.f32 %v11332, %v11613
        %v11615 = vrot.slane %v11614, 4
        %v11616 = vmax.f32 %v11614, %v11615
        %v11617 = vrot.slane %v11616, 2
        %v11618 = vmax.f32 %v11616, %v11617
        %v11619 = vrot.slane %v11618, 1
        %v11620 = vmax.f32 %v11618, %v11619
        %v11621 = vsel %vm11580, %v11335, -inf
        %v11622 = vmax.f32 %v11334, %v11621
        %v11623 = vrot.slane %v11622, 4
        %v11624 = vmax.f32 %v11622, %v11623
        %v11625 = vrot.slane %v11624, 2
        %v11626 = vmax.f32 %v11624, %v11625
        %v11627 = vrot.slane %v11626, 1
        %v11628 = vmax.f32 %v11626, %v11627
        %v11629 = vsel %vm11580, %v11337, -inf
        %v11630 = vmax.f32 %v11336, %v11629
        %v11631 = vrot.slane %v11630, 4
        %v11632 = vmax.f32 %v11630, %v11631
        %v11633 = vrot.slane %v11632, 2
        %v11634 = vmax.f32 %v11632, %v11633
        %v11635 = vrot.slane %v11634, 1
        %v11636 = vmax.f32 %v11634, %v11635
        %v11637 = vsel %vm11580, %v11339, -inf
        %v11638 = vmax.f32 %v11338, %v11637
        %v11639 = vrot.slane %v11638, 4
        %v11640 = vmax.f32 %v11638, %v11639
        %v11641 = vrot.slane %v11640, 2
        %v11642 = vmax.f32 %v11640, %v11641
        %v11643 = vrot.slane %v11642, 1
        %v11644 = vmax.f32 %v11642, %v11643
        %v11645 = vsel %vm11580, %v11341, -inf
        %v11646 = vmax.f32 %v11340, %v11645
        %v11647 = vrot.slane %v11646, 4
        %v11648 = vmax.f32 %v11646, %v11647
        %v11649 = vrot.slane %v11648, 2
        %v11650 = vmax.f32 %v11648, %v11649
        %v11651 = vrot.slane %v11650, 1
        %v11652 = vmax.f32 %v11650, %v11651
        %v11653 = vsel %vm11580, %v11343, -inf
        %v11654 = vmax.f32 %v11342, %v11653
        %v11655 = vrot.slane %v11654, 4
        %v11656 = vmax.f32 %v11654, %v11655
        %v11657 = vrot.slane %v11656, 2
        %v11658 = vmax.f32 %v11656, %v11657
        %v11659 = vrot.slane %v11658, 1
        %v11660 = vmax.f32 %v11658, %v11659
        %v11661 = vsel %vm11580, %v11345, -inf
        %v11662 = vmax.f32 %v11344, %v11661
        %v11663 = vrot.slane %v11662, 4
        %v11664 = vmax.f32 %v11662, %v11663
        %v11665 = vrot.slane %v11664, 2
        %v11666 = vmax.f32 %v11664, %v11665
        %v11667 = vrot.slane %v11666, 1
        %v11668 = vmax.f32 %v11666, %v11667
        %v11669 = vsel %vm11580, %v11347, -inf
        %v11670 = vmax.f32 %v11346, %v11669
        %v11671 = vrot.slane %v11670, 4
        %v11672 = vmax.f32 %v11670, %v11671
        %v11673 = vrot.slane %v11672, 2
        %v11674 = vmax.f32 %v11672, %v11673
        %v11675 = vrot.slane %v11674, 1
        %v11676 = vmax.f32 %v11674, %v11675
        %v11677 = vsel %vm11580, %v11349, -inf
        %v11678 = vmax.f32 %v11348, %v11677
        %v11679 = vrot.slane %v11678, 4
        %v11680 = vmax.f32 %v11678, %v11679
        %v11681 = vrot.slane %v11680, 2
        %v11682 = vmax.f32 %v11680, %v11681
        %v11683 = vrot.slane %v11682, 1
        %v11684 = vmax.f32 %v11682, %v11683
        %v11685 = vsel %vm11580, %v11351, -inf
        %v11686 = vmax.f32 %v11350, %v11685
        %v11687 = vrot.slane %v11686, 4
        %v11688 = vmax.f32 %v11686, %v11687
        %v11689 = vrot.slane %v11688, 2
        %v11690 = vmax.f32 %v11688, %v11689
        %v11691 = vrot.slane %v11690, 1
        %v11692 = vmax.f32 %v11690, %v11691
        %v11693 = vsel %vm11580, %v11353, -inf
        %v11694 = vmax.f32 %v11352, %v11693
        %v11695 = vrot.slane %v11694, 4
        %v11696 = vmax.f32 %v11694, %v11695
        %v11697 = vrot.slane %v11696, 2
        %v11698 = vmax.f32 %v11696, %v11697
        %v11699 = vrot.slane %v11698, 1
        %v11700 = vmax.f32 %v11698, %v11699
        %v11701 = vsel %vm11580, %v11355, -inf
        %v11702 = vmax.f32 %v11354, %v11701
        %v11703 = vrot.slane %v11702, 4
        %v11704 = vmax.f32 %v11702, %v11703
        %v11705 = vrot.slane %v11704, 2
        %v11706 = vmax.f32 %v11704, %v11705
        %v11707 = vrot.slane %v11706, 1
        %v11708 = vmax.f32 %v11706, %v11707
        %v11709 = vsel %vm11580, %v11357, -inf
        %v11710 = vmax.f32 %v11356, %v11709
        %v11711 = vrot.slane %v11710, 4
        %v11712 = vmax.f32 %v11710, %v11711
        %v11713 = vrot.slane %v11712, 2
        %v11714 = vmax.f32 %v11712, %v11713
        %v11715 = vrot.slane %v11714, 1
        %v11716 = vmax.f32 %v11714, %v11715
        %v11717 = vsel %vm11580, %v11359, -inf
        %v11718 = vmax.f32 %v11358, %v11717
        %v11719 = vrot.slane %v11718, 4
        %v11720 = vmax.f32 %v11718, %v11719
        %v11721 = vrot.slane %v11720, 2
        %v11722 = vmax.f32 %v11720, %v11721
        %v11723 = vrot.slane %v11722, 1
        %v11724 = vmax.f32 %v11722, %v11723
        %v11725 = vsel %vm11580, %v11361, -inf
        %v11726 = vmax.f32 %v11360, %v11725
        %v11727 = vrot.slane %v11726, 4
        %v11728 = vmax.f32 %v11726, %v11727
        %v11729 = vrot.slane %v11728, 2
        %v11730 = vmax.f32 %v11728, %v11729
        %v11731 = vrot.slane %v11730, 1
        %v11732 = vmax.f32 %v11730, %v11731
        %v11733 = vsel %vm11580, %v11363, -inf
        %v11734 = vmax.f32 %v11362, %v11733
        %v11735 = vrot.slane %v11734, 4
        %v11736 = vmax.f32 %v11734, %v11735
        %v11737 = vrot.slane %v11736, 2
        %v11738 = vmax.f32 %v11736, %v11737
        %v11739 = vrot.slane %v11738, 1
        %v11740 = vmax.f32 %v11738, %v11739
        %v11741 = vsel %vm11580, %v11365, -inf
        %v11742 = vmax.f32 %v11364, %v11741
        %v11743 = vrot.slane %v11742, 4
        %v11744 = vmax.f32 %v11742, %v11743
        %v11745 = vrot.slane %v11744, 2
        %v11746 = vmax.f32 %v11744, %v11745
        %v11747 = vrot.slane %v11746, 1
        %v11748 = vmax.f32 %v11746, %v11747
        %v11749 = vsel %vm11580, %v11367, -inf
        %v11750 = vmax.f32 %v11366, %v11749
        %v11751 = vrot.slane %v11750, 4
        %v11752 = vmax.f32 %v11750, %v11751
        %v11753 = vrot.slane %v11752, 2
        %v11754 = vmax.f32 %v11752, %v11753
        %v11755 = vrot.slane %v11754, 1
        %v11756 = vmax.f32 %v11754, %v11755
        %v11757 = vsel %vm11580, %v11369, -inf
        %v11758 = vmax.f32 %v11368, %v11757
        %v11759 = vrot.slane %v11758, 4
        %v11760 = vmax.f32 %v11758, %v11759
        %v11761 = vrot.slane %v11760, 2
        %v11762 = vmax.f32 %v11760, %v11761
        %v11763 = vrot.slane %v11762, 1
        %v11764 = vmax.f32 %v11762, %v11763
        %v11765 = vsel %vm11580, %v11371, -inf
        %v11766 = vmax.f32 %v11370, %v11765
        %v11767 = vrot.slane %v11766, 4
        %v11768 = vmax.f32 %v11766, %v11767
        %v11769 = vrot.slane %v11768, 2
        %v11770 = vmax.f32 %v11768, %v11769
        %v11771 = vrot.slane %v11770, 1
        %v11772 = vmax.f32 %v11770, %v11771
        %v11773 = vsel %vm11580, %v11373, -inf
        %v11774 = vmax.f32 %v11372, %v11773
        %v11775 = vrot.slane %v11774, 4
        %v11776 = vmax.f32 %v11774, %v11775
        %v11777 = vrot.slane %v11776, 2
        %v11778 = vmax.f32 %v11776, %v11777
        %v11779 = vrot.slane %v11778, 1
        %v11780 = vmax.f32 %v11778, %v11779
        %v11781 = vsel %vm11580, %v11375, -inf
        %v11782 = vmax.f32 %v11374, %v11781
        %v11783 = vrot.slane %v11782, 4
        %v11784 = vmax.f32 %v11782, %v11783
        %v11785 = vrot.slane %v11784, 2
        %v11786 = vmax.f32 %v11784, %v11785
        %v11787 = vrot.slane %v11786, 1
        %v11788 = vmax.f32 %v11786, %v11787
        %v11789 = vsel %vm11580, %v11377, -inf
        %v11790 = vmax.f32 %v11376, %v11789
        %v11791 = vrot.slane %v11790, 4
        %v11792 = vmax.f32 %v11790, %v11791
        %v11793 = vrot.slane %v11792, 2
        %v11794 = vmax.f32 %v11792, %v11793
        %v11795 = vrot.slane %v11794, 1
        %v11796 = vmax.f32 %v11794, %v11795
        %v11797 = vsel %vm11580, %v11379, -inf
        %v11798 = vmax.f32 %v11378, %v11797
        %v11799 = vrot.slane %v11798, 4
        %v11800 = vmax.f32 %v11798, %v11799
        %v11801 = vrot.slane %v11800, 2
        %v11802 = vmax.f32 %v11800, %v11801
        %v11803 = vrot.slane %v11802, 1
        %v11804 = vmax.f32 %v11802, %v11803
        %v11805 = vsel %vm11580, %v11381, -inf
        %v11806 = vmax.f32 %v11380, %v11805
        %v11807 = vrot.slane %v11806, 4
        %v11808 = vmax.f32 %v11806, %v11807
        %v11809 = vrot.slane %v11808, 2
        %v11810 = vmax.f32 %v11808, %v11809
        %v11811 = vrot.slane %v11810, 1
        %v11812 = vmax.f32 %v11810, %v11811
        %v11813 = vsel %vm11580, %v11383, -inf
        %v11814 = vmax.f32 %v11382, %v11813
        %v11815 = vrot.slane %v11814, 4
        %v11816 = vmax.f32 %v11814, %v11815
        %v11817 = vrot.slane %v11816, 2
        %v11818 = vmax.f32 %v11816, %v11817
        %v11819 = vrot.slane %v11818, 1
        %v11820 = vmax.f32 %v11818, %v11819
        %v11821 = vsel %vm11580, %v11385, -inf
        %v11822 = vmax.f32 %v11384, %v11821
        %v11823 = vrot.slane %v11822, 4
        %v11824 = vmax.f32 %v11822, %v11823
        %v11825 = vrot.slane %v11824, 2
        %v11826 = vmax.f32 %v11824, %v11825
        %v11827 = vrot.slane %v11826, 1
        %v11828 = vmax.f32 %v11826, %v11827
        %v11829 = vsel %vm11580, %v11387, -inf
        %v11830 = vmax.f32 %v11386, %v11829
        %v11831 = vrot.slane %v11830, 4
        %v11832 = vmax.f32 %v11830, %v11831
        %v11833 = vrot.slane %v11832, 2
        %v11834 = vmax.f32 %v11832, %v11833
        %v11835 = vrot.slane %v11834, 1
        %v11836 = vmax.f32 %v11834, %v11835
        %v11837 = vsel %vm11580, %v11389, -inf
        %v11838 = vmax.f32 %v11388, %v11837
        %v11839 = vrot.slane %v11838, 4
        %v11840 = vmax.f32 %v11838, %v11839
        %v11841 = vrot.slane %v11840, 2
        %v11842 = vmax.f32 %v11840, %v11841
        %v11843 = vrot.slane %v11842, 1
        %v11844 = vmax.f32 %v11842, %v11843
        %v11845 = vsel %vm11580, %v11391, -inf
        %v11846 = vmax.f32 %v11390, %v11845
        %v11847 = vrot.slane %v11846, 4
        %v11848 = vmax.f32 %v11846, %v11847
        %v11849 = vrot.slane %v11848, 2
        %v11850 = vmax.f32 %v11848, %v11849
        %v11851 = vrot.slane %v11850, 1
        %v11852 = vmax.f32 %v11850, %v11851
        %v11853 = vsel %vm11580, %v11393, -inf
        %v11854 = vmax.f32 %v11392, %v11853
        %v11855 = vrot.slane %v11854, 4
        %v11856 = vmax.f32 %v11854, %v11855
        %v11857 = vrot.slane %v11856, 2
        %v11858 = vmax.f32 %v11856, %v11857
        %v11859 = vrot.slane %v11858, 1
        %v11860 = vmax.f32 %v11858, %v11859
        %v11861 = vsel %vm11580, %v11395, -inf
        %v11862 = vmax.f32 %v11394, %v11861
        %v11863 = vrot.slane %v11862, 4
        %v11864 = vmax.f32 %v11862, %v11863
        %v11865 = vrot.slane %v11864, 2
        %v11866 = vmax.f32 %v11864, %v11865
        %v11867 = vrot.slane %v11866, 1
        %v11868 = vmax.f32 %v11866, %v11867
        %v11869 = vsel %vm11580, %v11397, -inf
        %v11870 = vmax.f32 %v11396, %v11869
        %v11871 = vrot.slane %v11870, 4
        %v11872 = vmax.f32 %v11870, %v11871
        %v11873 = vrot.slane %v11872, 2
        %v11874 = vmax.f32 %v11872, %v11873
        %v11875 = vrot.slane %v11874, 1
        %v11876 = vmax.f32 %v11874, %v11875
        %v11877 = vsel %vm11580, %v11399, -inf
        %v11878 = vmax.f32 %v11398, %v11877
        %v11879 = vrot.slane %v11878, 4
        %v11880 = vmax.f32 %v11878, %v11879
        %v11881 = vrot.slane %v11880, 2
        %v11882 = vmax.f32 %v11880, %v11881
        %v11883 = vrot.slane %v11882, 1
        %v11884 = vmax.f32 %v11882, %v11883
        %v11885 = vsel %vm11580, %v11401, -inf
        %v11886 = vmax.f32 %v11400, %v11885
        %v11887 = vrot.slane %v11886, 4
        %v11888 = vmax.f32 %v11886, %v11887
        %v11889 = vrot.slane %v11888, 2
        %v11890 = vmax.f32 %v11888, %v11889
        %v11891 = vrot.slane %v11890, 1
        %v11892 = vmax.f32 %v11890, %v11891
        %v11893 = vsel %vm11580, %v11403, -inf
        %v11894 = vmax.f32 %v11402, %v11893
        %v11895 = vrot.slane %v11894, 4
        %v11896 = vmax.f32 %v11894, %v11895
        %v11897 = vrot.slane %v11896, 2
        %v11898 = vmax.f32 %v11896, %v11897
        %v11899 = vrot.slane %v11898, 1
        %v11900 = vmax.f32 %v11898, %v11899
        %v11901 = vsel %vm11580, %v11405, -inf
        %v11902 = vmax.f32 %v11404, %v11901
        %v11903 = vrot.slane %v11902, 4
        %v11904 = vmax.f32 %v11902, %v11903
        %v11905 = vrot.slane %v11904, 2
        %v11906 = vmax.f32 %v11904, %v11905
        %v11907 = vrot.slane %v11906, 1
        %v11908 = vmax.f32 %v11906, %v11907
        %v11909 = vsel %vm11580, %v11407, -inf
        %v11910 = vmax.f32 %v11406, %v11909
        %v11911 = vrot.slane %v11910, 4
        %v11912 = vmax.f32 %v11910, %v11911
        %v11913 = vrot.slane %v11912, 2
        %v11914 = vmax.f32 %v11912, %v11913
        %v11915 = vrot.slane %v11914, 1
        %v11916 = vmax.f32 %v11914, %v11915
        %v11917 = vsel %vm11580, %v11409, -inf
        %v11918 = vmax.f32 %v11408, %v11917
        %v11919 = vrot.slane %v11918, 4
        %v11920 = vmax.f32 %v11918, %v11919
        %v11921 = vrot.slane %v11920, 2
        %v11922 = vmax.f32 %v11920, %v11921
        %v11923 = vrot.slane %v11922, 1
        %v11924 = vmax.f32 %v11922, %v11923
        %v11925 = vsel %vm11580, %v11411, -inf
        %v11926 = vmax.f32 %v11410, %v11925
        %v11927 = vrot.slane %v11926, 4
        %v11928 = vmax.f32 %v11926, %v11927
        %v11929 = vrot.slane %v11928, 2
        %v11930 = vmax.f32 %v11928, %v11929
        %v11931 = vrot.slane %v11930, 1
        %v11932 = vmax.f32 %v11930, %v11931
        %v11933 = vsel %vm11580, %v11413, -inf
        %v11934 = vmax.f32 %v11412, %v11933
        %v11935 = vrot.slane %v11934, 4
        %v11936 = vmax.f32 %v11934, %v11935
        %v11937 = vrot.slane %v11936, 2
        %v11938 = vmax.f32 %v11936, %v11937
        %v11939 = vrot.slane %v11938, 1
        %v11940 = vmax.f32 %v11938, %v11939
        %v11941 = vsel %vm11580, %v11415, -inf
        %v11942 = vmax.f32 %v11414, %v11941
        %v11943 = vrot.slane %v11942, 4
        %v11944 = vmax.f32 %v11942, %v11943
        %v11945 = vrot.slane %v11944, 2
        %v11946 = vmax.f32 %v11944, %v11945
        %v11947 = vrot.slane %v11946, 1
        %v11948 = vmax.f32 %v11946, %v11947
        %v11949 = vsel %vm11580, %v11417, -inf
        %v11950 = vmax.f32 %v11416, %v11949
        %v11951 = vrot.slane %v11950, 4
        %v11952 = vmax.f32 %v11950, %v11951
        %v11953 = vrot.slane %v11952, 2
        %v11954 = vmax.f32 %v11952, %v11953
        %v11955 = vrot.slane %v11954, 1
        %v11956 = vmax.f32 %v11954, %v11955
        %v11957 = vsel %vm11580, %v11419, -inf
        %v11958 = vmax.f32 %v11418, %v11957
        %v11959 = vrot.slane %v11958, 4
        %v11960 = vmax.f32 %v11958, %v11959
        %v11961 = vrot.slane %v11960, 2
        %v11962 = vmax.f32 %v11960, %v11961
        %v11963 = vrot.slane %v11962, 1
        %v11964 = vmax.f32 %v11962, %v11963
        %v11965 = vsel %vm11580, %v11421, -inf
        %v11966 = vmax.f32 %v11420, %v11965
        %v11967 = vrot.slane %v11966, 4
        %v11968 = vmax.f32 %v11966, %v11967
        %v11969 = vrot.slane %v11968, 2
        %v11970 = vmax.f32 %v11968, %v11969
        %v11971 = vrot.slane %v11970, 1
        %v11972 = vmax.f32 %v11970, %v11971
        %v11973 = vsel %vm11580, %v11423, -inf
        %v11974 = vmax.f32 %v11422, %v11973
        %v11975 = vrot.slane %v11974, 4
        %v11976 = vmax.f32 %v11974, %v11975
        %v11977 = vrot.slane %v11976, 2
        %v11978 = vmax.f32 %v11976, %v11977
        %v11979 = vrot.slane %v11978, 1
        %v11980 = vmax.f32 %v11978, %v11979
        %v11981 = vsel %vm11580, %v11425, -inf
        %v11982 = vmax.f32 %v11424, %v11981
        %v11983 = vrot.slane %v11982, 4
        %v11984 = vmax.f32 %v11982, %v11983
        %v11985 = vrot.slane %v11984, 2
        %v11986 = vmax.f32 %v11984, %v11985
        %v11987 = vrot.slane %v11986, 1
        %v11988 = vmax.f32 %v11986, %v11987
        %v11989 = vsel %vm11580, %v11427, -inf
        %v11990 = vmax.f32 %v11426, %v11989
        %v11991 = vrot.slane %v11990, 4
        %v11992 = vmax.f32 %v11990, %v11991
        %v11993 = vrot.slane %v11992, 2
        %v11994 = vmax.f32 %v11992, %v11993
        %v11995 = vrot.slane %v11994, 1
        %v11996 = vmax.f32 %v11994, %v11995
        %v11997 = vsel %vm11580, %v11429, -inf
        %v11998 = vmax.f32 %v11428, %v11997
        %v11999 = vrot.slane %v11998, 4
        %v12000 = vmax.f32 %v11998, %v11999
        %v12001 = vrot.slane %v12000, 2
        %v12002 = vmax.f32 %v12000, %v12001
        %v12003 = vrot.slane %v12002, 1
        %v12004 = vmax.f32 %v12002, %v12003
        %v12005 = vsel %vm11580, %v11431, -inf
        %v12006 = vmax.f32 %v11430, %v12005
        %v12007 = vrot.slane %v12006, 4
        %v12008 = vmax.f32 %v12006, %v12007
        %v12009 = vrot.slane %v12008, 2
        %v12010 = vmax.f32 %v12008, %v12009
        %v12011 = vrot.slane %v12010, 1
        %v12012 = vmax.f32 %v12010, %v12011
        %v12013 = vsel %vm11580, %v11433, -inf
        %v12014 = vmax.f32 %v11432, %v12013
        %v12015 = vrot.slane %v12014, 4
        %v12016 = vmax.f32 %v12014, %v12015
        %v12017 = vrot.slane %v12016, 2
        %v12018 = vmax.f32 %v12016, %v12017
        %v12019 = vrot.slane %v12018, 1
        %v12020 = vmax.f32 %v12018, %v12019
        %v12021 = vsel %vm11580, %v11435, -inf
        %v12022 = vmax.f32 %v11434, %v12021
        %v12023 = vrot.slane %v12022, 4
        %v12024 = vmax.f32 %v12022, %v12023
        %v12025 = vrot.slane %v12024, 2
        %v12026 = vmax.f32 %v12024, %v12025
        %v12027 = vrot.slane %v12026, 1
        %v12028 = vmax.f32 %v12026, %v12027
        %v12029 = vsel %vm11580, %v11437, -inf
        %v12030 = vmax.f32 %v11436, %v12029
        %v12031 = vrot.slane %v12030, 4
        %v12032 = vmax.f32 %v12030, %v12031
        %v12033 = vrot.slane %v12032, 2
        %v12034 = vmax.f32 %v12032, %v12033
        %v12035 = vrot.slane %v12034, 1
        %v12036 = vmax.f32 %v12034, %v12035
        %v12037 = vsel %vm11580, %v11439, -inf
        %v12038 = vmax.f32 %v11438, %v12037
        %v12039 = vrot.slane %v12038, 4
        %v12040 = vmax.f32 %v12038, %v12039
        %v12041 = vrot.slane %v12040, 2
        %v12042 = vmax.f32 %v12040, %v12041
        %v12043 = vrot.slane %v12042, 1
        %v12044 = vmax.f32 %v12042, %v12043
        %v12045 = vsel %vm11580, %v11441, -inf
        %v12046 = vmax.f32 %v11440, %v12045
        %v12047 = vrot.slane %v12046, 4
        %v12048 = vmax.f32 %v12046, %v12047
        %v12049 = vrot.slane %v12048, 2
        %v12050 = vmax.f32 %v12048, %v12049
        %v12051 = vrot.slane %v12050, 1
        %v12052 = vmax.f32 %v12050, %v12051
        %v12053 = vsel %vm11580, %v11443, -inf
        %v12054 = vmax.f32 %v11442, %v12053
        %v12055 = vrot.slane %v12054, 4
        %v12056 = vmax.f32 %v12054, %v12055
        %v12057 = vrot.slane %v12056, 2
        %v12058 = vmax.f32 %v12056, %v12057
        %v12059 = vrot.slane %v12058, 1
        %v12060 = vmax.f32 %v12058, %v12059
        %v12061 = vsel %vm11580, %v11445, -inf
        %v12062 = vmax.f32 %v11444, %v12061
        %v12063 = vrot.slane %v12062, 4
        %v12064 = vmax.f32 %v12062, %v12063
        %v12065 = vrot.slane %v12064, 2
        %v12066 = vmax.f32 %v12064, %v12065
        %v12067 = vrot.slane %v12066, 1
        %v12068 = vmax.f32 %v12066, %v12067
        %v12069 = vsel %vm11580, %v11447, -inf
        %v12070 = vmax.f32 %v11446, %v12069
        %v12071 = vrot.slane %v12070, 4
        %v12072 = vmax.f32 %v12070, %v12071
        %v12073 = vrot.slane %v12072, 2
        %v12074 = vmax.f32 %v12072, %v12073
        %v12075 = vrot.slane %v12074, 1
        %v12076 = vmax.f32 %v12074, %v12075
        %v12077 = vsel %vm11580, %v11449, -inf
        %v12078 = vmax.f32 %v11448, %v12077
        %v12079 = vrot.slane %v12078, 4
        %v12080 = vmax.f32 %v12078, %v12079
        %v12081 = vrot.slane %v12080, 2
        %v12082 = vmax.f32 %v12080, %v12081
        %v12083 = vrot.slane %v12082, 1
        %v12084 = vmax.f32 %v12082, %v12083
        %v12085 = vsel %vm11580, %v11451, -inf
        %v12086 = vmax.f32 %v11450, %v12085
        %v12087 = vrot.slane %v12086, 4
        %v12088 = vmax.f32 %v12086, %v12087
        %v12089 = vrot.slane %v12088, 2
        %v12090 = vmax.f32 %v12088, %v12089
        %v12091 = vrot.slane %v12090, 1
        %v12092 = vmax.f32 %v12090, %v12091
        %v12093 = vsel %vm11580, %v11453, -inf
        %v12094 = vmax.f32 %v11452, %v12093
        %v12095 = vrot.slane %v12094, 4
        %v12096 = vmax.f32 %v12094, %v12095
        %v12097 = vrot.slane %v12096, 2
        %v12098 = vmax.f32 %v12096, %v12097
        %v12099 = vrot.slane %v12098, 1
        %v12100 = vmax.f32 %v12098, %v12099
        %v12101 = vsel %vm11580, %v11455, -inf
        %v12102 = vmax.f32 %v11454, %v12101
        %v12103 = vrot.slane %v12102, 4
        %v12104 = vmax.f32 %v12102, %v12103
        %v12105 = vrot.slane %v12104, 2
        %v12106 = vmax.f32 %v12104, %v12105
        %v12107 = vrot.slane %v12106, 1
        %v12108 = vmax.f32 %v12106, %v12107
        %v12109 = vsel %vm11580, %v11457, -inf
        %v12110 = vmax.f32 %v11456, %v12109
        %v12111 = vrot.slane %v12110, 4
        %v12112 = vmax.f32 %v12110, %v12111
        %v12113 = vrot.slane %v12112, 2
        %v12114 = vmax.f32 %v12112, %v12113
        %v12115 = vrot.slane %v12114, 1
        %v12116 = vmax.f32 %v12114, %v12115
        %v12117 = vsel %vm11580, %v11459, -inf
        %v12118 = vmax.f32 %v11458, %v12117
        %v12119 = vrot.slane %v12118, 4
        %v12120 = vmax.f32 %v12118, %v12119
        %v12121 = vrot.slane %v12120, 2
        %v12122 = vmax.f32 %v12120, %v12121
        %v12123 = vrot.slane %v12122, 1
        %v12124 = vmax.f32 %v12122, %v12123
        %v12125 = vsel %vm11580, %v11461, -inf
        %v12126 = vmax.f32 %v11460, %v12125
        %v12127 = vrot.slane %v12126, 4
        %v12128 = vmax.f32 %v12126, %v12127
        %v12129 = vrot.slane %v12128, 2
        %v12130 = vmax.f32 %v12128, %v12129
        %v12131 = vrot.slane %v12130, 1
        %v12132 = vmax.f32 %v12130, %v12131
        %v12133 = vsel %vm11580, %v11463, -inf
        %v12134 = vmax.f32 %v11462, %v12133
        %v12135 = vrot.slane %v12134, 4
        %v12136 = vmax.f32 %v12134, %v12135
        %v12137 = vrot.slane %v12136, 2
        %v12138 = vmax.f32 %v12136, %v12137
        %v12139 = vrot.slane %v12138, 1
        %v12140 = vmax.f32 %v12138, %v12139
        %v12141 = vsel %vm11580, %v11465, -inf
        %v12142 = vmax.f32 %v11464, %v12141
        %v12143 = vrot.slane %v12142, 4
        %v12144 = vmax.f32 %v12142, %v12143
        %v12145 = vrot.slane %v12144, 2
        %v12146 = vmax.f32 %v12144, %v12145
        %v12147 = vrot.slane %v12146, 1
        %v12148 = vmax.f32 %v12146, %v12147
        %v12149 = vsel %vm11580, %v11467, -inf
        %v12150 = vmax.f32 %v11466, %v12149
        %v12151 = vrot.slane %v12150, 4
        %v12152 = vmax.f32 %v12150, %v12151
        %v12153 = vrot.slane %v12152, 2
        %v12154 = vmax.f32 %v12152, %v12153
        %v12155 = vrot.slane %v12154, 1
        %v12156 = vmax.f32 %v12154, %v12155
        %v12157 = vsel %vm11580, %v11469, -inf
        %v12158 = vmax.f32 %v11468, %v12157
        %v12159 = vrot.slane %v12158, 4
        %v12160 = vmax.f32 %v12158, %v12159
        %v12161 = vrot.slane %v12160, 2
        %v12162 = vmax.f32 %v12160, %v12161
        %v12163 = vrot.slane %v12162, 1
        %v12164 = vmax.f32 %v12162, %v12163
        %v12165 = vsel %vm11580, %v11471, -inf
        %v12166 = vmax.f32 %v11470, %v12165
        %v12167 = vrot.slane %v12166, 4
        %v12168 = vmax.f32 %v12166, %v12167
        %v12169 = vrot.slane %v12168, 2
        %v12170 = vmax.f32 %v12168, %v12169
        %v12171 = vrot.slane %v12170, 1
        %v12172 = vmax.f32 %v12170, %v12171
        %v12173 = vsel %vm11580, %v11473, -inf
        %v12174 = vmax.f32 %v11472, %v12173
        %v12175 = vrot.slane %v12174, 4
        %v12176 = vmax.f32 %v12174, %v12175
        %v12177 = vrot.slane %v12176, 2
        %v12178 = vmax.f32 %v12176, %v12177
        %v12179 = vrot.slane %v12178, 1
        %v12180 = vmax.f32 %v12178, %v12179
        %v12181 = vsel %vm11580, %v11475, -inf
        %v12182 = vmax.f32 %v11474, %v12181
        %v12183 = vrot.slane %v12182, 4
        %v12184 = vmax.f32 %v12182, %v12183
        %v12185 = vrot.slane %v12184, 2
        %v12186 = vmax.f32 %v12184, %v12185
        %v12187 = vrot.slane %v12186, 1
        %v12188 = vmax.f32 %v12186, %v12187
        %v12189 = vsel %vm11580, %v11477, -inf
        %v12190 = vmax.f32 %v11476, %v12189
        %v12191 = vrot.slane %v12190, 4
        %v12192 = vmax.f32 %v12190, %v12191
        %v12193 = vrot.slane %v12192, 2
        %v12194 = vmax.f32 %v12192, %v12193
        %v12195 = vrot.slane %v12194, 1
        %v12196 = vmax.f32 %v12194, %v12195
        %v12197 = vsel %vm11580, %v11479, -inf
        %v12198 = vmax.f32 %v11478, %v12197
        %v12199 = vrot.slane %v12198, 4
        %v12200 = vmax.f32 %v12198, %v12199
        %v12201 = vrot.slane %v12200, 2
        %v12202 = vmax.f32 %v12200, %v12201
        %v12203 = vrot.slane %v12202, 1
        %v12204 = vmax.f32 %v12202, %v12203
        %v12205 = vsel %vm11580, %v11481, -inf
        %v12206 = vmax.f32 %v11480, %v12205
        %v12207 = vrot.slane %v12206, 4
        %v12208 = vmax.f32 %v12206, %v12207
        %v12209 = vrot.slane %v12208, 2
        %v12210 = vmax.f32 %v12208, %v12209
        %v12211 = vrot.slane %v12210, 1
        %v12212 = vmax.f32 %v12210, %v12211
        %v12213 = vsel %vm11580, %v11483, -inf
        %v12214 = vmax.f32 %v11482, %v12213
        %v12215 = vrot.slane %v12214, 4
        %v12216 = vmax.f32 %v12214, %v12215
        %v12217 = vrot.slane %v12216, 2
        %v12218 = vmax.f32 %v12216, %v12217
        %v12219 = vrot.slane %v12218, 1
        %v12220 = vmax.f32 %v12218, %v12219
        %v12221 = vsel %vm11580, %v11485, -inf
        %v12222 = vmax.f32 %v11484, %v12221
        %v12223 = vrot.slane %v12222, 4
        %v12224 = vmax.f32 %v12222, %v12223
        %v12225 = vrot.slane %v12224, 2
        %v12226 = vmax.f32 %v12224, %v12225
        %v12227 = vrot.slane %v12226, 1
        %v12228 = vmax.f32 %v12226, %v12227
        %v12229 = vsel %vm11580, %v11487, -inf
        %v12230 = vmax.f32 %v11486, %v12229
        %v12231 = vrot.slane %v12230, 4
        %v12232 = vmax.f32 %v12230, %v12231
        %v12233 = vrot.slane %v12232, 2
        %v12234 = vmax.f32 %v12232, %v12233
        %v12235 = vrot.slane %v12234, 1
        %v12236 = vmax.f32 %v12234, %v12235
        %v12237 = vsel %vm11580, %v11489, -inf
        %v12238 = vmax.f32 %v11488, %v12237
        %v12239 = vrot.slane %v12238, 4
        %v12240 = vmax.f32 %v12238, %v12239
        %v12241 = vrot.slane %v12240, 2
        %v12242 = vmax.f32 %v12240, %v12241
        %v12243 = vrot.slane %v12242, 1
        %v12244 = vmax.f32 %v12242, %v12243
        %v12245 = vsel %vm11580, %v11491, -inf
        %v12246 = vmax.f32 %v11490, %v12245
        %v12247 = vrot.slane %v12246, 4
        %v12248 = vmax.f32 %v12246, %v12247
        %v12249 = vrot.slane %v12248, 2
        %v12250 = vmax.f32 %v12248, %v12249
        %v12251 = vrot.slane %v12250, 1
        %v12252 = vmax.f32 %v12250, %v12251
        %v12253 = vsel %vm11580, %v11493, -inf
        %v12254 = vmax.f32 %v11492, %v12253
        %v12255 = vrot.slane %v12254, 4
        %v12256 = vmax.f32 %v12254, %v12255
        %v12257 = vrot.slane %v12256, 2
        %v12258 = vmax.f32 %v12256, %v12257
        %v12259 = vrot.slane %v12258, 1
        %v12260 = vmax.f32 %v12258, %v12259
        %v12261 = vsel %vm11580, %v11495, -inf
        %v12262 = vmax.f32 %v11494, %v12261
        %v12263 = vrot.slane %v12262, 4
        %v12264 = vmax.f32 %v12262, %v12263
        %v12265 = vrot.slane %v12264, 2
        %v12266 = vmax.f32 %v12264, %v12265
        %v12267 = vrot.slane %v12266, 1
        %v12268 = vmax.f32 %v12266, %v12267
        %v12269 = vsel %vm11580, %v11497, -inf
        %v12270 = vmax.f32 %v11496, %v12269
        %v12271 = vrot.slane %v12270, 4
        %v12272 = vmax.f32 %v12270, %v12271
        %v12273 = vrot.slane %v12272, 2
        %v12274 = vmax.f32 %v12272, %v12273
        %v12275 = vrot.slane %v12274, 1
        %v12276 = vmax.f32 %v12274, %v12275
        %v12277 = vsel %vm11580, %v11499, -inf
        %v12278 = vmax.f32 %v11498, %v12277
        %v12279 = vrot.slane %v12278, 4
        %v12280 = vmax.f32 %v12278, %v12279
        %v12281 = vrot.slane %v12280, 2
        %v12282 = vmax.f32 %v12280, %v12281
        %v12283 = vrot.slane %v12282, 1
        %v12284 = vmax.f32 %v12282, %v12283
        %v12285 = vsel %vm11580, %v11501, -inf
        %v12286 = vmax.f32 %v11500, %v12285
        %v12287 = vrot.slane %v12286, 4
        %v12288 = vmax.f32 %v12286, %v12287
        %v12289 = vrot.slane %v12288, 2
        %v12290 = vmax.f32 %v12288, %v12289
        %v12291 = vrot.slane %v12290, 1
        %v12292 = vmax.f32 %v12290, %v12291
        %v12293 = vsel %vm11580, %v11503, -inf
        %v12294 = vmax.f32 %v11502, %v12293
        %v12295 = vrot.slane %v12294, 4
        %v12296 = vmax.f32 %v12294, %v12295
        %v12297 = vrot.slane %v12296, 2
        %v12298 = vmax.f32 %v12296, %v12297
        %v12299 = vrot.slane %v12298, 1
        %v12300 = vmax.f32 %v12298, %v12299
        %v12301 = vsel %vm11580, %v11505, -inf
        %v12302 = vmax.f32 %v11504, %v12301
        %v12303 = vrot.slane %v12302, 4
        %v12304 = vmax.f32 %v12302, %v12303
        %v12305 = vrot.slane %v12304, 2
        %v12306 = vmax.f32 %v12304, %v12305
        %v12307 = vrot.slane %v12306, 1
        %v12308 = vmax.f32 %v12306, %v12307
        %v12309 = vsel %vm11580, %v11507, -inf
        %v12310 = vmax.f32 %v11506, %v12309
        %v12311 = vrot.slane %v12310, 4
        %v12312 = vmax.f32 %v12310, %v12311
        %v12313 = vrot.slane %v12312, 2
        %v12314 = vmax.f32 %v12312, %v12313
        %v12315 = vrot.slane %v12314, 1
        %v12316 = vmax.f32 %v12314, %v12315
        %v12317 = vsel %vm11580, %v11509, -inf
        %v12318 = vmax.f32 %v11508, %v12317
        %v12319 = vrot.slane %v12318, 4
        %v12320 = vmax.f32 %v12318, %v12319
        %v12321 = vrot.slane %v12320, 2
        %v12322 = vmax.f32 %v12320, %v12321
        %v12323 = vrot.slane %v12322, 1
        %v12324 = vmax.f32 %v12322, %v12323
        %v12325 = vsel %vm11580, %v11511, -inf
        %v12326 = vmax.f32 %v11510, %v12325
        %v12327 = vrot.slane %v12326, 4
        %v12328 = vmax.f32 %v12326, %v12327
        %v12329 = vrot.slane %v12328, 2
        %v12330 = vmax.f32 %v12328, %v12329
        %v12331 = vrot.slane %v12330, 1
        %v12332 = vmax.f32 %v12330, %v12331
        %v12333 = vsel %vm11580, %v11513, -inf
        %v12334 = vmax.f32 %v11512, %v12333
        %v12335 = vrot.slane %v12334, 4
        %v12336 = vmax.f32 %v12334, %v12335
        %v12337 = vrot.slane %v12336, 2
        %v12338 = vmax.f32 %v12336, %v12337
        %v12339 = vrot.slane %v12338, 1
        %v12340 = vmax.f32 %v12338, %v12339
        %v12341 = vsel %vm11580, %v11515, -inf
        %v12342 = vmax.f32 %v11514, %v12341
        %v12343 = vrot.slane %v12342, 4
        %v12344 = vmax.f32 %v12342, %v12343
        %v12345 = vrot.slane %v12344, 2
        %v12346 = vmax.f32 %v12344, %v12345
        %v12347 = vrot.slane %v12346, 1
        %v12348 = vmax.f32 %v12346, %v12347
        %v12349 = vsel %vm11580, %v11517, -inf
        %v12350 = vmax.f32 %v11516, %v12349
        %v12351 = vrot.slane %v12350, 4
        %v12352 = vmax.f32 %v12350, %v12351
        %v12353 = vrot.slane %v12352, 2
        %v12354 = vmax.f32 %v12352, %v12353
        %v12355 = vrot.slane %v12354, 1
        %v12356 = vmax.f32 %v12354, %v12355
        %v12357 = vsel %vm11580, %v11519, -inf
        %v12358 = vmax.f32 %v11518, %v12357
        %v12359 = vrot.slane %v12358, 4
        %v12360 = vmax.f32 %v12358, %v12359
        %v12361 = vrot.slane %v12360, 2
        %v12362 = vmax.f32 %v12360, %v12361
        %v12363 = vrot.slane %v12362, 1
        %v12364 = vmax.f32 %v12362, %v12363
        %v12365 = vsel %vm11580, %v11521, -inf
        %v12366 = vmax.f32 %v11520, %v12365
        %v12367 = vrot.slane %v12366, 4
        %v12368 = vmax.f32 %v12366, %v12367
        %v12369 = vrot.slane %v12368, 2
        %v12370 = vmax.f32 %v12368, %v12369
        %v12371 = vrot.slane %v12370, 1
        %v12372 = vmax.f32 %v12370, %v12371
        %v12373 = vsel %vm11580, %v11523, -inf
        %v12374 = vmax.f32 %v11522, %v12373
        %v12375 = vrot.slane %v12374, 4
        %v12376 = vmax.f32 %v12374, %v12375
        %v12377 = vrot.slane %v12376, 2
        %v12378 = vmax.f32 %v12376, %v12377
        %v12379 = vrot.slane %v12378, 1
        %v12380 = vmax.f32 %v12378, %v12379
        %v12381 = vsel %vm11580, %v11525, -inf
        %v12382 = vmax.f32 %v11524, %v12381
        %v12383 = vrot.slane %v12382, 4
        %v12384 = vmax.f32 %v12382, %v12383
        %v12385 = vrot.slane %v12384, 2
        %v12386 = vmax.f32 %v12384, %v12385
        %v12387 = vrot.slane %v12386, 1
        %v12388 = vmax.f32 %v12386, %v12387
        %v12389 = vsel %vm11580, %v11527, -inf
        %v12390 = vmax.f32 %v11526, %v12389
        %v12391 = vrot.slane %v12390, 4
        %v12392 = vmax.f32 %v12390, %v12391
        %v12393 = vrot.slane %v12392, 2
        %v12394 = vmax.f32 %v12392, %v12393
        %v12395 = vrot.slane %v12394, 1
        %v12396 = vmax.f32 %v12394, %v12395
        %v12397 = vsel %vm11580, %v11529, -inf
        %v12398 = vmax.f32 %v11528, %v12397
        %v12399 = vrot.slane %v12398, 4
        %v12400 = vmax.f32 %v12398, %v12399
        %v12401 = vrot.slane %v12400, 2
        %v12402 = vmax.f32 %v12400, %v12401
        %v12403 = vrot.slane %v12402, 1
        %v12404 = vmax.f32 %v12402, %v12403
        %v12405 = vsel %vm11580, %v11531, -inf
        %v12406 = vmax.f32 %v11530, %v12405
        %v12407 = vrot.slane %v12406, 4
        %v12408 = vmax.f32 %v12406, %v12407
        %v12409 = vrot.slane %v12408, 2
        %v12410 = vmax.f32 %v12408, %v12409
        %v12411 = vrot.slane %v12410, 1
        %v12412 = vmax.f32 %v12410, %v12411
        %v12413 = vsel %vm11580, %v11533, -inf
        %v12414 = vmax.f32 %v11532, %v12413
        %v12415 = vrot.slane %v12414, 4
        %v12416 = vmax.f32 %v12414, %v12415
        %v12417 = vrot.slane %v12416, 2
        %v12418 = vmax.f32 %v12416, %v12417
        %v12419 = vrot.slane %v12418, 1
        %v12420 = vmax.f32 %v12418, %v12419
        %v12421 = vsel %vm11580, %v11535, -inf
        %v12422 = vmax.f32 %v11534, %v12421
        %v12423 = vrot.slane %v12422, 4
        %v12424 = vmax.f32 %v12422, %v12423
        %v12425 = vrot.slane %v12424, 2
        %v12426 = vmax.f32 %v12424, %v12425
        %v12427 = vrot.slane %v12426, 1
        %v12428 = vmax.f32 %v12426, %v12427
        %v12429 = vsel %vm11580, %v11537, -inf
        %v12430 = vmax.f32 %v11536, %v12429
        %v12431 = vrot.slane %v12430, 4
        %v12432 = vmax.f32 %v12430, %v12431
        %v12433 = vrot.slane %v12432, 2
        %v12434 = vmax.f32 %v12432, %v12433
        %v12435 = vrot.slane %v12434, 1
        %v12436 = vmax.f32 %v12434, %v12435
        %v12437 = vsel %vm11580, %v11539, -inf
        %v12438 = vmax.f32 %v11538, %v12437
        %v12439 = vrot.slane %v12438, 4
        %v12440 = vmax.f32 %v12438, %v12439
        %v12441 = vrot.slane %v12440, 2
        %v12442 = vmax.f32 %v12440, %v12441
        %v12443 = vrot.slane %v12442, 1
        %v12444 = vmax.f32 %v12442, %v12443
        %v12445 = vsel %vm11580, %v11541, -inf
        %v12446 = vmax.f32 %v11540, %v12445
        %v12447 = vrot.slane %v12446, 4
        %v12448 = vmax.f32 %v12446, %v12447
        %v12449 = vrot.slane %v12448, 2
        %v12450 = vmax.f32 %v12448, %v12449
        %v12451 = vrot.slane %v12450, 1
        %v12452 = vmax.f32 %v12450, %v12451
        %v12453 = vsel %vm11580, %v11543, -inf
        %v12454 = vmax.f32 %v11542, %v12453
        %v12455 = vrot.slane %v12454, 4
        %v12456 = vmax.f32 %v12454, %v12455
        %v12457 = vrot.slane %v12456, 2
        %v12458 = vmax.f32 %v12456, %v12457
        %v12459 = vrot.slane %v12458, 1
        %v12460 = vmax.f32 %v12458, %v12459
        %v12461 = vsel %vm11580, %v11545, -inf
        %v12462 = vmax.f32 %v11544, %v12461
        %v12463 = vrot.slane %v12462, 4
        %v12464 = vmax.f32 %v12462, %v12463
        %v12465 = vrot.slane %v12464, 2
        %v12466 = vmax.f32 %v12464, %v12465
        %v12467 = vrot.slane %v12466, 1
        %v12468 = vmax.f32 %v12466, %v12467
        %v12469 = vsel %vm11580, %v11547, -inf
        %v12470 = vmax.f32 %v11546, %v12469
        %v12471 = vrot.slane %v12470, 4
        %v12472 = vmax.f32 %v12470, %v12471
        %v12473 = vrot.slane %v12472, 2
        %v12474 = vmax.f32 %v12472, %v12473
        %v12475 = vrot.slane %v12474, 1
        %v12476 = vmax.f32 %v12474, %v12475
        %v12477 = vsel %vm11580, %v11549, -inf
        %v12478 = vmax.f32 %v11548, %v12477
        %v12479 = vrot.slane %v12478, 4
        %v12480 = vmax.f32 %v12478, %v12479
        %v12481 = vrot.slane %v12480, 2
        %v12482 = vmax.f32 %v12480, %v12481
        %v12483 = vrot.slane %v12482, 1
        %v12484 = vmax.f32 %v12482, %v12483
        %v12485 = vsel %vm11580, %v11551, -inf
        %v12486 = vmax.f32 %v11550, %v12485
        %v12487 = vrot.slane %v12486, 4
        %v12488 = vmax.f32 %v12486, %v12487
        %v12489 = vrot.slane %v12488, 2
        %v12490 = vmax.f32 %v12488, %v12489
        %v12491 = vrot.slane %v12490, 1
        %v12492 = vmax.f32 %v12490, %v12491
        %v12493 = vsel %vm11580, %v11553, -inf
        %v12494 = vmax.f32 %v11552, %v12493
        %v12495 = vrot.slane %v12494, 4
        %v12496 = vmax.f32 %v12494, %v12495
        %v12497 = vrot.slane %v12496, 2
        %v12498 = vmax.f32 %v12496, %v12497
        %v12499 = vrot.slane %v12498, 1
        %v12500 = vmax.f32 %v12498, %v12499
        %v12501 = vsel %vm11580, %v11555, -inf
        %v12502 = vmax.f32 %v11554, %v12501
        %v12503 = vrot.slane %v12502, 4
        %v12504 = vmax.f32 %v12502, %v12503
        %v12505 = vrot.slane %v12504, 2
        %v12506 = vmax.f32 %v12504, %v12505
        %v12507 = vrot.slane %v12506, 1
        %v12508 = vmax.f32 %v12506, %v12507
        %v12509 = vsel %vm11580, %v11557, -inf
        %v12510 = vmax.f32 %v11556, %v12509
        %v12511 = vrot.slane %v12510, 4
        %v12512 = vmax.f32 %v12510, %v12511
        %v12513 = vrot.slane %v12512, 2
        %v12514 = vmax.f32 %v12512, %v12513
        %v12515 = vrot.slane %v12514, 1
        %v12516 = vmax.f32 %v12514, %v12515
        %v12517 = vsel %vm11580, %v11559, -inf
        %v12518 = vmax.f32 %v11558, %v12517
        %v12519 = vrot.slane %v12518, 4
        %v12520 = vmax.f32 %v12518, %v12519
        %v12521 = vrot.slane %v12520, 2
        %v12522 = vmax.f32 %v12520, %v12521
        %v12523 = vrot.slane %v12522, 1
        %v12524 = vmax.f32 %v12522, %v12523
        %v12525 = vsel %vm11580, %v11561, -inf
        %v12526 = vmax.f32 %v11560, %v12525
        %v12527 = vrot.slane %v12526, 4
        %v12528 = vmax.f32 %v12526, %v12527
        %v12529 = vrot.slane %v12528, 2
        %v12530 = vmax.f32 %v12528, %v12529
        %v12531 = vrot.slane %v12530, 1
        %v12532 = vmax.f32 %v12530, %v12531
        %v12533 = vsel %vm11580, %v11563, -inf
        %v12534 = vmax.f32 %v11562, %v12533
        %v12535 = vrot.slane %v12534, 4
        %v12536 = vmax.f32 %v12534, %v12535
        %v12537 = vrot.slane %v12536, 2
        %v12538 = vmax.f32 %v12536, %v12537
        %v12539 = vrot.slane %v12538, 1
        %v12540 = vmax.f32 %v12538, %v12539
        %v12541 = vsel %vm11580, %v11565, -inf
        %v12542 = vmax.f32 %v11564, %v12541
        %v12543 = vrot.slane %v12542, 4
        %v12544 = vmax.f32 %v12542, %v12543
        %v12545 = vrot.slane %v12544, 2
        %v12546 = vmax.f32 %v12544, %v12545
        %v12547 = vrot.slane %v12546, 1
        %v12548 = vmax.f32 %v12546, %v12547
        %v12549 = vsel %vm11580, %v11567, -inf
        %v12550 = vmax.f32 %v11566, %v12549
        %v12551 = vrot.slane %v12550, 4
        %v12552 = vmax.f32 %v12550, %v12551
        %v12553 = vrot.slane %v12552, 2
        %v12554 = vmax.f32 %v12552, %v12553
        %v12555 = vrot.slane %v12554, 1
        %v12556 = vmax.f32 %v12554, %v12555
        %v12557 = vsel %vm11580, %v11569, -inf
        %v12558 = vmax.f32 %v11568, %v12557
        %v12559 = vrot.slane %v12558, 4
        %v12560 = vmax.f32 %v12558, %v12559
        %v12561 = vrot.slane %v12560, 2
        %v12562 = vmax.f32 %v12560, %v12561
        %v12563 = vrot.slane %v12562, 1
        %v12564 = vmax.f32 %v12562, %v12563
        %v12565 = vsel %vm11580, %v11571, -inf
        %v12566 = vmax.f32 %v11570, %v12565
        %v12567 = vrot.slane %v12566, 4
        %v12568 = vmax.f32 %v12566, %v12567
        %v12569 = vrot.slane %v12568, 2
        %v12570 = vmax.f32 %v12568, %v12569
        %v12571 = vrot.slane %v12570, 1
        %v12572 = vmax.f32 %v12570, %v12571
        %v12573 = vsel %vm11580, %v11573, -inf
        %v12574 = vmax.f32 %v11572, %v12573
        %v12575 = vrot.slane %v12574, 4
        %v12576 = vmax.f32 %v12574, %v12575
        %v12577 = vrot.slane %v12576, 2
        %v12578 = vmax.f32 %v12576, %v12577
        %v12579 = vrot.slane %v12578, 1
        %v12580 = vmax.f32 %v12578, %v12579
        %v12581 = vsel %vm11580, %v11575, -inf
        %v12582 = vmax.f32 %v11574, %v12581
        %v12583 = vrot.slane %v12582, 4
        %v12584 = vmax.f32 %v12582, %v12583
        %v12585 = vrot.slane %v12584, 2
        %v12586 = vmax.f32 %v12584, %v12585
        %v12587 = vrot.slane %v12586, 1
        %v12588 = vmax.f32 %v12586, %v12587
        %v12589 = vsel %vm11580, %v11577, -inf
        %v12590 = vmax.f32 %v11576, %v12589
        %v12591 = vrot.slane %v12590, 4
        %v12592 = vmax.f32 %v12590, %v12591
        %v12593 = vrot.slane %v12592, 2
        %v12594 = vmax.f32 %v12592, %v12593
        %v12595 = vrot.slane %v12594, 1
        %v12596 = vmax.f32 %v12594, %v12595
        %v12597 = vsel %vm11580, %v11579, -inf
        %v12598 = vmax.f32 %v11578, %v12597
        %v12599 = vrot.slane %v12598, 4
        %v12600 = vmax.f32 %v12598, %v12599
        %v12601 = vrot.slane %v12600, 2
        %v12602 = vmax.f32 %v12600, %v12601
        %v12603 = vrot.slane %v12602, 1
        %v12604 = vmax.f32 %v12602, %v12603
        %vm12733 = vcmask 1041409
        %v12734 = vsel %vm12733, %v11596, %v11588
        %vm12735 = vcmask 1042434
        %v12736 = vsel %vm12735, %v11604, %v12734
        %vm12737 = vcmask 1043459
        %v12738 = vsel %vm12737, %v11612, %v12736
        %vm12739 = vcmask 1044484
        %v12740 = vsel %vm12739, %v11620, %v12738
        %vm12741 = vcmask 1045509
        %v12742 = vsel %vm12741, %v11628, %v12740
        %vm12743 = vcmask 1046534
        %v12744 = vsel %vm12743, %v11636, %v12742
        %vm12745 = vcmask 1047559
        %v12746 = vsel %vm12745, %v11644, %v12744
        %v12747 = vsel %vm12733, %v11660, %v11652
        %v12748 = vsel %vm12735, %v11668, %v12747
        %v12749 = vsel %vm12737, %v11676, %v12748
        %v12750 = vsel %vm12739, %v11684, %v12749
        %v12751 = vsel %vm12741, %v11692, %v12750
        %v12752 = vsel %vm12743, %v11700, %v12751
        %v12753 = vsel %vm12745, %v11708, %v12752
        %v12754 = vsel %vm12733, %v11724, %v11716
        %v12755 = vsel %vm12735, %v11732, %v12754
        %v12756 = vsel %vm12737, %v11740, %v12755
        %v12757 = vsel %vm12739, %v11748, %v12756
        %v12758 = vsel %vm12741, %v11756, %v12757
        %v12759 = vsel %vm12743, %v11764, %v12758
        %v12760 = vsel %vm12745, %v11772, %v12759
        %v12761 = vsel %vm12733, %v11788, %v11780
        %v12762 = vsel %vm12735, %v11796, %v12761
        %v12763 = vsel %vm12737, %v11804, %v12762
        %v12764 = vsel %vm12739, %v11812, %v12763
        %v12765 = vsel %vm12741, %v11820, %v12764
        %v12766 = vsel %vm12743, %v11828, %v12765
        %v12767 = vsel %vm12745, %v11836, %v12766
        %v12768 = vsel %vm12733, %v11852, %v11844
        %v12769 = vsel %vm12735, %v11860, %v12768
        %v12770 = vsel %vm12737, %v11868, %v12769
        %v12771 = vsel %vm12739, %v11876, %v12770
        %v12772 = vsel %vm12741, %v11884, %v12771
        %v12773 = vsel %vm12743, %v11892, %v12772
        %v12774 = vsel %vm12745, %v11900, %v12773
        %v12775 = vsel %vm12733, %v11916, %v11908
        %v12776 = vsel %vm12735, %v11924, %v12775
        %v12777 = vsel %vm12737, %v11932, %v12776
        %v12778 = vsel %vm12739, %v11940, %v12777
        %v12779 = vsel %vm12741, %v11948, %v12778
        %v12780 = vsel %vm12743, %v11956, %v12779
        %v12781 = vsel %vm12745, %v11964, %v12780
        %v12782 = vsel %vm12733, %v11980, %v11972
        %v12783 = vsel %vm12735, %v11988, %v12782
        %v12784 = vsel %vm12737, %v11996, %v12783
        %v12785 = vsel %vm12739, %v12004, %v12784
        %v12786 = vsel %vm12741, %v12012, %v12785
        %v12787 = vsel %vm12743, %v12020, %v12786
        %v12788 = vsel %vm12745, %v12028, %v12787
        %v12789 = vsel %vm12733, %v12044, %v12036
        %v12790 = vsel %vm12735, %v12052, %v12789
        %v12791 = vsel %vm12737, %v12060, %v12790
        %v12792 = vsel %vm12739, %v12068, %v12791
        %v12793 = vsel %vm12741, %v12076, %v12792
        %v12794 = vsel %vm12743, %v12084, %v12793
        %v12795 = vsel %vm12745, %v12092, %v12794
        %v12796 = vsel %vm12733, %v12108, %v12100
        %v12797 = vsel %vm12735, %v12116, %v12796
        %v12798 = vsel %vm12737, %v12124, %v12797
        %v12799 = vsel %vm12739, %v12132, %v12798
        %v12800 = vsel %vm12741, %v12140, %v12799
        %v12801 = vsel %vm12743, %v12148, %v12800
        %v12802 = vsel %vm12745, %v12156, %v12801
        %v12803 = vsel %vm12733, %v12172, %v12164
        %v12804 = vsel %vm12735, %v12180, %v12803
        %v12805 = vsel %vm12737, %v12188, %v12804
        %v12806 = vsel %vm12739, %v12196, %v12805
        %v12807 = vsel %vm12741, %v12204, %v12806
        %v12808 = vsel %vm12743, %v12212, %v12807
        %v12809 = vsel %vm12745, %v12220, %v12808
        %v12810 = vsel %vm12733, %v12236, %v12228
        %v12811 = vsel %vm12735, %v12244, %v12810
        %v12812 = vsel %vm12737, %v12252, %v12811
        %v12813 = vsel %vm12739, %v12260, %v12812
        %v12814 = vsel %vm12741, %v12268, %v12813
        %v12815 = vsel %vm12743, %v12276, %v12814
        %v12816 = vsel %vm12745, %v12284, %v12815
        %v12817 = vsel %vm12733, %v12300, %v12292
        %v12818 = vsel %vm12735, %v12308, %v12817
        %v12819 = vsel %vm12737, %v12316, %v12818
        %v12820 = vsel %vm12739, %v12324, %v12819
        %v12821 = vsel %vm12741, %v12332, %v12820
        %v12822 = vsel %vm12743, %v12340, %v12821
        %v12823 = vsel %vm12745, %v12348, %v12822
        %v12824 = vsel %vm12733, %v12364, %v12356
        %v12825 = vsel %vm12735, %v12372, %v12824
        %v12826 = vsel %vm12737, %v12380, %v12825
        %v12827 = vsel %vm12739, %v12388, %v12826
        %v12828 = vsel %vm12741, %v12396, %v12827
        %v12829 = vsel %vm12743, %v12404, %v12828
        %v12830 = vsel %vm12745, %v12412, %v12829
        %v12831 = vsel %vm12733, %v12428, %v12420
        %v12832 = vsel %vm12735, %v12436, %v12831
        %v12833 = vsel %vm12737, %v12444, %v12832
        %v12834 = vsel %vm12739, %v12452, %v12833
        %v12835 = vsel %vm12741, %v12460, %v12834
        %v12836 = vsel %vm12743, %v12468, %v12835
        %v12837 = vsel %vm12745, %v12476, %v12836
        %v12838 = vsel %vm12733, %v12492, %v12484
        %v12839 = vsel %vm12735, %v12500, %v12838
        %v12840 = vsel %vm12737, %v12508, %v12839
        %v12841 = vsel %vm12739, %v12516, %v12840
        %v12842 = vsel %vm12741, %v12524, %v12841
        %v12843 = vsel %vm12743, %v12532, %v12842
        %v12844 = vsel %vm12745, %v12540, %v12843
        %v12845 = vsel %vm12733, %v12556, %v12548
        %v12846 = vsel %vm12735, %v12564, %v12845
        %v12847 = vsel %vm12737, %v12572, %v12846
        %v12848 = vsel %vm12739, %v12580, %v12847
        %v12849 = vsel %vm12741, %v12588, %v12848
        %v12850 = vsel %vm12743, %v12596, %v12849
        %v12851 = vsel %vm12745, %v12604, %v12850
        %12868 = vst [vmem:[%s191] sm:$0xff] %v12746
        %12869 = vst [vmem:[%s191 + $0x8] sm:$0xff] %v12753
        %12870 = vst [vmem:[%s191 + $0x10] sm:$0xff] %v12760
        %12871 = vst [vmem:[%s191 + $0x18] sm:$0xff] %v12767
        %12872 = vst [vmem:[%s191 + $0x20] sm:$0xff] %v12774
        %12873 = vst [vmem:[%s191 + $0x28] sm:$0xff] %v12781
        %12874 = vst [vmem:[%s191 + $0x30] sm:$0xff] %v12788
        %12875 = vst [vmem:[%s191 + $0x38] sm:$0xff] %v12795
        %12876 = vst [vmem:[%s191 + $0x40] sm:$0xff] %v12802
        %12877 = vst [vmem:[%s191 + $0x48] sm:$0xff] %v12809
        %12878 = vst [vmem:[%s191 + $0x50] sm:$0xff] %v12816
        %12879 = vst [vmem:[%s191 + $0x58] sm:$0xff] %v12823
        %12880 = vst [vmem:[%s191 + $0x60] sm:$0xff] %v12830
        %12881 = vst [vmem:[%s191 + $0x68] sm:$0xff] %v12837
        %12882 = vst [vmem:[%s191 + $0x70] sm:$0xff] %v12844
        %12883 = vst [vmem:[%s191 + $0x78] sm:$0xff] %v12851
        %s12884 = sand.u32 %s115, 1
        %s12885 = scalar_lea.sflag [#allocation3], %s12884
        %s12886 = sand.u32 %s115, 1
        %s12887 = smul.addr %s12886, 128
        %s12888 = scalar_lea.vmem [#allocation2], %s12887
        // Predicated region
        $region37: #{tpu_custom_call.1} parent=35 // pred_check
          %p12889 = pneg %p125
        $region38: #{tpu_custom_call.1} parent=35 // pred_check_branch
          %12891 = sbr.rel (%p12889) target = $region40
        $region39: #{tpu_custom_call.1} parent=35 // pred_region
          %s12892 = smul.u32 16, %s18
          %s12894 = ssub.s32 2048, 2048
          %12895 = vsyncadd %s12885, %s12894
          %s12896 = smul.addr %s12892, 128
          %s12897 = scalar_lea.hbm %s4, %s12896
          %s12898 = sshll.u32 %s12888, 4
          %s12899 = int_to_ptr.vmem [resolvable:$true] %s12898
          %12904 = dma.vmem_to_hbm [thread:$0]  %s12899, 2048, %s12897, %s12885, 128, 128, 8
        $region40: #{tpu_custom_call.1} parent=35 // pred_fallthru
          _
      $region36: #{tpu_custom_call.1} parent=5 // pred_fallthru
        _
      %p12905 = scmp.le.s32.totalorder 2, %s13
      // Predicated region
      $region41: #{tpu_custom_call.1} parent=5 // pred_check
        %p12906 = pneg %p12905
      $region42: #{tpu_custom_call.1} parent=5 // pred_check_branch
        %12908 = sbr.rel (%p12906) target = $region44
      $region43: #{tpu_custom_call.1} parent=5 // pred_region
        %s12909 = ssub.s32 %s13, 2
        // Predicated region
        $region45: #{tpu_custom_call.1} parent=43 // pred_check
          %p12910 = pneg %p131
        $region46: #{tpu_custom_call.1} parent=43 // pred_check_branch
          %12912 = sbr.rel (%p12910) target = $region48
        $region47: #{tpu_custom_call.1} parent=43 // pred_region
          %s12913 = sand.u32 %s116, 1
          %s12914 = scalar_lea.sflag [#allocation3], %s12913
          %s12915 = sand.u32 %s116, 1
          %s12916 = smul.addr %s12915, 128
          %s12917 = scalar_lea.vmem [#allocation2], %s12916
          %12918 = dma.done %s12914, 2048
        $region48: #{tpu_custom_call.1} parent=43 // pred_fallthru
          _
      $region44: #{tpu_custom_call.1} parent=5 // pred_fallthru
        _
    $region6: #{tpu_custom_call.1} parent=1 // loop_footer
      %s17 = sadd.s32 1, %s13
    $region7: #{tpu_custom_call.1} parent=1 // loop_footer_branch
      %12 = sbr.rel target = $region3
    $region8: #{tpu_custom_call.1} parent=1 // loop_exit
      _
    %12919 = vsyncpa [#allocation3], 1
    %s12920 = scalar_lea.sflag [#allocation3], 1
    %12921 = vsyncpa %s12920, 1

</llo_original>
